<compile_context>
chip_gen: v6e
topology: v6e:2x2x1
jax: 0.10.0
libtpu: 0.0.40
codegen_flags: <defaults>
</compile_context>

<pallas_src>
import jax
import jax.numpy as jnp
import numpy as np
from jax.experimental import pallas as pl
from jax.experimental.pallas import tpu as pltpu

LANE = 128
SUBLANE = 8


def _round_up(x, m):
    return ((x + m - 1) // m) * m


def _time_block(T, max_tb=8):
    """Largest divisor of T that is <= max_tb (keeps the tail exact)."""
    for tb in range(min(T, max_tb), 0, -1):
        if T % tb == 0:
            return tb
    return 1


def _batch_block(Bp):
    """Batch block size (lets megacore shard the batch axis when B is big)."""
    if Bp <= 128:
        return Bp
    for bb in (128, 64, 32, 16, 8):
        if Bp % bb == 0:
            return bb
    return Bp


def _pad_gate_cols(w, H, Hp):
    """(K, 4*H) -> (K, 4*Hp): pad each of the 4 gate blocks to Hp lanes."""
    K = w.shape[0]
    w = w.reshape(K, 4, H)
    w = jnp.pad(w, ((0, 0), (0, 0), (0, Hp - H)))
    return w.reshape(K, 4 * Hp)


# ---------------------------------------------------------------------------
# Kernel 1: stacked LSTM recurrence (time-blocked, fused gate matmul)
# ---------------------------------------------------------------------------
def make_lstm_kernel(num_layers, hidden_p, time_block, compute_dtype):
    L, Hp, Tb = num_layers, hidden_p, time_block

    def kernel(*args):
        x_ref = args[0]                               # (Tb, Bb, Ep) compute_dtype
        w_refs = [args[1 + 2 * l] for l in range(L)]  # (In_p + Hp, 4*Hp)
        b_refs = [args[2 + 2 * l] for l in range(L)]  # (1, 4*Hp) f32
        h0_ref = args[2 * L + 1]                      # (L, Bb, Hp) f32
        c0_ref = args[2 * L + 2]
        tops_ref = args[2 * L + 3]                    # (Tb, Bb, Hp) compute_dtype
        hn_ref = args[2 * L + 4]                      # (L, Bb, Hp) f32
        cn_ref = args[2 * L + 5]
        h_s = args[2 * L + 6]                         # scratch (L, Bb, Hp) f32
        c_s = args[2 * L + 7]

        t = pl.program_id(1)

        @pl.when(t == 0)
        def _():
            h_s[...] = h0_ref[...]
            c_s[...] = c0_ref[...]

        # Fully-unrolled time loop over this block (Tb is small & static).
        for i in range(Tb):
            inp = x_ref[i]                            # (Bb, Ep/Hp) compute_dtype
            for l in range(L):
                c_prev = c_s[l]                       # (Bb, Hp) f32
                # Fused gate matmul: one MXU push per layer per step.
                xh = jnp.concatenate(
                    [inp, h_s[l].astype(compute_dtype)], axis=-1)
                gates = jnp.dot(xh, w_refs[l][...],
                                preferred_element_type=jnp.float32)
                gates = gates + b_refs[l][...]        # (Bb, 4*Hp) f32
                # Lane-aligned gate slices (Hp is a multiple of 128).
                i_g = jax.nn.sigmoid(gates[:, 0 * Hp:1 * Hp])
                f_g = jax.nn.sigmoid(gates[:, 1 * Hp:2 * Hp])
                g_g = jnp.tanh(gates[:, 2 * Hp:3 * Hp])
                o_g = jax.nn.sigmoid(gates[:, 3 * Hp:4 * Hp])
                c_new = f_g * c_prev + i_g * g_g
                h_new = o_g * jnp.tanh(c_new)
                h_s[l] = h_new
                c_s[l] = c_new
                inp = h_new.astype(compute_dtype)     # feed next layer
            tops_ref[i] = inp                         # top-layer output, step i

        # Final hidden/cell state: only the last time step matters.
        @pl.when(t == pl.num_programs(1) - 1)
        def _():
            hn_ref[...] = h_s[...]
            cn_ref[...] = c_s[...]

    return kernel


# ---------------------------------------------------------------------------
# Kernel 2: FC projection, tiled over (rows, vocab) blocks
# ---------------------------------------------------------------------------
def fc_kernel(x_ref, w_ref, b_ref, o_ref):
    o_ref[...] = (jnp.dot(x_ref[...], w_ref[...],
                          preferred_element_type=jnp.float32)
                  + b_ref[...]).astype(o_ref.dtype)


# ---------------------------------------------------------------------------
# Wrapper: mirrors LSTM.forward(x, hidden) -> (out, (h_n, c_n))
# ---------------------------------------------------------------------------
def lstm_forward(tokens, hidden, params, *, compute_dtype=jnp.bfloat16):
    h0, c0 = hidden
    embed = params["embedding"]                       # (Vocab, E)
    B, T = tokens.shape
    L, _, H = h0.shape
    E = embed.shape[1]
    V = params["w_fc"].shape[1]

    Hp = _round_up(H, LANE)
    Ep = _round_up(E, LANE)
    Bp = _round_up(B, SUBLANE)
    Tb = _time_block(T)
    nt = T // Tb
    Bb = _batch_block(Bp)
    nb = Bp // Bb

    # ---- host-side glue: embedding gather, padding, weight fusion ----------
    x = jnp.take(embed, tokens, axis=0)               # (B, T, E)  XLA gather
    x = jnp.pad(x, ((0, Bp - B), (0, 0), (0, Ep - E)))
    x_tm = jnp.transpose(x, (1, 0, 2)).astype(compute_dtype)   # (T, Bp, Ep)

    fused_w, biases = [], []
    for l in range(L):
        w_ih = params["w_ih"][l]                      # (E or H, 4H)
        w_hh = params["w_hh"][l]                      # (H, 4H)
        b = params["b"][l]                            # (1, 4H) combined bias
        In = w_ih.shape[0]
        In_p = Ep if l == 0 else Hp
        w_ih_p = jnp.pad(_pad_gate_cols(w_ih, H, Hp), ((0, In_p - In), (0, 0)))
        w_hh_p = jnp.pad(_pad_gate_cols(w_hh, H, Hp), ((0, Hp - H), (0, 0)))
        fused_w.append(jnp.concatenate([w_ih_p, w_hh_p],
                                       axis=0).astype(compute_dtype))
        biases.append(_pad_gate_cols(b, H, Hp).astype(jnp.float32))

    h0_p = jnp.pad(h0, ((0, 0), (0, Bp - B), (0, Hp - H))).astype(jnp.float32)
    c0_p = jnp.pad(c0, ((0, 0), (0, Bp - B), (0, Hp - H))).astype(jnp.float32)

    # ---- pallas_call #1: recurrence ----------------------------------------
    inputs = [x_tm]
    in_specs = [pl.BlockSpec((Tb, Bb, Ep), lambda b, t: (t, b, 0))]
    for l in range(L):
        inputs += [fused_w[l], biases[l]]
        in_specs += [
            pl.BlockSpec(fused_w[l].shape, lambda b, t: (0, 0)),
            pl.BlockSpec(biases[l].shape, lambda b, t: (0, 0)),
        ]
    inputs += [h0_p, c0_p]
    in_specs += [
        pl.BlockSpec((L, Bb, Hp), lambda b, t: (0, b, 0)),
        pl.BlockSpec((L, Bb, Hp), lambda b, t: (0, b, 0)),
    ]

    out_shape = (
        jax.ShapeDtypeStruct((T, Bp, Hp), compute_dtype),   # top-layer outputs
        jax.ShapeDtypeStruct((L, Bp, Hp), jnp.float32),     # h_n
        jax.ShapeDtypeStruct((L, Bp, Hp), jnp.float32),     # c_n
    )
    out_specs = (
        pl.BlockSpec((Tb, Bb, Hp), lambda b, t: (t, b, 0)),
        pl.BlockSpec((L, Bb, Hp), lambda b, t: (0, b, 0)),
        pl.BlockSpec((L, Bb, Hp), lambda b, t: (0, b, 0)),
    )

    kernel = make_lstm_kernel(L, Hp, Tb, compute_dtype)
    tops_tm, hn_p, cn_p = pl.pallas_call(
        kernel,
        out_shape=out_shape,
        grid_spec=pltpu.PrefetchScalarGridSpec(
            num_scalar_prefetch=0,
            grid=(nb, nt),                    # time axis MUST stay "arbitrary"
            in_specs=in_specs,
            out_specs=out_specs,
            scratch_shapes=[
                pltpu.VMEM((L, Bb, Hp), jnp.float32),   # h state
                pltpu.VMEM((L, Bb, Hp), jnp.float32),   # c state
            ],
        ),
        compiler_params=pltpu.CompilerParams(
            dimension_semantics=("parallel", "arbitrary"),
            vmem_limit_bytes=48 * 1024 * 1024),
    )(*inputs)

    # ---- pallas_call #2: FC projection, tiled over vocab -------------------
    # Small (T, B, H) reorder in XLA (H << V, negligible vs the logits tensor),
    # so the FC kernel can emit batch-major, lane-dense logits directly.
    tops_bm = jnp.transpose(tops_tm, (1, 0, 2))[:B]          # (B, T, Hp)
    rows = B * T
    x_rows = tops_bm.reshape(rows, Hp)

    Tm = 256 if rows >= 256 else _round_up(rows, SUBLANE)
    rows_p = _round_up(rows, Tm)
    x_rows = jnp.pad(x_rows, ((0, rows_p - rows), (0, 0)))

    Tv = 256 if V >= 256 else LANE
    Vp = _round_up(V, Tv)
    w_fc_p = jnp.pad(params["w_fc"],
                     ((0, Hp - H), (0, Vp - V))).astype(compute_dtype)
    b_fc_p = jnp.pad(params["b_fc"], ((0, 0), (0, Vp - V))).astype(jnp.float32)

    logits_p = pl.pallas_call(
        fc_kernel,
        out_shape=jax.ShapeDtypeStruct((rows_p, Vp), jnp.float32),
        grid_spec=pltpu.PrefetchScalarGridSpec(
            num_scalar_prefetch=0,
            grid=(rows_p // Tm, Vp // Tv),
            in_specs=[
                pl.BlockSpec((Tm, Hp), lambda i, j: (i, 0)),
                pl.BlockSpec((Hp, Tv), lambda i, j: (0, j)),
                pl.BlockSpec((1, Tv), lambda i, j: (0, j)),
            ],
            out_specs=pl.BlockSpec((Tm, Tv), lambda i, j: (i, j)),
        ),
        compiler_params=pltpu.CompilerParams(
            dimension_semantics=("parallel", "parallel"),
            vmem_limit_bytes=48 * 1024 * 1024),
    )(x_rows, w_fc_p, b_fc_p)

    out = logits_p[:rows, :V]                     # (B*T, V), batch-major rows
    h_n = hn_p[:, :B, :H]
    c_n = cn_p[:, :B, :H]
    return out, (h_n, c_n)


# ---------------------------------------------------------------------------
# Pure-JAX reference (f32) for correctness checking
# ---------------------------------------------------------------------------
def lstm_reference(tokens, hidden, params):
    h0, c0 = hidden
    x = jnp.take(params["embedding"], tokens, axis=0)    # (B, T, E)
    B, T, _ = x.shape
    L, _, H = h0.shape

    def step(carry, x_t):
        h, c = carry
        inp = x_t
        new_h, new_c = [], []
        for l in range(L):
            gates = (inp @ params["w_ih"][l] + h[l] @ params["w_hh"][l]
                     + params["b"][l])
            i_g = jax.nn.sigmoid(gates[:, 0 * H:1 * H])
            f_g = jax.nn.sigmoid(gates[:, 1 * H:2 * H])
            g_g = jnp.tanh(gates[:, 2 * H:3 * H])
            o_g = jax.nn.sigmoid(gates[:, 3 * H:4 * H])
            c_new = f_g * c[l] + i_g * g_g
            h_new = o_g * jnp.tanh(c_new)
            new_h.append(h_new)
            new_c.append(c_new)
            inp = h_new
        return (jnp.stack(new_h), jnp.stack(new_c)), inp

    (h_n, c_n), tops = jax.lax.scan(step, (h0, c0), jnp.transpose(x, (1, 0, 2)))
    tops = jnp.transpose(tops, (1, 0, 2)).reshape(B * T, H)
    out = tops @ params["w_fc"] + params["b_fc"]
    return out, (h_n, c_n)


def init_params(key, vocab_size, embed_size, hidden_size, num_layers):
    V, E, H, L = vocab_size, embed_size, hidden_size, num_layers
    keys = jax.random.split(key, 4 + 3 * L)
    k = 1.0 / np.sqrt(H)
    params = {
        "embedding": jax.random.normal(keys[0], (V, E), jnp.float32),
        "w_fc": jax.random.uniform(keys[1], (H, V), jnp.float32, -k, k),
        "b_fc": jax.random.uniform(keys[2], (1, V), jnp.float32, -k, k),
        "w_ih": [],
        "w_hh": [],
        "b": [],
    }
    for l in range(L):
        in_dim = E if l == 0 else H
        kw = keys[3 + 3 * l:6 + 3 * l]
        params["w_ih"].append(
            jax.random.uniform(kw[0], (in_dim, 4 * H), jnp.float32, -k, k))
        params["w_hh"].append(
            jax.random.uniform(kw[1], (H, 4 * H), jnp.float32, -k, k))
        params["b"].append(   # combined b_ih + b_hh
            jax.random.uniform(kw[2], (1, 4 * H), jnp.float32, -k, k))
    return params


if __name__ == "__main__":
    vocab_size, embed_size, hidden_size, num_layers = 32, 16, 32, 2
    batch, seq = 2, 8

    root = jax.random.PRNGKey(0)
    k_params, k_tok = jax.random.split(root)
    params = init_params(k_params, vocab_size, embed_size, hidden_size,
                         num_layers)
    tokens = jax.random.randint(k_tok, (batch, seq), 0, vocab_size,
                                dtype=jnp.int32)
    # init_hidden equivalent:
    h0 = jnp.zeros((num_layers, batch, hidden_size), jnp.float32)
    c0 = jnp.zeros((num_layers, batch, hidden_size), jnp.float32)

    out_ref, (h_ref, c_ref) = lstm_reference(tokens, (h0, c0), params)

    # 1) exact-semantics check (f32 compute path)
    out32, (hn32, cn32) = lstm_forward(tokens, (h0, c0), params,
                                       compute_dtype=jnp.float32)
    out32 = jax.block_until_ready(out32)
    np.testing.assert_allclose(np.asarray(out32), np.asarray(out_ref),
                               rtol=1e-3, atol=1e-3)
    np.testing.assert_allclose(np.asarray(hn32), np.asarray(h_ref),
                               rtol=1e-3, atol=1e-3)
    np.testing.assert_allclose(np.asarray(cn32), np.asarray(c_ref),
                               rtol=1e-3, atol=1e-3)

    # 2) performance config: bf16 MXU inputs, f32 accumulation / gate math
    out, (h_n, c_n) = lstm_forward(tokens, (h0, c0), params,
                                   compute_dtype=jnp.bfloat16)
    out = jax.block_until_ready(out)
    h_n = jax.block_until_ready(h_n)
    c_n = jax.block_until_ready(c_n)
    np.testing.assert_allclose(np.asarray(out), np.asarray(out_ref),
                               rtol=1e-1, atol=1e-1)
    np.testing.assert_allclose(np.asarray(h_n), np.asarray(h_ref),
                               rtol=1e-1, atol=1e-1)
    np.testing.assert_allclose(np.asarray(c_n), np.asarray(c_ref),
                               rtol=1e-1, atol=1e-1)

    print("KERNEL_OK")
</pallas_src>

<mosaic_0001>
module attributes {stable_mosaic.version = 11 : i64} {
  func.func @kernel(%arg0: i32, %arg1: i32, %arg2: memref<8x8x128xf32, #tpu.memory_space<vmem>>, %arg3: memref<256x512xf32, #tpu.memory_space<vmem>>, %arg4: memref<1x512xf32, #tpu.memory_space<vmem>>, %arg5: memref<256x512xf32, #tpu.memory_space<vmem>>, %arg6: memref<1x512xf32, #tpu.memory_space<vmem>>, %arg7: memref<2x8x128xf32, #tpu.memory_space<vmem>>, %arg8: memref<2x8x128xf32, #tpu.memory_space<vmem>>, %arg9: memref<8x8x128xf32, #tpu.memory_space<vmem>>, %arg10: memref<2x8x128xf32, #tpu.memory_space<vmem>>, %arg11: memref<2x8x128xf32, #tpu.memory_space<vmem>>, %arg12: memref<2x8x128xf32, #tpu.memory_space<vmem>>, %arg13: memref<2x8x128xf32, #tpu.memory_space<vmem>>) attributes {dimension_semantics = [#tpu.dimension_semantics<parallel>, #tpu.dimension_semantics<arbitrary>], iteration_bounds = array<i64: 1, 1>, scalar_prefetch = 0 : i64, scratch_operands = 2 : i64, tpu.core_type = #tpu.core_type<tc>, window_params = [{transform_indices = @transform_0, window_bounds = array<i64: 8, 8, 128>}, {pipeline_mode = #tpu.pipeline_mode<synchronous>, transform_indices = @transform_1, window_bounds = array<i64: 256, 512>}, {pipeline_mode = #tpu.pipeline_mode<synchronous>, transform_indices = @transform_2, window_bounds = array<i64: 1, 512>}, {pipeline_mode = #tpu.pipeline_mode<synchronous>, transform_indices = @transform_3, window_bounds = array<i64: 256, 512>}, {pipeline_mode = #tpu.pipeline_mode<synchronous>, transform_indices = @transform_4, window_bounds = array<i64: 1, 512>}, {transform_indices = @transform_5, window_bounds = array<i64: 2, 8, 128>}, {transform_indices = @transform_6, window_bounds = array<i64: 2, 8, 128>}, {transform_indices = @transform_7, window_bounds = array<i64: 8, 8, 128>}, {transform_indices = @transform_8, window_bounds = array<i64: 2, 8, 128>}, {transform_indices = @transform_9, window_bounds = array<i64: 2, 8, 128>}]} {
    %c0_i32 = arith.constant 0 : i32
    %0 = arith.cmpi eq, %arg1, %c0_i32 : i32
    %1 = arith.extui %0 : i1 to i32
    %c0_i32_0 = arith.constant 0 : i32
    %2 = arith.cmpi ne, %1, %c0_i32_0 : i32
    scf.if %2 {
      %c0_362 = arith.constant 0 : index
      %c0_363 = arith.constant 0 : index
      %c0_364 = arith.constant 0 : index
      %702 = vector.load %arg7[%c0_362, %c0_363, %c0_364] : memref<2x8x128xf32, #tpu.memory_space<vmem>>, vector<2x8x128xf32>
      %c0_365 = arith.constant 0 : index
      %c0_366 = arith.constant 0 : index
      %c0_367 = arith.constant 0 : index
      %703 = vector.load %arg12[%c0_365, %c0_366, %c0_367] : memref<2x8x128xf32, #tpu.memory_space<vmem>>, vector<2x8x128xf32>
      tpu.vector_store %arg12[%c0_365, %c0_366, %c0_367], %702 {strides = array<i32>} : memref<2x8x128xf32, #tpu.memory_space<vmem>>, vector<2x8x128xf32>,
      %c0_368 = arith.constant 0 : index
      %c0_369 = arith.constant 0 : index
      %c0_370 = arith.constant 0 : index
      %704 = vector.load %arg8[%c0_368, %c0_369, %c0_370] : memref<2x8x128xf32, #tpu.memory_space<vmem>>, vector<2x8x128xf32>
      %c0_371 = arith.constant 0 : index
      %c0_372 = arith.constant 0 : index
      %c0_373 = arith.constant 0 : index
      %705 = vector.load %arg13[%c0_371, %c0_372, %c0_373] : memref<2x8x128xf32, #tpu.memory_space<vmem>>, vector<2x8x128xf32>
      tpu.vector_store %arg13[%c0_371, %c0_372, %c0_373], %704 {strides = array<i32>} : memref<2x8x128xf32, #tpu.memory_space<vmem>>, vector<2x8x128xf32>,
    } else {
    }
    %c0 = arith.constant 0 : index
    %c0_1 = arith.constant 0 : index
    %c0_2 = arith.constant 0 : index
    %3 = vector.load %arg2[%c0, %c0_1, %c0_2] : memref<8x8x128xf32, #tpu.memory_space<vmem>>, vector<1x8x128xf32>
    %4 = vector.shape_cast %3 : vector<1x8x128xf32> to vector<8x128xf32>
    %c0_3 = arith.constant 0 : index
    %c0_4 = arith.constant 0 : index
    %c0_5 = arith.constant 0 : index
    %5 = vector.load %arg13[%c0_3, %c0_4, %c0_5] : memref<2x8x128xf32, #tpu.memory_space<vmem>>, vector<1x8x128xf32>
    %6 = vector.shape_cast %5 : vector<1x8x128xf32> to vector<8x128xf32>
    %c0_6 = arith.constant 0 : index
    %c0_7 = arith.constant 0 : index
    %c0_8 = arith.constant 0 : index
    %7 = vector.load %arg12[%c0_6, %c0_7, %c0_8] : memref<2x8x128xf32, #tpu.memory_space<vmem>>, vector<1x8x128xf32>
    %8 = vector.shape_cast %7 : vector<1x8x128xf32> to vector<8x128xf32>
    %9 = tpu.concatenate %4, %8 in 1 : vector<8x128xf32>, vector<8x128xf32> -> vector<8x256xf32>
    %c0_9 = arith.constant 0 : index
    %c0_10 = arith.constant 0 : index
    %10 = vector.load %arg3[%c0_9, %c0_10] : memref<256x512xf32, #tpu.memory_space<vmem>>, vector<256x512xf32>
    %cst = arith.constant dense<0.000000e+00> : vector<8x512xf32>
    %11 = tpu.matmul %9, %10, %cst {dimension_numbers = #tpu.dot_dimension_numbers<[1], [0], [0], [1], [0, 0, 1, 1], [], []>} : vector<8x256xf32>, vector<256x512xf32>, vector<8x512xf32> -> vector<8x512xf32>
    %c0_11 = arith.constant 0 : index
    %c0_12 = arith.constant 0 : index
    %12 = vector.load %arg4[%c0_11, %c0_12] : memref<1x512xf32, #tpu.memory_space<vmem>>, vector<1x512xf32>
    %13 = vector.broadcast %12 : vector<1x512xf32> to vector<8x512xf32>
    %14 = arith.addf %11, %13 : vector<8x512xf32>
    %15 = vector.extract_strided_slice %14 {offsets = [0, 0], sizes = [8, 128], strides = [1, 1]} : vector<8x512xf32> to vector<8x128xf32>
    %16 = arith.negf %15 : vector<8x128xf32>
    %17 = math.exp %16 : vector<8x128xf32>
    %cst_13 = arith.constant 1.000000e+00 : f32
    %18 = vector.broadcast %cst_13 : f32 to vector<8x128xf32>
    %19 = arith.addf %18, %17 : vector<8x128xf32>
    %20 = arith.divf %18, %19 : vector<8x128xf32>
    %21 = vector.extract_strided_slice %14 {offsets = [0, 128], sizes = [8, 128], strides = [1, 1]} : vector<8x512xf32> to vector<8x128xf32>
    %22 = arith.negf %21 : vector<8x128xf32>
    %23 = math.exp %22 : vector<8x128xf32>
    %cst_14 = arith.constant 1.000000e+00 : f32
    %24 = vector.broadcast %cst_14 : f32 to vector<8x128xf32>
    %25 = arith.addf %24, %23 : vector<8x128xf32>
    %26 = arith.divf %24, %25 : vector<8x128xf32>
    %27 = vector.extract_strided_slice %14 {offsets = [0, 256], sizes = [8, 128], strides = [1, 1]} : vector<8x512xf32> to vector<8x128xf32>
    %28 = math.tanh %27 : vector<8x128xf32>
    %29 = vector.extract_strided_slice %14 {offsets = [0, 384], sizes = [8, 128], strides = [1, 1]} : vector<8x512xf32> to vector<8x128xf32>
    %30 = arith.negf %29 : vector<8x128xf32>
    %31 = math.exp %30 : vector<8x128xf32>
    %cst_15 = arith.constant 1.000000e+00 : f32
    %32 = vector.broadcast %cst_15 : f32 to vector<8x128xf32>
    %33 = arith.addf %32, %31 : vector<8x128xf32>
    %34 = arith.divf %32, %33 : vector<8x128xf32>
    %35 = arith.mulf %26, %6 : vector<8x128xf32>
    %36 = arith.mulf %20, %28 : vector<8x128xf32>
    %37 = arith.addf %35, %36 : vector<8x128xf32>
    %38 = math.tanh %37 : vector<8x128xf32>
    %39 = arith.mulf %34, %38 : vector<8x128xf32>
    %c0_16 = arith.constant 0 : index
    %c0_17 = arith.constant 0 : index
    %c0_18 = arith.constant 0 : index
    %40 = vector.load %arg12[%c0_16, %c0_17, %c0_18] : memref<2x8x128xf32, #tpu.memory_space<vmem>>, vector<1x8x128xf32>
    %41 = vector.shape_cast %40 : vector<1x8x128xf32> to vector<8x128xf32>
    %42 = vector.shape_cast %39 : vector<8x128xf32> to vector<1x8x128xf32>
    tpu.vector_store %arg12[%c0_16, %c0_17, %c0_18], %42 {strides = array<i32>} : memref<2x8x128xf32, #tpu.memory_space<vmem>>, vector<1x8x128xf32>,
    %c0_19 = arith.constant 0 : index
    %c0_20 = arith.constant 0 : index
    %c0_21 = arith.constant 0 : index
    %43 = vector.load %arg13[%c0_19, %c0_20, %c0_21] : memref<2x8x128xf32, #tpu.memory_space<vmem>>, vector<1x8x128xf32>
    %44 = vector.shape_cast %43 : vector<1x8x128xf32> to vector<8x128xf32>
    %45 = vector.shape_cast %37 : vector<8x128xf32> to vector<1x8x128xf32>
    tpu.vector_store %arg13[%c0_19, %c0_20, %c0_21], %45 {strides = array<i32>} : memref<2x8x128xf32, #tpu.memory_space<vmem>>, vector<1x8x128xf32>,
    %c1 = arith.constant 1 : index
    %c0_22 = arith.constant 0 : index
    %c0_23 = arith.constant 0 : index
    %46 = vector.load %arg13[%c1, %c0_22, %c0_23] : memref<2x8x128xf32, #tpu.memory_space<vmem>>, vector<1x8x128xf32>
    %47 = vector.shape_cast %46 : vector<1x8x128xf32> to vector<8x128xf32>
    %c1_24 = arith.constant 1 : index
    %c0_25 = arith.constant 0 : index
    %c0_26 = arith.constant 0 : index
    %48 = vector.load %arg12[%c1_24, %c0_25, %c0_26] : memref<2x8x128xf32, #tpu.memory_space<vmem>>, vector<1x8x128xf32>
    %49 = vector.shape_cast %48 : vector<1x8x128xf32> to vector<8x128xf32>
    %50 = tpu.concatenate %39, %49 in 1 : vector<8x128xf32>, vector<8x128xf32> -> vector<8x256xf32>
    %c0_27 = arith.constant 0 : index
    %c0_28 = arith.constant 0 : index
    %51 = vector.load %arg5[%c0_27, %c0_28] : memref<256x512xf32, #tpu.memory_space<vmem>>, vector<256x512xf32>
    %cst_29 = arith.constant dense<0.000000e+00> : vector<8x512xf32>
    %52 = tpu.matmul %50, %51, %cst_29 {dimension_numbers = #tpu.dot_dimension_numbers<[1], [0], [0], [1], [0, 0, 1, 1], [], []>} : vector<8x256xf32>, vector<256x512xf32>, vector<8x512xf32> -> vector<8x512xf32>
    %c0_30 = arith.constant 0 : index
    %c0_31 = arith.constant 0 : index
    %53 = vector.load %arg6[%c0_30, %c0_31] : memref<1x512xf32, #tpu.memory_space<vmem>>, vector<1x512xf32>
    %54 = vector.broadcast %53 : vector<1x512xf32> to vector<8x512xf32>
    %55 = arith.addf %52, %54 : vector<8x512xf32>
    %56 = vector.extract_strided_slice %55 {offsets = [0, 0], sizes = [8, 128], strides = [1, 1]} : vector<8x512xf32> to vector<8x128xf32>
    %57 = arith.negf %56 : vector<8x128xf32>
    %58 = math.exp %57 : vector<8x128xf32>
    %cst_32 = arith.constant 1.000000e+00 : f32
    %59 = vector.broadcast %cst_32 : f32 to vector<8x128xf32>
    %60 = arith.addf %59, %58 : vector<8x128xf32>
    %61 = arith.divf %59, %60 : vector<8x128xf32>
    %62 = vector.extract_strided_slice %55 {offsets = [0, 128], sizes = [8, 128], strides = [1, 1]} : vector<8x512xf32> to vector<8x128xf32>
    %63 = arith.negf %62 : vector<8x128xf32>
    %64 = math.exp %63 : vector<8x128xf32>
    %cst_33 = arith.constant 1.000000e+00 : f32
    %65 = vector.broadcast %cst_33 : f32 to vector<8x128xf32>
    %66 = arith.addf %65, %64 : vector<8x128xf32>
    %67 = arith.divf %65, %66 : vector<8x128xf32>
    %68 = vector.extract_strided_slice %55 {offsets = [0, 256], sizes = [8, 128], strides = [1, 1]} : vector<8x512xf32> to vector<8x128xf32>
    %69 = math.tanh %68 : vector<8x128xf32>
    %70 = vector.extract_strided_slice %55 {offsets = [0, 384], sizes = [8, 128], strides = [1, 1]} : vector<8x512xf32> to vector<8x128xf32>
    %71 = arith.negf %70 : vector<8x128xf32>
    %72 = math.exp %71 : vector<8x128xf32>
    %cst_34 = arith.constant 1.000000e+00 : f32
    %73 = vector.broadcast %cst_34 : f32 to vector<8x128xf32>
    %74 = arith.addf %73, %72 : vector<8x128xf32>
    %75 = arith.divf %73, %74 : vector<8x128xf32>
    %76 = arith.mulf %67, %47 : vector<8x128xf32>
    %77 = arith.mulf %61, %69 : vector<8x128xf32>
    %78 = arith.addf %76, %77 : vector<8x128xf32>
    %79 = math.tanh %78 : vector<8x128xf32>
    %80 = arith.mulf %75, %79 : vector<8x128xf32>
    %c1_35 = arith.constant 1 : index
    %c0_36 = arith.constant 0 : index
    %c0_37 = arith.constant 0 : index
    %81 = vector.load %arg12[%c1_35, %c0_36, %c0_37] : memref<2x8x128xf32, #tpu.memory_space<vmem>>, vector<1x8x128xf32>
    %82 = vector.shape_cast %81 : vector<1x8x128xf32> to vector<8x128xf32>
    %83 = vector.shape_cast %80 : vector<8x128xf32> to vector<1x8x128xf32>
    tpu.vector_store %arg12[%c1_35, %c0_36, %c0_37], %83 {strides = array<i32>} : memref<2x8x128xf32, #tpu.memory_space<vmem>>, vector<1x8x128xf32>,
    %c1_38 = arith.constant 1 : index
    %c0_39 = arith.constant 0 : index
    %c0_40 = arith.constant 0 : index
    %84 = vector.load %arg13[%c1_38, %c0_39, %c0_40] : memref<2x8x128xf32, #tpu.memory_space<vmem>>, vector<1x8x128xf32>
    %85 = vector.shape_cast %84 : vector<1x8x128xf32> to vector<8x128xf32>
    %86 = vector.shape_cast %78 : vector<8x128xf32> to vector<1x8x128xf32>
    tpu.vector_store %arg13[%c1_38, %c0_39, %c0_40], %86 {strides = array<i32>} : memref<2x8x128xf32, #tpu.memory_space<vmem>>, vector<1x8x128xf32>,
    %c0_41 = arith.constant 0 : index
    %c0_42 = arith.constant 0 : index
    %c0_43 = arith.constant 0 : index
    %87 = vector.load %arg9[%c0_41, %c0_42, %c0_43] : memref<8x8x128xf32, #tpu.memory_space<vmem>>, vector<1x8x128xf32>
    %88 = vector.shape_cast %87 : vector<1x8x128xf32> to vector<8x128xf32>
    %89 = vector.shape_cast %80 : vector<8x128xf32> to vector<1x8x128xf32>
    tpu.vector_store %arg9[%c0_41, %c0_42, %c0_43], %89 {strides = array<i32>} : memref<8x8x128xf32, #tpu.memory_space<vmem>>, vector<1x8x128xf32>,
    %c1_44 = arith.constant 1 : index
    %c0_45 = arith.constant 0 : index
    %c0_46 = arith.constant 0 : index
    %90 = vector.load %arg2[%c1_44, %c0_45, %c0_46] : memref<8x8x128xf32, #tpu.memory_space<vmem>>, vector<1x8x128xf32>
    %91 = vector.shape_cast %90 : vector<1x8x128xf32> to vector<8x128xf32>
    %c0_47 = arith.constant 0 : index
    %c0_48 = arith.constant 0 : index
    %c0_49 = arith.constant 0 : index
    %92 = vector.load %arg13[%c0_47, %c0_48, %c0_49] : memref<2x8x128xf32, #tpu.memory_space<vmem>>, vector<1x8x128xf32>
    %93 = vector.shape_cast %92 : vector<1x8x128xf32> to vector<8x128xf32>
    %c0_50 = arith.constant 0 : index
    %c0_51 = arith.constant 0 : index
    %c0_52 = arith.constant 0 : index
    %94 = vector.load %arg12[%c0_50, %c0_51, %c0_52] : memref<2x8x128xf32, #tpu.memory_space<vmem>>, vector<1x8x128xf32>
    %95 = vector.shape_cast %94 : vector<1x8x128xf32> to vector<8x128xf32>
    %96 = tpu.concatenate %91, %95 in 1 : vector<8x128xf32>, vector<8x128xf32> -> vector<8x256xf32>
    %c0_53 = arith.constant 0 : index
    %c0_54 = arith.constant 0 : index
    %97 = vector.load %arg3[%c0_53, %c0_54] : memref<256x512xf32, #tpu.memory_space<vmem>>, vector<256x512xf32>
    %cst_55 = arith.constant dense<0.000000e+00> : vector<8x512xf32>
    %98 = tpu.matmul %96, %97, %cst_55 {dimension_numbers = #tpu.dot_dimension_numbers<[1], [0], [0], [1], [0, 0, 1, 1], [], []>} : vector<8x256xf32>, vector<256x512xf32>, vector<8x512xf32> -> vector<8x512xf32>
    %c0_56 = arith.constant 0 : index
    %c0_57 = arith.constant 0 : index
    %99 = vector.load %arg4[%c0_56, %c0_57] : memref<1x512xf32, #tpu.memory_space<vmem>>, vector<1x512xf32>
    %100 = vector.broadcast %99 : vector<1x512xf32> to vector<8x512xf32>
    %101 = arith.addf %98, %100 : vector<8x512xf32>
    %102 = vector.extract_strided_slice %101 {offsets = [0, 0], sizes = [8, 128], strides = [1, 1]} : vector<8x512xf32> to vector<8x128xf32>
    %103 = arith.negf %102 : vector<8x128xf32>
    %104 = math.exp %103 : vector<8x128xf32>
    %cst_58 = arith.constant 1.000000e+00 : f32
    %105 = vector.broadcast %cst_58 : f32 to vector<8x128xf32>
    %106 = arith.addf %105, %104 : vector<8x128xf32>
    %107 = arith.divf %105, %106 : vector<8x128xf32>
    %108 = vector.extract_strided_slice %101 {offsets = [0, 128], sizes = [8, 128], strides = [1, 1]} : vector<8x512xf32> to vector<8x128xf32>
    %109 = arith.negf %108 : vector<8x128xf32>
    %110 = math.exp %109 : vector<8x128xf32>
    %cst_59 = arith.constant 1.000000e+00 : f32
    %111 = vector.broadcast %cst_59 : f32 to vector<8x128xf32>
    %112 = arith.addf %111, %110 : vector<8x128xf32>
    %113 = arith.divf %111, %112 : vector<8x128xf32>
    %114 = vector.extract_strided_slice %101 {offsets = [0, 256], sizes = [8, 128], strides = [1, 1]} : vector<8x512xf32> to vector<8x128xf32>
    %115 = math.tanh %114 : vector<8x128xf32>
    %116 = vector.extract_strided_slice %101 {offsets = [0, 384], sizes = [8, 128], strides = [1, 1]} : vector<8x512xf32> to vector<8x128xf32>
    %117 = arith.negf %116 : vector<8x128xf32>
    %118 = math.exp %117 : vector<8x128xf32>
    %cst_60 = arith.constant 1.000000e+00 : f32
    %119 = vector.broadcast %cst_60 : f32 to vector<8x128xf32>
    %120 = arith.addf %119, %118 : vector<8x128xf32>
    %121 = arith.divf %119, %120 : vector<8x128xf32>
    %122 = arith.mulf %113, %93 : vector<8x128xf32>
    %123 = arith.mulf %107, %115 : vector<8x128xf32>
    %124 = arith.addf %122, %123 : vector<8x128xf32>
    %125 = math.tanh %124 : vector<8x128xf32>
    %126 = arith.mulf %121, %125 : vector<8x128xf32>
    %c0_61 = arith.constant 0 : index
    %c0_62 = arith.constant 0 : index
    %c0_63 = arith.constant 0 : index
    %127 = vector.load %arg12[%c0_61, %c0_62, %c0_63] : memref<2x8x128xf32, #tpu.memory_space<vmem>>, vector<1x8x128xf32>
    %128 = vector.shape_cast %127 : vector<1x8x128xf32> to vector<8x128xf32>
    %129 = vector.shape_cast %126 : vector<8x128xf32> to vector<1x8x128xf32>
    tpu.vector_store %arg12[%c0_61, %c0_62, %c0_63], %129 {strides = array<i32>} : memref<2x8x128xf32, #tpu.memory_space<vmem>>, vector<1x8x128xf32>,
    %c0_64 = arith.constant 0 : index
    %c0_65 = arith.constant 0 : index
    %c0_66 = arith.constant 0 : index
    %130 = vector.load %arg13[%c0_64, %c0_65, %c0_66] : memref<2x8x128xf32, #tpu.memory_space<vmem>>, vector<1x8x128xf32>
    %131 = vector.shape_cast %130 : vector<1x8x128xf32> to vector<8x128xf32>
    %132 = vector.shape_cast %124 : vector<8x128xf32> to vector<1x8x128xf32>
    tpu.vector_store %arg13[%c0_64, %c0_65, %c0_66], %132 {strides = array<i32>} : memref<2x8x128xf32, #tpu.memory_space<vmem>>, vector<1x8x128xf32>,
    %c1_67 = arith.constant 1 : index
    %c0_68 = arith.constant 0 : index
    %c0_69 = arith.constant 0 : index
    %133 = vector.load %arg13[%c1_67, %c0_68, %c0_69] : memref<2x8x128xf32, #tpu.memory_space<vmem>>, vector<1x8x128xf32>
    %134 = vector.shape_cast %133 : vector<1x8x128xf32> to vector<8x128xf32>
    %c1_70 = arith.constant 1 : index
    %c0_71 = arith.constant 0 : index
    %c0_72 = arith.constant 0 : index
    %135 = vector.load %arg12[%c1_70, %c0_71, %c0_72] : memref<2x8x128xf32, #tpu.memory_space<vmem>>, vector<1x8x128xf32>
    %136 = vector.shape_cast %135 : vector<1x8x128xf32> to vector<8x128xf32>
    %137 = tpu.concatenate %126, %136 in 1 : vector<8x128xf32>, vector<8x128xf32> -> vector<8x256xf32>
    %c0_73 = arith.constant 0 : index
    %c0_74 = arith.constant 0 : index
    %138 = vector.load %arg5[%c0_73, %c0_74] : memref<256x512xf32, #tpu.memory_space<vmem>>, vector<256x512xf32>
    %cst_75 = arith.constant dense<0.000000e+00> : vector<8x512xf32>
    %139 = tpu.matmul %137, %138, %cst_75 {dimension_numbers = #tpu.dot_dimension_numbers<[1], [0], [0], [1], [0, 0, 1, 1], [], []>} : vector<8x256xf32>, vector<256x512xf32>, vector<8x512xf32> -> vector<8x512xf32>
    %c0_76 = arith.constant 0 : index
    %c0_77 = arith.constant 0 : index
    %140 = vector.load %arg6[%c0_76, %c0_77] : memref<1x512xf32, #tpu.memory_space<vmem>>, vector<1x512xf32>
    %141 = vector.broadcast %140 : vector<1x512xf32> to vector<8x512xf32>
    %142 = arith.addf %139, %141 : vector<8x512xf32>
    %143 = vector.extract_strided_slice %142 {offsets = [0, 0], sizes = [8, 128], strides = [1, 1]} : vector<8x512xf32> to vector<8x128xf32>
    %144 = arith.negf %143 : vector<8x128xf32>
    %145 = math.exp %144 : vector<8x128xf32>
    %cst_78 = arith.constant 1.000000e+00 : f32
    %146 = vector.broadcast %cst_78 : f32 to vector<8x128xf32>
    %147 = arith.addf %146, %145 : vector<8x128xf32>
    %148 = arith.divf %146, %147 : vector<8x128xf32>
    %149 = vector.extract_strided_slice %142 {offsets = [0, 128], sizes = [8, 128], strides = [1, 1]} : vector<8x512xf32> to vector<8x128xf32>
    %150 = arith.negf %149 : vector<8x128xf32>
    %151 = math.exp %150 : vector<8x128xf32>
    %cst_79 = arith.constant 1.000000e+00 : f32
    %152 = vector.broadcast %cst_79 : f32 to vector<8x128xf32>
    %153 = arith.addf %152, %151 : vector<8x128xf32>
    %154 = arith.divf %152, %153 : vector<8x128xf32>
    %155 = vector.extract_strided_slice %142 {offsets = [0, 256], sizes = [8, 128], strides = [1, 1]} : vector<8x512xf32> to vector<8x128xf32>
    %156 = math.tanh %155 : vector<8x128xf32>
    %157 = vector.extract_strided_slice %142 {offsets = [0, 384], sizes = [8, 128], strides = [1, 1]} : vector<8x512xf32> to vector<8x128xf32>
    %158 = arith.negf %157 : vector<8x128xf32>
    %159 = math.exp %158 : vector<8x128xf32>
    %cst_80 = arith.constant 1.000000e+00 : f32
    %160 = vector.broadcast %cst_80 : f32 to vector<8x128xf32>
    %161 = arith.addf %160, %159 : vector<8x128xf32>
    %162 = arith.divf %160, %161 : vector<8x128xf32>
    %163 = arith.mulf %154, %134 : vector<8x128xf32>
    %164 = arith.mulf %148, %156 : vector<8x128xf32>
    %165 = arith.addf %163, %164 : vector<8x128xf32>
    %166 = math.tanh %165 : vector<8x128xf32>
    %167 = arith.mulf %162, %166 : vector<8x128xf32>
    %c1_81 = arith.constant 1 : index
    %c0_82 = arith.constant 0 : index
    %c0_83 = arith.constant 0 : index
    %168 = vector.load %arg12[%c1_81, %c0_82, %c0_83] : memref<2x8x128xf32, #tpu.memory_space<vmem>>, vector<1x8x128xf32>
    %169 = vector.shape_cast %168 : vector<1x8x128xf32> to vector<8x128xf32>
    %170 = vector.shape_cast %167 : vector<8x128xf32> to vector<1x8x128xf32>
    tpu.vector_store %arg12[%c1_81, %c0_82, %c0_83], %170 {strides = array<i32>} : memref<2x8x128xf32, #tpu.memory_space<vmem>>, vector<1x8x128xf32>,
    %c1_84 = arith.constant 1 : index
    %c0_85 = arith.constant 0 : index
    %c0_86 = arith.constant 0 : index
    %171 = vector.load %arg13[%c1_84, %c0_85, %c0_86] : memref<2x8x128xf32, #tpu.memory_space<vmem>>, vector<1x8x128xf32>
    %172 = vector.shape_cast %171 : vector<1x8x128xf32> to vector<8x128xf32>
    %173 = vector.shape_cast %165 : vector<8x128xf32> to vector<1x8x128xf32>
    tpu.vector_store %arg13[%c1_84, %c0_85, %c0_86], %173 {strides = array<i32>} : memref<2x8x128xf32, #tpu.memory_space<vmem>>, vector<1x8x128xf32>,
    %c1_87 = arith.constant 1 : index
    %c0_88 = arith.constant 0 : index
    %c0_89 = arith.constant 0 : index
    %174 = vector.load %arg9[%c1_87, %c0_88, %c0_89] : memref<8x8x128xf32, #tpu.memory_space<vmem>>, vector<1x8x128xf32>
    %175 = vector.shape_cast %174 : vector<1x8x128xf32> to vector<8x128xf32>
    %176 = vector.shape_cast %167 : vector<8x128xf32> to vector<1x8x128xf32>
    tpu.vector_store %arg9[%c1_87, %c0_88, %c0_89], %176 {strides = array<i32>} : memref<8x8x128xf32, #tpu.memory_space<vmem>>, vector<1x8x128xf32>,
    %c2 = arith.constant 2 : index
    %c0_90 = arith.constant 0 : index
    %c0_91 = arith.constant 0 : index
    %177 = vector.load %arg2[%c2, %c0_90, %c0_91] : memref<8x8x128xf32, #tpu.memory_space<vmem>>, vector<1x8x128xf32>
    %178 = vector.shape_cast %177 : vector<1x8x128xf32> to vector<8x128xf32>
    %c0_92 = arith.constant 0 : index
    %c0_93 = arith.constant 0 : index
    %c0_94 = arith.constant 0 : index
    %179 = vector.load %arg13[%c0_92, %c0_93, %c0_94] : memref<2x8x128xf32, #tpu.memory_space<vmem>>, vector<1x8x128xf32>
    %180 = vector.shape_cast %179 : vector<1x8x128xf32> to vector<8x128xf32>
    %c0_95 = arith.constant 0 : index
    %c0_96 = arith.constant 0 : index
    %c0_97 = arith.constant 0 : index
    %181 = vector.load %arg12[%c0_95, %c0_96, %c0_97] : memref<2x8x128xf32, #tpu.memory_space<vmem>>, vector<1x8x128xf32>
    %182 = vector.shape_cast %181 : vector<1x8x128xf32> to vector<8x128xf32>
    %183 = tpu.concatenate %178, %182 in 1 : vector<8x128xf32>, vector<8x128xf32> -> vector<8x256xf32>
    %c0_98 = arith.constant 0 : index
    %c0_99 = arith.constant 0 : index
    %184 = vector.load %arg3[%c0_98, %c0_99] : memref<256x512xf32, #tpu.memory_space<vmem>>, vector<256x512xf32>
    %cst_100 = arith.constant dense<0.000000e+00> : vector<8x512xf32>
    %185 = tpu.matmul %183, %184, %cst_100 {dimension_numbers = #tpu.dot_dimension_numbers<[1], [0], [0], [1], [0, 0, 1, 1], [], []>} : vector<8x256xf32>, vector<256x512xf32>, vector<8x512xf32> -> vector<8x512xf32>
    %c0_101 = arith.constant 0 : index
    %c0_102 = arith.constant 0 : index
    %186 = vector.load %arg4[%c0_101, %c0_102] : memref<1x512xf32, #tpu.memory_space<vmem>>, vector<1x512xf32>
    %187 = vector.broadcast %186 : vector<1x512xf32> to vector<8x512xf32>
    %188 = arith.addf %185, %187 : vector<8x512xf32>
    %189 = vector.extract_strided_slice %188 {offsets = [0, 0], sizes = [8, 128], strides = [1, 1]} : vector<8x512xf32> to vector<8x128xf32>
    %190 = arith.negf %189 : vector<8x128xf32>
    %191 = math.exp %190 : vector<8x128xf32>
    %cst_103 = arith.constant 1.000000e+00 : f32
    %192 = vector.broadcast %cst_103 : f32 to vector<8x128xf32>
    %193 = arith.addf %192, %191 : vector<8x128xf32>
    %194 = arith.divf %192, %193 : vector<8x128xf32>
    %195 = vector.extract_strided_slice %188 {offsets = [0, 128], sizes = [8, 128], strides = [1, 1]} : vector<8x512xf32> to vector<8x128xf32>
    %196 = arith.negf %195 : vector<8x128xf32>
    %197 = math.exp %196 : vector<8x128xf32>
    %cst_104 = arith.constant 1.000000e+00 : f32
    %198 = vector.broadcast %cst_104 : f32 to vector<8x128xf32>
    %199 = arith.addf %198, %197 : vector<8x128xf32>
    %200 = arith.divf %198, %199 : vector<8x128xf32>
    %201 = vector.extract_strided_slice %188 {offsets = [0, 256], sizes = [8, 128], strides = [1, 1]} : vector<8x512xf32> to vector<8x128xf32>
    %202 = math.tanh %201 : vector<8x128xf32>
    %203 = vector.extract_strided_slice %188 {offsets = [0, 384], sizes = [8, 128], strides = [1, 1]} : vector<8x512xf32> to vector<8x128xf32>
    %204 = arith.negf %203 : vector<8x128xf32>
    %205 = math.exp %204 : vector<8x128xf32>
    %cst_105 = arith.constant 1.000000e+00 : f32
    %206 = vector.broadcast %cst_105 : f32 to vector<8x128xf32>
    %207 = arith.addf %206, %205 : vector<8x128xf32>
    %208 = arith.divf %206, %207 : vector<8x128xf32>
    %209 = arith.mulf %200, %180 : vector<8x128xf32>
    %210 = arith.mulf %194, %202 : vector<8x128xf32>
    %211 = arith.addf %209, %210 : vector<8x128xf32>
    %212 = math.tanh %211 : vector<8x128xf32>
    %213 = arith.mulf %208, %212 : vector<8x128xf32>
    %c0_106 = arith.constant 0 : index
    %c0_107 = arith.constant 0 : index
    %c0_108 = arith.constant 0 : index
    %214 = vector.load %arg12[%c0_106, %c0_107, %c0_108] : memref<2x8x128xf32, #tpu.memory_space<vmem>>, vector<1x8x128xf32>
    %215 = vector.shape_cast %214 : vector<1x8x128xf32> to vector<8x128xf32>
    %216 = vector.shape_cast %213 : vector<8x128xf32> to vector<1x8x128xf32>
    tpu.vector_store %arg12[%c0_106, %c0_107, %c0_108], %216 {strides = array<i32>} : memref<2x8x128xf32, #tpu.memory_space<vmem>>, vector<1x8x128xf32>,
    %c0_109 = arith.constant 0 : index
    %c0_110 = arith.constant 0 : index
    %c0_111 = arith.constant 0 : index
    %217 = vector.load %arg13[%c0_109, %c0_110, %c0_111] : memref<2x8x128xf32, #tpu.memory_space<vmem>>, vector<1x8x128xf32>
    %218 = vector.shape_cast %217 : vector<1x8x128xf32> to vector<8x128xf32>
    %219 = vector.shape_cast %211 : vector<8x128xf32> to vector<1x8x128xf32>
    tpu.vector_store %arg13[%c0_109, %c0_110, %c0_111], %219 {strides = array<i32>} : memref<2x8x128xf32, #tpu.memory_space<vmem>>, vector<1x8x128xf32>,
    %c1_112 = arith.constant 1 : index
    %c0_113 = arith.constant 0 : index
    %c0_114 = arith.constant 0 : index
    %220 = vector.load %arg13[%c1_112, %c0_113, %c0_114] : memref<2x8x128xf32, #tpu.memory_space<vmem>>, vector<1x8x128xf32>
    %221 = vector.shape_cast %220 : vector<1x8x128xf32> to vector<8x128xf32>
    %c1_115 = arith.constant 1 : index
    %c0_116 = arith.constant 0 : index
    %c0_117 = arith.constant 0 : index
    %222 = vector.load %arg12[%c1_115, %c0_116, %c0_117] : memref<2x8x128xf32, #tpu.memory_space<vmem>>, vector<1x8x128xf32>
    %223 = vector.shape_cast %222 : vector<1x8x128xf32> to vector<8x128xf32>
    %224 = tpu.concatenate %213, %223 in 1 : vector<8x128xf32>, vector<8x128xf32> -> vector<8x256xf32>
    %c0_118 = arith.constant 0 : index
    %c0_119 = arith.constant 0 : index
    %225 = vector.load %arg5[%c0_118, %c0_119] : memref<256x512xf32, #tpu.memory_space<vmem>>, vector<256x512xf32>
    %cst_120 = arith.constant dense<0.000000e+00> : vector<8x512xf32>
    %226 = tpu.matmul %224, %225, %cst_120 {dimension_numbers = #tpu.dot_dimension_numbers<[1], [0], [0], [1], [0, 0, 1, 1], [], []>} : vector<8x256xf32>, vector<256x512xf32>, vector<8x512xf32> -> vector<8x512xf32>
    %c0_121 = arith.constant 0 : index
    %c0_122 = arith.constant 0 : index
    %227 = vector.load %arg6[%c0_121, %c0_122] : memref<1x512xf32, #tpu.memory_space<vmem>>, vector<1x512xf32>
    %228 = vector.broadcast %227 : vector<1x512xf32> to vector<8x512xf32>
    %229 = arith.addf %226, %228 : vector<8x512xf32>
    %230 = vector.extract_strided_slice %229 {offsets = [0, 0], sizes = [8, 128], strides = [1, 1]} : vector<8x512xf32> to vector<8x128xf32>
    %231 = arith.negf %230 : vector<8x128xf32>
    %232 = math.exp %231 : vector<8x128xf32>
    %cst_123 = arith.constant 1.000000e+00 : f32
    %233 = vector.broadcast %cst_123 : f32 to vector<8x128xf32>
    %234 = arith.addf %233, %232 : vector<8x128xf32>
    %235 = arith.divf %233, %234 : vector<8x128xf32>
    %236 = vector.extract_strided_slice %229 {offsets = [0, 128], sizes = [8, 128], strides = [1, 1]} : vector<8x512xf32> to vector<8x128xf32>
    %237 = arith.negf %236 : vector<8x128xf32>
    %238 = math.exp %237 : vector<8x128xf32>
    %cst_124 = arith.constant 1.000000e+00 : f32
    %239 = vector.broadcast %cst_124 : f32 to vector<8x128xf32>
    %240 = arith.addf %239, %238 : vector<8x128xf32>
    %241 = arith.divf %239, %240 : vector<8x128xf32>
    %242 = vector.extract_strided_slice %229 {offsets = [0, 256], sizes = [8, 128], strides = [1, 1]} : vector<8x512xf32> to vector<8x128xf32>
    %243 = math.tanh %242 : vector<8x128xf32>
    %244 = vector.extract_strided_slice %229 {offsets = [0, 384], sizes = [8, 128], strides = [1, 1]} : vector<8x512xf32> to vector<8x128xf32>
    %245 = arith.negf %244 : vector<8x128xf32>
    %246 = math.exp %245 : vector<8x128xf32>
    %cst_125 = arith.constant 1.000000e+00 : f32
    %247 = vector.broadcast %cst_125 : f32 to vector<8x128xf32>
    %248 = arith.addf %247, %246 : vector<8x128xf32>
    %249 = arith.divf %247, %248 : vector<8x128xf32>
    %250 = arith.mulf %241, %221 : vector<8x128xf32>
    %251 = arith.mulf %235, %243 : vector<8x128xf32>
    %252 = arith.addf %250, %251 : vector<8x128xf32>
    %253 = math.tanh %252 : vector<8x128xf32>
    %254 = arith.mulf %249, %253 : vector<8x128xf32>
    %c1_126 = arith.constant 1 : index
    %c0_127 = arith.constant 0 : index
    %c0_128 = arith.constant 0 : index
    %255 = vector.load %arg12[%c1_126, %c0_127, %c0_128] : memref<2x8x128xf32, #tpu.memory_space<vmem>>, vector<1x8x128xf32>
    %256 = vector.shape_cast %255 : vector<1x8x128xf32> to vector<8x128xf32>
    %257 = vector.shape_cast %254 : vector<8x128xf32> to vector<1x8x128xf32>
    tpu.vector_store %arg12[%c1_126, %c0_127, %c0_128], %257 {strides = array<i32>} : memref<2x8x128xf32, #tpu.memory_space<vmem>>, vector<1x8x128xf32>,
    %c1_129 = arith.constant 1 : index
    %c0_130 = arith.constant 0 : index
    %c0_131 = arith.constant 0 : index
    %258 = vector.load %arg13[%c1_129, %c0_130, %c0_131] : memref<2x8x128xf32, #tpu.memory_space<vmem>>, vector<1x8x128xf32>
    %259 = vector.shape_cast %258 : vector<1x8x128xf32> to vector<8x128xf32>
    %260 = vector.shape_cast %252 : vector<8x128xf32> to vector<1x8x128xf32>
    tpu.vector_store %arg13[%c1_129, %c0_130, %c0_131], %260 {strides = array<i32>} : memref<2x8x128xf32, #tpu.memory_space<vmem>>, vector<1x8x128xf32>,
    %c2_132 = arith.constant 2 : index
    %c0_133 = arith.constant 0 : index
    %c0_134 = arith.constant 0 : index
    %261 = vector.load %arg9[%c2_132, %c0_133, %c0_134] : memref<8x8x128xf32, #tpu.memory_space<vmem>>, vector<1x8x128xf32>
    %262 = vector.shape_cast %261 : vector<1x8x128xf32> to vector<8x128xf32>
    %263 = vector.shape_cast %254 : vector<8x128xf32> to vector<1x8x128xf32>
    tpu.vector_store %arg9[%c2_132, %c0_133, %c0_134], %263 {strides = array<i32>} : memref<8x8x128xf32, #tpu.memory_space<vmem>>, vector<1x8x128xf32>,
    %c3 = arith.constant 3 : index
    %c0_135 = arith.constant 0 : index
    %c0_136 = arith.constant 0 : index
    %264 = vector.load %arg2[%c3, %c0_135, %c0_136] : memref<8x8x128xf32, #tpu.memory_space<vmem>>, vector<1x8x128xf32>
    %265 = vector.shape_cast %264 : vector<1x8x128xf32> to vector<8x128xf32>
    %c0_137 = arith.constant 0 : index
    %c0_138 = arith.constant 0 : index
    %c0_139 = arith.constant 0 : index
    %266 = vector.load %arg13[%c0_137, %c0_138, %c0_139] : memref<2x8x128xf32, #tpu.memory_space<vmem>>, vector<1x8x128xf32>
    %267 = vector.shape_cast %266 : vector<1x8x128xf32> to vector<8x128xf32>
    %c0_140 = arith.constant 0 : index
    %c0_141 = arith.constant 0 : index
    %c0_142 = arith.constant 0 : index
    %268 = vector.load %arg12[%c0_140, %c0_141, %c0_142] : memref<2x8x128xf32, #tpu.memory_space<vmem>>, vector<1x8x128xf32>
    %269 = vector.shape_cast %268 : vector<1x8x128xf32> to vector<8x128xf32>
    %270 = tpu.concatenate %265, %269 in 1 : vector<8x128xf32>, vector<8x128xf32> -> vector<8x256xf32>
    %c0_143 = arith.constant 0 : index
    %c0_144 = arith.constant 0 : index
    %271 = vector.load %arg3[%c0_143, %c0_144] : memref<256x512xf32, #tpu.memory_space<vmem>>, vector<256x512xf32>
    %cst_145 = arith.constant dense<0.000000e+00> : vector<8x512xf32>
    %272 = tpu.matmul %270, %271, %cst_145 {dimension_numbers = #tpu.dot_dimension_numbers<[1], [0], [0], [1], [0, 0, 1, 1], [], []>} : vector<8x256xf32>, vector<256x512xf32>, vector<8x512xf32> -> vector<8x512xf32>
    %c0_146 = arith.constant 0 : index
    %c0_147 = arith.constant 0 : index
    %273 = vector.load %arg4[%c0_146, %c0_147] : memref<1x512xf32, #tpu.memory_space<vmem>>, vector<1x512xf32>
    %274 = vector.broadcast %273 : vector<1x512xf32> to vector<8x512xf32>
    %275 = arith.addf %272, %274 : vector<8x512xf32>
    %276 = vector.extract_strided_slice %275 {offsets = [0, 0], sizes = [8, 128], strides = [1, 1]} : vector<8x512xf32> to vector<8x128xf32>
    %277 = arith.negf %276 : vector<8x128xf32>
    %278 = math.exp %277 : vector<8x128xf32>
    %cst_148 = arith.constant 1.000000e+00 : f32
    %279 = vector.broadcast %cst_148 : f32 to vector<8x128xf32>
    %280 = arith.addf %279, %278 : vector<8x128xf32>
    %281 = arith.divf %279, %280 : vector<8x128xf32>
    %282 = vector.extract_strided_slice %275 {offsets = [0, 128], sizes = [8, 128], strides = [1, 1]} : vector<8x512xf32> to vector<8x128xf32>
    %283 = arith.negf %282 : vector<8x128xf32>
    %284 = math.exp %283 : vector<8x128xf32>
    %cst_149 = arith.constant 1.000000e+00 : f32
    %285 = vector.broadcast %cst_149 : f32 to vector<8x128xf32>
    %286 = arith.addf %285, %284 : vector<8x128xf32>
    %287 = arith.divf %285, %286 : vector<8x128xf32>
    %288 = vector.extract_strided_slice %275 {offsets = [0, 256], sizes = [8, 128], strides = [1, 1]} : vector<8x512xf32> to vector<8x128xf32>
    %289 = math.tanh %288 : vector<8x128xf32>
    %290 = vector.extract_strided_slice %275 {offsets = [0, 384], sizes = [8, 128], strides = [1, 1]} : vector<8x512xf32> to vector<8x128xf32>
    %291 = arith.negf %290 : vector<8x128xf32>
    %292 = math.exp %291 : vector<8x128xf32>
    %cst_150 = arith.constant 1.000000e+00 : f32
    %293 = vector.broadcast %cst_150 : f32 to vector<8x128xf32>
    %294 = arith.addf %293, %292 : vector<8x128xf32>
    %295 = arith.divf %293, %294 : vector<8x128xf32>
    %296 = arith.mulf %287, %267 : vector<8x128xf32>
    %297 = arith.mulf %281, %289 : vector<8x128xf32>
    %298 = arith.addf %296, %297 : vector<8x128xf32>
    %299 = math.tanh %298 : vector<8x128xf32>
    %300 = arith.mulf %295, %299 : vector<8x128xf32>
    %c0_151 = arith.constant 0 : index
    %c0_152 = arith.constant 0 : index
    %c0_153 = arith.constant 0 : index
    %301 = vector.load %arg12[%c0_151, %c0_152, %c0_153] : memref<2x8x128xf32, #tpu.memory_space<vmem>>, vector<1x8x128xf32>
    %302 = vector.shape_cast %301 : vector<1x8x128xf32> to vector<8x128xf32>
    %303 = vector.shape_cast %300 : vector<8x128xf32> to vector<1x8x128xf32>
    tpu.vector_store %arg12[%c0_151, %c0_152, %c0_153], %303 {strides = array<i32>} : memref<2x8x128xf32, #tpu.memory_space<vmem>>, vector<1x8x128xf32>,
    %c0_154 = arith.constant 0 : index
    %c0_155 = arith.constant 0 : index
    %c0_156 = arith.constant 0 : index
    %304 = vector.load %arg13[%c0_154, %c0_155, %c0_156] : memref<2x8x128xf32, #tpu.memory_space<vmem>>, vector<1x8x128xf32>
    %305 = vector.shape_cast %304 : vector<1x8x128xf32> to vector<8x128xf32>
    %306 = vector.shape_cast %298 : vector<8x128xf32> to vector<1x8x128xf32>
    tpu.vector_store %arg13[%c0_154, %c0_155, %c0_156], %306 {strides = array<i32>} : memref<2x8x128xf32, #tpu.memory_space<vmem>>, vector<1x8x128xf32>,
    %c1_157 = arith.constant 1 : index
    %c0_158 = arith.constant 0 : index
    %c0_159 = arith.constant 0 : index
    %307 = vector.load %arg13[%c1_157, %c0_158, %c0_159] : memref<2x8x128xf32, #tpu.memory_space<vmem>>, vector<1x8x128xf32>
    %308 = vector.shape_cast %307 : vector<1x8x128xf32> to vector<8x128xf32>
    %c1_160 = arith.constant 1 : index
    %c0_161 = arith.constant 0 : index
    %c0_162 = arith.constant 0 : index
    %309 = vector.load %arg12[%c1_160, %c0_161, %c0_162] : memref<2x8x128xf32, #tpu.memory_space<vmem>>, vector<1x8x128xf32>
    %310 = vector.shape_cast %309 : vector<1x8x128xf32> to vector<8x128xf32>
    %311 = tpu.concatenate %300, %310 in 1 : vector<8x128xf32>, vector<8x128xf32> -> vector<8x256xf32>
    %c0_163 = arith.constant 0 : index
    %c0_164 = arith.constant 0 : index
    %312 = vector.load %arg5[%c0_163, %c0_164] : memref<256x512xf32, #tpu.memory_space<vmem>>, vector<256x512xf32>
    %cst_165 = arith.constant dense<0.000000e+00> : vector<8x512xf32>
    %313 = tpu.matmul %311, %312, %cst_165 {dimension_numbers = #tpu.dot_dimension_numbers<[1], [0], [0], [1], [0, 0, 1, 1], [], []>} : vector<8x256xf32>, vector<256x512xf32>, vector<8x512xf32> -> vector<8x512xf32>
    %c0_166 = arith.constant 0 : index
    %c0_167 = arith.constant 0 : index
    %314 = vector.load %arg6[%c0_166, %c0_167] : memref<1x512xf32, #tpu.memory_space<vmem>>, vector<1x512xf32>
    %315 = vector.broadcast %314 : vector<1x512xf32> to vector<8x512xf32>
    %316 = arith.addf %313, %315 : vector<8x512xf32>
    %317 = vector.extract_strided_slice %316 {offsets = [0, 0], sizes = [8, 128], strides = [1, 1]} : vector<8x512xf32> to vector<8x128xf32>
    %318 = arith.negf %317 : vector<8x128xf32>
    %319 = math.exp %318 : vector<8x128xf32>
    %cst_168 = arith.constant 1.000000e+00 : f32
    %320 = vector.broadcast %cst_168 : f32 to vector<8x128xf32>
    %321 = arith.addf %320, %319 : vector<8x128xf32>
    %322 = arith.divf %320, %321 : vector<8x128xf32>
    %323 = vector.extract_strided_slice %316 {offsets = [0, 128], sizes = [8, 128], strides = [1, 1]} : vector<8x512xf32> to vector<8x128xf32>
    %324 = arith.negf %323 : vector<8x128xf32>
    %325 = math.exp %324 : vector<8x128xf32>
    %cst_169 = arith.constant 1.000000e+00 : f32
    %326 = vector.broadcast %cst_169 : f32 to vector<8x128xf32>
    %327 = arith.addf %326, %325 : vector<8x128xf32>
    %328 = arith.divf %326, %327 : vector<8x128xf32>
    %329 = vector.extract_strided_slice %316 {offsets = [0, 256], sizes = [8, 128], strides = [1, 1]} : vector<8x512xf32> to vector<8x128xf32>
    %330 = math.tanh %329 : vector<8x128xf32>
    %331 = vector.extract_strided_slice %316 {offsets = [0, 384], sizes = [8, 128], strides = [1, 1]} : vector<8x512xf32> to vector<8x128xf32>
    %332 = arith.negf %331 : vector<8x128xf32>
    %333 = math.exp %332 : vector<8x128xf32>
    %cst_170 = arith.constant 1.000000e+00 : f32
    %334 = vector.broadcast %cst_170 : f32 to vector<8x128xf32>
    %335 = arith.addf %334, %333 : vector<8x128xf32>
    %336 = arith.divf %334, %335 : vector<8x128xf32>
    %337 = arith.mulf %328, %308 : vector<8x128xf32>
    %338 = arith.mulf %322, %330 : vector<8x128xf32>
    %339 = arith.addf %337, %338 : vector<8x128xf32>
    %340 = math.tanh %339 : vector<8x128xf32>
    %341 = arith.mulf %336, %340 : vector<8x128xf32>
    %c1_171 = arith.constant 1 : index
    %c0_172 = arith.constant 0 : index
    %c0_173 = arith.constant 0 : index
    %342 = vector.load %arg12[%c1_171, %c0_172, %c0_173] : memref<2x8x128xf32, #tpu.memory_space<vmem>>, vector<1x8x128xf32>
    %343 = vector.shape_cast %342 : vector<1x8x128xf32> to vector<8x128xf32>
    %344 = vector.shape_cast %341 : vector<8x128xf32> to vector<1x8x128xf32>
    tpu.vector_store %arg12[%c1_171, %c0_172, %c0_173], %344 {strides = array<i32>} : memref<2x8x128xf32, #tpu.memory_space<vmem>>, vector<1x8x128xf32>,
    %c1_174 = arith.constant 1 : index
    %c0_175 = arith.constant 0 : index
    %c0_176 = arith.constant 0 : index
    %345 = vector.load %arg13[%c1_174, %c0_175, %c0_176] : memref<2x8x128xf32, #tpu.memory_space<vmem>>, vector<1x8x128xf32>
    %346 = vector.shape_cast %345 : vector<1x8x128xf32> to vector<8x128xf32>
    %347 = vector.shape_cast %339 : vector<8x128xf32> to vector<1x8x128xf32>
    tpu.vector_store %arg13[%c1_174, %c0_175, %c0_176], %347 {strides = array<i32>} : memref<2x8x128xf32, #tpu.memory_space<vmem>>, vector<1x8x128xf32>,
    %c3_177 = arith.constant 3 : index
    %c0_178 = arith.constant 0 : index
    %c0_179 = arith.constant 0 : index
    %348 = vector.load %arg9[%c3_177, %c0_178, %c0_179] : memref<8x8x128xf32, #tpu.memory_space<vmem>>, vector<1x8x128xf32>
    %349 = vector.shape_cast %348 : vector<1x8x128xf32> to vector<8x128xf32>
    %350 = vector.shape_cast %341 : vector<8x128xf32> to vector<1x8x128xf32>
    tpu.vector_store %arg9[%c3_177, %c0_178, %c0_179], %350 {strides = array<i32>} : memref<8x8x128xf32, #tpu.memory_space<vmem>>, vector<1x8x128xf32>,
    %c4 = arith.constant 4 : index
    %c0_180 = arith.constant 0 : index
    %c0_181 = arith.constant 0 : index
    %351 = vector.load %arg2[%c4, %c0_180, %c0_181] : memref<8x8x128xf32, #tpu.memory_space<vmem>>, vector<1x8x128xf32>
    %352 = vector.shape_cast %351 : vector<1x8x128xf32> to vector<8x128xf32>
    %c0_182 = arith.constant 0 : index
    %c0_183 = arith.constant 0 : index
    %c0_184 = arith.constant 0 : index
    %353 = vector.load %arg13[%c0_182, %c0_183, %c0_184] : memref<2x8x128xf32, #tpu.memory_space<vmem>>, vector<1x8x128xf32>
    %354 = vector.shape_cast %353 : vector<1x8x128xf32> to vector<8x128xf32>
    %c0_185 = arith.constant 0 : index
    %c0_186 = arith.constant 0 : index
    %c0_187 = arith.constant 0 : index
    %355 = vector.load %arg12[%c0_185, %c0_186, %c0_187] : memref<2x8x128xf32, #tpu.memory_space<vmem>>, vector<1x8x128xf32>
    %356 = vector.shape_cast %355 : vector<1x8x128xf32> to vector<8x128xf32>
    %357 = tpu.concatenate %352, %356 in 1 : vector<8x128xf32>, vector<8x128xf32> -> vector<8x256xf32>
    %c0_188 = arith.constant 0 : index
    %c0_189 = arith.constant 0 : index
    %358 = vector.load %arg3[%c0_188, %c0_189] : memref<256x512xf32, #tpu.memory_space<vmem>>, vector<256x512xf32>
    %cst_190 = arith.constant dense<0.000000e+00> : vector<8x512xf32>
    %359 = tpu.matmul %357, %358, %cst_190 {dimension_numbers = #tpu.dot_dimension_numbers<[1], [0], [0], [1], [0, 0, 1, 1], [], []>} : vector<8x256xf32>, vector<256x512xf32>, vector<8x512xf32> -> vector<8x512xf32>
    %c0_191 = arith.constant 0 : index
    %c0_192 = arith.constant 0 : index
    %360 = vector.load %arg4[%c0_191, %c0_192] : memref<1x512xf32, #tpu.memory_space<vmem>>, vector<1x512xf32>
    %361 = vector.broadcast %360 : vector<1x512xf32> to vector<8x512xf32>
    %362 = arith.addf %359, %361 : vector<8x512xf32>
    %363 = vector.extract_strided_slice %362 {offsets = [0, 0], sizes = [8, 128], strides = [1, 1]} : vector<8x512xf32> to vector<8x128xf32>
    %364 = arith.negf %363 : vector<8x128xf32>
    %365 = math.exp %364 : vector<8x128xf32>
    %cst_193 = arith.constant 1.000000e+00 : f32
    %366 = vector.broadcast %cst_193 : f32 to vector<8x128xf32>
    %367 = arith.addf %366, %365 : vector<8x128xf32>
    %368 = arith.divf %366, %367 : vector<8x128xf32>
    %369 = vector.extract_strided_slice %362 {offsets = [0, 128], sizes = [8, 128], strides = [1, 1]} : vector<8x512xf32> to vector<8x128xf32>
    %370 = arith.negf %369 : vector<8x128xf32>
    %371 = math.exp %370 : vector<8x128xf32>
    %cst_194 = arith.constant 1.000000e+00 : f32
    %372 = vector.broadcast %cst_194 : f32 to vector<8x128xf32>
    %373 = arith.addf %372, %371 : vector<8x128xf32>
    %374 = arith.divf %372, %373 : vector<8x128xf32>
    %375 = vector.extract_strided_slice %362 {offsets = [0, 256], sizes = [8, 128], strides = [1, 1]} : vector<8x512xf32> to vector<8x128xf32>
    %376 = math.tanh %375 : vector<8x128xf32>
    %377 = vector.extract_strided_slice %362 {offsets = [0, 384], sizes = [8, 128], strides = [1, 1]} : vector<8x512xf32> to vector<8x128xf32>
    %378 = arith.negf %377 : vector<8x128xf32>
    %379 = math.exp %378 : vector<8x128xf32>
    %cst_195 = arith.constant 1.000000e+00 : f32
    %380 = vector.broadcast %cst_195 : f32 to vector<8x128xf32>
    %381 = arith.addf %380, %379 : vector<8x128xf32>
    %382 = arith.divf %380, %381 : vector<8x128xf32>
    %383 = arith.mulf %374, %354 : vector<8x128xf32>
    %384 = arith.mulf %368, %376 : vector<8x128xf32>
    %385 = arith.addf %383, %384 : vector<8x128xf32>
    %386 = math.tanh %385 : vector<8x128xf32>
    %387 = arith.mulf %382, %386 : vector<8x128xf32>
    %c0_196 = arith.constant 0 : index
    %c0_197 = arith.constant 0 : index
    %c0_198 = arith.constant 0 : index
    %388 = vector.load %arg12[%c0_196, %c0_197, %c0_198] : memref<2x8x128xf32, #tpu.memory_space<vmem>>, vector<1x8x128xf32>
    %389 = vector.shape_cast %388 : vector<1x8x128xf32> to vector<8x128xf32>
    %390 = vector.shape_cast %387 : vector<8x128xf32> to vector<1x8x128xf32>
    tpu.vector_store %arg12[%c0_196, %c0_197, %c0_198], %390 {strides = array<i32>} : memref<2x8x128xf32, #tpu.memory_space<vmem>>, vector<1x8x128xf32>,
    %c0_199 = arith.constant 0 : index
    %c0_200 = arith.constant 0 : index
    %c0_201 = arith.constant 0 : index
    %391 = vector.load %arg13[%c0_199, %c0_200, %c0_201] : memref<2x8x128xf32, #tpu.memory_space<vmem>>, vector<1x8x128xf32>
    %392 = vector.shape_cast %391 : vector<1x8x128xf32> to vector<8x128xf32>
    %393 = vector.shape_cast %385 : vector<8x128xf32> to vector<1x8x128xf32>
    tpu.vector_store %arg13[%c0_199, %c0_200, %c0_201], %393 {strides = array<i32>} : memref<2x8x128xf32, #tpu.memory_space<vmem>>, vector<1x8x128xf32>,
    %c1_202 = arith.constant 1 : index
    %c0_203 = arith.constant 0 : index
    %c0_204 = arith.constant 0 : index
    %394 = vector.load %arg13[%c1_202, %c0_203, %c0_204] : memref<2x8x128xf32, #tpu.memory_space<vmem>>, vector<1x8x128xf32>
    %395 = vector.shape_cast %394 : vector<1x8x128xf32> to vector<8x128xf32>
    %c1_205 = arith.constant 1 : index
    %c0_206 = arith.constant 0 : index
    %c0_207 = arith.constant 0 : index
    %396 = vector.load %arg12[%c1_205, %c0_206, %c0_207] : memref<2x8x128xf32, #tpu.memory_space<vmem>>, vector<1x8x128xf32>
    %397 = vector.shape_cast %396 : vector<1x8x128xf32> to vector<8x128xf32>
    %398 = tpu.concatenate %387, %397 in 1 : vector<8x128xf32>, vector<8x128xf32> -> vector<8x256xf32>
    %c0_208 = arith.constant 0 : index
    %c0_209 = arith.constant 0 : index
    %399 = vector.load %arg5[%c0_208, %c0_209] : memref<256x512xf32, #tpu.memory_space<vmem>>, vector<256x512xf32>
    %cst_210 = arith.constant dense<0.000000e+00> : vector<8x512xf32>
    %400 = tpu.matmul %398, %399, %cst_210 {dimension_numbers = #tpu.dot_dimension_numbers<[1], [0], [0], [1], [0, 0, 1, 1], [], []>} : vector<8x256xf32>, vector<256x512xf32>, vector<8x512xf32> -> vector<8x512xf32>
    %c0_211 = arith.constant 0 : index
    %c0_212 = arith.constant 0 : index
    %401 = vector.load %arg6[%c0_211, %c0_212] : memref<1x512xf32, #tpu.memory_space<vmem>>, vector<1x512xf32>
    %402 = vector.broadcast %401 : vector<1x512xf32> to vector<8x512xf32>
    %403 = arith.addf %400, %402 : vector<8x512xf32>
    %404 = vector.extract_strided_slice %403 {offsets = [0, 0], sizes = [8, 128], strides = [1, 1]} : vector<8x512xf32> to vector<8x128xf32>
    %405 = arith.negf %404 : vector<8x128xf32>
    %406 = math.exp %405 : vector<8x128xf32>
    %cst_213 = arith.constant 1.000000e+00 : f32
    %407 = vector.broadcast %cst_213 : f32 to vector<8x128xf32>
    %408 = arith.addf %407, %406 : vector<8x128xf32>
    %409 = arith.divf %407, %408 : vector<8x128xf32>
    %410 = vector.extract_strided_slice %403 {offsets = [0, 128], sizes = [8, 128], strides = [1, 1]} : vector<8x512xf32> to vector<8x128xf32>
    %411 = arith.negf %410 : vector<8x128xf32>
    %412 = math.exp %411 : vector<8x128xf32>
    %cst_214 = arith.constant 1.000000e+00 : f32
    %413 = vector.broadcast %cst_214 : f32 to vector<8x128xf32>
    %414 = arith.addf %413, %412 : vector<8x128xf32>
    %415 = arith.divf %413, %414 : vector<8x128xf32>
    %416 = vector.extract_strided_slice %403 {offsets = [0, 256], sizes = [8, 128], strides = [1, 1]} : vector<8x512xf32> to vector<8x128xf32>
    %417 = math.tanh %416 : vector<8x128xf32>
    %418 = vector.extract_strided_slice %403 {offsets = [0, 384], sizes = [8, 128], strides = [1, 1]} : vector<8x512xf32> to vector<8x128xf32>
    %419 = arith.negf %418 : vector<8x128xf32>
    %420 = math.exp %419 : vector<8x128xf32>
    %cst_215 = arith.constant 1.000000e+00 : f32
    %421 = vector.broadcast %cst_215 : f32 to vector<8x128xf32>
    %422 = arith.addf %421, %420 : vector<8x128xf32>
    %423 = arith.divf %421, %422 : vector<8x128xf32>
    %424 = arith.mulf %415, %395 : vector<8x128xf32>
    %425 = arith.mulf %409, %417 : vector<8x128xf32>
    %426 = arith.addf %424, %425 : vector<8x128xf32>
    %427 = math.tanh %426 : vector<8x128xf32>
    %428 = arith.mulf %423, %427 : vector<8x128xf32>
    %c1_216 = arith.constant 1 : index
    %c0_217 = arith.constant 0 : index
    %c0_218 = arith.constant 0 : index
    %429 = vector.load %arg12[%c1_216, %c0_217, %c0_218] : memref<2x8x128xf32, #tpu.memory_space<vmem>>, vector<1x8x128xf32>
    %430 = vector.shape_cast %429 : vector<1x8x128xf32> to vector<8x128xf32>
    %431 = vector.shape_cast %428 : vector<8x128xf32> to vector<1x8x128xf32>
    tpu.vector_store %arg12[%c1_216, %c0_217, %c0_218], %431 {strides = array<i32>} : memref<2x8x128xf32, #tpu.memory_space<vmem>>, vector<1x8x128xf32>,
    %c1_219 = arith.constant 1 : index
    %c0_220 = arith.constant 0 : index
    %c0_221 = arith.constant 0 : index
    %432 = vector.load %arg13[%c1_219, %c0_220, %c0_221] : memref<2x8x128xf32, #tpu.memory_space<vmem>>, vector<1x8x128xf32>
    %433 = vector.shape_cast %432 : vector<1x8x128xf32> to vector<8x128xf32>
    %434 = vector.shape_cast %426 : vector<8x128xf32> to vector<1x8x128xf32>
    tpu.vector_store %arg13[%c1_219, %c0_220, %c0_221], %434 {strides = array<i32>} : memref<2x8x128xf32, #tpu.memory_space<vmem>>, vector<1x8x128xf32>,
    %c4_222 = arith.constant 4 : index
    %c0_223 = arith.constant 0 : index
    %c0_224 = arith.constant 0 : index
    %435 = vector.load %arg9[%c4_222, %c0_223, %c0_224] : memref<8x8x128xf32, #tpu.memory_space<vmem>>, vector<1x8x128xf32>
    %436 = vector.shape_cast %435 : vector<1x8x128xf32> to vector<8x128xf32>
    %437 = vector.shape_cast %428 : vector<8x128xf32> to vector<1x8x128xf32>
    tpu.vector_store %arg9[%c4_222, %c0_223, %c0_224], %437 {strides = array<i32>} : memref<8x8x128xf32, #tpu.memory_space<vmem>>, vector<1x8x128xf32>,
    %c5 = arith.constant 5 : index
    %c0_225 = arith.constant 0 : index
    %c0_226 = arith.constant 0 : index
    %438 = vector.load %arg2[%c5, %c0_225, %c0_226] : memref<8x8x128xf32, #tpu.memory_space<vmem>>, vector<1x8x128xf32>
    %439 = vector.shape_cast %438 : vector<1x8x128xf32> to vector<8x128xf32>
    %c0_227 = arith.constant 0 : index
    %c0_228 = arith.constant 0 : index
    %c0_229 = arith.constant 0 : index
    %440 = vector.load %arg13[%c0_227, %c0_228, %c0_229] : memref<2x8x128xf32, #tpu.memory_space<vmem>>, vector<1x8x128xf32>
    %441 = vector.shape_cast %440 : vector<1x8x128xf32> to vector<8x128xf32>
    %c0_230 = arith.constant 0 : index
    %c0_231 = arith.constant 0 : index
    %c0_232 = arith.constant 0 : index
    %442 = vector.load %arg12[%c0_230, %c0_231, %c0_232] : memref<2x8x128xf32, #tpu.memory_space<vmem>>, vector<1x8x128xf32>
    %443 = vector.shape_cast %442 : vector<1x8x128xf32> to vector<8x128xf32>
    %444 = tpu.concatenate %439, %443 in 1 : vector<8x128xf32>, vector<8x128xf32> -> vector<8x256xf32>
    %c0_233 = arith.constant 0 : index
    %c0_234 = arith.constant 0 : index
    %445 = vector.load %arg3[%c0_233, %c0_234] : memref<256x512xf32, #tpu.memory_space<vmem>>, vector<256x512xf32>
    %cst_235 = arith.constant dense<0.000000e+00> : vector<8x512xf32>
    %446 = tpu.matmul %444, %445, %cst_235 {dimension_numbers = #tpu.dot_dimension_numbers<[1], [0], [0], [1], [0, 0, 1, 1], [], []>} : vector<8x256xf32>, vector<256x512xf32>, vector<8x512xf32> -> vector<8x512xf32>
    %c0_236 = arith.constant 0 : index
    %c0_237 = arith.constant 0 : index
    %447 = vector.load %arg4[%c0_236, %c0_237] : memref<1x512xf32, #tpu.memory_space<vmem>>, vector<1x512xf32>
    %448 = vector.broadcast %447 : vector<1x512xf32> to vector<8x512xf32>
    %449 = arith.addf %446, %448 : vector<8x512xf32>
    %450 = vector.extract_strided_slice %449 {offsets = [0, 0], sizes = [8, 128], strides = [1, 1]} : vector<8x512xf32> to vector<8x128xf32>
    %451 = arith.negf %450 : vector<8x128xf32>
    %452 = math.exp %451 : vector<8x128xf32>
    %cst_238 = arith.constant 1.000000e+00 : f32
    %453 = vector.broadcast %cst_238 : f32 to vector<8x128xf32>
    %454 = arith.addf %453, %452 : vector<8x128xf32>
    %455 = arith.divf %453, %454 : vector<8x128xf32>
    %456 = vector.extract_strided_slice %449 {offsets = [0, 128], sizes = [8, 128], strides = [1, 1]} : vector<8x512xf32> to vector<8x128xf32>
    %457 = arith.negf %456 : vector<8x128xf32>
    %458 = math.exp %457 : vector<8x128xf32>
    %cst_239 = arith.constant 1.000000e+00 : f32
    %459 = vector.broadcast %cst_239 : f32 to vector<8x128xf32>
    %460 = arith.addf %459, %458 : vector<8x128xf32>
    %461 = arith.divf %459, %460 : vector<8x128xf32>
    %462 = vector.extract_strided_slice %449 {offsets = [0, 256], sizes = [8, 128], strides = [1, 1]} : vector<8x512xf32> to vector<8x128xf32>
    %463 = math.tanh %462 : vector<8x128xf32>
    %464 = vector.extract_strided_slice %449 {offsets = [0, 384], sizes = [8, 128], strides = [1, 1]} : vector<8x512xf32> to vector<8x128xf32>
    %465 = arith.negf %464 : vector<8x128xf32>
    %466 = math.exp %465 : vector<8x128xf32>
    %cst_240 = arith.constant 1.000000e+00 : f32
    %467 = vector.broadcast %cst_240 : f32 to vector<8x128xf32>
    %468 = arith.addf %467, %466 : vector<8x128xf32>
    %469 = arith.divf %467, %468 : vector<8x128xf32>
    %470 = arith.mulf %461, %441 : vector<8x128xf32>
    %471 = arith.mulf %455, %463 : vector<8x128xf32>
    %472 = arith.addf %470, %471 : vector<8x128xf32>
    %473 = math.tanh %472 : vector<8x128xf32>
    %474 = arith.mulf %469, %473 : vector<8x128xf32>
    %c0_241 = arith.constant 0 : index
    %c0_242 = arith.constant 0 : index
    %c0_243 = arith.constant 0 : index
    %475 = vector.load %arg12[%c0_241, %c0_242, %c0_243] : memref<2x8x128xf32, #tpu.memory_space<vmem>>, vector<1x8x128xf32>
    %476 = vector.shape_cast %475 : vector<1x8x128xf32> to vector<8x128xf32>
    %477 = vector.shape_cast %474 : vector<8x128xf32> to vector<1x8x128xf32>
    tpu.vector_store %arg12[%c0_241, %c0_242, %c0_243], %477 {strides = array<i32>} : memref<2x8x128xf32, #tpu.memory_space<vmem>>, vector<1x8x128xf32>,
    %c0_244 = arith.constant 0 : index
    %c0_245 = arith.constant 0 : index
    %c0_246 = arith.constant 0 : index
    %478 = vector.load %arg13[%c0_244, %c0_245, %c0_246] : memref<2x8x128xf32, #tpu.memory_space<vmem>>, vector<1x8x128xf32>
    %479 = vector.shape_cast %478 : vector<1x8x128xf32> to vector<8x128xf32>
    %480 = vector.shape_cast %472 : vector<8x128xf32> to vector<1x8x128xf32>
    tpu.vector_store %arg13[%c0_244, %c0_245, %c0_246], %480 {strides = array<i32>} : memref<2x8x128xf32, #tpu.memory_space<vmem>>, vector<1x8x128xf32>,
    %c1_247 = arith.constant 1 : index
    %c0_248 = arith.constant 0 : index
    %c0_249 = arith.constant 0 : index
    %481 = vector.load %arg13[%c1_247, %c0_248, %c0_249] : memref<2x8x128xf32, #tpu.memory_space<vmem>>, vector<1x8x128xf32>
    %482 = vector.shape_cast %481 : vector<1x8x128xf32> to vector<8x128xf32>
    %c1_250 = arith.constant 1 : index
    %c0_251 = arith.constant 0 : index
    %c0_252 = arith.constant 0 : index
    %483 = vector.load %arg12[%c1_250, %c0_251, %c0_252] : memref<2x8x128xf32, #tpu.memory_space<vmem>>, vector<1x8x128xf32>
    %484 = vector.shape_cast %483 : vector<1x8x128xf32> to vector<8x128xf32>
    %485 = tpu.concatenate %474, %484 in 1 : vector<8x128xf32>, vector<8x128xf32> -> vector<8x256xf32>
    %c0_253 = arith.constant 0 : index
    %c0_254 = arith.constant 0 : index
    %486 = vector.load %arg5[%c0_253, %c0_254] : memref<256x512xf32, #tpu.memory_space<vmem>>, vector<256x512xf32>
    %cst_255 = arith.constant dense<0.000000e+00> : vector<8x512xf32>
    %487 = tpu.matmul %485, %486, %cst_255 {dimension_numbers = #tpu.dot_dimension_numbers<[1], [0], [0], [1], [0, 0, 1, 1], [], []>} : vector<8x256xf32>, vector<256x512xf32>, vector<8x512xf32> -> vector<8x512xf32>
    %c0_256 = arith.constant 0 : index
    %c0_257 = arith.constant 0 : index
    %488 = vector.load %arg6[%c0_256, %c0_257] : memref<1x512xf32, #tpu.memory_space<vmem>>, vector<1x512xf32>
    %489 = vector.broadcast %488 : vector<1x512xf32> to vector<8x512xf32>
    %490 = arith.addf %487, %489 : vector<8x512xf32>
    %491 = vector.extract_strided_slice %490 {offsets = [0, 0], sizes = [8, 128], strides = [1, 1]} : vector<8x512xf32> to vector<8x128xf32>
    %492 = arith.negf %491 : vector<8x128xf32>
    %493 = math.exp %492 : vector<8x128xf32>
    %cst_258 = arith.constant 1.000000e+00 : f32
    %494 = vector.broadcast %cst_258 : f32 to vector<8x128xf32>
    %495 = arith.addf %494, %493 : vector<8x128xf32>
    %496 = arith.divf %494, %495 : vector<8x128xf32>
    %497 = vector.extract_strided_slice %490 {offsets = [0, 128], sizes = [8, 128], strides = [1, 1]} : vector<8x512xf32> to vector<8x128xf32>
    %498 = arith.negf %497 : vector<8x128xf32>
    %499 = math.exp %498 : vector<8x128xf32>
    %cst_259 = arith.constant 1.000000e+00 : f32
    %500 = vector.broadcast %cst_259 : f32 to vector<8x128xf32>
    %501 = arith.addf %500, %499 : vector<8x128xf32>
    %502 = arith.divf %500, %501 : vector<8x128xf32>
    %503 = vector.extract_strided_slice %490 {offsets = [0, 256], sizes = [8, 128], strides = [1, 1]} : vector<8x512xf32> to vector<8x128xf32>
    %504 = math.tanh %503 : vector<8x128xf32>
    %505 = vector.extract_strided_slice %490 {offsets = [0, 384], sizes = [8, 128], strides = [1, 1]} : vector<8x512xf32> to vector<8x128xf32>
    %506 = arith.negf %505 : vector<8x128xf32>
    %507 = math.exp %506 : vector<8x128xf32>
    %cst_260 = arith.constant 1.000000e+00 : f32
    %508 = vector.broadcast %cst_260 : f32 to vector<8x128xf32>
    %509 = arith.addf %508, %507 : vector<8x128xf32>
    %510 = arith.divf %508, %509 : vector<8x128xf32>
    %511 = arith.mulf %502, %482 : vector<8x128xf32>
    %512 = arith.mulf %496, %504 : vector<8x128xf32>
    %513 = arith.addf %511, %512 : vector<8x128xf32>
    %514 = math.tanh %513 : vector<8x128xf32>
    %515 = arith.mulf %510, %514 : vector<8x128xf32>
    %c1_261 = arith.constant 1 : index
    %c0_262 = arith.constant 0 : index
    %c0_263 = arith.constant 0 : index
    %516 = vector.load %arg12[%c1_261, %c0_262, %c0_263] : memref<2x8x128xf32, #tpu.memory_space<vmem>>, vector<1x8x128xf32>
    %517 = vector.shape_cast %516 : vector<1x8x128xf32> to vector<8x128xf32>
    %518 = vector.shape_cast %515 : vector<8x128xf32> to vector<1x8x128xf32>
    tpu.vector_store %arg12[%c1_261, %c0_262, %c0_263], %518 {strides = array<i32>} : memref<2x8x128xf32, #tpu.memory_space<vmem>>, vector<1x8x128xf32>,
    %c1_264 = arith.constant 1 : index
    %c0_265 = arith.constant 0 : index
    %c0_266 = arith.constant 0 : index
    %519 = vector.load %arg13[%c1_264, %c0_265, %c0_266] : memref<2x8x128xf32, #tpu.memory_space<vmem>>, vector<1x8x128xf32>
    %520 = vector.shape_cast %519 : vector<1x8x128xf32> to vector<8x128xf32>
    %521 = vector.shape_cast %513 : vector<8x128xf32> to vector<1x8x128xf32>
    tpu.vector_store %arg13[%c1_264, %c0_265, %c0_266], %521 {strides = array<i32>} : memref<2x8x128xf32, #tpu.memory_space<vmem>>, vector<1x8x128xf32>,
    %c5_267 = arith.constant 5 : index
    %c0_268 = arith.constant 0 : index
    %c0_269 = arith.constant 0 : index
    %522 = vector.load %arg9[%c5_267, %c0_268, %c0_269] : memref<8x8x128xf32, #tpu.memory_space<vmem>>, vector<1x8x128xf32>
    %523 = vector.shape_cast %522 : vector<1x8x128xf32> to vector<8x128xf32>
    %524 = vector.shape_cast %515 : vector<8x128xf32> to vector<1x8x128xf32>
    tpu.vector_store %arg9[%c5_267, %c0_268, %c0_269], %524 {strides = array<i32>} : memref<8x8x128xf32, #tpu.memory_space<vmem>>, vector<1x8x128xf32>,
    %c6 = arith.constant 6 : index
    %c0_270 = arith.constant 0 : index
    %c0_271 = arith.constant 0 : index
    %525 = vector.load %arg2[%c6, %c0_270, %c0_271] : memref<8x8x128xf32, #tpu.memory_space<vmem>>, vector<1x8x128xf32>
    %526 = vector.shape_cast %525 : vector<1x8x128xf32> to vector<8x128xf32>
    %c0_272 = arith.constant 0 : index
    %c0_273 = arith.constant 0 : index
    %c0_274 = arith.constant 0 : index
    %527 = vector.load %arg13[%c0_272, %c0_273, %c0_274] : memref<2x8x128xf32, #tpu.memory_space<vmem>>, vector<1x8x128xf32>
    %528 = vector.shape_cast %527 : vector<1x8x128xf32> to vector<8x128xf32>
    %c0_275 = arith.constant 0 : index
    %c0_276 = arith.constant 0 : index
    %c0_277 = arith.constant 0 : index
    %529 = vector.load %arg12[%c0_275, %c0_276, %c0_277] : memref<2x8x128xf32, #tpu.memory_space<vmem>>, vector<1x8x128xf32>
    %530 = vector.shape_cast %529 : vector<1x8x128xf32> to vector<8x128xf32>
    %531 = tpu.concatenate %526, %530 in 1 : vector<8x128xf32>, vector<8x128xf32> -> vector<8x256xf32>
    %c0_278 = arith.constant 0 : index
    %c0_279 = arith.constant 0 : index
    %532 = vector.load %arg3[%c0_278, %c0_279] : memref<256x512xf32, #tpu.memory_space<vmem>>, vector<256x512xf32>
    %cst_280 = arith.constant dense<0.000000e+00> : vector<8x512xf32>
    %533 = tpu.matmul %531, %532, %cst_280 {dimension_numbers = #tpu.dot_dimension_numbers<[1], [0], [0], [1], [0, 0, 1, 1], [], []>} : vector<8x256xf32>, vector<256x512xf32>, vector<8x512xf32> -> vector<8x512xf32>
    %c0_281 = arith.constant 0 : index
    %c0_282 = arith.constant 0 : index
    %534 = vector.load %arg4[%c0_281, %c0_282] : memref<1x512xf32, #tpu.memory_space<vmem>>, vector<1x512xf32>
    %535 = vector.broadcast %534 : vector<1x512xf32> to vector<8x512xf32>
    %536 = arith.addf %533, %535 : vector<8x512xf32>
    %537 = vector.extract_strided_slice %536 {offsets = [0, 0], sizes = [8, 128], strides = [1, 1]} : vector<8x512xf32> to vector<8x128xf32>
    %538 = arith.negf %537 : vector<8x128xf32>
    %539 = math.exp %538 : vector<8x128xf32>
    %cst_283 = arith.constant 1.000000e+00 : f32
    %540 = vector.broadcast %cst_283 : f32 to vector<8x128xf32>
    %541 = arith.addf %540, %539 : vector<8x128xf32>
    %542 = arith.divf %540, %541 : vector<8x128xf32>
    %543 = vector.extract_strided_slice %536 {offsets = [0, 128], sizes = [8, 128], strides = [1, 1]} : vector<8x512xf32> to vector<8x128xf32>
    %544 = arith.negf %543 : vector<8x128xf32>
    %545 = math.exp %544 : vector<8x128xf32>
    %cst_284 = arith.constant 1.000000e+00 : f32
    %546 = vector.broadcast %cst_284 : f32 to vector<8x128xf32>
    %547 = arith.addf %546, %545 : vector<8x128xf32>
    %548 = arith.divf %546, %547 : vector<8x128xf32>
    %549 = vector.extract_strided_slice %536 {offsets = [0, 256], sizes = [8, 128], strides = [1, 1]} : vector<8x512xf32> to vector<8x128xf32>
    %550 = math.tanh %549 : vector<8x128xf32>
    %551 = vector.extract_strided_slice %536 {offsets = [0, 384], sizes = [8, 128], strides = [1, 1]} : vector<8x512xf32> to vector<8x128xf32>
    %552 = arith.negf %551 : vector<8x128xf32>
    %553 = math.exp %552 : vector<8x128xf32>
    %cst_285 = arith.constant 1.000000e+00 : f32
    %554 = vector.broadcast %cst_285 : f32 to vector<8x128xf32>
    %555 = arith.addf %554, %553 : vector<8x128xf32>
    %556 = arith.divf %554, %555 : vector<8x128xf32>
    %557 = arith.mulf %548, %528 : vector<8x128xf32>
    %558 = arith.mulf %542, %550 : vector<8x128xf32>
    %559 = arith.addf %557, %558 : vector<8x128xf32>
    %560 = math.tanh %559 : vector<8x128xf32>
    %561 = arith.mulf %556, %560 : vector<8x128xf32>
    %c0_286 = arith.constant 0 : index
    %c0_287 = arith.constant 0 : index
    %c0_288 = arith.constant 0 : index
    %562 = vector.load %arg12[%c0_286, %c0_287, %c0_288] : memref<2x8x128xf32, #tpu.memory_space<vmem>>, vector<1x8x128xf32>
    %563 = vector.shape_cast %562 : vector<1x8x128xf32> to vector<8x128xf32>
    %564 = vector.shape_cast %561 : vector<8x128xf32> to vector<1x8x128xf32>
    tpu.vector_store %arg12[%c0_286, %c0_287, %c0_288], %564 {strides = array<i32>} : memref<2x8x128xf32, #tpu.memory_space<vmem>>, vector<1x8x128xf32>,
    %c0_289 = arith.constant 0 : index
    %c0_290 = arith.constant 0 : index
    %c0_291 = arith.constant 0 : index
    %565 = vector.load %arg13[%c0_289, %c0_290, %c0_291] : memref<2x8x128xf32, #tpu.memory_space<vmem>>, vector<1x8x128xf32>
    %566 = vector.shape_cast %565 : vector<1x8x128xf32> to vector<8x128xf32>
    %567 = vector.shape_cast %559 : vector<8x128xf32> to vector<1x8x128xf32>
    tpu.vector_store %arg13[%c0_289, %c0_290, %c0_291], %567 {strides = array<i32>} : memref<2x8x128xf32, #tpu.memory_space<vmem>>, vector<1x8x128xf32>,
    %c1_292 = arith.constant 1 : index
    %c0_293 = arith.constant 0 : index
    %c0_294 = arith.constant 0 : index
    %568 = vector.load %arg13[%c1_292, %c0_293, %c0_294] : memref<2x8x128xf32, #tpu.memory_space<vmem>>, vector<1x8x128xf32>
    %569 = vector.shape_cast %568 : vector<1x8x128xf32> to vector<8x128xf32>
    %c1_295 = arith.constant 1 : index
    %c0_296 = arith.constant 0 : index
    %c0_297 = arith.constant 0 : index
    %570 = vector.load %arg12[%c1_295, %c0_296, %c0_297] : memref<2x8x128xf32, #tpu.memory_space<vmem>>, vector<1x8x128xf32>
    %571 = vector.shape_cast %570 : vector<1x8x128xf32> to vector<8x128xf32>
    %572 = tpu.concatenate %561, %571 in 1 : vector<8x128xf32>, vector<8x128xf32> -> vector<8x256xf32>
    %c0_298 = arith.constant 0 : index
    %c0_299 = arith.constant 0 : index
    %573 = vector.load %arg5[%c0_298, %c0_299] : memref<256x512xf32, #tpu.memory_space<vmem>>, vector<256x512xf32>
    %cst_300 = arith.constant dense<0.000000e+00> : vector<8x512xf32>
    %574 = tpu.matmul %572, %573, %cst_300 {dimension_numbers = #tpu.dot_dimension_numbers<[1], [0], [0], [1], [0, 0, 1, 1], [], []>} : vector<8x256xf32>, vector<256x512xf32>, vector<8x512xf32> -> vector<8x512xf32>
    %c0_301 = arith.constant 0 : index
    %c0_302 = arith.constant 0 : index
    %575 = vector.load %arg6[%c0_301, %c0_302] : memref<1x512xf32, #tpu.memory_space<vmem>>, vector<1x512xf32>
    %576 = vector.broadcast %575 : vector<1x512xf32> to vector<8x512xf32>
    %577 = arith.addf %574, %576 : vector<8x512xf32>
    %578 = vector.extract_strided_slice %577 {offsets = [0, 0], sizes = [8, 128], strides = [1, 1]} : vector<8x512xf32> to vector<8x128xf32>
    %579 = arith.negf %578 : vector<8x128xf32>
    %580 = math.exp %579 : vector<8x128xf32>
    %cst_303 = arith.constant 1.000000e+00 : f32
    %581 = vector.broadcast %cst_303 : f32 to vector<8x128xf32>
    %582 = arith.addf %581, %580 : vector<8x128xf32>
    %583 = arith.divf %581, %582 : vector<8x128xf32>
    %584 = vector.extract_strided_slice %577 {offsets = [0, 128], sizes = [8, 128], strides = [1, 1]} : vector<8x512xf32> to vector<8x128xf32>
    %585 = arith.negf %584 : vector<8x128xf32>
    %586 = math.exp %585 : vector<8x128xf32>
    %cst_304 = arith.constant 1.000000e+00 : f32
    %587 = vector.broadcast %cst_304 : f32 to vector<8x128xf32>
    %588 = arith.addf %587, %586 : vector<8x128xf32>
    %589 = arith.divf %587, %588 : vector<8x128xf32>
    %590 = vector.extract_strided_slice %577 {offsets = [0, 256], sizes = [8, 128], strides = [1, 1]} : vector<8x512xf32> to vector<8x128xf32>
    %591 = math.tanh %590 : vector<8x128xf32>
    %592 = vector.extract_strided_slice %577 {offsets = [0, 384], sizes = [8, 128], strides = [1, 1]} : vector<8x512xf32> to vector<8x128xf32>
    %593 = arith.negf %592 : vector<8x128xf32>
    %594 = math.exp %593 : vector<8x128xf32>
    %cst_305 = arith.constant 1.000000e+00 : f32
    %595 = vector.broadcast %cst_305 : f32 to vector<8x128xf32>
    %596 = arith.addf %595, %594 : vector<8x128xf32>
    %597 = arith.divf %595, %596 : vector<8x128xf32>
    %598 = arith.mulf %589, %569 : vector<8x128xf32>
    %599 = arith.mulf %583, %591 : vector<8x128xf32>
    %600 = arith.addf %598, %599 : vector<8x128xf32>
    %601 = math.tanh %600 : vector<8x128xf32>
    %602 = arith.mulf %597, %601 : vector<8x128xf32>
    %c1_306 = arith.constant 1 : index
    %c0_307 = arith.constant 0 : index
    %c0_308 = arith.constant 0 : index
    %603 = vector.load %arg12[%c1_306, %c0_307, %c0_308] : memref<2x8x128xf32, #tpu.memory_space<vmem>>, vector<1x8x128xf32>
    %604 = vector.shape_cast %603 : vector<1x8x128xf32> to vector<8x128xf32>
    %605 = vector.shape_cast %602 : vector<8x128xf32> to vector<1x8x128xf32>
    tpu.vector_store %arg12[%c1_306, %c0_307, %c0_308], %605 {strides = array<i32>} : memref<2x8x128xf32, #tpu.memory_space<vmem>>, vector<1x8x128xf32>,
    %c1_309 = arith.constant 1 : index
    %c0_310 = arith.constant 0 : index
    %c0_311 = arith.constant 0 : index
    %606 = vector.load %arg13[%c1_309, %c0_310, %c0_311] : memref<2x8x128xf32, #tpu.memory_space<vmem>>, vector<1x8x128xf32>
    %607 = vector.shape_cast %606 : vector<1x8x128xf32> to vector<8x128xf32>
    %608 = vector.shape_cast %600 : vector<8x128xf32> to vector<1x8x128xf32>
    tpu.vector_store %arg13[%c1_309, %c0_310, %c0_311], %608 {strides = array<i32>} : memref<2x8x128xf32, #tpu.memory_space<vmem>>, vector<1x8x128xf32>,
    %c6_312 = arith.constant 6 : index
    %c0_313 = arith.constant 0 : index
    %c0_314 = arith.constant 0 : index
    %609 = vector.load %arg9[%c6_312, %c0_313, %c0_314] : memref<8x8x128xf32, #tpu.memory_space<vmem>>, vector<1x8x128xf32>
    %610 = vector.shape_cast %609 : vector<1x8x128xf32> to vector<8x128xf32>
    %611 = vector.shape_cast %602 : vector<8x128xf32> to vector<1x8x128xf32>
    tpu.vector_store %arg9[%c6_312, %c0_313, %c0_314], %611 {strides = array<i32>} : memref<8x8x128xf32, #tpu.memory_space<vmem>>, vector<1x8x128xf32>,
    %c7 = arith.constant 7 : index
    %c0_315 = arith.constant 0 : index
    %c0_316 = arith.constant 0 : index
    %612 = vector.load %arg2[%c7, %c0_315, %c0_316] : memref<8x8x128xf32, #tpu.memory_space<vmem>>, vector<1x8x128xf32>
    %613 = vector.shape_cast %612 : vector<1x8x128xf32> to vector<8x128xf32>
    %c0_317 = arith.constant 0 : index
    %c0_318 = arith.constant 0 : index
    %c0_319 = arith.constant 0 : index
    %614 = vector.load %arg13[%c0_317, %c0_318, %c0_319] : memref<2x8x128xf32, #tpu.memory_space<vmem>>, vector<1x8x128xf32>
    %615 = vector.shape_cast %614 : vector<1x8x128xf32> to vector<8x128xf32>
    %c0_320 = arith.constant 0 : index
    %c0_321 = arith.constant 0 : index
    %c0_322 = arith.constant 0 : index
    %616 = vector.load %arg12[%c0_320, %c0_321, %c0_322] : memref<2x8x128xf32, #tpu.memory_space<vmem>>, vector<1x8x128xf32>
    %617 = vector.shape_cast %616 : vector<1x8x128xf32> to vector<8x128xf32>
    %618 = tpu.concatenate %613, %617 in 1 : vector<8x128xf32>, vector<8x128xf32> -> vector<8x256xf32>
    %c0_323 = arith.constant 0 : index
    %c0_324 = arith.constant 0 : index
    %619 = vector.load %arg3[%c0_323, %c0_324] : memref<256x512xf32, #tpu.memory_space<vmem>>, vector<256x512xf32>
    %cst_325 = arith.constant dense<0.000000e+00> : vector<8x512xf32>
    %620 = tpu.matmul %618, %619, %cst_325 {dimension_numbers = #tpu.dot_dimension_numbers<[1], [0], [0], [1], [0, 0, 1, 1], [], []>} : vector<8x256xf32>, vector<256x512xf32>, vector<8x512xf32> -> vector<8x512xf32>
    %c0_326 = arith.constant 0 : index
    %c0_327 = arith.constant 0 : index
    %621 = vector.load %arg4[%c0_326, %c0_327] : memref<1x512xf32, #tpu.memory_space<vmem>>, vector<1x512xf32>
    %622 = vector.broadcast %621 : vector<1x512xf32> to vector<8x512xf32>
    %623 = arith.addf %620, %622 : vector<8x512xf32>
    %624 = vector.extract_strided_slice %623 {offsets = [0, 0], sizes = [8, 128], strides = [1, 1]} : vector<8x512xf32> to vector<8x128xf32>
    %625 = arith.negf %624 : vector<8x128xf32>
    %626 = math.exp %625 : vector<8x128xf32>
    %cst_328 = arith.constant 1.000000e+00 : f32
    %627 = vector.broadcast %cst_328 : f32 to vector<8x128xf32>
    %628 = arith.addf %627, %626 : vector<8x128xf32>
    %629 = arith.divf %627, %628 : vector<8x128xf32>
    %630 = vector.extract_strided_slice %623 {offsets = [0, 128], sizes = [8, 128], strides = [1, 1]} : vector<8x512xf32> to vector<8x128xf32>
    %631 = arith.negf %630 : vector<8x128xf32>
    %632 = math.exp %631 : vector<8x128xf32>
    %cst_329 = arith.constant 1.000000e+00 : f32
    %633 = vector.broadcast %cst_329 : f32 to vector<8x128xf32>
    %634 = arith.addf %633, %632 : vector<8x128xf32>
    %635 = arith.divf %633, %634 : vector<8x128xf32>
    %636 = vector.extract_strided_slice %623 {offsets = [0, 256], sizes = [8, 128], strides = [1, 1]} : vector<8x512xf32> to vector<8x128xf32>
    %637 = math.tanh %636 : vector<8x128xf32>
    %638 = vector.extract_strided_slice %623 {offsets = [0, 384], sizes = [8, 128], strides = [1, 1]} : vector<8x512xf32> to vector<8x128xf32>
    %639 = arith.negf %638 : vector<8x128xf32>
    %640 = math.exp %639 : vector<8x128xf32>
    %cst_330 = arith.constant 1.000000e+00 : f32
    %641 = vector.broadcast %cst_330 : f32 to vector<8x128xf32>
    %642 = arith.addf %641, %640 : vector<8x128xf32>
    %643 = arith.divf %641, %642 : vector<8x128xf32>
    %644 = arith.mulf %635, %615 : vector<8x128xf32>
    %645 = arith.mulf %629, %637 : vector<8x128xf32>
    %646 = arith.addf %644, %645 : vector<8x128xf32>
    %647 = math.tanh %646 : vector<8x128xf32>
    %648 = arith.mulf %643, %647 : vector<8x128xf32>
    %c0_331 = arith.constant 0 : index
    %c0_332 = arith.constant 0 : index
    %c0_333 = arith.constant 0 : index
    %649 = vector.load %arg12[%c0_331, %c0_332, %c0_333] : memref<2x8x128xf32, #tpu.memory_space<vmem>>, vector<1x8x128xf32>
    %650 = vector.shape_cast %649 : vector<1x8x128xf32> to vector<8x128xf32>
    %651 = vector.shape_cast %648 : vector<8x128xf32> to vector<1x8x128xf32>
    tpu.vector_store %arg12[%c0_331, %c0_332, %c0_333], %651 {strides = array<i32>} : memref<2x8x128xf32, #tpu.memory_space<vmem>>, vector<1x8x128xf32>,
    %c0_334 = arith.constant 0 : index
    %c0_335 = arith.constant 0 : index
    %c0_336 = arith.constant 0 : index
    %652 = vector.load %arg13[%c0_334, %c0_335, %c0_336] : memref<2x8x128xf32, #tpu.memory_space<vmem>>, vector<1x8x128xf32>
    %653 = vector.shape_cast %652 : vector<1x8x128xf32> to vector<8x128xf32>
    %654 = vector.shape_cast %646 : vector<8x128xf32> to vector<1x8x128xf32>
    tpu.vector_store %arg13[%c0_334, %c0_335, %c0_336], %654 {strides = array<i32>} : memref<2x8x128xf32, #tpu.memory_space<vmem>>, vector<1x8x128xf32>,
    %c1_337 = arith.constant 1 : index
    %c0_338 = arith.constant 0 : index
    %c0_339 = arith.constant 0 : index
    %655 = vector.load %arg13[%c1_337, %c0_338, %c0_339] : memref<2x8x128xf32, #tpu.memory_space<vmem>>, vector<1x8x128xf32>
    %656 = vector.shape_cast %655 : vector<1x8x128xf32> to vector<8x128xf32>
    %c1_340 = arith.constant 1 : index
    %c0_341 = arith.constant 0 : index
    %c0_342 = arith.constant 0 : index
    %657 = vector.load %arg12[%c1_340, %c0_341, %c0_342] : memref<2x8x128xf32, #tpu.memory_space<vmem>>, vector<1x8x128xf32>
    %658 = vector.shape_cast %657 : vector<1x8x128xf32> to vector<8x128xf32>
    %659 = tpu.concatenate %648, %658 in 1 : vector<8x128xf32>, vector<8x128xf32> -> vector<8x256xf32>
    %c0_343 = arith.constant 0 : index
    %c0_344 = arith.constant 0 : index
    %660 = vector.load %arg5[%c0_343, %c0_344] : memref<256x512xf32, #tpu.memory_space<vmem>>, vector<256x512xf32>
    %cst_345 = arith.constant dense<0.000000e+00> : vector<8x512xf32>
    %661 = tpu.matmul %659, %660, %cst_345 {dimension_numbers = #tpu.dot_dimension_numbers<[1], [0], [0], [1], [0, 0, 1, 1], [], []>} : vector<8x256xf32>, vector<256x512xf32>, vector<8x512xf32> -> vector<8x512xf32>
    %c0_346 = arith.constant 0 : index
    %c0_347 = arith.constant 0 : index
    %662 = vector.load %arg6[%c0_346, %c0_347] : memref<1x512xf32, #tpu.memory_space<vmem>>, vector<1x512xf32>
    %663 = vector.broadcast %662 : vector<1x512xf32> to vector<8x512xf32>
    %664 = arith.addf %661, %663 : vector<8x512xf32>
    %665 = vector.extract_strided_slice %664 {offsets = [0, 0], sizes = [8, 128], strides = [1, 1]} : vector<8x512xf32> to vector<8x128xf32>
    %666 = arith.negf %665 : vector<8x128xf32>
    %667 = math.exp %666 : vector<8x128xf32>
    %cst_348 = arith.constant 1.000000e+00 : f32
    %668 = vector.broadcast %cst_348 : f32 to vector<8x128xf32>
    %669 = arith.addf %668, %667 : vector<8x128xf32>
    %670 = arith.divf %668, %669 : vector<8x128xf32>
    %671 = vector.extract_strided_slice %664 {offsets = [0, 128], sizes = [8, 128], strides = [1, 1]} : vector<8x512xf32> to vector<8x128xf32>
    %672 = arith.negf %671 : vector<8x128xf32>
    %673 = math.exp %672 : vector<8x128xf32>
    %cst_349 = arith.constant 1.000000e+00 : f32
    %674 = vector.broadcast %cst_349 : f32 to vector<8x128xf32>
    %675 = arith.addf %674, %673 : vector<8x128xf32>
    %676 = arith.divf %674, %675 : vector<8x128xf32>
    %677 = vector.extract_strided_slice %664 {offsets = [0, 256], sizes = [8, 128], strides = [1, 1]} : vector<8x512xf32> to vector<8x128xf32>
    %678 = math.tanh %677 : vector<8x128xf32>
    %679 = vector.extract_strided_slice %664 {offsets = [0, 384], sizes = [8, 128], strides = [1, 1]} : vector<8x512xf32> to vector<8x128xf32>
    %680 = arith.negf %679 : vector<8x128xf32>
    %681 = math.exp %680 : vector<8x128xf32>
    %cst_350 = arith.constant 1.000000e+00 : f32
    %682 = vector.broadcast %cst_350 : f32 to vector<8x128xf32>
    %683 = arith.addf %682, %681 : vector<8x128xf32>
    %684 = arith.divf %682, %683 : vector<8x128xf32>
    %685 = arith.mulf %676, %656 : vector<8x128xf32>
    %686 = arith.mulf %670, %678 : vector<8x128xf32>
    %687 = arith.addf %685, %686 : vector<8x128xf32>
    %688 = math.tanh %687 : vector<8x128xf32>
    %689 = arith.mulf %684, %688 : vector<8x128xf32>
    %c1_351 = arith.constant 1 : index
    %c0_352 = arith.constant 0 : index
    %c0_353 = arith.constant 0 : index
    %690 = vector.load %arg12[%c1_351, %c0_352, %c0_353] : memref<2x8x128xf32, #tpu.memory_space<vmem>>, vector<1x8x128xf32>
    %691 = vector.shape_cast %690 : vector<1x8x128xf32> to vector<8x128xf32>
    %692 = vector.shape_cast %689 : vector<8x128xf32> to vector<1x8x128xf32>
    tpu.vector_store %arg12[%c1_351, %c0_352, %c0_353], %692 {strides = array<i32>} : memref<2x8x128xf32, #tpu.memory_space<vmem>>, vector<1x8x128xf32>,
    %c1_354 = arith.constant 1 : index
    %c0_355 = arith.constant 0 : index
    %c0_356 = arith.constant 0 : index
    %693 = vector.load %arg13[%c1_354, %c0_355, %c0_356] : memref<2x8x128xf32, #tpu.memory_space<vmem>>, vector<1x8x128xf32>
    %694 = vector.shape_cast %693 : vector<1x8x128xf32> to vector<8x128xf32>
    %695 = vector.shape_cast %687 : vector<8x128xf32> to vector<1x8x128xf32>
    tpu.vector_store %arg13[%c1_354, %c0_355, %c0_356], %695 {strides = array<i32>} : memref<2x8x128xf32, #tpu.memory_space<vmem>>, vector<1x8x128xf32>,
    %c7_357 = arith.constant 7 : index
    %c0_358 = arith.constant 0 : index
    %c0_359 = arith.constant 0 : index
    %696 = vector.load %arg9[%c7_357, %c0_358, %c0_359] : memref<8x8x128xf32, #tpu.memory_space<vmem>>, vector<1x8x128xf32>
    %697 = vector.shape_cast %696 : vector<1x8x128xf32> to vector<8x128xf32>
    %698 = vector.shape_cast %689 : vector<8x128xf32> to vector<1x8x128xf32>
    tpu.vector_store %arg9[%c7_357, %c0_358, %c0_359], %698 {strides = array<i32>} : memref<8x8x128xf32, #tpu.memory_space<vmem>>, vector<1x8x128xf32>,
    %c0_i32_360 = arith.constant 0 : i32
    %699 = arith.cmpi eq, %arg1, %c0_i32_360 : i32
    %700 = arith.extui %699 : i1 to i32
    %c0_i32_361 = arith.constant 0 : i32
    %701 = arith.cmpi ne, %700, %c0_i32_361 : i32
    scf.if %701 {
      %c0_362 = arith.constant 0 : index
      %c0_363 = arith.constant 0 : index
      %c0_364 = arith.constant 0 : index
      %702 = vector.load %arg12[%c0_362, %c0_363, %c0_364] : memref<2x8x128xf32, #tpu.memory_space<vmem>>, vector<2x8x128xf32>
      %c0_365 = arith.constant 0 : index
      %c0_366 = arith.constant 0 : index
      %c0_367 = arith.constant 0 : index
      %703 = vector.load %arg10[%c0_365, %c0_366, %c0_367] : memref<2x8x128xf32, #tpu.memory_space<vmem>>, vector<2x8x128xf32>
      tpu.vector_store %arg10[%c0_365, %c0_366, %c0_367], %702 {strides = array<i32>} : memref<2x8x128xf32, #tpu.memory_space<vmem>>, vector<2x8x128xf32>,
      %c0_368 = arith.constant 0 : index
      %c0_369 = arith.constant 0 : index
      %c0_370 = arith.constant 0 : index
      %704 = vector.load %arg13[%c0_368, %c0_369, %c0_370] : memref<2x8x128xf32, #tpu.memory_space<vmem>>, vector<2x8x128xf32>
      %c0_371 = arith.constant 0 : index
      %c0_372 = arith.constant 0 : index
      %c0_373 = arith.constant 0 : index
      %705 = vector.load %arg11[%c0_371, %c0_372, %c0_373] : memref<2x8x128xf32, #tpu.memory_space<vmem>>, vector<2x8x128xf32>
      tpu.vector_store %arg11[%c0_371, %c0_372, %c0_373], %704 {strides = array<i32>} : memref<2x8x128xf32, #tpu.memory_space<vmem>>, vector<2x8x128xf32>,
    } else {
    }
    return
  }
  func.func @transform_0(%arg0: i32, %arg1: i32) -> (i32, i32, i32) {
    %c0_i32 = arith.constant 0 : i32
    %c0_i32_0 = arith.constant 0 : i32
    return %arg1, %arg0, %c0_i32 : i32, i32, i32
  }
  func.func @transform_1(%arg0: i32, %arg1: i32) -> (i32, i32) {
    %c0_i32 = arith.constant 0 : i32
    %c0_i32_0 = arith.constant 0 : i32
    %c0_i32_1 = arith.constant 0 : i32
    return %c0_i32, %c0_i32_0 : i32, i32
  }
  func.func @transform_2(%arg0: i32, %arg1: i32) -> (i32, i32) {
    %c0_i32 = arith.constant 0 : i32
    %c0_i32_0 = arith.constant 0 : i32
    %c0_i32_1 = arith.constant 0 : i32
    return %c0_i32, %c0_i32_0 : i32, i32
  }
  func.func @transform_3(%arg0: i32, %arg1: i32) -> (i32, i32) {
    %c0_i32 = arith.constant 0 : i32
    %c0_i32_0 = arith.constant 0 : i32
    %c0_i32_1 = arith.constant 0 : i32
    return %c0_i32, %c0_i32_0 : i32, i32
  }
  func.func @transform_4(%arg0: i32, %arg1: i32) -> (i32, i32) {
    %c0_i32 = arith.constant 0 : i32
    %c0_i32_0 = arith.constant 0 : i32
    %c0_i32_1 = arith.constant 0 : i32
    return %c0_i32, %c0_i32_0 : i32, i32
  }
  func.func @transform_5(%arg0: i32, %arg1: i32) -> (i32, i32, i32) {
    %c0_i32 = arith.constant 0 : i32
    %c0_i32_0 = arith.constant 0 : i32
    %c0_i32_1 = arith.constant 0 : i32
    return %c0_i32, %arg0, %c0_i32_0 : i32, i32, i32
  }
  func.func @transform_6(%arg0: i32, %arg1: i32) -> (i32, i32, i32) {
    %c0_i32 = arith.constant 0 : i32
    %c0_i32_0 = arith.constant 0 : i32
    %c0_i32_1 = arith.constant 0 : i32
    return %c0_i32, %arg0, %c0_i32_0 : i32, i32, i32
  }
  func.func @transform_7(%arg0: i32, %arg1: i32) -> (i32, i32, i32) {
    %c0_i32 = arith.constant 0 : i32
    %c0_i32_0 = arith.constant 0 : i32
    return %arg1, %arg0, %c0_i32 : i32, i32, i32
  }
  func.func @transform_8(%arg0: i32, %arg1: i32) -> (i32, i32, i32) {
    %c0_i32 = arith.constant 0 : i32
    %c0_i32_0 = arith.constant 0 : i32
    %c0_i32_1 = arith.constant 0 : i32
    return %c0_i32, %arg0, %c0_i32_0 : i32, i32, i32
  }
  func.func @transform_9(%arg0: i32, %arg1: i32) -> (i32, i32, i32) {
    %c0_i32 = arith.constant 0 : i32
    %c0_i32_0 = arith.constant 0 : i32
    %c0_i32_1 = arith.constant 0 : i32
    return %c0_i32, %arg0, %c0_i32_0 : i32, i32, i32
  }
}

</mosaic_0001>

<llo_original>
// kernel: tpu_custom_call.1
$region0: #{tpu_custom_call.1}
  #allocation0 [shape = 'u32[]', space=smem, size = 0x4, offset = 0x4, fixed_abs, tag = 'smem constant byte address 0x4 - core index']
  #allocation1 [shape = 'u32[144,128]{1,0:T(1,128)}', space=vmem, size = 0x12000, scoped, tag = 'internal scratch']
  #allocation2 [shape = 'f32[2,8,128]{2,1,0:T(8,128)}', space=vmem, size = 0x2000, scoped, tag = 'scratch operand']
  #allocation3 [shape = 'f32[2,8,128]{2,1,0:T(8,128)}', space=vmem, size = 0x2000, scoped, tag = 'scratch operand']
  %s0 = inlined_call_operand.hbm [shape: f32[8,8,128], index: 0, kind: input, shape index: {}]
  %s1 = inlined_call_operand.hbm [shape: f32[256,512], index: 1, kind: input, shape index: {}]
  %s2 = inlined_call_operand.hbm [shape: f32[1,512], index: 2, kind: input, shape index: {}]
  %s3 = inlined_call_operand.hbm [shape: f32[256,512], index: 3, kind: input, shape index: {}]
  %s4 = inlined_call_operand.vmem [shape: f32[1,512], index: 4, kind: input, shape index: {}]
  %s5 = inlined_call_operand.hbm [shape: f32[2,8,128], index: 5, kind: input, shape index: {}]
  %s6 = inlined_call_operand.hbm [shape: f32[2,8,128], index: 6, kind: input, shape index: {}]
  %s7 = inlined_call_operand.hbm [shape: f32[8,8,128], index: 7, kind: output, shape index: {0}]
  %s8 = inlined_call_operand.hbm [shape: f32[2,8,128], index: 8, kind: output, shape index: {1}]
  %s9 = inlined_call_operand.hbm [shape: f32[2,8,128], index: 9, kind: output, shape index: {2}]
  %10 = xla_tuple %s7, %s8, %s9
  %s11 = sld [smem:[#allocation0]]
  $region86: #{tpu_custom_call.1} parent=0
    _
  %s13 = ssub.s32 1, %s11
  %s14 = scalar_select 0, %s13, %s11
  $region1: #{tpu_custom_call.1} parent=0
    #allocation4 [shape = 'u8[32768]{0}', space=vmem, size = 0x8000, scoped, tag = 'input window, operand 0, single buffered']
    #allocation5 [shape = 's32[1]{0}', space=sflag, size = 0x4, scoped, tag = 'scoped memory for tpu_custom_call.1']
    #allocation6 [shape = 's32[1]{0}', space=sflag, size = 0x4, scoped, tag = 'scoped memory for tpu_custom_call.1']
    #allocation7 [shape = 'u8[524288]{0}', space=vmem, size = 0x80000, scoped, tag = 'input window, operand 1, single buffered']
    #allocation8 [shape = 's32[1]{0}', space=sflag, size = 0x4, scoped, tag = 'scoped memory for tpu_custom_call.1']
    #allocation9 [shape = 'u8[2048]{0}', space=vmem, size = 0x800, scoped, tag = 'input window, operand 2, single buffered']
    #allocation10 [shape = 'u8[524288]{0}', space=vmem, size = 0x80000, scoped, tag = 'input window, operand 3, single buffered']
    #allocation11 [shape = 's32[1]{0}', space=sflag, size = 0x4, scoped, tag = 'scoped memory for tpu_custom_call.1']
    #allocation12 [shape = 'u8[8192]{0}', space=vmem, size = 0x2000, scoped, tag = 'input window, operand 5, single buffered']
    #allocation13 [shape = 'u8[8192]{0}', space=vmem, size = 0x2000, scoped, tag = 'input window, operand 6, single buffered']
    #allocation14 [shape = 's32[1]{0}', space=sflag, size = 0x4, scoped, tag = 'scoped memory for tpu_custom_call.1']
    #allocation15 [shape = 'u8[32768]{0}', space=vmem, size = 0x8000, scoped, tag = 'output window, operand 0, single buffered']
    #allocation16 [shape = 'u8[8192]{0}', space=vmem, size = 0x2000, scoped, tag = 'output window, operand 1, single buffered']
    #allocation17 [shape = 's32[1]{0}', space=sflag, size = 0x4, scoped, tag = 'scoped memory for tpu_custom_call.1']
    #allocation18 [shape = 'u8[8192]{0}', space=vmem, size = 0x2000, scoped, tag = 'output window, operand 2, single buffered']
    %15 = vsyncpa [#allocation5], 0
    %16 = vsyncpa [#allocation8], 0
    %17 = vsyncpa [#allocation11], 0
    %18 = vsyncpa [#allocation14], 0
    %19 = vsyncpa [#allocation6], 0
    %20 = vsyncpa [#allocation17], 0
    // Predicated region
    $region2: #{tpu_custom_call.1} parent=1 // pred_check
      _
    $region3: #{tpu_custom_call.1} parent=1 // pred_check_branch
      %22 = sbr.rel (0) target = $region5
    $region4: #{tpu_custom_call.1} parent=1 // pred_region
      %s24 = ssub.s32 1024, 1024
      %25 = vsyncadd [#allocation5], %s24
      %s26 = sshll.u32 [#allocation4], 4
      %s27 = int_to_ptr.vmem [resolvable:$true] %s26
      %32 = dma.hbm_to_vmem [thread:$0]  %s0, 1024, %s27, [#allocation5], 128, 128, 8
    $region5: #{tpu_custom_call.1} parent=1 // pred_fallthru
      _
    // Predicated region
    $region6: #{tpu_custom_call.1} parent=1 // pred_check
      _
    $region7: #{tpu_custom_call.1} parent=1 // pred_check_branch
      %34 = sbr.rel (0) target = $region9
    $region8: #{tpu_custom_call.1} parent=1 // pred_region
      %s36 = ssub.s32 16384, 16384
      %37 = vsyncadd [#allocation8], %s36
      %s38 = sshll.u32 [#allocation7], 4
      %s39 = int_to_ptr.vmem [resolvable:$true] %s38
      %44 = dma.hbm_to_vmem [thread:$0]  %s1, 16384, %s39, [#allocation8], 512, 512, 32
    $region9: #{tpu_custom_call.1} parent=1 // pred_fallthru
      _
    // Predicated region
    $region10: #{tpu_custom_call.1} parent=1 // pred_check
      _
    $region11: #{tpu_custom_call.1} parent=1 // pred_check_branch
      %46 = sbr.rel (0) target = $region13
    $region12: #{tpu_custom_call.1} parent=1 // pred_region
      %s48 = ssub.s32 64, 64
      %49 = vsyncadd [#allocation8], %s48
      %s51 = sshll.u32 [#allocation9], 4
      %s52 = int_to_ptr.vmem [resolvable:$true] %s51
      %54 = dma.hbm_to_vmem [thread:$0]  %s2, 64, %s52, [#allocation8]
    $region13: #{tpu_custom_call.1} parent=1 // pred_fallthru
      _
    // Predicated region
    $region14: #{tpu_custom_call.1} parent=1 // pred_check
      _
    $region15: #{tpu_custom_call.1} parent=1 // pred_check_branch
      %56 = sbr.rel (0) target = $region17
    $region16: #{tpu_custom_call.1} parent=1 // pred_region
      %s58 = ssub.s32 16384, 16384
      %59 = vsyncadd [#allocation11], %s58
      %s60 = sshll.u32 [#allocation10], 4
      %s61 = int_to_ptr.vmem [resolvable:$true] %s60
      %66 = dma.hbm_to_vmem [thread:$0]  %s3, 16384, %s61, [#allocation11], 512, 512, 32
    $region17: #{tpu_custom_call.1} parent=1 // pred_fallthru
      _
    // Predicated region
    $region18: #{tpu_custom_call.1} parent=1 // pred_check
      _
    $region19: #{tpu_custom_call.1} parent=1 // pred_check_branch
      %68 = sbr.rel (0) target = $region21
    $region20: #{tpu_custom_call.1} parent=1 // pred_region
      _
    $region21: #{tpu_custom_call.1} parent=1 // pred_fallthru
      _
    // Predicated region
    $region22: #{tpu_custom_call.1} parent=1 // pred_check
      _
    $region23: #{tpu_custom_call.1} parent=1 // pred_check_branch
      %70 = sbr.rel (0) target = $region25
    $region24: #{tpu_custom_call.1} parent=1 // pred_region
      %s72 = ssub.s32 256, 256
      %73 = vsyncadd [#allocation11], %s72
      %s74 = sshll.u32 [#allocation12], 4
      %s75 = int_to_ptr.vmem [resolvable:$true] %s74
      %80 = dma.hbm_to_vmem [thread:$0]  %s5, 256, %s75, [#allocation11], 128, 128, 8
    $region25: #{tpu_custom_call.1} parent=1 // pred_fallthru
      _
    // Predicated region
    $region26: #{tpu_custom_call.1} parent=1 // pred_check
      _
    $region27: #{tpu_custom_call.1} parent=1 // pred_check_branch
      %82 = sbr.rel (0) target = $region29
    $region28: #{tpu_custom_call.1} parent=1 // pred_region
      %s84 = ssub.s32 256, 256
      %85 = vsyncadd [#allocation14], %s84
      %s86 = sshll.u32 [#allocation13], 4
      %s87 = int_to_ptr.vmem [resolvable:$true] %s86
      %92 = dma.hbm_to_vmem [thread:$0]  %s6, 256, %s87, [#allocation14], 128, 128, 8
    $region29: #{tpu_custom_call.1} parent=1 // pred_fallthru
      _
    // Predicated region
    $region30: #{tpu_custom_call.1} parent=1 // pred_check
      _
    $region31: #{tpu_custom_call.1} parent=1 // pred_check_branch
      %94 = sbr.rel (0) target = $region33
    $region32: #{tpu_custom_call.1} parent=1 // pred_region
      %95 = dma.done [#allocation5], 1024
    $region33: #{tpu_custom_call.1} parent=1 // pred_fallthru
      _
    // Predicated region
    $region34: #{tpu_custom_call.1} parent=1 // pred_check
      _
    $region35: #{tpu_custom_call.1} parent=1 // pred_check_branch
      %97 = sbr.rel (0) target = $region37
    $region36: #{tpu_custom_call.1} parent=1 // pred_region
      %98 = dma.done [#allocation8], 16384
    $region37: #{tpu_custom_call.1} parent=1 // pred_fallthru
      _
    // Predicated region
    $region38: #{tpu_custom_call.1} parent=1 // pred_check
      _
    $region39: #{tpu_custom_call.1} parent=1 // pred_check_branch
      %100 = sbr.rel (0) target = $region41
    $region40: #{tpu_custom_call.1} parent=1 // pred_region
      %101 = dma.done [#allocation8], 64
    $region41: #{tpu_custom_call.1} parent=1 // pred_fallthru
      _
    // Predicated region
    $region42: #{tpu_custom_call.1} parent=1 // pred_check
      _
    $region43: #{tpu_custom_call.1} parent=1 // pred_check_branch
      %103 = sbr.rel (0) target = $region45
    $region44: #{tpu_custom_call.1} parent=1 // pred_region
      %104 = dma.done [#allocation11], 16384
    $region45: #{tpu_custom_call.1} parent=1 // pred_fallthru
      _
    // Predicated region
    $region46: #{tpu_custom_call.1} parent=1 // pred_check
      _
    $region47: #{tpu_custom_call.1} parent=1 // pred_check_branch
      %106 = sbr.rel (0) target = $region49
    $region48: #{tpu_custom_call.1} parent=1 // pred_region
      %107 = dma.done [#allocation11], 256
    $region49: #{tpu_custom_call.1} parent=1 // pred_fallthru
      _
    // Predicated region
    $region50: #{tpu_custom_call.1} parent=1 // pred_check
      _
    $region51: #{tpu_custom_call.1} parent=1 // pred_check_branch
      %109 = sbr.rel (0) target = $region53
    $region52: #{tpu_custom_call.1} parent=1 // pred_region
      %110 = dma.done [#allocation14], 256
    $region53: #{tpu_custom_call.1} parent=1 // pred_fallthru
      _
    %p111 = scmp.eq.s32.totalorder 0, 0
    // Predicated region
    $region54: #{tpu_custom_call.1} parent=1 // pred_check
      %p112 = pneg %p111
    $region55: #{tpu_custom_call.1} parent=1 // pred_check_branch
      %114 = sbr.rel (%p112) target = $region57
    $region56: #{tpu_custom_call.1} parent=1 // pred_region
      %v115 = vld [vmem:[#allocation12] sm:$0xff]
      %v116 = vld [vmem:[#allocation12 + $0x8] sm:$0xff]
      %117 = vst [vmem:[#allocation2] sm:$0xff] %v115
      %118 = vst [vmem:[#allocation2 + $0x8] sm:$0xff] %v116
      %v119 = vld [vmem:[#allocation13] sm:$0xff]
      %v120 = vld [vmem:[#allocation13 + $0x8] sm:$0xff]
      %121 = vst [vmem:[#allocation3] sm:$0xff] %v119
      %122 = vst [vmem:[#allocation3 + $0x8] sm:$0xff] %v120
    $region57: #{tpu_custom_call.1} parent=1 // pred_fallthru
      _
    %v123 = vld [vmem:[#allocation4] sm:$0xff]
    %v124 = vld [vmem:[#allocation3] sm:$0xff]
    %v125 = vld [vmem:[#allocation2] sm:$0xff]
    %v126 = vld [vmem:[#allocation7] sm:$0xff]
    %v127 = vld [vmem:[#allocation7 + $0x8] sm:$0xff]
    %v128 = vld [vmem:[#allocation7 + $0x10] sm:$0xff]
    %v129 = vld [vmem:[#allocation7 + $0x18] sm:$0xff]
    %v130 = vld [vmem:[#allocation7 + $0x20] sm:$0xff]
    %v131 = vld [vmem:[#allocation7 + $0x28] sm:$0xff]
    %v132 = vld [vmem:[#allocation7 + $0x30] sm:$0xff]
    %v133 = vld [vmem:[#allocation7 + $0x38] sm:$0xff]
    %v134 = vld [vmem:[#allocation7 + $0x40] sm:$0xff]
    %v135 = vld [vmem:[#allocation7 + $0x48] sm:$0xff]
    %v136 = vld [vmem:[#allocation7 + $0x50] sm:$0xff]
    %v137 = vld [vmem:[#allocation7 + $0x58] sm:$0xff]
    %v138 = vld [vmem:[#allocation7 + $0x60] sm:$0xff]
    %v139 = vld [vmem:[#allocation7 + $0x68] sm:$0xff]
    %v140 = vld [vmem:[#allocation7 + $0x70] sm:$0xff]
    %v141 = vld [vmem:[#allocation7 + $0x78] sm:$0xff]
    %v142 = vld [vmem:[#allocation7 + $0x80] sm:$0xff]
    %v143 = vld [vmem:[#allocation7 + $0x88] sm:$0xff]
    %v144 = vld [vmem:[#allocation7 + $0x90] sm:$0xff]
    %v145 = vld [vmem:[#allocation7 + $0x98] sm:$0xff]
    %v146 = vld [vmem:[#allocation7 + $0xa0] sm:$0xff]
    %v147 = vld [vmem:[#allocation7 + $0xa8] sm:$0xff]
    %v148 = vld [vmem:[#allocation7 + $0xb0] sm:$0xff]
    %v149 = vld [vmem:[#allocation7 + $0xb8] sm:$0xff]
    %v150 = vld [vmem:[#allocation7 + $0xc0] sm:$0xff]
    %v151 = vld [vmem:[#allocation7 + $0xc8] sm:$0xff]
    %v152 = vld [vmem:[#allocation7 + $0xd0] sm:$0xff]
    %v153 = vld [vmem:[#allocation7 + $0xd8] sm:$0xff]
    %v154 = vld [vmem:[#allocation7 + $0xe0] sm:$0xff]
    %v155 = vld [vmem:[#allocation7 + $0xe8] sm:$0xff]
    %v156 = vld [vmem:[#allocation7 + $0xf0] sm:$0xff]
    %v157 = vld [vmem:[#allocation7 + $0xf8] sm:$0xff]
    %v158 = vld [vmem:[#allocation7 + $0x100] sm:$0xff]
    %v159 = vld [vmem:[#allocation7 + $0x108] sm:$0xff]
    %v160 = vld [vmem:[#allocation7 + $0x110] sm:$0xff]
    %v161 = vld [vmem:[#allocation7 + $0x118] sm:$0xff]
    %v162 = vld [vmem:[#allocation7 + $0x120] sm:$0xff]
    %v163 = vld [vmem:[#allocation7 + $0x128] sm:$0xff]
    %v164 = vld [vmem:[#allocation7 + $0x130] sm:$0xff]
    %v165 = vld [vmem:[#allocation7 + $0x138] sm:$0xff]
    %v166 = vld [vmem:[#allocation7 + $0x140] sm:$0xff]
    %v167 = vld [vmem:[#allocation7 + $0x148] sm:$0xff]
    %v168 = vld [vmem:[#allocation7 + $0x150] sm:$0xff]
    %v169 = vld [vmem:[#allocation7 + $0x158] sm:$0xff]
    %v170 = vld [vmem:[#allocation7 + $0x160] sm:$0xff]
    %v171 = vld [vmem:[#allocation7 + $0x168] sm:$0xff]
    %v172 = vld [vmem:[#allocation7 + $0x170] sm:$0xff]
    %v173 = vld [vmem:[#allocation7 + $0x178] sm:$0xff]
    %v174 = vld [vmem:[#allocation7 + $0x180] sm:$0xff]
    %v175 = vld [vmem:[#allocation7 + $0x188] sm:$0xff]
    %v176 = vld [vmem:[#allocation7 + $0x190] sm:$0xff]
    %v177 = vld [vmem:[#allocation7 + $0x198] sm:$0xff]
    %v178 = vld [vmem:[#allocation7 + $0x1a0] sm:$0xff]
    %v179 = vld [vmem:[#allocation7 + $0x1a8] sm:$0xff]
    %v180 = vld [vmem:[#allocation7 + $0x1b0] sm:$0xff]
    %v181 = vld [vmem:[#allocation7 + $0x1b8] sm:$0xff]
    %v182 = vld [vmem:[#allocation7 + $0x1c0] sm:$0xff]
    %v183 = vld [vmem:[#allocation7 + $0x1c8] sm:$0xff]
    %v184 = vld [vmem:[#allocation7 + $0x1d0] sm:$0xff]
    %v185 = vld [vmem:[#allocation7 + $0x1d8] sm:$0xff]
    %v186 = vld [vmem:[#allocation7 + $0x1e0] sm:$0xff]
    %v187 = vld [vmem:[#allocation7 + $0x1e8] sm:$0xff]
    %v188 = vld [vmem:[#allocation7 + $0x1f0] sm:$0xff]
    %v189 = vld [vmem:[#allocation7 + $0x1f8] sm:$0xff]
    %v190 = vld [vmem:[#allocation7 + $0x200] sm:$0xff]
    %v191 = vld [vmem:[#allocation7 + $0x208] sm:$0xff]
    %v192 = vld [vmem:[#allocation7 + $0x210] sm:$0xff]
    %v193 = vld [vmem:[#allocation7 + $0x218] sm:$0xff]
    %v194 = vld [vmem:[#allocation7 + $0x220] sm:$0xff]
    %v195 = vld [vmem:[#allocation7 + $0x228] sm:$0xff]
    %v196 = vld [vmem:[#allocation7 + $0x230] sm:$0xff]
    %v197 = vld [vmem:[#allocation7 + $0x238] sm:$0xff]
    %v198 = vld [vmem:[#allocation7 + $0x240] sm:$0xff]
    %v199 = vld [vmem:[#allocation7 + $0x248] sm:$0xff]
    %v200 = vld [vmem:[#allocation7 + $0x250] sm:$0xff]
    %v201 = vld [vmem:[#allocation7 + $0x258] sm:$0xff]
    %v202 = vld [vmem:[#allocation7 + $0x260] sm:$0xff]
    %v203 = vld [vmem:[#allocation7 + $0x268] sm:$0xff]
    %v204 = vld [vmem:[#allocation7 + $0x270] sm:$0xff]
    %v205 = vld [vmem:[#allocation7 + $0x278] sm:$0xff]
    %v206 = vld [vmem:[#allocation7 + $0x280] sm:$0xff]
    %v207 = vld [vmem:[#allocation7 + $0x288] sm:$0xff]
    %v208 = vld [vmem:[#allocation7 + $0x290] sm:$0xff]
    %v209 = vld [vmem:[#allocation7 + $0x298] sm:$0xff]
    %v210 = vld [vmem:[#allocation7 + $0x2a0] sm:$0xff]
    %v211 = vld [vmem:[#allocation7 + $0x2a8] sm:$0xff]
    %v212 = vld [vmem:[#allocation7 + $0x2b0] sm:$0xff]
    %v213 = vld [vmem:[#allocation7 + $0x2b8] sm:$0xff]
    %v214 = vld [vmem:[#allocation7 + $0x2c0] sm:$0xff]
    %v215 = vld [vmem:[#allocation7 + $0x2c8] sm:$0xff]
    %v216 = vld [vmem:[#allocation7 + $0x2d0] sm:$0xff]
    %v217 = vld [vmem:[#allocation7 + $0x2d8] sm:$0xff]
    %v218 = vld [vmem:[#allocation7 + $0x2e0] sm:$0xff]
    %v219 = vld [vmem:[#allocation7 + $0x2e8] sm:$0xff]
    %v220 = vld [vmem:[#allocation7 + $0x2f0] sm:$0xff]
    %v221 = vld [vmem:[#allocation7 + $0x2f8] sm:$0xff]
    %v222 = vld [vmem:[#allocation7 + $0x300] sm:$0xff]
    %v223 = vld [vmem:[#allocation7 + $0x308] sm:$0xff]
    %v224 = vld [vmem:[#allocation7 + $0x310] sm:$0xff]
    %v225 = vld [vmem:[#allocation7 + $0x318] sm:$0xff]
    %v226 = vld [vmem:[#allocation7 + $0x320] sm:$0xff]
    %v227 = vld [vmem:[#allocation7 + $0x328] sm:$0xff]
    %v228 = vld [vmem:[#allocation7 + $0x330] sm:$0xff]
    %v229 = vld [vmem:[#allocation7 + $0x338] sm:$0xff]
    %v230 = vld [vmem:[#allocation7 + $0x340] sm:$0xff]
    %v231 = vld [vmem:[#allocation7 + $0x348] sm:$0xff]
    %v232 = vld [vmem:[#allocation7 + $0x350] sm:$0xff]
    %v233 = vld [vmem:[#allocation7 + $0x358] sm:$0xff]
    %v234 = vld [vmem:[#allocation7 + $0x360] sm:$0xff]
    %v235 = vld [vmem:[#allocation7 + $0x368] sm:$0xff]
    %v236 = vld [vmem:[#allocation7 + $0x370] sm:$0xff]
    %v237 = vld [vmem:[#allocation7 + $0x378] sm:$0xff]
    %v238 = vld [vmem:[#allocation7 + $0x380] sm:$0xff]
    %v239 = vld [vmem:[#allocation7 + $0x388] sm:$0xff]
    %v240 = vld [vmem:[#allocation7 + $0x390] sm:$0xff]
    %v241 = vld [vmem:[#allocation7 + $0x398] sm:$0xff]
    %v242 = vld [vmem:[#allocation7 + $0x3a0] sm:$0xff]
    %v243 = vld [vmem:[#allocation7 + $0x3a8] sm:$0xff]
    %v244 = vld [vmem:[#allocation7 + $0x3b0] sm:$0xff]
    %v245 = vld [vmem:[#allocation7 + $0x3b8] sm:$0xff]
    %v246 = vld [vmem:[#allocation7 + $0x3c0] sm:$0xff]
    %v247 = vld [vmem:[#allocation7 + $0x3c8] sm:$0xff]
    %v248 = vld [vmem:[#allocation7 + $0x3d0] sm:$0xff]
    %v249 = vld [vmem:[#allocation7 + $0x3d8] sm:$0xff]
    %v250 = vld [vmem:[#allocation7 + $0x3e0] sm:$0xff]
    %v251 = vld [vmem:[#allocation7 + $0x3e8] sm:$0xff]
    %v252 = vld [vmem:[#allocation7 + $0x3f0] sm:$0xff]
    %v253 = vld [vmem:[#allocation7 + $0x3f8] sm:$0xff]
    %v254 = vld [vmem:[#allocation9] sm:$0xf]
    %v256 = vlaneseq
    %v257 = vshrl.u32 %v256, 7
    %v258 = vsub.s32 0, %v257
    %v259 = vrot.slane %v254, %v258
    %v260 = vlaneseq
    %v261 = vshrl.u32 %v260, 7
    %v262 = vsub.s32 1, %v261
    %v263 = vrot.slane %v254, %v262
    %v264 = vlaneseq
    %v265 = vshrl.u32 %v264, 7
    %v266 = vsub.s32 2, %v265
    %v267 = vrot.slane %v254, %v266
    %v268 = vlaneseq
    %v269 = vshrl.u32 %v268, 7
    %v270 = vsub.s32 3, %v269
    %v271 = vrot.slane %v254, %v270
    %276 = vmatprep.subr.mxu0 %v187
    %277 = vmatpush1.msra.mxu0 %v186
    %278 = vmatprep.subr.mxu0 %v183
    %279 = vmatpush1.msra.mxu0 %v182
    %280 = vmatprep.subr.mxu0 %v179
    %281 = vmatpush1.msra.mxu0 %v178
    %282 = vmatprep.subr.mxu0 %v175
    %283 = vmatpush1.msra.mxu0 %v174
    %284 = vmatprep.subr.mxu0 %v171
    %285 = vmatpush1.msra.mxu0 %v170
    %286 = vmatprep.subr.mxu0 %v167
    %287 = vmatpush1.msra.mxu0 %v166
    %288 = vmatprep.subr.mxu0 %v163
    %289 = vmatpush1.msra.mxu0 %v162
    %290 = vmatprep.subr.mxu0 %v159
    %291 = vmatpush1.msra.mxu0 %v158
    %292 = vmatprep.subr.mxu0 %v155
    %293 = vmatpush1.msra.mxu0 %v154
    %294 = vmatprep.subr.mxu0 %v151
    %295 = vmatpush1.msra.mxu0 %v150
    %296 = vmatprep.subr.mxu0 %v147
    %297 = vmatpush1.msra.mxu0 %v146
    %298 = vmatprep.subr.mxu0 %v143
    %299 = vmatpush1.msra.mxu0 %v142
    %300 = vmatprep.subr.mxu0 %v139
    %301 = vmatpush1.msra.mxu0 %v138
    %302 = vmatprep.subr.mxu0 %v135
    %303 = vmatpush1.msra.mxu0 %v134
    %304 = vmatprep.subr.mxu0 %v131
    %305 = vmatpush1.msra.mxu0 %v130
    %306 = vmatprep.subr.mxu0 %v127
    %307 = vmatpush1.msra.mxu0 %v126
    %308 = vmatprep.subr.mxu0 %v251
    %309 = vmatpush2.msra.mxu0 %v250
    %310 = vmatprep.subr.mxu0 %v247
    %311 = vmatpush2.msra.mxu0 %v246
    %312 = vmatprep.subr.mxu0 %v243
    %313 = vmatpush2.msra.mxu0 %v242
    %314 = vmatprep.subr.mxu0 %v239
    %315 = vmatpush2.msra.mxu0 %v238
    %316 = vmatprep.subr.mxu0 %v235
    %317 = vmatpush2.msra.mxu0 %v234
    %318 = vmatprep.subr.mxu0 %v231
    %319 = vmatpush2.msra.mxu0 %v230
    %320 = vmatprep.subr.mxu0 %v227
    %321 = vmatpush2.msra.mxu0 %v226
    %322 = vmatprep.subr.mxu0 %v223
    %323 = vmatpush2.msra.mxu0 %v222
    %324 = vmatprep.subr.mxu0 %v219
    %325 = vmatpush2.msra.mxu0 %v218
    %326 = vmatprep.subr.mxu0 %v215
    %327 = vmatpush2.msra.mxu0 %v214
    %328 = vmatprep.subr.mxu0 %v211
    %329 = vmatpush2.msra.mxu0 %v210
    %330 = vmatprep.subr.mxu0 %v207
    %331 = vmatpush2.msra.mxu0 %v206
    %332 = vmatprep.subr.mxu0 %v203
    %333 = vmatpush2.msra.mxu0 %v202
    %334 = vmatprep.subr.mxu0 %v199
    %335 = vmatpush2.msra.mxu0 %v198
    %336 = vmatprep.subr.mxu0 %v195
    %337 = vmatpush2.msra.mxu0 %v194
    %338 = vmatprep.subr.mxu0 %v191
    %339 = vmatpush2.msra.mxu0 %v190
    %340 = vmatprep.mubr.f32.mxu0 %v125
    %341 = vmatmul.mubr.f32.gmra.mxu0 %v123
    %v342 = vpop.f32.mrf.mxu0
    %v343 = vadd.f32 %v259, %v342
    %v344 = vpop.f32.mrf.mxu0
    %v345 = vadd.f32 %v263, %v344
    %346 = vdwg.mxu0
    %347 = vmatprep.subr.mxu0 %v189
    %348 = vmatpush1.msra.mxu0 %v188
    %349 = vmatprep.subr.mxu0 %v185
    %350 = vmatpush1.msra.mxu0 %v184
    %351 = vmatprep.subr.mxu0 %v181
    %352 = vmatpush1.msra.mxu0 %v180
    %353 = vmatprep.subr.mxu0 %v177
    %354 = vmatpush1.msra.mxu0 %v176
    %355 = vmatprep.subr.mxu0 %v173
    %356 = vmatpush1.msra.mxu0 %v172
    %357 = vmatprep.subr.mxu0 %v169
    %358 = vmatpush1.msra.mxu0 %v168
    %359 = vmatprep.subr.mxu0 %v165
    %360 = vmatpush1.msra.mxu0 %v164
    %361 = vmatprep.subr.mxu0 %v161
    %362 = vmatpush1.msra.mxu0 %v160
    %363 = vmatprep.subr.mxu0 %v157
    %364 = vmatpush1.msra.mxu0 %v156
    %365 = vmatprep.subr.mxu0 %v153
    %366 = vmatpush1.msra.mxu0 %v152
    %367 = vmatprep.subr.mxu0 %v149
    %368 = vmatpush1.msra.mxu0 %v148
    %369 = vmatprep.subr.mxu0 %v145
    %370 = vmatpush1.msra.mxu0 %v144
    %371 = vmatprep.subr.mxu0 %v141
    %372 = vmatpush1.msra.mxu0 %v140
    %373 = vmatprep.subr.mxu0 %v137
    %374 = vmatpush1.msra.mxu0 %v136
    %375 = vmatprep.subr.mxu0 %v133
    %376 = vmatpush1.msra.mxu0 %v132
    %377 = vmatprep.subr.mxu0 %v129
    %378 = vmatpush1.msra.mxu0 %v128
    %379 = vmatprep.subr.mxu0 %v253
    %380 = vmatpush2.msra.mxu0 %v252
    %381 = vmatprep.subr.mxu0 %v249
    %382 = vmatpush2.msra.mxu0 %v248
    %383 = vmatprep.subr.mxu0 %v245
    %384 = vmatpush2.msra.mxu0 %v244
    %385 = vmatprep.subr.mxu0 %v241
    %386 = vmatpush2.msra.mxu0 %v240
    %387 = vmatprep.subr.mxu0 %v237
    %388 = vmatpush2.msra.mxu0 %v236
    %389 = vmatprep.subr.mxu0 %v233
    %390 = vmatpush2.msra.mxu0 %v232
    %391 = vmatprep.subr.mxu0 %v229
    %392 = vmatpush2.msra.mxu0 %v228
    %393 = vmatprep.subr.mxu0 %v225
    %394 = vmatpush2.msra.mxu0 %v224
    %395 = vmatprep.subr.mxu0 %v221
    %396 = vmatpush2.msra.mxu0 %v220
    %397 = vmatprep.subr.mxu0 %v217
    %398 = vmatpush2.msra.mxu0 %v216
    %399 = vmatprep.subr.mxu0 %v213
    %400 = vmatpush2.msra.mxu0 %v212
    %401 = vmatprep.subr.mxu0 %v209
    %402 = vmatpush2.msra.mxu0 %v208
    %403 = vmatprep.subr.mxu0 %v205
    %404 = vmatpush2.msra.mxu0 %v204
    %405 = vmatprep.subr.mxu0 %v201
    %406 = vmatpush2.msra.mxu0 %v200
    %407 = vmatprep.subr.mxu0 %v197
    %408 = vmatpush2.msra.mxu0 %v196
    %409 = vmatprep.subr.mxu0 %v193
    %410 = vmatpush2.msra.mxu0 %v192
    %411 = vmatprep.mubr.f32.mxu0 %v125
    %412 = vmatmul.mubr.f32.gmra.mxu0 %v123
    %v413 = vpop.f32.mrf.mxu0
    %v414 = vadd.f32 %v267, %v413
    %v415 = vpop.f32.mrf.mxu0
    %v416 = vadd.f32 %v271, %v415
    %417 = vdwg.mxu0
    %v418 = vxor.u32 %v343, 2147483648
    %v419 = vmul.f32 %v418, 1.442695
    %v420 = vpow.pop %v419
    %v421 = vadd.f32 %v420, 1.0
    %v422 = vrcp.pop %v421
    %v423 = vmul.f32 1.0, %v422
    %v424 = vxor.u32 %v345, 2147483648
    %v425 = vmul.f32 %v424, 1.442695
    %v426 = vpow.pop %v425
    %v427 = vadd.f32 %v426, 1.0
    %v428 = vrcp.pop %v427
    %v429 = vmul.f32 1.0, %v428
    %v430 = vtanh.pop %v414
    %v431 = vxor.u32 %v416, 2147483648
    %v432 = vmul.f32 %v431, 1.442695
    %v433 = vpow.pop %v432
    %v434 = vadd.f32 %v433, 1.0
    %v435 = vrcp.pop %v434
    %v436 = vmul.f32 1.0, %v435
    %v437 = vmul.f32 %v429, %v124
    %v438 = vmul.f32 %v423, %v430
    %v439 = vadd.f32 %v437, %v438
    %v440 = vtanh.pop %v439
    %v441 = vmul.f32 %v436, %v440
    %442 = vst [vmem:[#allocation2] sm:$0xff] %v441
    %443 = vst [vmem:[#allocation3] sm:$0xff] %v439
    %s444 = scalar_lea.vmem [#allocation3], 8
    %v445 = vld [vmem:[%s444] sm:$0xff]
    %s446 = scalar_lea.vmem [#allocation2], 8
    %v447 = vld [vmem:[%s446] sm:$0xff]
    %v448 = vld [vmem:[#allocation10] sm:$0xff]
    %v449 = vld [vmem:[#allocation10 + $0x8] sm:$0xff]
    %v450 = vld [vmem:[#allocation10 + $0x10] sm:$0xff]
    %v451 = vld [vmem:[#allocation10 + $0x18] sm:$0xff]
    %v452 = vld [vmem:[#allocation10 + $0x20] sm:$0xff]
    %v453 = vld [vmem:[#allocation10 + $0x28] sm:$0xff]
    %v454 = vld [vmem:[#allocation10 + $0x30] sm:$0xff]
    %v455 = vld [vmem:[#allocation10 + $0x38] sm:$0xff]
    %v456 = vld [vmem:[#allocation10 + $0x40] sm:$0xff]
    %v457 = vld [vmem:[#allocation10 + $0x48] sm:$0xff]
    %v458 = vld [vmem:[#allocation10 + $0x50] sm:$0xff]
    %v459 = vld [vmem:[#allocation10 + $0x58] sm:$0xff]
    %v460 = vld [vmem:[#allocation10 + $0x60] sm:$0xff]
    %v461 = vld [vmem:[#allocation10 + $0x68] sm:$0xff]
    %v462 = vld [vmem:[#allocation10 + $0x70] sm:$0xff]
    %v463 = vld [vmem:[#allocation10 + $0x78] sm:$0xff]
    %v464 = vld [vmem:[#allocation10 + $0x80] sm:$0xff]
    %v465 = vld [vmem:[#allocation10 + $0x88] sm:$0xff]
    %v466 = vld [vmem:[#allocation10 + $0x90] sm:$0xff]
    %v467 = vld [vmem:[#allocation10 + $0x98] sm:$0xff]
    %v468 = vld [vmem:[#allocation10 + $0xa0] sm:$0xff]
    %v469 = vld [vmem:[#allocation10 + $0xa8] sm:$0xff]
    %v470 = vld [vmem:[#allocation10 + $0xb0] sm:$0xff]
    %v471 = vld [vmem:[#allocation10 + $0xb8] sm:$0xff]
    %v472 = vld [vmem:[#allocation10 + $0xc0] sm:$0xff]
    %v473 = vld [vmem:[#allocation10 + $0xc8] sm:$0xff]
    %v474 = vld [vmem:[#allocation10 + $0xd0] sm:$0xff]
    %v475 = vld [vmem:[#allocation10 + $0xd8] sm:$0xff]
    %v476 = vld [vmem:[#allocation10 + $0xe0] sm:$0xff]
    %v477 = vld [vmem:[#allocation10 + $0xe8] sm:$0xff]
    %v478 = vld [vmem:[#allocation10 + $0xf0] sm:$0xff]
    %v479 = vld [vmem:[#allocation10 + $0xf8] sm:$0xff]
    %v480 = vld [vmem:[#allocation10 + $0x100] sm:$0xff]
    %v481 = vld [vmem:[#allocation10 + $0x108] sm:$0xff]
    %v482 = vld [vmem:[#allocation10 + $0x110] sm:$0xff]
    %v483 = vld [vmem:[#allocation10 + $0x118] sm:$0xff]
    %v484 = vld [vmem:[#allocation10 + $0x120] sm:$0xff]
    %v485 = vld [vmem:[#allocation10 + $0x128] sm:$0xff]
    %v486 = vld [vmem:[#allocation10 + $0x130] sm:$0xff]
    %v487 = vld [vmem:[#allocation10 + $0x138] sm:$0xff]
    %v488 = vld [vmem:[#allocation10 + $0x140] sm:$0xff]
    %v489 = vld [vmem:[#allocation10 + $0x148] sm:$0xff]
    %v490 = vld [vmem:[#allocation10 + $0x150] sm:$0xff]
    %v491 = vld [vmem:[#allocation10 + $0x158] sm:$0xff]
    %v492 = vld [vmem:[#allocation10 + $0x160] sm:$0xff]
    %v493 = vld [vmem:[#allocation10 + $0x168] sm:$0xff]
    %v494 = vld [vmem:[#allocation10 + $0x170] sm:$0xff]
    %v495 = vld [vmem:[#allocation10 + $0x178] sm:$0xff]
    %v496 = vld [vmem:[#allocation10 + $0x180] sm:$0xff]
    %v497 = vld [vmem:[#allocation10 + $0x188] sm:$0xff]
    %v498 = vld [vmem:[#allocation10 + $0x190] sm:$0xff]
    %v499 = vld [vmem:[#allocation10 + $0x198] sm:$0xff]
    %v500 = vld [vmem:[#allocation10 + $0x1a0] sm:$0xff]
    %v501 = vld [vmem:[#allocation10 + $0x1a8] sm:$0xff]
    %v502 = vld [vmem:[#allocation10 + $0x1b0] sm:$0xff]
    %v503 = vld [vmem:[#allocation10 + $0x1b8] sm:$0xff]
    %v504 = vld [vmem:[#allocation10 + $0x1c0] sm:$0xff]
    %v505 = vld [vmem:[#allocation10 + $0x1c8] sm:$0xff]
    %v506 = vld [vmem:[#allocation10 + $0x1d0] sm:$0xff]
    %v507 = vld [vmem:[#allocation10 + $0x1d8] sm:$0xff]
    %v508 = vld [vmem:[#allocation10 + $0x1e0] sm:$0xff]
    %v509 = vld [vmem:[#allocation10 + $0x1e8] sm:$0xff]
    %v510 = vld [vmem:[#allocation10 + $0x1f0] sm:$0xff]
    %v511 = vld [vmem:[#allocation10 + $0x1f8] sm:$0xff]
    %v512 = vld [vmem:[#allocation10 + $0x200] sm:$0xff]
    %v513 = vld [vmem:[#allocation10 + $0x208] sm:$0xff]
    %v514 = vld [vmem:[#allocation10 + $0x210] sm:$0xff]
    %v515 = vld [vmem:[#allocation10 + $0x218] sm:$0xff]
    %v516 = vld [vmem:[#allocation10 + $0x220] sm:$0xff]
    %v517 = vld [vmem:[#allocation10 + $0x228] sm:$0xff]
    %v518 = vld [vmem:[#allocation10 + $0x230] sm:$0xff]
    %v519 = vld [vmem:[#allocation10 + $0x238] sm:$0xff]
    %v520 = vld [vmem:[#allocation10 + $0x240] sm:$0xff]
    %v521 = vld [vmem:[#allocation10 + $0x248] sm:$0xff]
    %v522 = vld [vmem:[#allocation10 + $0x250] sm:$0xff]
    %v523 = vld [vmem:[#allocation10 + $0x258] sm:$0xff]
    %v524 = vld [vmem:[#allocation10 + $0x260] sm:$0xff]
    %v525 = vld [vmem:[#allocation10 + $0x268] sm:$0xff]
    %v526 = vld [vmem:[#allocation10 + $0x270] sm:$0xff]
    %v527 = vld [vmem:[#allocation10 + $0x278] sm:$0xff]
    %v528 = vld [vmem:[#allocation10 + $0x280] sm:$0xff]
    %v529 = vld [vmem:[#allocation10 + $0x288] sm:$0xff]
    %v530 = vld [vmem:[#allocation10 + $0x290] sm:$0xff]
    %v531 = vld [vmem:[#allocation10 + $0x298] sm:$0xff]
    %v532 = vld [vmem:[#allocation10 + $0x2a0] sm:$0xff]
    %v533 = vld [vmem:[#allocation10 + $0x2a8] sm:$0xff]
    %v534 = vld [vmem:[#allocation10 + $0x2b0] sm:$0xff]
    %v535 = vld [vmem:[#allocation10 + $0x2b8] sm:$0xff]
    %v536 = vld [vmem:[#allocation10 + $0x2c0] sm:$0xff]
    %v537 = vld [vmem:[#allocation10 + $0x2c8] sm:$0xff]
    %v538 = vld [vmem:[#allocation10 + $0x2d0] sm:$0xff]
    %v539 = vld [vmem:[#allocation10 + $0x2d8] sm:$0xff]
    %v540 = vld [vmem:[#allocation10 + $0x2e0] sm:$0xff]
    %v541 = vld [vmem:[#allocation10 + $0x2e8] sm:$0xff]
    %v542 = vld [vmem:[#allocation10 + $0x2f0] sm:$0xff]
    %v543 = vld [vmem:[#allocation10 + $0x2f8] sm:$0xff]
    %v544 = vld [vmem:[#allocation10 + $0x300] sm:$0xff]
    %v545 = vld [vmem:[#allocation10 + $0x308] sm:$0xff]
    %v546 = vld [vmem:[#allocation10 + $0x310] sm:$0xff]
    %v547 = vld [vmem:[#allocation10 + $0x318] sm:$0xff]
    %v548 = vld [vmem:[#allocation10 + $0x320] sm:$0xff]
    %v549 = vld [vmem:[#allocation10 + $0x328] sm:$0xff]
    %v550 = vld [vmem:[#allocation10 + $0x330] sm:$0xff]
    %v551 = vld [vmem:[#allocation10 + $0x338] sm:$0xff]
    %v552 = vld [vmem:[#allocation10 + $0x340] sm:$0xff]
    %v553 = vld [vmem:[#allocation10 + $0x348] sm:$0xff]
    %v554 = vld [vmem:[#allocation10 + $0x350] sm:$0xff]
    %v555 = vld [vmem:[#allocation10 + $0x358] sm:$0xff]
    %v556 = vld [vmem:[#allocation10 + $0x360] sm:$0xff]
    %v557 = vld [vmem:[#allocation10 + $0x368] sm:$0xff]
    %v558 = vld [vmem:[#allocation10 + $0x370] sm:$0xff]
    %v559 = vld [vmem:[#allocation10 + $0x378] sm:$0xff]
    %v560 = vld [vmem:[#allocation10 + $0x380] sm:$0xff]
    %v561 = vld [vmem:[#allocation10 + $0x388] sm:$0xff]
    %v562 = vld [vmem:[#allocation10 + $0x390] sm:$0xff]
    %v563 = vld [vmem:[#allocation10 + $0x398] sm:$0xff]
    %v564 = vld [vmem:[#allocation10 + $0x3a0] sm:$0xff]
    %v565 = vld [vmem:[#allocation10 + $0x3a8] sm:$0xff]
    %v566 = vld [vmem:[#allocation10 + $0x3b0] sm:$0xff]
    %v567 = vld [vmem:[#allocation10 + $0x3b8] sm:$0xff]
    %v568 = vld [vmem:[#allocation10 + $0x3c0] sm:$0xff]
    %v569 = vld [vmem:[#allocation10 + $0x3c8] sm:$0xff]
    %v570 = vld [vmem:[#allocation10 + $0x3d0] sm:$0xff]
    %v571 = vld [vmem:[#allocation10 + $0x3d8] sm:$0xff]
    %v572 = vld [vmem:[#allocation10 + $0x3e0] sm:$0xff]
    %v573 = vld [vmem:[#allocation10 + $0x3e8] sm:$0xff]
    %v574 = vld [vmem:[#allocation10 + $0x3f0] sm:$0xff]
    %v575 = vld [vmem:[#allocation10 + $0x3f8] sm:$0xff]
    %v576 = vld [vmem:[%s4] sm:$0xf]
    %v578 = vlaneseq
    %v579 = vshrl.u32 %v578, 7
    %v580 = vsub.s32 0, %v579
    %v581 = vrot.slane %v576, %v580
    %v582 = vlaneseq
    %v583 = vshrl.u32 %v582, 7
    %v584 = vsub.s32 1, %v583
    %v585 = vrot.slane %v576, %v584
    %v586 = vlaneseq
    %v587 = vshrl.u32 %v586, 7
    %v588 = vsub.s32 2, %v587
    %v589 = vrot.slane %v576, %v588
    %v590 = vlaneseq
    %v591 = vshrl.u32 %v590, 7
    %v592 = vsub.s32 3, %v591
    %v593 = vrot.slane %v576, %v592
    %598 = vmatprep.subr.mxu0 %v509
    %599 = vmatpush1.msra.mxu0 %v508
    %600 = vmatprep.subr.mxu0 %v505
    %601 = vmatpush1.msra.mxu0 %v504
    %602 = vmatprep.subr.mxu0 %v501
    %603 = vmatpush1.msra.mxu0 %v500
    %604 = vmatprep.subr.mxu0 %v497
    %605 = vmatpush1.msra.mxu0 %v496
    %606 = vmatprep.subr.mxu0 %v493
    %607 = vmatpush1.msra.mxu0 %v492
    %608 = vmatprep.subr.mxu0 %v489
    %609 = vmatpush1.msra.mxu0 %v488
    %610 = vmatprep.subr.mxu0 %v485
    %611 = vmatpush1.msra.mxu0 %v484
    %612 = vmatprep.subr.mxu0 %v481
    %613 = vmatpush1.msra.mxu0 %v480
    %614 = vmatprep.subr.mxu0 %v477
    %615 = vmatpush1.msra.mxu0 %v476
    %616 = vmatprep.subr.mxu0 %v473
    %617 = vmatpush1.msra.mxu0 %v472
    %618 = vmatprep.subr.mxu0 %v469
    %619 = vmatpush1.msra.mxu0 %v468
    %620 = vmatprep.subr.mxu0 %v465
    %621 = vmatpush1.msra.mxu0 %v464
    %622 = vmatprep.subr.mxu0 %v461
    %623 = vmatpush1.msra.mxu0 %v460
    %624 = vmatprep.subr.mxu0 %v457
    %625 = vmatpush1.msra.mxu0 %v456
    %626 = vmatprep.subr.mxu0 %v453
    %627 = vmatpush1.msra.mxu0 %v452
    %628 = vmatprep.subr.mxu0 %v449
    %629 = vmatpush1.msra.mxu0 %v448
    %630 = vmatprep.subr.mxu0 %v573
    %631 = vmatpush2.msra.mxu0 %v572
    %632 = vmatprep.subr.mxu0 %v569
    %633 = vmatpush2.msra.mxu0 %v568
    %634 = vmatprep.subr.mxu0 %v565
    %635 = vmatpush2.msra.mxu0 %v564
    %636 = vmatprep.subr.mxu0 %v561
    %637 = vmatpush2.msra.mxu0 %v560
    %638 = vmatprep.subr.mxu0 %v557
    %639 = vmatpush2.msra.mxu0 %v556
    %640 = vmatprep.subr.mxu0 %v553
    %641 = vmatpush2.msra.mxu0 %v552
    %642 = vmatprep.subr.mxu0 %v549
    %643 = vmatpush2.msra.mxu0 %v548
    %644 = vmatprep.subr.mxu0 %v545
    %645 = vmatpush2.msra.mxu0 %v544
    %646 = vmatprep.subr.mxu0 %v541
    %647 = vmatpush2.msra.mxu0 %v540
    %648 = vmatprep.subr.mxu0 %v537
    %649 = vmatpush2.msra.mxu0 %v536
    %650 = vmatprep.subr.mxu0 %v533
    %651 = vmatpush2.msra.mxu0 %v532
    %652 = vmatprep.subr.mxu0 %v529
    %653 = vmatpush2.msra.mxu0 %v528
    %654 = vmatprep.subr.mxu0 %v525
    %655 = vmatpush2.msra.mxu0 %v524
    %656 = vmatprep.subr.mxu0 %v521
    %657 = vmatpush2.msra.mxu0 %v520
    %658 = vmatprep.subr.mxu0 %v517
    %659 = vmatpush2.msra.mxu0 %v516
    %660 = vmatprep.subr.mxu0 %v513
    %661 = vmatpush2.msra.mxu0 %v512
    %662 = vmatprep.mubr.f32.mxu0 %v447
    %663 = vmatmul.mubr.f32.gmra.mxu0 %v441
    %v664 = vpop.f32.mrf.mxu0
    %v665 = vadd.f32 %v581, %v664
    %v666 = vpop.f32.mrf.mxu0
    %v667 = vadd.f32 %v585, %v666
    %668 = vdwg.mxu0
    %669 = vmatprep.subr.mxu0 %v511
    %670 = vmatpush1.msra.mxu0 %v510
    %671 = vmatprep.subr.mxu0 %v507
    %672 = vmatpush1.msra.mxu0 %v506
    %673 = vmatprep.subr.mxu0 %v503
    %674 = vmatpush1.msra.mxu0 %v502
    %675 = vmatprep.subr.mxu0 %v499
    %676 = vmatpush1.msra.mxu0 %v498
    %677 = vmatprep.subr.mxu0 %v495
    %678 = vmatpush1.msra.mxu0 %v494
    %679 = vmatprep.subr.mxu0 %v491
    %680 = vmatpush1.msra.mxu0 %v490
    %681 = vmatprep.subr.mxu0 %v487
    %682 = vmatpush1.msra.mxu0 %v486
    %683 = vmatprep.subr.mxu0 %v483
    %684 = vmatpush1.msra.mxu0 %v482
    %685 = vmatprep.subr.mxu0 %v479
    %686 = vmatpush1.msra.mxu0 %v478
    %687 = vmatprep.subr.mxu0 %v475
    %688 = vmatpush1.msra.mxu0 %v474
    %689 = vmatprep.subr.mxu0 %v471
    %690 = vmatpush1.msra.mxu0 %v470
    %691 = vmatprep.subr.mxu0 %v467
    %692 = vmatpush1.msra.mxu0 %v466
    %693 = vmatprep.subr.mxu0 %v463
    %694 = vmatpush1.msra.mxu0 %v462
    %695 = vmatprep.subr.mxu0 %v459
    %696 = vmatpush1.msra.mxu0 %v458
    %697 = vmatprep.subr.mxu0 %v455
    %698 = vmatpush1.msra.mxu0 %v454
    %699 = vmatprep.subr.mxu0 %v451
    %700 = vmatpush1.msra.mxu0 %v450
    %701 = vmatprep.subr.mxu0 %v575
    %702 = vmatpush2.msra.mxu0 %v574
    %703 = vmatprep.subr.mxu0 %v571
    %704 = vmatpush2.msra.mxu0 %v570
    %705 = vmatprep.subr.mxu0 %v567
    %706 = vmatpush2.msra.mxu0 %v566
    %707 = vmatprep.subr.mxu0 %v563
    %708 = vmatpush2.msra.mxu0 %v562
    %709 = vmatprep.subr.mxu0 %v559
    %710 = vmatpush2.msra.mxu0 %v558
    %711 = vmatprep.subr.mxu0 %v555
    %712 = vmatpush2.msra.mxu0 %v554
    %713 = vmatprep.subr.mxu0 %v551
    %714 = vmatpush2.msra.mxu0 %v550
    %715 = vmatprep.subr.mxu0 %v547
    %716 = vmatpush2.msra.mxu0 %v546
    %717 = vmatprep.subr.mxu0 %v543
    %718 = vmatpush2.msra.mxu0 %v542
    %719 = vmatprep.subr.mxu0 %v539
    %720 = vmatpush2.msra.mxu0 %v538
    %721 = vmatprep.subr.mxu0 %v535
    %722 = vmatpush2.msra.mxu0 %v534
    %723 = vmatprep.subr.mxu0 %v531
    %724 = vmatpush2.msra.mxu0 %v530
    %725 = vmatprep.subr.mxu0 %v527
    %726 = vmatpush2.msra.mxu0 %v526
    %727 = vmatprep.subr.mxu0 %v523
    %728 = vmatpush2.msra.mxu0 %v522
    %729 = vmatprep.subr.mxu0 %v519
    %730 = vmatpush2.msra.mxu0 %v518
    %731 = vmatprep.subr.mxu0 %v515
    %732 = vmatpush2.msra.mxu0 %v514
    %733 = vmatprep.mubr.f32.mxu0 %v447
    %734 = vmatmul.mubr.f32.gmra.mxu0 %v441
    %v735 = vpop.f32.mrf.mxu0
    %v736 = vadd.f32 %v589, %v735
    %v737 = vpop.f32.mrf.mxu0
    %v738 = vadd.f32 %v593, %v737
    %739 = vdwg.mxu0
    %v740 = vxor.u32 %v665, 2147483648
    %v741 = vmul.f32 %v740, 1.442695
    %v742 = vpow.pop %v741
    %v743 = vadd.f32 %v742, 1.0
    %v744 = vrcp.pop %v743
    %v745 = vmul.f32 1.0, %v744
    %v746 = vxor.u32 %v667, 2147483648
    %v747 = vmul.f32 %v746, 1.442695
    %v748 = vpow.pop %v747
    %v749 = vadd.f32 %v748, 1.0
    %v750 = vrcp.pop %v749
    %v751 = vmul.f32 1.0, %v750
    %v752 = vtanh.pop %v736
    %v753 = vxor.u32 %v738, 2147483648
    %v754 = vmul.f32 %v753, 1.442695
    %v755 = vpow.pop %v754
    %v756 = vadd.f32 %v755, 1.0
    %v757 = vrcp.pop %v756
    %v758 = vmul.f32 1.0, %v757
    %v759 = vmul.f32 %v751, %v445
    %v760 = vmul.f32 %v745, %v752
    %v761 = vadd.f32 %v759, %v760
    %v762 = vtanh.pop %v761
    %v763 = vmul.f32 %v758, %v762
    %764 = vst [vmem:[%s446] sm:$0xff] %v763
    %765 = vst [vmem:[%s444] sm:$0xff] %v761
    %766 = vst [vmem:[#allocation15] sm:$0xff] %v763
    %s767 = scalar_lea.vmem [#allocation4], 8
    %v768 = vld [vmem:[%s767] sm:$0xff]
    %v769 = vld [vmem:[#allocation3] sm:$0xff]
    %v770 = vld [vmem:[#allocation2] sm:$0xff]
    %v771 = vld [vmem:[#allocation7] sm:$0xff]
    %v772 = vld [vmem:[#allocation7 + $0x8] sm:$0xff]
    %v773 = vld [vmem:[#allocation7 + $0x10] sm:$0xff]
    %v774 = vld [vmem:[#allocation7 + $0x18] sm:$0xff]
    %v775 = vld [vmem:[#allocation7 + $0x20] sm:$0xff]
    %v776 = vld [vmem:[#allocation7 + $0x28] sm:$0xff]
    %v777 = vld [vmem:[#allocation7 + $0x30] sm:$0xff]
    %v778 = vld [vmem:[#allocation7 + $0x38] sm:$0xff]
    %v779 = vld [vmem:[#allocation7 + $0x40] sm:$0xff]
    %v780 = vld [vmem:[#allocation7 + $0x48] sm:$0xff]
    %v781 = vld [vmem:[#allocation7 + $0x50] sm:$0xff]
    %v782 = vld [vmem:[#allocation7 + $0x58] sm:$0xff]
    %v783 = vld [vmem:[#allocation7 + $0x60] sm:$0xff]
    %v784 = vld [vmem:[#allocation7 + $0x68] sm:$0xff]
    %v785 = vld [vmem:[#allocation7 + $0x70] sm:$0xff]
    %v786 = vld [vmem:[#allocation7 + $0x78] sm:$0xff]
    %v787 = vld [vmem:[#allocation7 + $0x80] sm:$0xff]
    %v788 = vld [vmem:[#allocation7 + $0x88] sm:$0xff]
    %v789 = vld [vmem:[#allocation7 + $0x90] sm:$0xff]
    %v790 = vld [vmem:[#allocation7 + $0x98] sm:$0xff]
    %v791 = vld [vmem:[#allocation7 + $0xa0] sm:$0xff]
    %v792 = vld [vmem:[#allocation7 + $0xa8] sm:$0xff]
    %v793 = vld [vmem:[#allocation7 + $0xb0] sm:$0xff]
    %v794 = vld [vmem:[#allocation7 + $0xb8] sm:$0xff]
    %v795 = vld [vmem:[#allocation7 + $0xc0] sm:$0xff]
    %v796 = vld [vmem:[#allocation7 + $0xc8] sm:$0xff]
    %v797 = vld [vmem:[#allocation7 + $0xd0] sm:$0xff]
    %v798 = vld [vmem:[#allocation7 + $0xd8] sm:$0xff]
    %v799 = vld [vmem:[#allocation7 + $0xe0] sm:$0xff]
    %v800 = vld [vmem:[#allocation7 + $0xe8] sm:$0xff]
    %v801 = vld [vmem:[#allocation7 + $0xf0] sm:$0xff]
    %v802 = vld [vmem:[#allocation7 + $0xf8] sm:$0xff]
    %v803 = vld [vmem:[#allocation7 + $0x100] sm:$0xff]
    %v804 = vld [vmem:[#allocation7 + $0x108] sm:$0xff]
    %v805 = vld [vmem:[#allocation7 + $0x110] sm:$0xff]
    %v806 = vld [vmem:[#allocation7 + $0x118] sm:$0xff]
    %v807 = vld [vmem:[#allocation7 + $0x120] sm:$0xff]
    %v808 = vld [vmem:[#allocation7 + $0x128] sm:$0xff]
    %v809 = vld [vmem:[#allocation7 + $0x130] sm:$0xff]
    %v810 = vld [vmem:[#allocation7 + $0x138] sm:$0xff]
    %v811 = vld [vmem:[#allocation7 + $0x140] sm:$0xff]
    %v812 = vld [vmem:[#allocation7 + $0x148] sm:$0xff]
    %v813 = vld [vmem:[#allocation7 + $0x150] sm:$0xff]
    %v814 = vld [vmem:[#allocation7 + $0x158] sm:$0xff]
    %v815 = vld [vmem:[#allocation7 + $0x160] sm:$0xff]
    %v816 = vld [vmem:[#allocation7 + $0x168] sm:$0xff]
    %v817 = vld [vmem:[#allocation7 + $0x170] sm:$0xff]
    %v818 = vld [vmem:[#allocation7 + $0x178] sm:$0xff]
    %v819 = vld [vmem:[#allocation7 + $0x180] sm:$0xff]
    %v820 = vld [vmem:[#allocation7 + $0x188] sm:$0xff]
    %v821 = vld [vmem:[#allocation7 + $0x190] sm:$0xff]
    %v822 = vld [vmem:[#allocation7 + $0x198] sm:$0xff]
    %v823 = vld [vmem:[#allocation7 + $0x1a0] sm:$0xff]
    %v824 = vld [vmem:[#allocation7 + $0x1a8] sm:$0xff]
    %v825 = vld [vmem:[#allocation7 + $0x1b0] sm:$0xff]
    %v826 = vld [vmem:[#allocation7 + $0x1b8] sm:$0xff]
    %v827 = vld [vmem:[#allocation7 + $0x1c0] sm:$0xff]
    %v828 = vld [vmem:[#allocation7 + $0x1c8] sm:$0xff]
    %v829 = vld [vmem:[#allocation7 + $0x1d0] sm:$0xff]
    %v830 = vld [vmem:[#allocation7 + $0x1d8] sm:$0xff]
    %v831 = vld [vmem:[#allocation7 + $0x1e0] sm:$0xff]
    %v832 = vld [vmem:[#allocation7 + $0x1e8] sm:$0xff]
    %v833 = vld [vmem:[#allocation7 + $0x1f0] sm:$0xff]
    %v834 = vld [vmem:[#allocation7 + $0x1f8] sm:$0xff]
    %v835 = vld [vmem:[#allocation7 + $0x200] sm:$0xff]
    %v836 = vld [vmem:[#allocation7 + $0x208] sm:$0xff]
    %v837 = vld [vmem:[#allocation7 + $0x210] sm:$0xff]
    %v838 = vld [vmem:[#allocation7 + $0x218] sm:$0xff]
    %v839 = vld [vmem:[#allocation7 + $0x220] sm:$0xff]
    %v840 = vld [vmem:[#allocation7 + $0x228] sm:$0xff]
    %v841 = vld [vmem:[#allocation7 + $0x230] sm:$0xff]
    %v842 = vld [vmem:[#allocation7 + $0x238] sm:$0xff]
    %v843 = vld [vmem:[#allocation7 + $0x240] sm:$0xff]
    %v844 = vld [vmem:[#allocation7 + $0x248] sm:$0xff]
    %v845 = vld [vmem:[#allocation7 + $0x250] sm:$0xff]
    %v846 = vld [vmem:[#allocation7 + $0x258] sm:$0xff]
    %v847 = vld [vmem:[#allocation7 + $0x260] sm:$0xff]
    %v848 = vld [vmem:[#allocation7 + $0x268] sm:$0xff]
    %v849 = vld [vmem:[#allocation7 + $0x270] sm:$0xff]
    %v850 = vld [vmem:[#allocation7 + $0x278] sm:$0xff]
    %v851 = vld [vmem:[#allocation7 + $0x280] sm:$0xff]
    %v852 = vld [vmem:[#allocation7 + $0x288] sm:$0xff]
    %v853 = vld [vmem:[#allocation7 + $0x290] sm:$0xff]
    %v854 = vld [vmem:[#allocation7 + $0x298] sm:$0xff]
    %v855 = vld [vmem:[#allocation7 + $0x2a0] sm:$0xff]
    %v856 = vld [vmem:[#allocation7 + $0x2a8] sm:$0xff]
    %v857 = vld [vmem:[#allocation7 + $0x2b0] sm:$0xff]
    %v858 = vld [vmem:[#allocation7 + $0x2b8] sm:$0xff]
    %v859 = vld [vmem:[#allocation7 + $0x2c0] sm:$0xff]
    %v860 = vld [vmem:[#allocation7 + $0x2c8] sm:$0xff]
    %v861 = vld [vmem:[#allocation7 + $0x2d0] sm:$0xff]
    %v862 = vld [vmem:[#allocation7 + $0x2d8] sm:$0xff]
    %v863 = vld [vmem:[#allocation7 + $0x2e0] sm:$0xff]
    %v864 = vld [vmem:[#allocation7 + $0x2e8] sm:$0xff]
    %v865 = vld [vmem:[#allocation7 + $0x2f0] sm:$0xff]
    %v866 = vld [vmem:[#allocation7 + $0x2f8] sm:$0xff]
    %v867 = vld [vmem:[#allocation7 + $0x300] sm:$0xff]
    %v868 = vld [vmem:[#allocation7 + $0x308] sm:$0xff]
    %v869 = vld [vmem:[#allocation7 + $0x310] sm:$0xff]
    %v870 = vld [vmem:[#allocation7 + $0x318] sm:$0xff]
    %v871 = vld [vmem:[#allocation7 + $0x320] sm:$0xff]
    %v872 = vld [vmem:[#allocation7 + $0x328] sm:$0xff]
    %v873 = vld [vmem:[#allocation7 + $0x330] sm:$0xff]
    %v874 = vld [vmem:[#allocation7 + $0x338] sm:$0xff]
    %v875 = vld [vmem:[#allocation7 + $0x340] sm:$0xff]
    %v876 = vld [vmem:[#allocation7 + $0x348] sm:$0xff]
    %v877 = vld [vmem:[#allocation7 + $0x350] sm:$0xff]
    %v878 = vld [vmem:[#allocation7 + $0x358] sm:$0xff]
    %v879 = vld [vmem:[#allocation7 + $0x360] sm:$0xff]
    %v880 = vld [vmem:[#allocation7 + $0x368] sm:$0xff]
    %v881 = vld [vmem:[#allocation7 + $0x370] sm:$0xff]
    %v882 = vld [vmem:[#allocation7 + $0x378] sm:$0xff]
    %v883 = vld [vmem:[#allocation7 + $0x380] sm:$0xff]
    %v884 = vld [vmem:[#allocation7 + $0x388] sm:$0xff]
    %v885 = vld [vmem:[#allocation7 + $0x390] sm:$0xff]
    %v886 = vld [vmem:[#allocation7 + $0x398] sm:$0xff]
    %v887 = vld [vmem:[#allocation7 + $0x3a0] sm:$0xff]
    %v888 = vld [vmem:[#allocation7 + $0x3a8] sm:$0xff]
    %v889 = vld [vmem:[#allocation7 + $0x3b0] sm:$0xff]
    %v890 = vld [vmem:[#allocation7 + $0x3b8] sm:$0xff]
    %v891 = vld [vmem:[#allocation7 + $0x3c0] sm:$0xff]
    %v892 = vld [vmem:[#allocation7 + $0x3c8] sm:$0xff]
    %v893 = vld [vmem:[#allocation7 + $0x3d0] sm:$0xff]
    %v894 = vld [vmem:[#allocation7 + $0x3d8] sm:$0xff]
    %v895 = vld [vmem:[#allocation7 + $0x3e0] sm:$0xff]
    %v896 = vld [vmem:[#allocation7 + $0x3e8] sm:$0xff]
    %v897 = vld [vmem:[#allocation7 + $0x3f0] sm:$0xff]
    %v898 = vld [vmem:[#allocation7 + $0x3f8] sm:$0xff]
    %v899 = vld [vmem:[#allocation9] sm:$0xf]
    %v901 = vlaneseq
    %v902 = vshrl.u32 %v901, 7
    %v903 = vsub.s32 0, %v902
    %v904 = vrot.slane %v899, %v903
    %v905 = vlaneseq
    %v906 = vshrl.u32 %v905, 7
    %v907 = vsub.s32 1, %v906
    %v908 = vrot.slane %v899, %v907
    %v909 = vlaneseq
    %v910 = vshrl.u32 %v909, 7
    %v911 = vsub.s32 2, %v910
    %v912 = vrot.slane %v899, %v911
    %v913 = vlaneseq
    %v914 = vshrl.u32 %v913, 7
    %v915 = vsub.s32 3, %v914
    %v916 = vrot.slane %v899, %v915
    %921 = vmatprep.subr.mxu0 %v832
    %922 = vmatpush1.msra.mxu0 %v831
    %923 = vmatprep.subr.mxu0 %v828
    %924 = vmatpush1.msra.mxu0 %v827
    %925 = vmatprep.subr.mxu0 %v824
    %926 = vmatpush1.msra.mxu0 %v823
    %927 = vmatprep.subr.mxu0 %v820
    %928 = vmatpush1.msra.mxu0 %v819
    %929 = vmatprep.subr.mxu0 %v816
    %930 = vmatpush1.msra.mxu0 %v815
    %931 = vmatprep.subr.mxu0 %v812
    %932 = vmatpush1.msra.mxu0 %v811
    %933 = vmatprep.subr.mxu0 %v808
    %934 = vmatpush1.msra.mxu0 %v807
    %935 = vmatprep.subr.mxu0 %v804
    %936 = vmatpush1.msra.mxu0 %v803
    %937 = vmatprep.subr.mxu0 %v800
    %938 = vmatpush1.msra.mxu0 %v799
    %939 = vmatprep.subr.mxu0 %v796
    %940 = vmatpush1.msra.mxu0 %v795
    %941 = vmatprep.subr.mxu0 %v792
    %942 = vmatpush1.msra.mxu0 %v791
    %943 = vmatprep.subr.mxu0 %v788
    %944 = vmatpush1.msra.mxu0 %v787
    %945 = vmatprep.subr.mxu0 %v784
    %946 = vmatpush1.msra.mxu0 %v783
    %947 = vmatprep.subr.mxu0 %v780
    %948 = vmatpush1.msra.mxu0 %v779
    %949 = vmatprep.subr.mxu0 %v776
    %950 = vmatpush1.msra.mxu0 %v775
    %951 = vmatprep.subr.mxu0 %v772
    %952 = vmatpush1.msra.mxu0 %v771
    %953 = vmatprep.subr.mxu0 %v896
    %954 = vmatpush2.msra.mxu0 %v895
    %955 = vmatprep.subr.mxu0 %v892
    %956 = vmatpush2.msra.mxu0 %v891
    %957 = vmatprep.subr.mxu0 %v888
    %958 = vmatpush2.msra.mxu0 %v887
    %959 = vmatprep.subr.mxu0 %v884
    %960 = vmatpush2.msra.mxu0 %v883
    %961 = vmatprep.subr.mxu0 %v880
    %962 = vmatpush2.msra.mxu0 %v879
    %963 = vmatprep.subr.mxu0 %v876
    %964 = vmatpush2.msra.mxu0 %v875
    %965 = vmatprep.subr.mxu0 %v872
    %966 = vmatpush2.msra.mxu0 %v871
    %967 = vmatprep.subr.mxu0 %v868
    %968 = vmatpush2.msra.mxu0 %v867
    %969 = vmatprep.subr.mxu0 %v864
    %970 = vmatpush2.msra.mxu0 %v863
    %971 = vmatprep.subr.mxu0 %v860
    %972 = vmatpush2.msra.mxu0 %v859
    %973 = vmatprep.subr.mxu0 %v856
    %974 = vmatpush2.msra.mxu0 %v855
    %975 = vmatprep.subr.mxu0 %v852
    %976 = vmatpush2.msra.mxu0 %v851
    %977 = vmatprep.subr.mxu0 %v848
    %978 = vmatpush2.msra.mxu0 %v847
    %979 = vmatprep.subr.mxu0 %v844
    %980 = vmatpush2.msra.mxu0 %v843
    %981 = vmatprep.subr.mxu0 %v840
    %982 = vmatpush2.msra.mxu0 %v839
    %983 = vmatprep.subr.mxu0 %v836
    %984 = vmatpush2.msra.mxu0 %v835
    %985 = vmatprep.mubr.f32.mxu0 %v770
    %986 = vmatmul.mubr.f32.gmra.mxu0 %v768
    %v987 = vpop.f32.mrf.mxu0
    %v988 = vadd.f32 %v904, %v987
    %v989 = vpop.f32.mrf.mxu0
    %v990 = vadd.f32 %v908, %v989
    %991 = vdwg.mxu0
    %992 = vmatprep.subr.mxu0 %v834
    %993 = vmatpush1.msra.mxu0 %v833
    %994 = vmatprep.subr.mxu0 %v830
    %995 = vmatpush1.msra.mxu0 %v829
    %996 = vmatprep.subr.mxu0 %v826
    %997 = vmatpush1.msra.mxu0 %v825
    %998 = vmatprep.subr.mxu0 %v822
    %999 = vmatpush1.msra.mxu0 %v821
    %1000 = vmatprep.subr.mxu0 %v818
    %1001 = vmatpush1.msra.mxu0 %v817
    %1002 = vmatprep.subr.mxu0 %v814
    %1003 = vmatpush1.msra.mxu0 %v813
    %1004 = vmatprep.subr.mxu0 %v810
    %1005 = vmatpush1.msra.mxu0 %v809
    %1006 = vmatprep.subr.mxu0 %v806
    %1007 = vmatpush1.msra.mxu0 %v805
    %1008 = vmatprep.subr.mxu0 %v802
    %1009 = vmatpush1.msra.mxu0 %v801
    %1010 = vmatprep.subr.mxu0 %v798
    %1011 = vmatpush1.msra.mxu0 %v797
    %1012 = vmatprep.subr.mxu0 %v794
    %1013 = vmatpush1.msra.mxu0 %v793
    %1014 = vmatprep.subr.mxu0 %v790
    %1015 = vmatpush1.msra.mxu0 %v789
    %1016 = vmatprep.subr.mxu0 %v786
    %1017 = vmatpush1.msra.mxu0 %v785
    %1018 = vmatprep.subr.mxu0 %v782
    %1019 = vmatpush1.msra.mxu0 %v781
    %1020 = vmatprep.subr.mxu0 %v778
    %1021 = vmatpush1.msra.mxu0 %v777
    %1022 = vmatprep.subr.mxu0 %v774
    %1023 = vmatpush1.msra.mxu0 %v773
    %1024 = vmatprep.subr.mxu0 %v898
    %1025 = vmatpush2.msra.mxu0 %v897
    %1026 = vmatprep.subr.mxu0 %v894
    %1027 = vmatpush2.msra.mxu0 %v893
    %1028 = vmatprep.subr.mxu0 %v890
    %1029 = vmatpush2.msra.mxu0 %v889
    %1030 = vmatprep.subr.mxu0 %v886
    %1031 = vmatpush2.msra.mxu0 %v885
    %1032 = vmatprep.subr.mxu0 %v882
    %1033 = vmatpush2.msra.mxu0 %v881
    %1034 = vmatprep.subr.mxu0 %v878
    %1035 = vmatpush2.msra.mxu0 %v877
    %1036 = vmatprep.subr.mxu0 %v874
    %1037 = vmatpush2.msra.mxu0 %v873
    %1038 = vmatprep.subr.mxu0 %v870
    %1039 = vmatpush2.msra.mxu0 %v869
    %1040 = vmatprep.subr.mxu0 %v866
    %1041 = vmatpush2.msra.mxu0 %v865
    %1042 = vmatprep.subr.mxu0 %v862
    %1043 = vmatpush2.msra.mxu0 %v861
    %1044 = vmatprep.subr.mxu0 %v858
    %1045 = vmatpush2.msra.mxu0 %v857
    %1046 = vmatprep.subr.mxu0 %v854
    %1047 = vmatpush2.msra.mxu0 %v853
    %1048 = vmatprep.subr.mxu0 %v850
    %1049 = vmatpush2.msra.mxu0 %v849
    %1050 = vmatprep.subr.mxu0 %v846
    %1051 = vmatpush2.msra.mxu0 %v845
    %1052 = vmatprep.subr.mxu0 %v842
    %1053 = vmatpush2.msra.mxu0 %v841
    %1054 = vmatprep.subr.mxu0 %v838
    %1055 = vmatpush2.msra.mxu0 %v837
    %1056 = vmatprep.mubr.f32.mxu0 %v770
    %1057 = vmatmul.mubr.f32.gmra.mxu0 %v768
    %v1058 = vpop.f32.mrf.mxu0
    %v1059 = vadd.f32 %v912, %v1058
    %v1060 = vpop.f32.mrf.mxu0
    %v1061 = vadd.f32 %v916, %v1060
    %1062 = vdwg.mxu0
    %v1063 = vxor.u32 %v988, 2147483648
    %v1064 = vmul.f32 %v1063, 1.442695
    %v1065 = vpow.pop %v1064
    %v1066 = vadd.f32 %v1065, 1.0
    %v1067 = vrcp.pop %v1066
    %v1068 = vmul.f32 1.0, %v1067
    %v1069 = vxor.u32 %v990, 2147483648
    %v1070 = vmul.f32 %v1069, 1.442695
    %v1071 = vpow.pop %v1070
    %v1072 = vadd.f32 %v1071, 1.0
    %v1073 = vrcp.pop %v1072
    %v1074 = vmul.f32 1.0, %v1073
    %v1075 = vtanh.pop %v1059
    %v1076 = vxor.u32 %v1061, 2147483648
    %v1077 = vmul.f32 %v1076, 1.442695
    %v1078 = vpow.pop %v1077
    %v1079 = vadd.f32 %v1078, 1.0
    %v1080 = vrcp.pop %v1079
    %v1081 = vmul.f32 1.0, %v1080
    %v1082 = vmul.f32 %v1074, %v769
    %v1083 = vmul.f32 %v1068, %v1075
    %v1084 = vadd.f32 %v1082, %v1083
    %v1085 = vtanh.pop %v1084
    %v1086 = vmul.f32 %v1081, %v1085
    %1087 = vst [vmem:[#allocation2] sm:$0xff] %v1086
    %1088 = vst [vmem:[#allocation3] sm:$0xff] %v1084
    %v1089 = vld [vmem:[%s444] sm:$0xff]
    %v1090 = vld [vmem:[%s446] sm:$0xff]
    %v1091 = vld [vmem:[#allocation10] sm:$0xff]
    %v1092 = vld [vmem:[#allocation10 + $0x8] sm:$0xff]
    %v1093 = vld [vmem:[#allocation10 + $0x10] sm:$0xff]
    %v1094 = vld [vmem:[#allocation10 + $0x18] sm:$0xff]
    %v1095 = vld [vmem:[#allocation10 + $0x20] sm:$0xff]
    %v1096 = vld [vmem:[#allocation10 + $0x28] sm:$0xff]
    %v1097 = vld [vmem:[#allocation10 + $0x30] sm:$0xff]
    %v1098 = vld [vmem:[#allocation10 + $0x38] sm:$0xff]
    %v1099 = vld [vmem:[#allocation10 + $0x40] sm:$0xff]
    %v1100 = vld [vmem:[#allocation10 + $0x48] sm:$0xff]
    %v1101 = vld [vmem:[#allocation10 + $0x50] sm:$0xff]
    %v1102 = vld [vmem:[#allocation10 + $0x58] sm:$0xff]
    %v1103 = vld [vmem:[#allocation10 + $0x60] sm:$0xff]
    %v1104 = vld [vmem:[#allocation10 + $0x68] sm:$0xff]
    %v1105 = vld [vmem:[#allocation10 + $0x70] sm:$0xff]
    %v1106 = vld [vmem:[#allocation10 + $0x78] sm:$0xff]
    %v1107 = vld [vmem:[#allocation10 + $0x80] sm:$0xff]
    %v1108 = vld [vmem:[#allocation10 + $0x88] sm:$0xff]
    %v1109 = vld [vmem:[#allocation10 + $0x90] sm:$0xff]
    %v1110 = vld [vmem:[#allocation10 + $0x98] sm:$0xff]
    %v1111 = vld [vmem:[#allocation10 + $0xa0] sm:$0xff]
    %v1112 = vld [vmem:[#allocation10 + $0xa8] sm:$0xff]
    %v1113 = vld [vmem:[#allocation10 + $0xb0] sm:$0xff]
    %v1114 = vld [vmem:[#allocation10 + $0xb8] sm:$0xff]
    %v1115 = vld [vmem:[#allocation10 + $0xc0] sm:$0xff]
    %v1116 = vld [vmem:[#allocation10 + $0xc8] sm:$0xff]
    %v1117 = vld [vmem:[#allocation10 + $0xd0] sm:$0xff]
    %v1118 = vld [vmem:[#allocation10 + $0xd8] sm:$0xff]
    %v1119 = vld [vmem:[#allocation10 + $0xe0] sm:$0xff]
    %v1120 = vld [vmem:[#allocation10 + $0xe8] sm:$0xff]
    %v1121 = vld [vmem:[#allocation10 + $0xf0] sm:$0xff]
    %v1122 = vld [vmem:[#allocation10 + $0xf8] sm:$0xff]
    %v1123 = vld [vmem:[#allocation10 + $0x100] sm:$0xff]
    %v1124 = vld [vmem:[#allocation10 + $0x108] sm:$0xff]
    %v1125 = vld [vmem:[#allocation10 + $0x110] sm:$0xff]
    %v1126 = vld [vmem:[#allocation10 + $0x118] sm:$0xff]
    %v1127 = vld [vmem:[#allocation10 + $0x120] sm:$0xff]
    %v1128 = vld [vmem:[#allocation10 + $0x128] sm:$0xff]
    %v1129 = vld [vmem:[#allocation10 + $0x130] sm:$0xff]
    %v1130 = vld [vmem:[#allocation10 + $0x138] sm:$0xff]
    %v1131 = vld [vmem:[#allocation10 + $0x140] sm:$0xff]
    %v1132 = vld [vmem:[#allocation10 + $0x148] sm:$0xff]
    %v1133 = vld [vmem:[#allocation10 + $0x150] sm:$0xff]
    %v1134 = vld [vmem:[#allocation10 + $0x158] sm:$0xff]
    %v1135 = vld [vmem:[#allocation10 + $0x160] sm:$0xff]
    %v1136 = vld [vmem:[#allocation10 + $0x168] sm:$0xff]
    %v1137 = vld [vmem:[#allocation10 + $0x170] sm:$0xff]
    %v1138 = vld [vmem:[#allocation10 + $0x178] sm:$0xff]
    %v1139 = vld [vmem:[#allocation10 + $0x180] sm:$0xff]
    %v1140 = vld [vmem:[#allocation10 + $0x188] sm:$0xff]
    %v1141 = vld [vmem:[#allocation10 + $0x190] sm:$0xff]
    %v1142 = vld [vmem:[#allocation10 + $0x198] sm:$0xff]
    %v1143 = vld [vmem:[#allocation10 + $0x1a0] sm:$0xff]
    %v1144 = vld [vmem:[#allocation10 + $0x1a8] sm:$0xff]
    %v1145 = vld [vmem:[#allocation10 + $0x1b0] sm:$0xff]
    %v1146 = vld [vmem:[#allocation10 + $0x1b8] sm:$0xff]
    %v1147 = vld [vmem:[#allocation10 + $0x1c0] sm:$0xff]
    %v1148 = vld [vmem:[#allocation10 + $0x1c8] sm:$0xff]
    %v1149 = vld [vmem:[#allocation10 + $0x1d0] sm:$0xff]
    %v1150 = vld [vmem:[#allocation10 + $0x1d8] sm:$0xff]
    %v1151 = vld [vmem:[#allocation10 + $0x1e0] sm:$0xff]
    %v1152 = vld [vmem:[#allocation10 + $0x1e8] sm:$0xff]
    %v1153 = vld [vmem:[#allocation10 + $0x1f0] sm:$0xff]
    %v1154 = vld [vmem:[#allocation10 + $0x1f8] sm:$0xff]
    %v1155 = vld [vmem:[#allocation10 + $0x200] sm:$0xff]
    %v1156 = vld [vmem:[#allocation10 + $0x208] sm:$0xff]
    %v1157 = vld [vmem:[#allocation10 + $0x210] sm:$0xff]
    %v1158 = vld [vmem:[#allocation10 + $0x218] sm:$0xff]
    %v1159 = vld [vmem:[#allocation10 + $0x220] sm:$0xff]
    %v1160 = vld [vmem:[#allocation10 + $0x228] sm:$0xff]
    %v1161 = vld [vmem:[#allocation10 + $0x230] sm:$0xff]
    %v1162 = vld [vmem:[#allocation10 + $0x238] sm:$0xff]
    %v1163 = vld [vmem:[#allocation10 + $0x240] sm:$0xff]
    %v1164 = vld [vmem:[#allocation10 + $0x248] sm:$0xff]
    %v1165 = vld [vmem:[#allocation10 + $0x250] sm:$0xff]
    %v1166 = vld [vmem:[#allocation10 + $0x258] sm:$0xff]
    %v1167 = vld [vmem:[#allocation10 + $0x260] sm:$0xff]
    %v1168 = vld [vmem:[#allocation10 + $0x268] sm:$0xff]
    %v1169 = vld [vmem:[#allocation10 + $0x270] sm:$0xff]
    %v1170 = vld [vmem:[#allocation10 + $0x278] sm:$0xff]
    %v1171 = vld [vmem:[#allocation10 + $0x280] sm:$0xff]
    %v1172 = vld [vmem:[#allocation10 + $0x288] sm:$0xff]
    %v1173 = vld [vmem:[#allocation10 + $0x290] sm:$0xff]
    %v1174 = vld [vmem:[#allocation10 + $0x298] sm:$0xff]
    %v1175 = vld [vmem:[#allocation10 + $0x2a0] sm:$0xff]
    %v1176 = vld [vmem:[#allocation10 + $0x2a8] sm:$0xff]
    %v1177 = vld [vmem:[#allocation10 + $0x2b0] sm:$0xff]
    %v1178 = vld [vmem:[#allocation10 + $0x2b8] sm:$0xff]
    %v1179 = vld [vmem:[#allocation10 + $0x2c0] sm:$0xff]
    %v1180 = vld [vmem:[#allocation10 + $0x2c8] sm:$0xff]
    %v1181 = vld [vmem:[#allocation10 + $0x2d0] sm:$0xff]
    %v1182 = vld [vmem:[#allocation10 + $0x2d8] sm:$0xff]
    %v1183 = vld [vmem:[#allocation10 + $0x2e0] sm:$0xff]
    %v1184 = vld [vmem:[#allocation10 + $0x2e8] sm:$0xff]
    %v1185 = vld [vmem:[#allocation10 + $0x2f0] sm:$0xff]
    %v1186 = vld [vmem:[#allocation10 + $0x2f8] sm:$0xff]
    %v1187 = vld [vmem:[#allocation10 + $0x300] sm:$0xff]
    %v1188 = vld [vmem:[#allocation10 + $0x308] sm:$0xff]
    %v1189 = vld [vmem:[#allocation10 + $0x310] sm:$0xff]
    %v1190 = vld [vmem:[#allocation10 + $0x318] sm:$0xff]
    %v1191 = vld [vmem:[#allocation10 + $0x320] sm:$0xff]
    %v1192 = vld [vmem:[#allocation10 + $0x328] sm:$0xff]
    %v1193 = vld [vmem:[#allocation10 + $0x330] sm:$0xff]
    %v1194 = vld [vmem:[#allocation10 + $0x338] sm:$0xff]
    %v1195 = vld [vmem:[#allocation10 + $0x340] sm:$0xff]
    %v1196 = vld [vmem:[#allocation10 + $0x348] sm:$0xff]
    %v1197 = vld [vmem:[#allocation10 + $0x350] sm:$0xff]
    %v1198 = vld [vmem:[#allocation10 + $0x358] sm:$0xff]
    %v1199 = vld [vmem:[#allocation10 + $0x360] sm:$0xff]
    %v1200 = vld [vmem:[#allocation10 + $0x368] sm:$0xff]
    %v1201 = vld [vmem:[#allocation10 + $0x370] sm:$0xff]
    %v1202 = vld [vmem:[#allocation10 + $0x378] sm:$0xff]
    %v1203 = vld [vmem:[#allocation10 + $0x380] sm:$0xff]
    %v1204 = vld [vmem:[#allocation10 + $0x388] sm:$0xff]
    %v1205 = vld [vmem:[#allocation10 + $0x390] sm:$0xff]
    %v1206 = vld [vmem:[#allocation10 + $0x398] sm:$0xff]
    %v1207 = vld [vmem:[#allocation10 + $0x3a0] sm:$0xff]
    %v1208 = vld [vmem:[#allocation10 + $0x3a8] sm:$0xff]
    %v1209 = vld [vmem:[#allocation10 + $0x3b0] sm:$0xff]
    %v1210 = vld [vmem:[#allocation10 + $0x3b8] sm:$0xff]
    %v1211 = vld [vmem:[#allocation10 + $0x3c0] sm:$0xff]
    %v1212 = vld [vmem:[#allocation10 + $0x3c8] sm:$0xff]
    %v1213 = vld [vmem:[#allocation10 + $0x3d0] sm:$0xff]
    %v1214 = vld [vmem:[#allocation10 + $0x3d8] sm:$0xff]
    %v1215 = vld [vmem:[#allocation10 + $0x3e0] sm:$0xff]
    %v1216 = vld [vmem:[#allocation10 + $0x3e8] sm:$0xff]
    %v1217 = vld [vmem:[#allocation10 + $0x3f0] sm:$0xff]
    %v1218 = vld [vmem:[#allocation10 + $0x3f8] sm:$0xff]
    %v1219 = vld [vmem:[%s4] sm:$0xf]
    %v1221 = vlaneseq
    %v1222 = vshrl.u32 %v1221, 7
    %v1223 = vsub.s32 0, %v1222
    %v1224 = vrot.slane %v1219, %v1223
    %v1225 = vlaneseq
    %v1226 = vshrl.u32 %v1225, 7
    %v1227 = vsub.s32 1, %v1226
    %v1228 = vrot.slane %v1219, %v1227
    %v1229 = vlaneseq
    %v1230 = vshrl.u32 %v1229, 7
    %v1231 = vsub.s32 2, %v1230
    %v1232 = vrot.slane %v1219, %v1231
    %v1233 = vlaneseq
    %v1234 = vshrl.u32 %v1233, 7
    %v1235 = vsub.s32 3, %v1234
    %v1236 = vrot.slane %v1219, %v1235
    %1241 = vmatprep.subr.mxu0 %v1152
    %1242 = vmatpush1.msra.mxu0 %v1151
    %1243 = vmatprep.subr.mxu0 %v1148
    %1244 = vmatpush1.msra.mxu0 %v1147
    %1245 = vmatprep.subr.mxu0 %v1144
    %1246 = vmatpush1.msra.mxu0 %v1143
    %1247 = vmatprep.subr.mxu0 %v1140
    %1248 = vmatpush1.msra.mxu0 %v1139
    %1249 = vmatprep.subr.mxu0 %v1136
    %1250 = vmatpush1.msra.mxu0 %v1135
    %1251 = vmatprep.subr.mxu0 %v1132
    %1252 = vmatpush1.msra.mxu0 %v1131
    %1253 = vmatprep.subr.mxu0 %v1128
    %1254 = vmatpush1.msra.mxu0 %v1127
    %1255 = vmatprep.subr.mxu0 %v1124
    %1256 = vmatpush1.msra.mxu0 %v1123
    %1257 = vmatprep.subr.mxu0 %v1120
    %1258 = vmatpush1.msra.mxu0 %v1119
    %1259 = vmatprep.subr.mxu0 %v1116
    %1260 = vmatpush1.msra.mxu0 %v1115
    %1261 = vmatprep.subr.mxu0 %v1112
    %1262 = vmatpush1.msra.mxu0 %v1111
    %1263 = vmatprep.subr.mxu0 %v1108
    %1264 = vmatpush1.msra.mxu0 %v1107
    %1265 = vmatprep.subr.mxu0 %v1104
    %1266 = vmatpush1.msra.mxu0 %v1103
    %1267 = vmatprep.subr.mxu0 %v1100
    %1268 = vmatpush1.msra.mxu0 %v1099
    %1269 = vmatprep.subr.mxu0 %v1096
    %1270 = vmatpush1.msra.mxu0 %v1095
    %1271 = vmatprep.subr.mxu0 %v1092
    %1272 = vmatpush1.msra.mxu0 %v1091
    %1273 = vmatprep.subr.mxu0 %v1216
    %1274 = vmatpush2.msra.mxu0 %v1215
    %1275 = vmatprep.subr.mxu0 %v1212
    %1276 = vmatpush2.msra.mxu0 %v1211
    %1277 = vmatprep.subr.mxu0 %v1208
    %1278 = vmatpush2.msra.mxu0 %v1207
    %1279 = vmatprep.subr.mxu0 %v1204
    %1280 = vmatpush2.msra.mxu0 %v1203
    %1281 = vmatprep.subr.mxu0 %v1200
    %1282 = vmatpush2.msra.mxu0 %v1199
    %1283 = vmatprep.subr.mxu0 %v1196
    %1284 = vmatpush2.msra.mxu0 %v1195
    %1285 = vmatprep.subr.mxu0 %v1192
    %1286 = vmatpush2.msra.mxu0 %v1191
    %1287 = vmatprep.subr.mxu0 %v1188
    %1288 = vmatpush2.msra.mxu0 %v1187
    %1289 = vmatprep.subr.mxu0 %v1184
    %1290 = vmatpush2.msra.mxu0 %v1183
    %1291 = vmatprep.subr.mxu0 %v1180
    %1292 = vmatpush2.msra.mxu0 %v1179
    %1293 = vmatprep.subr.mxu0 %v1176
    %1294 = vmatpush2.msra.mxu0 %v1175
    %1295 = vmatprep.subr.mxu0 %v1172
    %1296 = vmatpush2.msra.mxu0 %v1171
    %1297 = vmatprep.subr.mxu0 %v1168
    %1298 = vmatpush2.msra.mxu0 %v1167
    %1299 = vmatprep.subr.mxu0 %v1164
    %1300 = vmatpush2.msra.mxu0 %v1163
    %1301 = vmatprep.subr.mxu0 %v1160
    %1302 = vmatpush2.msra.mxu0 %v1159
    %1303 = vmatprep.subr.mxu0 %v1156
    %1304 = vmatpush2.msra.mxu0 %v1155
    %1305 = vmatprep.mubr.f32.mxu0 %v1090
    %1306 = vmatmul.mubr.f32.gmra.mxu0 %v1086
    %v1307 = vpop.f32.mrf.mxu0
    %v1308 = vadd.f32 %v1224, %v1307
    %v1309 = vpop.f32.mrf.mxu0
    %v1310 = vadd.f32 %v1228, %v1309
    %1311 = vdwg.mxu0
    %1312 = vmatprep.subr.mxu0 %v1154
    %1313 = vmatpush1.msra.mxu0 %v1153
    %1314 = vmatprep.subr.mxu0 %v1150
    %1315 = vmatpush1.msra.mxu0 %v1149
    %1316 = vmatprep.subr.mxu0 %v1146
    %1317 = vmatpush1.msra.mxu0 %v1145
    %1318 = vmatprep.subr.mxu0 %v1142
    %1319 = vmatpush1.msra.mxu0 %v1141
    %1320 = vmatprep.subr.mxu0 %v1138
    %1321 = vmatpush1.msra.mxu0 %v1137
    %1322 = vmatprep.subr.mxu0 %v1134
    %1323 = vmatpush1.msra.mxu0 %v1133
    %1324 = vmatprep.subr.mxu0 %v1130
    %1325 = vmatpush1.msra.mxu0 %v1129
    %1326 = vmatprep.subr.mxu0 %v1126
    %1327 = vmatpush1.msra.mxu0 %v1125
    %1328 = vmatprep.subr.mxu0 %v1122
    %1329 = vmatpush1.msra.mxu0 %v1121
    %1330 = vmatprep.subr.mxu0 %v1118
    %1331 = vmatpush1.msra.mxu0 %v1117
    %1332 = vmatprep.subr.mxu0 %v1114
    %1333 = vmatpush1.msra.mxu0 %v1113
    %1334 = vmatprep.subr.mxu0 %v1110
    %1335 = vmatpush1.msra.mxu0 %v1109
    %1336 = vmatprep.subr.mxu0 %v1106
    %1337 = vmatpush1.msra.mxu0 %v1105
    %1338 = vmatprep.subr.mxu0 %v1102
    %1339 = vmatpush1.msra.mxu0 %v1101
    %1340 = vmatprep.subr.mxu0 %v1098
    %1341 = vmatpush1.msra.mxu0 %v1097
    %1342 = vmatprep.subr.mxu0 %v1094
    %1343 = vmatpush1.msra.mxu0 %v1093
    %1344 = vmatprep.subr.mxu0 %v1218
    %1345 = vmatpush2.msra.mxu0 %v1217
    %1346 = vmatprep.subr.mxu0 %v1214
    %1347 = vmatpush2.msra.mxu0 %v1213
    %1348 = vmatprep.subr.mxu0 %v1210
    %1349 = vmatpush2.msra.mxu0 %v1209
    %1350 = vmatprep.subr.mxu0 %v1206
    %1351 = vmatpush2.msra.mxu0 %v1205
    %1352 = vmatprep.subr.mxu0 %v1202
    %1353 = vmatpush2.msra.mxu0 %v1201
    %1354 = vmatprep.subr.mxu0 %v1198
    %1355 = vmatpush2.msra.mxu0 %v1197
    %1356 = vmatprep.subr.mxu0 %v1194
    %1357 = vmatpush2.msra.mxu0 %v1193
    %1358 = vmatprep.subr.mxu0 %v1190
    %1359 = vmatpush2.msra.mxu0 %v1189
    %1360 = vmatprep.subr.mxu0 %v1186
    %1361 = vmatpush2.msra.mxu0 %v1185
    %1362 = vmatprep.subr.mxu0 %v1182
    %1363 = vmatpush2.msra.mxu0 %v1181
    %1364 = vmatprep.subr.mxu0 %v1178
    %1365 = vmatpush2.msra.mxu0 %v1177
    %1366 = vmatprep.subr.mxu0 %v1174
    %1367 = vmatpush2.msra.mxu0 %v1173
    %1368 = vmatprep.subr.mxu0 %v1170
    %1369 = vmatpush2.msra.mxu0 %v1169
    %1370 = vmatprep.subr.mxu0 %v1166
    %1371 = vmatpush2.msra.mxu0 %v1165
    %1372 = vmatprep.subr.mxu0 %v1162
    %1373 = vmatpush2.msra.mxu0 %v1161
    %1374 = vmatprep.subr.mxu0 %v1158
    %1375 = vmatpush2.msra.mxu0 %v1157
    %1376 = vmatprep.mubr.f32.mxu0 %v1090
    %1377 = vmatmul.mubr.f32.gmra.mxu0 %v1086
    %v1378 = vpop.f32.mrf.mxu0
    %v1379 = vadd.f32 %v1232, %v1378
    %v1380 = vpop.f32.mrf.mxu0
    %v1381 = vadd.f32 %v1236, %v1380
    %1382 = vdwg.mxu0
    %v1383 = vxor.u32 %v1308, 2147483648
    %v1384 = vmul.f32 %v1383, 1.442695
    %v1385 = vpow.pop %v1384
    %v1386 = vadd.f32 %v1385, 1.0
    %v1387 = vrcp.pop %v1386
    %v1388 = vmul.f32 1.0, %v1387
    %v1389 = vxor.u32 %v1310, 2147483648
    %v1390 = vmul.f32 %v1389, 1.442695
    %v1391 = vpow.pop %v1390
    %v1392 = vadd.f32 %v1391, 1.0
    %v1393 = vrcp.pop %v1392
    %v1394 = vmul.f32 1.0, %v1393
    %v1395 = vtanh.pop %v1379
    %v1396 = vxor.u32 %v1381, 2147483648
    %v1397 = vmul.f32 %v1396, 1.442695
    %v1398 = vpow.pop %v1397
    %v1399 = vadd.f32 %v1398, 1.0
    %v1400 = vrcp.pop %v1399
    %v1401 = vmul.f32 1.0, %v1400
    %v1402 = vmul.f32 %v1394, %v1089
    %v1403 = vmul.f32 %v1388, %v1395
    %v1404 = vadd.f32 %v1402, %v1403
    %v1405 = vtanh.pop %v1404
    %v1406 = vmul.f32 %v1401, %v1405
    %1407 = vst [vmem:[%s446] sm:$0xff] %v1406
    %1408 = vst [vmem:[%s444] sm:$0xff] %v1404
    %s1409 = scalar_lea.vmem [#allocation15], 8
    %1410 = vst [vmem:[%s1409] sm:$0xff] %v1406
    %s1411 = scalar_lea.vmem [#allocation4], 16
    %v1412 = vld [vmem:[%s1411] sm:$0xff]
    %v1413 = vld [vmem:[#allocation3] sm:$0xff]
    %v1414 = vld [vmem:[#allocation2] sm:$0xff]
    %v1415 = vld [vmem:[#allocation7] sm:$0xff]
    %v1416 = vld [vmem:[#allocation7 + $0x8] sm:$0xff]
    %v1417 = vld [vmem:[#allocation7 + $0x10] sm:$0xff]
    %v1418 = vld [vmem:[#allocation7 + $0x18] sm:$0xff]
    %v1419 = vld [vmem:[#allocation7 + $0x20] sm:$0xff]
    %v1420 = vld [vmem:[#allocation7 + $0x28] sm:$0xff]
    %v1421 = vld [vmem:[#allocation7 + $0x30] sm:$0xff]
    %v1422 = vld [vmem:[#allocation7 + $0x38] sm:$0xff]
    %v1423 = vld [vmem:[#allocation7 + $0x40] sm:$0xff]
    %v1424 = vld [vmem:[#allocation7 + $0x48] sm:$0xff]
    %v1425 = vld [vmem:[#allocation7 + $0x50] sm:$0xff]
    %v1426 = vld [vmem:[#allocation7 + $0x58] sm:$0xff]
    %v1427 = vld [vmem:[#allocation7 + $0x60] sm:$0xff]
    %v1428 = vld [vmem:[#allocation7 + $0x68] sm:$0xff]
    %v1429 = vld [vmem:[#allocation7 + $0x70] sm:$0xff]
    %v1430 = vld [vmem:[#allocation7 + $0x78] sm:$0xff]
    %v1431 = vld [vmem:[#allocation7 + $0x80] sm:$0xff]
    %v1432 = vld [vmem:[#allocation7 + $0x88] sm:$0xff]
    %v1433 = vld [vmem:[#allocation7 + $0x90] sm:$0xff]
    %v1434 = vld [vmem:[#allocation7 + $0x98] sm:$0xff]
    %v1435 = vld [vmem:[#allocation7 + $0xa0] sm:$0xff]
    %v1436 = vld [vmem:[#allocation7 + $0xa8] sm:$0xff]
    %v1437 = vld [vmem:[#allocation7 + $0xb0] sm:$0xff]
    %v1438 = vld [vmem:[#allocation7 + $0xb8] sm:$0xff]
    %v1439 = vld [vmem:[#allocation7 + $0xc0] sm:$0xff]
    %v1440 = vld [vmem:[#allocation7 + $0xc8] sm:$0xff]
    %v1441 = vld [vmem:[#allocation7 + $0xd0] sm:$0xff]
    %v1442 = vld [vmem:[#allocation7 + $0xd8] sm:$0xff]
    %v1443 = vld [vmem:[#allocation7 + $0xe0] sm:$0xff]
    %v1444 = vld [vmem:[#allocation7 + $0xe8] sm:$0xff]
    %v1445 = vld [vmem:[#allocation7 + $0xf0] sm:$0xff]
    %v1446 = vld [vmem:[#allocation7 + $0xf8] sm:$0xff]
    %v1447 = vld [vmem:[#allocation7 + $0x100] sm:$0xff]
    %v1448 = vld [vmem:[#allocation7 + $0x108] sm:$0xff]
    %v1449 = vld [vmem:[#allocation7 + $0x110] sm:$0xff]
    %v1450 = vld [vmem:[#allocation7 + $0x118] sm:$0xff]
    %v1451 = vld [vmem:[#allocation7 + $0x120] sm:$0xff]
    %v1452 = vld [vmem:[#allocation7 + $0x128] sm:$0xff]
    %v1453 = vld [vmem:[#allocation7 + $0x130] sm:$0xff]
    %v1454 = vld [vmem:[#allocation7 + $0x138] sm:$0xff]
    %v1455 = vld [vmem:[#allocation7 + $0x140] sm:$0xff]
    %v1456 = vld [vmem:[#allocation7 + $0x148] sm:$0xff]
    %v1457 = vld [vmem:[#allocation7 + $0x150] sm:$0xff]
    %v1458 = vld [vmem:[#allocation7 + $0x158] sm:$0xff]
    %v1459 = vld [vmem:[#allocation7 + $0x160] sm:$0xff]
    %v1460 = vld [vmem:[#allocation7 + $0x168] sm:$0xff]
    %v1461 = vld [vmem:[#allocation7 + $0x170] sm:$0xff]
    %v1462 = vld [vmem:[#allocation7 + $0x178] sm:$0xff]
    %v1463 = vld [vmem:[#allocation7 + $0x180] sm:$0xff]
    %v1464 = vld [vmem:[#allocation7 + $0x188] sm:$0xff]
    %v1465 = vld [vmem:[#allocation7 + $0x190] sm:$0xff]
    %v1466 = vld [vmem:[#allocation7 + $0x198] sm:$0xff]
    %v1467 = vld [vmem:[#allocation7 + $0x1a0] sm:$0xff]
    %v1468 = vld [vmem:[#allocation7 + $0x1a8] sm:$0xff]
    %v1469 = vld [vmem:[#allocation7 + $0x1b0] sm:$0xff]
    %v1470 = vld [vmem:[#allocation7 + $0x1b8] sm:$0xff]
    %v1471 = vld [vmem:[#allocation7 + $0x1c0] sm:$0xff]
    %v1472 = vld [vmem:[#allocation7 + $0x1c8] sm:$0xff]
    %v1473 = vld [vmem:[#allocation7 + $0x1d0] sm:$0xff]
    %v1474 = vld [vmem:[#allocation7 + $0x1d8] sm:$0xff]
    %v1475 = vld [vmem:[#allocation7 + $0x1e0] sm:$0xff]
    %v1476 = vld [vmem:[#allocation7 + $0x1e8] sm:$0xff]
    %v1477 = vld [vmem:[#allocation7 + $0x1f0] sm:$0xff]
    %v1478 = vld [vmem:[#allocation7 + $0x1f8] sm:$0xff]
    %v1479 = vld [vmem:[#allocation7 + $0x200] sm:$0xff]
    %v1480 = vld [vmem:[#allocation7 + $0x208] sm:$0xff]
    %v1481 = vld [vmem:[#allocation7 + $0x210] sm:$0xff]
    %v1482 = vld [vmem:[#allocation7 + $0x218] sm:$0xff]
    %v1483 = vld [vmem:[#allocation7 + $0x220] sm:$0xff]
    %v1484 = vld [vmem:[#allocation7 + $0x228] sm:$0xff]
    %v1485 = vld [vmem:[#allocation7 + $0x230] sm:$0xff]
    %v1486 = vld [vmem:[#allocation7 + $0x238] sm:$0xff]
    %v1487 = vld [vmem:[#allocation7 + $0x240] sm:$0xff]
    %v1488 = vld [vmem:[#allocation7 + $0x248] sm:$0xff]
    %v1489 = vld [vmem:[#allocation7 + $0x250] sm:$0xff]
    %v1490 = vld [vmem:[#allocation7 + $0x258] sm:$0xff]
    %v1491 = vld [vmem:[#allocation7 + $0x260] sm:$0xff]
    %v1492 = vld [vmem:[#allocation7 + $0x268] sm:$0xff]
    %v1493 = vld [vmem:[#allocation7 + $0x270] sm:$0xff]
    %v1494 = vld [vmem:[#allocation7 + $0x278] sm:$0xff]
    %v1495 = vld [vmem:[#allocation7 + $0x280] sm:$0xff]
    %v1496 = vld [vmem:[#allocation7 + $0x288] sm:$0xff]
    %v1497 = vld [vmem:[#allocation7 + $0x290] sm:$0xff]
    %v1498 = vld [vmem:[#allocation7 + $0x298] sm:$0xff]
    %v1499 = vld [vmem:[#allocation7 + $0x2a0] sm:$0xff]
    %v1500 = vld [vmem:[#allocation7 + $0x2a8] sm:$0xff]
    %v1501 = vld [vmem:[#allocation7 + $0x2b0] sm:$0xff]
    %v1502 = vld [vmem:[#allocation7 + $0x2b8] sm:$0xff]
    %v1503 = vld [vmem:[#allocation7 + $0x2c0] sm:$0xff]
    %v1504 = vld [vmem:[#allocation7 + $0x2c8] sm:$0xff]
    %v1505 = vld [vmem:[#allocation7 + $0x2d0] sm:$0xff]
    %v1506 = vld [vmem:[#allocation7 + $0x2d8] sm:$0xff]
    %v1507 = vld [vmem:[#allocation7 + $0x2e0] sm:$0xff]
    %v1508 = vld [vmem:[#allocation7 + $0x2e8] sm:$0xff]
    %v1509 = vld [vmem:[#allocation7 + $0x2f0] sm:$0xff]
    %v1510 = vld [vmem:[#allocation7 + $0x2f8] sm:$0xff]
    %v1511 = vld [vmem:[#allocation7 + $0x300] sm:$0xff]
    %v1512 = vld [vmem:[#allocation7 + $0x308] sm:$0xff]
    %v1513 = vld [vmem:[#allocation7 + $0x310] sm:$0xff]
    %v1514 = vld [vmem:[#allocation7 + $0x318] sm:$0xff]
    %v1515 = vld [vmem:[#allocation7 + $0x320] sm:$0xff]
    %v1516 = vld [vmem:[#allocation7 + $0x328] sm:$0xff]
    %v1517 = vld [vmem:[#allocation7 + $0x330] sm:$0xff]
    %v1518 = vld [vmem:[#allocation7 + $0x338] sm:$0xff]
    %v1519 = vld [vmem:[#allocation7 + $0x340] sm:$0xff]
    %v1520 = vld [vmem:[#allocation7 + $0x348] sm:$0xff]
    %v1521 = vld [vmem:[#allocation7 + $0x350] sm:$0xff]
    %v1522 = vld [vmem:[#allocation7 + $0x358] sm:$0xff]
    %v1523 = vld [vmem:[#allocation7 + $0x360] sm:$0xff]
    %v1524 = vld [vmem:[#allocation7 + $0x368] sm:$0xff]
    %v1525 = vld [vmem:[#allocation7 + $0x370] sm:$0xff]
    %v1526 = vld [vmem:[#allocation7 + $0x378] sm:$0xff]
    %v1527 = vld [vmem:[#allocation7 + $0x380] sm:$0xff]
    %v1528 = vld [vmem:[#allocation7 + $0x388] sm:$0xff]
    %v1529 = vld [vmem:[#allocation7 + $0x390] sm:$0xff]
    %v1530 = vld [vmem:[#allocation7 + $0x398] sm:$0xff]
    %v1531 = vld [vmem:[#allocation7 + $0x3a0] sm:$0xff]
    %v1532 = vld [vmem:[#allocation7 + $0x3a8] sm:$0xff]
    %v1533 = vld [vmem:[#allocation7 + $0x3b0] sm:$0xff]
    %v1534 = vld [vmem:[#allocation7 + $0x3b8] sm:$0xff]
    %v1535 = vld [vmem:[#allocation7 + $0x3c0] sm:$0xff]
    %v1536 = vld [vmem:[#allocation7 + $0x3c8] sm:$0xff]
    %v1537 = vld [vmem:[#allocation7 + $0x3d0] sm:$0xff]
    %v1538 = vld [vmem:[#allocation7 + $0x3d8] sm:$0xff]
    %v1539 = vld [vmem:[#allocation7 + $0x3e0] sm:$0xff]
    %v1540 = vld [vmem:[#allocation7 + $0x3e8] sm:$0xff]
    %v1541 = vld [vmem:[#allocation7 + $0x3f0] sm:$0xff]
    %v1542 = vld [vmem:[#allocation7 + $0x3f8] sm:$0xff]
    %v1543 = vld [vmem:[#allocation9] sm:$0xf]
    %v1545 = vlaneseq
    %v1546 = vshrl.u32 %v1545, 7
    %v1547 = vsub.s32 0, %v1546
    %v1548 = vrot.slane %v1543, %v1547
    %v1549 = vlaneseq
    %v1550 = vshrl.u32 %v1549, 7
    %v1551 = vsub.s32 1, %v1550
    %v1552 = vrot.slane %v1543, %v1551
    %v1553 = vlaneseq
    %v1554 = vshrl.u32 %v1553, 7
    %v1555 = vsub.s32 2, %v1554
    %v1556 = vrot.slane %v1543, %v1555
    %v1557 = vlaneseq
    %v1558 = vshrl.u32 %v1557, 7
    %v1559 = vsub.s32 3, %v1558
    %v1560 = vrot.slane %v1543, %v1559
    %1565 = vmatprep.subr.mxu0 %v1476
    %1566 = vmatpush1.msra.mxu0 %v1475
    %1567 = vmatprep.subr.mxu0 %v1472
    %1568 = vmatpush1.msra.mxu0 %v1471
    %1569 = vmatprep.subr.mxu0 %v1468
    %1570 = vmatpush1.msra.mxu0 %v1467
    %1571 = vmatprep.subr.mxu0 %v1464
    %1572 = vmatpush1.msra.mxu0 %v1463
    %1573 = vmatprep.subr.mxu0 %v1460
    %1574 = vmatpush1.msra.mxu0 %v1459
    %1575 = vmatprep.subr.mxu0 %v1456
    %1576 = vmatpush1.msra.mxu0 %v1455
    %1577 = vmatprep.subr.mxu0 %v1452
    %1578 = vmatpush1.msra.mxu0 %v1451
    %1579 = vmatprep.subr.mxu0 %v1448
    %1580 = vmatpush1.msra.mxu0 %v1447
    %1581 = vmatprep.subr.mxu0 %v1444
    %1582 = vmatpush1.msra.mxu0 %v1443
    %1583 = vmatprep.subr.mxu0 %v1440
    %1584 = vmatpush1.msra.mxu0 %v1439
    %1585 = vmatprep.subr.mxu0 %v1436
    %1586 = vmatpush1.msra.mxu0 %v1435
    %1587 = vmatprep.subr.mxu0 %v1432
    %1588 = vmatpush1.msra.mxu0 %v1431
    %1589 = vmatprep.subr.mxu0 %v1428
    %1590 = vmatpush1.msra.mxu0 %v1427
    %1591 = vmatprep.subr.mxu0 %v1424
    %1592 = vmatpush1.msra.mxu0 %v1423
    %1593 = vmatprep.subr.mxu0 %v1420
    %1594 = vmatpush1.msra.mxu0 %v1419
    %1595 = vmatprep.subr.mxu0 %v1416
    %1596 = vmatpush1.msra.mxu0 %v1415
    %1597 = vmatprep.subr.mxu0 %v1540
    %1598 = vmatpush2.msra.mxu0 %v1539
    %1599 = vmatprep.subr.mxu0 %v1536
    %1600 = vmatpush2.msra.mxu0 %v1535
    %1601 = vmatprep.subr.mxu0 %v1532
    %1602 = vmatpush2.msra.mxu0 %v1531
    %1603 = vmatprep.subr.mxu0 %v1528
    %1604 = vmatpush2.msra.mxu0 %v1527
    %1605 = vmatprep.subr.mxu0 %v1524
    %1606 = vmatpush2.msra.mxu0 %v1523
    %1607 = vmatprep.subr.mxu0 %v1520
    %1608 = vmatpush2.msra.mxu0 %v1519
    %1609 = vmatprep.subr.mxu0 %v1516
    %1610 = vmatpush2.msra.mxu0 %v1515
    %1611 = vmatprep.subr.mxu0 %v1512
    %1612 = vmatpush2.msra.mxu0 %v1511
    %1613 = vmatprep.subr.mxu0 %v1508
    %1614 = vmatpush2.msra.mxu0 %v1507
    %1615 = vmatprep.subr.mxu0 %v1504
    %1616 = vmatpush2.msra.mxu0 %v1503
    %1617 = vmatprep.subr.mxu0 %v1500
    %1618 = vmatpush2.msra.mxu0 %v1499
    %1619 = vmatprep.subr.mxu0 %v1496
    %1620 = vmatpush2.msra.mxu0 %v1495
    %1621 = vmatprep.subr.mxu0 %v1492
    %1622 = vmatpush2.msra.mxu0 %v1491
    %1623 = vmatprep.subr.mxu0 %v1488
    %1624 = vmatpush2.msra.mxu0 %v1487
    %1625 = vmatprep.subr.mxu0 %v1484
    %1626 = vmatpush2.msra.mxu0 %v1483
    %1627 = vmatprep.subr.mxu0 %v1480
    %1628 = vmatpush2.msra.mxu0 %v1479
    %1629 = vmatprep.mubr.f32.mxu0 %v1414
    %1630 = vmatmul.mubr.f32.gmra.mxu0 %v1412
    %v1631 = vpop.f32.mrf.mxu0
    %v1632 = vadd.f32 %v1548, %v1631
    %v1633 = vpop.f32.mrf.mxu0
    %v1634 = vadd.f32 %v1552, %v1633
    %1635 = vdwg.mxu0
    %1636 = vmatprep.subr.mxu0 %v1478
    %1637 = vmatpush1.msra.mxu0 %v1477
    %1638 = vmatprep.subr.mxu0 %v1474
    %1639 = vmatpush1.msra.mxu0 %v1473
    %1640 = vmatprep.subr.mxu0 %v1470
    %1641 = vmatpush1.msra.mxu0 %v1469
    %1642 = vmatprep.subr.mxu0 %v1466
    %1643 = vmatpush1.msra.mxu0 %v1465
    %1644 = vmatprep.subr.mxu0 %v1462
    %1645 = vmatpush1.msra.mxu0 %v1461
    %1646 = vmatprep.subr.mxu0 %v1458
    %1647 = vmatpush1.msra.mxu0 %v1457
    %1648 = vmatprep.subr.mxu0 %v1454
    %1649 = vmatpush1.msra.mxu0 %v1453
    %1650 = vmatprep.subr.mxu0 %v1450
    %1651 = vmatpush1.msra.mxu0 %v1449
    %1652 = vmatprep.subr.mxu0 %v1446
    %1653 = vmatpush1.msra.mxu0 %v1445
    %1654 = vmatprep.subr.mxu0 %v1442
    %1655 = vmatpush1.msra.mxu0 %v1441
    %1656 = vmatprep.subr.mxu0 %v1438
    %1657 = vmatpush1.msra.mxu0 %v1437
    %1658 = vmatprep.subr.mxu0 %v1434
    %1659 = vmatpush1.msra.mxu0 %v1433
    %1660 = vmatprep.subr.mxu0 %v1430
    %1661 = vmatpush1.msra.mxu0 %v1429
    %1662 = vmatprep.subr.mxu0 %v1426
    %1663 = vmatpush1.msra.mxu0 %v1425
    %1664 = vmatprep.subr.mxu0 %v1422
    %1665 = vmatpush1.msra.mxu0 %v1421
    %1666 = vmatprep.subr.mxu0 %v1418
    %1667 = vmatpush1.msra.mxu0 %v1417
    %1668 = vmatprep.subr.mxu0 %v1542
    %1669 = vmatpush2.msra.mxu0 %v1541
    %1670 = vmatprep.subr.mxu0 %v1538
    %1671 = vmatpush2.msra.mxu0 %v1537
    %1672 = vmatprep.subr.mxu0 %v1534
    %1673 = vmatpush2.msra.mxu0 %v1533
    %1674 = vmatprep.subr.mxu0 %v1530
    %1675 = vmatpush2.msra.mxu0 %v1529
    %1676 = vmatprep.subr.mxu0 %v1526
    %1677 = vmatpush2.msra.mxu0 %v1525
    %1678 = vmatprep.subr.mxu0 %v1522
    %1679 = vmatpush2.msra.mxu0 %v1521
    %1680 = vmatprep.subr.mxu0 %v1518
    %1681 = vmatpush2.msra.mxu0 %v1517
    %1682 = vmatprep.subr.mxu0 %v1514
    %1683 = vmatpush2.msra.mxu0 %v1513
    %1684 = vmatprep.subr.mxu0 %v1510
    %1685 = vmatpush2.msra.mxu0 %v1509
    %1686 = vmatprep.subr.mxu0 %v1506
    %1687 = vmatpush2.msra.mxu0 %v1505
    %1688 = vmatprep.subr.mxu0 %v1502
    %1689 = vmatpush2.msra.mxu0 %v1501
    %1690 = vmatprep.subr.mxu0 %v1498
    %1691 = vmatpush2.msra.mxu0 %v1497
    %1692 = vmatprep.subr.mxu0 %v1494
    %1693 = vmatpush2.msra.mxu0 %v1493
    %1694 = vmatprep.subr.mxu0 %v1490
    %1695 = vmatpush2.msra.mxu0 %v1489
    %1696 = vmatprep.subr.mxu0 %v1486
    %1697 = vmatpush2.msra.mxu0 %v1485
    %1698 = vmatprep.subr.mxu0 %v1482
    %1699 = vmatpush2.msra.mxu0 %v1481
    %1700 = vmatprep.mubr.f32.mxu0 %v1414
    %1701 = vmatmul.mubr.f32.gmra.mxu0 %v1412
    %v1702 = vpop.f32.mrf.mxu0
    %v1703 = vadd.f32 %v1556, %v1702
    %v1704 = vpop.f32.mrf.mxu0
    %v1705 = vadd.f32 %v1560, %v1704
    %1706 = vdwg.mxu0
    %v1707 = vxor.u32 %v1632, 2147483648
    %v1708 = vmul.f32 %v1707, 1.442695
    %v1709 = vpow.pop %v1708
    %v1710 = vadd.f32 %v1709, 1.0
    %v1711 = vrcp.pop %v1710
    %v1712 = vmul.f32 1.0, %v1711
    %v1713 = vxor.u32 %v1634, 2147483648
    %v1714 = vmul.f32 %v1713, 1.442695
    %v1715 = vpow.pop %v1714
    %v1716 = vadd.f32 %v1715, 1.0
    %v1717 = vrcp.pop %v1716
    %v1718 = vmul.f32 1.0, %v1717
    %v1719 = vtanh.pop %v1703
    %v1720 = vxor.u32 %v1705, 2147483648
    %v1721 = vmul.f32 %v1720, 1.442695
    %v1722 = vpow.pop %v1721
    %v1723 = vadd.f32 %v1722, 1.0
    %v1724 = vrcp.pop %v1723
    %v1725 = vmul.f32 1.0, %v1724
    %v1726 = vmul.f32 %v1718, %v1413
    %v1727 = vmul.f32 %v1712, %v1719
    %v1728 = vadd.f32 %v1726, %v1727
    %v1729 = vtanh.pop %v1728
    %v1730 = vmul.f32 %v1725, %v1729
    %1731 = vst [vmem:[#allocation2] sm:$0xff] %v1730
    %1732 = vst [vmem:[#allocation3] sm:$0xff] %v1728
    %v1733 = vld [vmem:[%s444] sm:$0xff]
    %v1734 = vld [vmem:[%s446] sm:$0xff]
    %v1735 = vld [vmem:[#allocation10] sm:$0xff]
    %v1736 = vld [vmem:[#allocation10 + $0x8] sm:$0xff]
    %v1737 = vld [vmem:[#allocation10 + $0x10] sm:$0xff]
    %v1738 = vld [vmem:[#allocation10 + $0x18] sm:$0xff]
    %v1739 = vld [vmem:[#allocation10 + $0x20] sm:$0xff]
    %v1740 = vld [vmem:[#allocation10 + $0x28] sm:$0xff]
    %v1741 = vld [vmem:[#allocation10 + $0x30] sm:$0xff]
    %v1742 = vld [vmem:[#allocation10 + $0x38] sm:$0xff]
    %v1743 = vld [vmem:[#allocation10 + $0x40] sm:$0xff]
    %v1744 = vld [vmem:[#allocation10 + $0x48] sm:$0xff]
    %v1745 = vld [vmem:[#allocation10 + $0x50] sm:$0xff]
    %v1746 = vld [vmem:[#allocation10 + $0x58] sm:$0xff]
    %v1747 = vld [vmem:[#allocation10 + $0x60] sm:$0xff]
    %v1748 = vld [vmem:[#allocation10 + $0x68] sm:$0xff]
    %v1749 = vld [vmem:[#allocation10 + $0x70] sm:$0xff]
    %v1750 = vld [vmem:[#allocation10 + $0x78] sm:$0xff]
    %v1751 = vld [vmem:[#allocation10 + $0x80] sm:$0xff]
    %v1752 = vld [vmem:[#allocation10 + $0x88] sm:$0xff]
    %v1753 = vld [vmem:[#allocation10 + $0x90] sm:$0xff]
    %v1754 = vld [vmem:[#allocation10 + $0x98] sm:$0xff]
    %v1755 = vld [vmem:[#allocation10 + $0xa0] sm:$0xff]
    %v1756 = vld [vmem:[#allocation10 + $0xa8] sm:$0xff]
    %v1757 = vld [vmem:[#allocation10 + $0xb0] sm:$0xff]
    %v1758 = vld [vmem:[#allocation10 + $0xb8] sm:$0xff]
    %v1759 = vld [vmem:[#allocation10 + $0xc0] sm:$0xff]
    %v1760 = vld [vmem:[#allocation10 + $0xc8] sm:$0xff]
    %v1761 = vld [vmem:[#allocation10 + $0xd0] sm:$0xff]
    %v1762 = vld [vmem:[#allocation10 + $0xd8] sm:$0xff]
    %v1763 = vld [vmem:[#allocation10 + $0xe0] sm:$0xff]
    %v1764 = vld [vmem:[#allocation10 + $0xe8] sm:$0xff]
    %v1765 = vld [vmem:[#allocation10 + $0xf0] sm:$0xff]
    %v1766 = vld [vmem:[#allocation10 + $0xf8] sm:$0xff]
    %v1767 = vld [vmem:[#allocation10 + $0x100] sm:$0xff]
    %v1768 = vld [vmem:[#allocation10 + $0x108] sm:$0xff]
    %v1769 = vld [vmem:[#allocation10 + $0x110] sm:$0xff]
    %v1770 = vld [vmem:[#allocation10 + $0x118] sm:$0xff]
    %v1771 = vld [vmem:[#allocation10 + $0x120] sm:$0xff]
    %v1772 = vld [vmem:[#allocation10 + $0x128] sm:$0xff]
    %v1773 = vld [vmem:[#allocation10 + $0x130] sm:$0xff]
    %v1774 = vld [vmem:[#allocation10 + $0x138] sm:$0xff]
    %v1775 = vld [vmem:[#allocation10 + $0x140] sm:$0xff]
    %v1776 = vld [vmem:[#allocation10 + $0x148] sm:$0xff]
    %v1777 = vld [vmem:[#allocation10 + $0x150] sm:$0xff]
    %v1778 = vld [vmem:[#allocation10 + $0x158] sm:$0xff]
    %v1779 = vld [vmem:[#allocation10 + $0x160] sm:$0xff]
    %v1780 = vld [vmem:[#allocation10 + $0x168] sm:$0xff]
    %v1781 = vld [vmem:[#allocation10 + $0x170] sm:$0xff]
    %v1782 = vld [vmem:[#allocation10 + $0x178] sm:$0xff]
    %v1783 = vld [vmem:[#allocation10 + $0x180] sm:$0xff]
    %v1784 = vld [vmem:[#allocation10 + $0x188] sm:$0xff]
    %v1785 = vld [vmem:[#allocation10 + $0x190] sm:$0xff]
    %v1786 = vld [vmem:[#allocation10 + $0x198] sm:$0xff]
    %v1787 = vld [vmem:[#allocation10 + $0x1a0] sm:$0xff]
    %v1788 = vld [vmem:[#allocation10 + $0x1a8] sm:$0xff]
    %v1789 = vld [vmem:[#allocation10 + $0x1b0] sm:$0xff]
    %v1790 = vld [vmem:[#allocation10 + $0x1b8] sm:$0xff]
    %v1791 = vld [vmem:[#allocation10 + $0x1c0] sm:$0xff]
    %v1792 = vld [vmem:[#allocation10 + $0x1c8] sm:$0xff]
    %v1793 = vld [vmem:[#allocation10 + $0x1d0] sm:$0xff]
    %v1794 = vld [vmem:[#allocation10 + $0x1d8] sm:$0xff]
    %v1795 = vld [vmem:[#allocation10 + $0x1e0] sm:$0xff]
    %v1796 = vld [vmem:[#allocation10 + $0x1e8] sm:$0xff]
    %v1797 = vld [vmem:[#allocation10 + $0x1f0] sm:$0xff]
    %v1798 = vld [vmem:[#allocation10 + $0x1f8] sm:$0xff]
    %v1799 = vld [vmem:[#allocation10 + $0x200] sm:$0xff]
    %v1800 = vld [vmem:[#allocation10 + $0x208] sm:$0xff]
    %v1801 = vld [vmem:[#allocation10 + $0x210] sm:$0xff]
    %v1802 = vld [vmem:[#allocation10 + $0x218] sm:$0xff]
    %v1803 = vld [vmem:[#allocation10 + $0x220] sm:$0xff]
    %v1804 = vld [vmem:[#allocation10 + $0x228] sm:$0xff]
    %v1805 = vld [vmem:[#allocation10 + $0x230] sm:$0xff]
    %v1806 = vld [vmem:[#allocation10 + $0x238] sm:$0xff]
    %v1807 = vld [vmem:[#allocation10 + $0x240] sm:$0xff]
    %v1808 = vld [vmem:[#allocation10 + $0x248] sm:$0xff]
    %v1809 = vld [vmem:[#allocation10 + $0x250] sm:$0xff]
    %v1810 = vld [vmem:[#allocation10 + $0x258] sm:$0xff]
    %v1811 = vld [vmem:[#allocation10 + $0x260] sm:$0xff]
    %v1812 = vld [vmem:[#allocation10 + $0x268] sm:$0xff]
    %v1813 = vld [vmem:[#allocation10 + $0x270] sm:$0xff]
    %v1814 = vld [vmem:[#allocation10 + $0x278] sm:$0xff]
    %v1815 = vld [vmem:[#allocation10 + $0x280] sm:$0xff]
    %v1816 = vld [vmem:[#allocation10 + $0x288] sm:$0xff]
    %v1817 = vld [vmem:[#allocation10 + $0x290] sm:$0xff]
    %v1818 = vld [vmem:[#allocation10 + $0x298] sm:$0xff]
    %v1819 = vld [vmem:[#allocation10 + $0x2a0] sm:$0xff]
    %v1820 = vld [vmem:[#allocation10 + $0x2a8] sm:$0xff]
    %v1821 = vld [vmem:[#allocation10 + $0x2b0] sm:$0xff]
    %v1822 = vld [vmem:[#allocation10 + $0x2b8] sm:$0xff]
    %v1823 = vld [vmem:[#allocation10 + $0x2c0] sm:$0xff]
    %v1824 = vld [vmem:[#allocation10 + $0x2c8] sm:$0xff]
    %v1825 = vld [vmem:[#allocation10 + $0x2d0] sm:$0xff]
    %v1826 = vld [vmem:[#allocation10 + $0x2d8] sm:$0xff]
    %v1827 = vld [vmem:[#allocation10 + $0x2e0] sm:$0xff]
    %v1828 = vld [vmem:[#allocation10 + $0x2e8] sm:$0xff]
    %v1829 = vld [vmem:[#allocation10 + $0x2f0] sm:$0xff]
    %v1830 = vld [vmem:[#allocation10 + $0x2f8] sm:$0xff]
    %v1831 = vld [vmem:[#allocation10 + $0x300] sm:$0xff]
    %v1832 = vld [vmem:[#allocation10 + $0x308] sm:$0xff]
    %v1833 = vld [vmem:[#allocation10 + $0x310] sm:$0xff]
    %v1834 = vld [vmem:[#allocation10 + $0x318] sm:$0xff]
    %v1835 = vld [vmem:[#allocation10 + $0x320] sm:$0xff]
    %v1836 = vld [vmem:[#allocation10 + $0x328] sm:$0xff]
    %v1837 = vld [vmem:[#allocation10 + $0x330] sm:$0xff]
    %v1838 = vld [vmem:[#allocation10 + $0x338] sm:$0xff]
    %v1839 = vld [vmem:[#allocation10 + $0x340] sm:$0xff]
    %v1840 = vld [vmem:[#allocation10 + $0x348] sm:$0xff]
    %v1841 = vld [vmem:[#allocation10 + $0x350] sm:$0xff]
    %v1842 = vld [vmem:[#allocation10 + $0x358] sm:$0xff]
    %v1843 = vld [vmem:[#allocation10 + $0x360] sm:$0xff]
    %v1844 = vld [vmem:[#allocation10 + $0x368] sm:$0xff]
    %v1845 = vld [vmem:[#allocation10 + $0x370] sm:$0xff]
    %v1846 = vld [vmem:[#allocation10 + $0x378] sm:$0xff]
    %v1847 = vld [vmem:[#allocation10 + $0x380] sm:$0xff]
    %v1848 = vld [vmem:[#allocation10 + $0x388] sm:$0xff]
    %v1849 = vld [vmem:[#allocation10 + $0x390] sm:$0xff]
    %v1850 = vld [vmem:[#allocation10 + $0x398] sm:$0xff]
    %v1851 = vld [vmem:[#allocation10 + $0x3a0] sm:$0xff]
    %v1852 = vld [vmem:[#allocation10 + $0x3a8] sm:$0xff]
    %v1853 = vld [vmem:[#allocation10 + $0x3b0] sm:$0xff]
    %v1854 = vld [vmem:[#allocation10 + $0x3b8] sm:$0xff]
    %v1855 = vld [vmem:[#allocation10 + $0x3c0] sm:$0xff]
    %v1856 = vld [vmem:[#allocation10 + $0x3c8] sm:$0xff]
    %v1857 = vld [vmem:[#allocation10 + $0x3d0] sm:$0xff]
    %v1858 = vld [vmem:[#allocation10 + $0x3d8] sm:$0xff]
    %v1859 = vld [vmem:[#allocation10 + $0x3e0] sm:$0xff]
    %v1860 = vld [vmem:[#allocation10 + $0x3e8] sm:$0xff]
    %v1861 = vld [vmem:[#allocation10 + $0x3f0] sm:$0xff]
    %v1862 = vld [vmem:[#allocation10 + $0x3f8] sm:$0xff]
    %v1863 = vld [vmem:[%s4] sm:$0xf]
    %v1865 = vlaneseq
    %v1866 = vshrl.u32 %v1865, 7
    %v1867 = vsub.s32 0, %v1866
    %v1868 = vrot.slane %v1863, %v1867
    %v1869 = vlaneseq
    %v1870 = vshrl.u32 %v1869, 7
    %v1871 = vsub.s32 1, %v1870
    %v1872 = vrot.slane %v1863, %v1871
    %v1873 = vlaneseq
    %v1874 = vshrl.u32 %v1873, 7
    %v1875 = vsub.s32 2, %v1874
    %v1876 = vrot.slane %v1863, %v1875
    %v1877 = vlaneseq
    %v1878 = vshrl.u32 %v1877, 7
    %v1879 = vsub.s32 3, %v1878
    %v1880 = vrot.slane %v1863, %v1879
    %1885 = vmatprep.subr.mxu0 %v1796
    %1886 = vmatpush1.msra.mxu0 %v1795
    %1887 = vmatprep.subr.mxu0 %v1792
    %1888 = vmatpush1.msra.mxu0 %v1791
    %1889 = vmatprep.subr.mxu0 %v1788
    %1890 = vmatpush1.msra.mxu0 %v1787
    %1891 = vmatprep.subr.mxu0 %v1784
    %1892 = vmatpush1.msra.mxu0 %v1783
    %1893 = vmatprep.subr.mxu0 %v1780
    %1894 = vmatpush1.msra.mxu0 %v1779
    %1895 = vmatprep.subr.mxu0 %v1776
    %1896 = vmatpush1.msra.mxu0 %v1775
    %1897 = vmatprep.subr.mxu0 %v1772
    %1898 = vmatpush1.msra.mxu0 %v1771
    %1899 = vmatprep.subr.mxu0 %v1768
    %1900 = vmatpush1.msra.mxu0 %v1767
    %1901 = vmatprep.subr.mxu0 %v1764
    %1902 = vmatpush1.msra.mxu0 %v1763
    %1903 = vmatprep.subr.mxu0 %v1760
    %1904 = vmatpush1.msra.mxu0 %v1759
    %1905 = vmatprep.subr.mxu0 %v1756
    %1906 = vmatpush1.msra.mxu0 %v1755
    %1907 = vmatprep.subr.mxu0 %v1752
    %1908 = vmatpush1.msra.mxu0 %v1751
    %1909 = vmatprep.subr.mxu0 %v1748
    %1910 = vmatpush1.msra.mxu0 %v1747
    %1911 = vmatprep.subr.mxu0 %v1744
    %1912 = vmatpush1.msra.mxu0 %v1743
    %1913 = vmatprep.subr.mxu0 %v1740
    %1914 = vmatpush1.msra.mxu0 %v1739
    %1915 = vmatprep.subr.mxu0 %v1736
    %1916 = vmatpush1.msra.mxu0 %v1735
    %1917 = vmatprep.subr.mxu0 %v1860
    %1918 = vmatpush2.msra.mxu0 %v1859
    %1919 = vmatprep.subr.mxu0 %v1856
    %1920 = vmatpush2.msra.mxu0 %v1855
    %1921 = vmatprep.subr.mxu0 %v1852
    %1922 = vmatpush2.msra.mxu0 %v1851
    %1923 = vmatprep.subr.mxu0 %v1848
    %1924 = vmatpush2.msra.mxu0 %v1847
    %1925 = vmatprep.subr.mxu0 %v1844
    %1926 = vmatpush2.msra.mxu0 %v1843
    %1927 = vmatprep.subr.mxu0 %v1840
    %1928 = vmatpush2.msra.mxu0 %v1839
    %1929 = vmatprep.subr.mxu0 %v1836
    %1930 = vmatpush2.msra.mxu0 %v1835
    %1931 = vmatprep.subr.mxu0 %v1832
    %1932 = vmatpush2.msra.mxu0 %v1831
    %1933 = vmatprep.subr.mxu0 %v1828
    %1934 = vmatpush2.msra.mxu0 %v1827
    %1935 = vmatprep.subr.mxu0 %v1824
    %1936 = vmatpush2.msra.mxu0 %v1823
    %1937 = vmatprep.subr.mxu0 %v1820
    %1938 = vmatpush2.msra.mxu0 %v1819
    %1939 = vmatprep.subr.mxu0 %v1816
    %1940 = vmatpush2.msra.mxu0 %v1815
    %1941 = vmatprep.subr.mxu0 %v1812
    %1942 = vmatpush2.msra.mxu0 %v1811
    %1943 = vmatprep.subr.mxu0 %v1808
    %1944 = vmatpush2.msra.mxu0 %v1807
    %1945 = vmatprep.subr.mxu0 %v1804
    %1946 = vmatpush2.msra.mxu0 %v1803
    %1947 = vmatprep.subr.mxu0 %v1800
    %1948 = vmatpush2.msra.mxu0 %v1799
    %1949 = vmatprep.mubr.f32.mxu0 %v1734
    %1950 = vmatmul.mubr.f32.gmra.mxu0 %v1730
    %v1951 = vpop.f32.mrf.mxu0
    %v1952 = vadd.f32 %v1868, %v1951
    %v1953 = vpop.f32.mrf.mxu0
    %v1954 = vadd.f32 %v1872, %v1953
    %1955 = vdwg.mxu0
    %1956 = vmatprep.subr.mxu0 %v1798
    %1957 = vmatpush1.msra.mxu0 %v1797
    %1958 = vmatprep.subr.mxu0 %v1794
    %1959 = vmatpush1.msra.mxu0 %v1793
    %1960 = vmatprep.subr.mxu0 %v1790
    %1961 = vmatpush1.msra.mxu0 %v1789
    %1962 = vmatprep.subr.mxu0 %v1786
    %1963 = vmatpush1.msra.mxu0 %v1785
    %1964 = vmatprep.subr.mxu0 %v1782
    %1965 = vmatpush1.msra.mxu0 %v1781
    %1966 = vmatprep.subr.mxu0 %v1778
    %1967 = vmatpush1.msra.mxu0 %v1777
    %1968 = vmatprep.subr.mxu0 %v1774
    %1969 = vmatpush1.msra.mxu0 %v1773
    %1970 = vmatprep.subr.mxu0 %v1770
    %1971 = vmatpush1.msra.mxu0 %v1769
    %1972 = vmatprep.subr.mxu0 %v1766
    %1973 = vmatpush1.msra.mxu0 %v1765
    %1974 = vmatprep.subr.mxu0 %v1762
    %1975 = vmatpush1.msra.mxu0 %v1761
    %1976 = vmatprep.subr.mxu0 %v1758
    %1977 = vmatpush1.msra.mxu0 %v1757
    %1978 = vmatprep.subr.mxu0 %v1754
    %1979 = vmatpush1.msra.mxu0 %v1753
    %1980 = vmatprep.subr.mxu0 %v1750
    %1981 = vmatpush1.msra.mxu0 %v1749
    %1982 = vmatprep.subr.mxu0 %v1746
    %1983 = vmatpush1.msra.mxu0 %v1745
    %1984 = vmatprep.subr.mxu0 %v1742
    %1985 = vmatpush1.msra.mxu0 %v1741
    %1986 = vmatprep.subr.mxu0 %v1738
    %1987 = vmatpush1.msra.mxu0 %v1737
    %1988 = vmatprep.subr.mxu0 %v1862
    %1989 = vmatpush2.msra.mxu0 %v1861
    %1990 = vmatprep.subr.mxu0 %v1858
    %1991 = vmatpush2.msra.mxu0 %v1857
    %1992 = vmatprep.subr.mxu0 %v1854
    %1993 = vmatpush2.msra.mxu0 %v1853
    %1994 = vmatprep.subr.mxu0 %v1850
    %1995 = vmatpush2.msra.mxu0 %v1849
    %1996 = vmatprep.subr.mxu0 %v1846
    %1997 = vmatpush2.msra.mxu0 %v1845
    %1998 = vmatprep.subr.mxu0 %v1842
    %1999 = vmatpush2.msra.mxu0 %v1841
    %2000 = vmatprep.subr.mxu0 %v1838
    %2001 = vmatpush2.msra.mxu0 %v1837
    %2002 = vmatprep.subr.mxu0 %v1834
    %2003 = vmatpush2.msra.mxu0 %v1833
    %2004 = vmatprep.subr.mxu0 %v1830
    %2005 = vmatpush2.msra.mxu0 %v1829
    %2006 = vmatprep.subr.mxu0 %v1826
    %2007 = vmatpush2.msra.mxu0 %v1825
    %2008 = vmatprep.subr.mxu0 %v1822
    %2009 = vmatpush2.msra.mxu0 %v1821
    %2010 = vmatprep.subr.mxu0 %v1818
    %2011 = vmatpush2.msra.mxu0 %v1817
    %2012 = vmatprep.subr.mxu0 %v1814
    %2013 = vmatpush2.msra.mxu0 %v1813
    %2014 = vmatprep.subr.mxu0 %v1810
    %2015 = vmatpush2.msra.mxu0 %v1809
    %2016 = vmatprep.subr.mxu0 %v1806
    %2017 = vmatpush2.msra.mxu0 %v1805
    %2018 = vmatprep.subr.mxu0 %v1802
    %2019 = vmatpush2.msra.mxu0 %v1801
    %2020 = vmatprep.mubr.f32.mxu0 %v1734
    %2021 = vmatmul.mubr.f32.gmra.mxu0 %v1730
    %v2022 = vpop.f32.mrf.mxu0
    %v2023 = vadd.f32 %v1876, %v2022
    %v2024 = vpop.f32.mrf.mxu0
    %v2025 = vadd.f32 %v1880, %v2024
    %2026 = vdwg.mxu0
    %v2027 = vxor.u32 %v1952, 2147483648
    %v2028 = vmul.f32 %v2027, 1.442695
    %v2029 = vpow.pop %v2028
    %v2030 = vadd.f32 %v2029, 1.0
    %v2031 = vrcp.pop %v2030
    %v2032 = vmul.f32 1.0, %v2031
    %v2033 = vxor.u32 %v1954, 2147483648
    %v2034 = vmul.f32 %v2033, 1.442695
    %v2035 = vpow.pop %v2034
    %v2036 = vadd.f32 %v2035, 1.0
    %v2037 = vrcp.pop %v2036
    %v2038 = vmul.f32 1.0, %v2037
    %v2039 = vtanh.pop %v2023
    %v2040 = vxor.u32 %v2025, 2147483648
    %v2041 = vmul.f32 %v2040, 1.442695
    %v2042 = vpow.pop %v2041
    %v2043 = vadd.f32 %v2042, 1.0
    %v2044 = vrcp.pop %v2043
    %v2045 = vmul.f32 1.0, %v2044
    %v2046 = vmul.f32 %v2038, %v1733
    %v2047 = vmul.f32 %v2032, %v2039
    %v2048 = vadd.f32 %v2046, %v2047
    %v2049 = vtanh.pop %v2048
    %v2050 = vmul.f32 %v2045, %v2049
    %2051 = vst [vmem:[%s446] sm:$0xff] %v2050
    %2052 = vst [vmem:[%s444] sm:$0xff] %v2048
    %s2053 = scalar_lea.vmem [#allocation15], 16
    %2054 = vst [vmem:[%s2053] sm:$0xff] %v2050
    %s2055 = scalar_lea.vmem [#allocation4], 24
    %v2056 = vld [vmem:[%s2055] sm:$0xff]
    %v2057 = vld [vmem:[#allocation3] sm:$0xff]
    %v2058 = vld [vmem:[#allocation2] sm:$0xff]
    %v2059 = vld [vmem:[#allocation7] sm:$0xff]
    %v2060 = vld [vmem:[#allocation7 + $0x8] sm:$0xff]
    %v2061 = vld [vmem:[#allocation7 + $0x10] sm:$0xff]
    %v2062 = vld [vmem:[#allocation7 + $0x18] sm:$0xff]
    %v2063 = vld [vmem:[#allocation7 + $0x20] sm:$0xff]
    %v2064 = vld [vmem:[#allocation7 + $0x28] sm:$0xff]
    %v2065 = vld [vmem:[#allocation7 + $0x30] sm:$0xff]
    %v2066 = vld [vmem:[#allocation7 + $0x38] sm:$0xff]
    %v2067 = vld [vmem:[#allocation7 + $0x40] sm:$0xff]
    %v2068 = vld [vmem:[#allocation7 + $0x48] sm:$0xff]
    %v2069 = vld [vmem:[#allocation7 + $0x50] sm:$0xff]
    %v2070 = vld [vmem:[#allocation7 + $0x58] sm:$0xff]
    %v2071 = vld [vmem:[#allocation7 + $0x60] sm:$0xff]
    %v2072 = vld [vmem:[#allocation7 + $0x68] sm:$0xff]
    %v2073 = vld [vmem:[#allocation7 + $0x70] sm:$0xff]
    %v2074 = vld [vmem:[#allocation7 + $0x78] sm:$0xff]
    %v2075 = vld [vmem:[#allocation7 + $0x80] sm:$0xff]
    %v2076 = vld [vmem:[#allocation7 + $0x88] sm:$0xff]
    %v2077 = vld [vmem:[#allocation7 + $0x90] sm:$0xff]
    %v2078 = vld [vmem:[#allocation7 + $0x98] sm:$0xff]
    %v2079 = vld [vmem:[#allocation7 + $0xa0] sm:$0xff]
    %v2080 = vld [vmem:[#allocation7 + $0xa8] sm:$0xff]
    %v2081 = vld [vmem:[#allocation7 + $0xb0] sm:$0xff]
    %v2082 = vld [vmem:[#allocation7 + $0xb8] sm:$0xff]
    %v2083 = vld [vmem:[#allocation7 + $0xc0] sm:$0xff]
    %v2084 = vld [vmem:[#allocation7 + $0xc8] sm:$0xff]
    %v2085 = vld [vmem:[#allocation7 + $0xd0] sm:$0xff]
    %v2086 = vld [vmem:[#allocation7 + $0xd8] sm:$0xff]
    %v2087 = vld [vmem:[#allocation7 + $0xe0] sm:$0xff]
    %v2088 = vld [vmem:[#allocation7 + $0xe8] sm:$0xff]
    %v2089 = vld [vmem:[#allocation7 + $0xf0] sm:$0xff]
    %v2090 = vld [vmem:[#allocation7 + $0xf8] sm:$0xff]
    %v2091 = vld [vmem:[#allocation7 + $0x100] sm:$0xff]
    %v2092 = vld [vmem:[#allocation7 + $0x108] sm:$0xff]
    %v2093 = vld [vmem:[#allocation7 + $0x110] sm:$0xff]
    %v2094 = vld [vmem:[#allocation7 + $0x118] sm:$0xff]
    %v2095 = vld [vmem:[#allocation7 + $0x120] sm:$0xff]
    %v2096 = vld [vmem:[#allocation7 + $0x128] sm:$0xff]
    %v2097 = vld [vmem:[#allocation7 + $0x130] sm:$0xff]
    %v2098 = vld [vmem:[#allocation7 + $0x138] sm:$0xff]
    %v2099 = vld [vmem:[#allocation7 + $0x140] sm:$0xff]
    %v2100 = vld [vmem:[#allocation7 + $0x148] sm:$0xff]
    %v2101 = vld [vmem:[#allocation7 + $0x150] sm:$0xff]
    %v2102 = vld [vmem:[#allocation7 + $0x158] sm:$0xff]
    %v2103 = vld [vmem:[#allocation7 + $0x160] sm:$0xff]
    %v2104 = vld [vmem:[#allocation7 + $0x168] sm:$0xff]
    %v2105 = vld [vmem:[#allocation7 + $0x170] sm:$0xff]
    %v2106 = vld [vmem:[#allocation7 + $0x178] sm:$0xff]
    %v2107 = vld [vmem:[#allocation7 + $0x180] sm:$0xff]
    %v2108 = vld [vmem:[#allocation7 + $0x188] sm:$0xff]
    %v2109 = vld [vmem:[#allocation7 + $0x190] sm:$0xff]
    %v2110 = vld [vmem:[#allocation7 + $0x198] sm:$0xff]
    %v2111 = vld [vmem:[#allocation7 + $0x1a0] sm:$0xff]
    %v2112 = vld [vmem:[#allocation7 + $0x1a8] sm:$0xff]
    %v2113 = vld [vmem:[#allocation7 + $0x1b0] sm:$0xff]
    %v2114 = vld [vmem:[#allocation7 + $0x1b8] sm:$0xff]
    %v2115 = vld [vmem:[#allocation7 + $0x1c0] sm:$0xff]
    %v2116 = vld [vmem:[#allocation7 + $0x1c8] sm:$0xff]
    %v2117 = vld [vmem:[#allocation7 + $0x1d0] sm:$0xff]
    %v2118 = vld [vmem:[#allocation7 + $0x1d8] sm:$0xff]
    %v2119 = vld [vmem:[#allocation7 + $0x1e0] sm:$0xff]
    %v2120 = vld [vmem:[#allocation7 + $0x1e8] sm:$0xff]
    %v2121 = vld [vmem:[#allocation7 + $0x1f0] sm:$0xff]
    %v2122 = vld [vmem:[#allocation7 + $0x1f8] sm:$0xff]
    %v2123 = vld [vmem:[#allocation7 + $0x200] sm:$0xff]
    %v2124 = vld [vmem:[#allocation7 + $0x208] sm:$0xff]
    %v2125 = vld [vmem:[#allocation7 + $0x210] sm:$0xff]
    %v2126 = vld [vmem:[#allocation7 + $0x218] sm:$0xff]
    %v2127 = vld [vmem:[#allocation7 + $0x220] sm:$0xff]
    %v2128 = vld [vmem:[#allocation7 + $0x228] sm:$0xff]
    %v2129 = vld [vmem:[#allocation7 + $0x230] sm:$0xff]
    %v2130 = vld [vmem:[#allocation7 + $0x238] sm:$0xff]
    %v2131 = vld [vmem:[#allocation7 + $0x240] sm:$0xff]
    %v2132 = vld [vmem:[#allocation7 + $0x248] sm:$0xff]
    %v2133 = vld [vmem:[#allocation7 + $0x250] sm:$0xff]
    %v2134 = vld [vmem:[#allocation7 + $0x258] sm:$0xff]
    %v2135 = vld [vmem:[#allocation7 + $0x260] sm:$0xff]
    %v2136 = vld [vmem:[#allocation7 + $0x268] sm:$0xff]
    %v2137 = vld [vmem:[#allocation7 + $0x270] sm:$0xff]
    %v2138 = vld [vmem:[#allocation7 + $0x278] sm:$0xff]
    %v2139 = vld [vmem:[#allocation7 + $0x280] sm:$0xff]
    %v2140 = vld [vmem:[#allocation7 + $0x288] sm:$0xff]
    %v2141 = vld [vmem:[#allocation7 + $0x290] sm:$0xff]
    %v2142 = vld [vmem:[#allocation7 + $0x298] sm:$0xff]
    %v2143 = vld [vmem:[#allocation7 + $0x2a0] sm:$0xff]
    %v2144 = vld [vmem:[#allocation7 + $0x2a8] sm:$0xff]
    %v2145 = vld [vmem:[#allocation7 + $0x2b0] sm:$0xff]
    %v2146 = vld [vmem:[#allocation7 + $0x2b8] sm:$0xff]
    %v2147 = vld [vmem:[#allocation7 + $0x2c0] sm:$0xff]
    %v2148 = vld [vmem:[#allocation7 + $0x2c8] sm:$0xff]
    %v2149 = vld [vmem:[#allocation7 + $0x2d0] sm:$0xff]
    %v2150 = vld [vmem:[#allocation7 + $0x2d8] sm:$0xff]
    %v2151 = vld [vmem:[#allocation7 + $0x2e0] sm:$0xff]
    %v2152 = vld [vmem:[#allocation7 + $0x2e8] sm:$0xff]
    %v2153 = vld [vmem:[#allocation7 + $0x2f0] sm:$0xff]
    %v2154 = vld [vmem:[#allocation7 + $0x2f8] sm:$0xff]
    %v2155 = vld [vmem:[#allocation7 + $0x300] sm:$0xff]
    %v2156 = vld [vmem:[#allocation7 + $0x308] sm:$0xff]
    %v2157 = vld [vmem:[#allocation7 + $0x310] sm:$0xff]
    %v2158 = vld [vmem:[#allocation7 + $0x318] sm:$0xff]
    %v2159 = vld [vmem:[#allocation7 + $0x320] sm:$0xff]
    %v2160 = vld [vmem:[#allocation7 + $0x328] sm:$0xff]
    %v2161 = vld [vmem:[#allocation7 + $0x330] sm:$0xff]
    %v2162 = vld [vmem:[#allocation7 + $0x338] sm:$0xff]
    %v2163 = vld [vmem:[#allocation7 + $0x340] sm:$0xff]
    %v2164 = vld [vmem:[#allocation7 + $0x348] sm:$0xff]
    %v2165 = vld [vmem:[#allocation7 + $0x350] sm:$0xff]
    %v2166 = vld [vmem:[#allocation7 + $0x358] sm:$0xff]
    %v2167 = vld [vmem:[#allocation7 + $0x360] sm:$0xff]
    %v2168 = vld [vmem:[#allocation7 + $0x368] sm:$0xff]
    %v2169 = vld [vmem:[#allocation7 + $0x370] sm:$0xff]
    %v2170 = vld [vmem:[#allocation7 + $0x378] sm:$0xff]
    %v2171 = vld [vmem:[#allocation7 + $0x380] sm:$0xff]
    %v2172 = vld [vmem:[#allocation7 + $0x388] sm:$0xff]
    %v2173 = vld [vmem:[#allocation7 + $0x390] sm:$0xff]
    %v2174 = vld [vmem:[#allocation7 + $0x398] sm:$0xff]
    %v2175 = vld [vmem:[#allocation7 + $0x3a0] sm:$0xff]
    %v2176 = vld [vmem:[#allocation7 + $0x3a8] sm:$0xff]
    %v2177 = vld [vmem:[#allocation7 + $0x3b0] sm:$0xff]
    %v2178 = vld [vmem:[#allocation7 + $0x3b8] sm:$0xff]
    %v2179 = vld [vmem:[#allocation7 + $0x3c0] sm:$0xff]
    %v2180 = vld [vmem:[#allocation7 + $0x3c8] sm:$0xff]
    %v2181 = vld [vmem:[#allocation7 + $0x3d0] sm:$0xff]
    %v2182 = vld [vmem:[#allocation7 + $0x3d8] sm:$0xff]
    %v2183 = vld [vmem:[#allocation7 + $0x3e0] sm:$0xff]
    %v2184 = vld [vmem:[#allocation7 + $0x3e8] sm:$0xff]
    %v2185 = vld [vmem:[#allocation7 + $0x3f0] sm:$0xff]
    %v2186 = vld [vmem:[#allocation7 + $0x3f8] sm:$0xff]
    %v2187 = vld [vmem:[#allocation9] sm:$0xf]
    %v2189 = vlaneseq
    %v2190 = vshrl.u32 %v2189, 7
    %v2191 = vsub.s32 0, %v2190
    %v2192 = vrot.slane %v2187, %v2191
    %v2193 = vlaneseq
    %v2194 = vshrl.u32 %v2193, 7
    %v2195 = vsub.s32 1, %v2194
    %v2196 = vrot.slane %v2187, %v2195
    %v2197 = vlaneseq
    %v2198 = vshrl.u32 %v2197, 7
    %v2199 = vsub.s32 2, %v2198
    %v2200 = vrot.slane %v2187, %v2199
    %v2201 = vlaneseq
    %v2202 = vshrl.u32 %v2201, 7
    %v2203 = vsub.s32 3, %v2202
    %v2204 = vrot.slane %v2187, %v2203
    %2209 = vmatprep.subr.mxu0 %v2120
    %2210 = vmatpush1.msra.mxu0 %v2119
    %2211 = vmatprep.subr.mxu0 %v2116
    %2212 = vmatpush1.msra.mxu0 %v2115
    %2213 = vmatprep.subr.mxu0 %v2112
    %2214 = vmatpush1.msra.mxu0 %v2111
    %2215 = vmatprep.subr.mxu0 %v2108
    %2216 = vmatpush1.msra.mxu0 %v2107
    %2217 = vmatprep.subr.mxu0 %v2104
    %2218 = vmatpush1.msra.mxu0 %v2103
    %2219 = vmatprep.subr.mxu0 %v2100
    %2220 = vmatpush1.msra.mxu0 %v2099
    %2221 = vmatprep.subr.mxu0 %v2096
    %2222 = vmatpush1.msra.mxu0 %v2095
    %2223 = vmatprep.subr.mxu0 %v2092
    %2224 = vmatpush1.msra.mxu0 %v2091
    %2225 = vmatprep.subr.mxu0 %v2088
    %2226 = vmatpush1.msra.mxu0 %v2087
    %2227 = vmatprep.subr.mxu0 %v2084
    %2228 = vmatpush1.msra.mxu0 %v2083
    %2229 = vmatprep.subr.mxu0 %v2080
    %2230 = vmatpush1.msra.mxu0 %v2079
    %2231 = vmatprep.subr.mxu0 %v2076
    %2232 = vmatpush1.msra.mxu0 %v2075
    %2233 = vmatprep.subr.mxu0 %v2072
    %2234 = vmatpush1.msra.mxu0 %v2071
    %2235 = vmatprep.subr.mxu0 %v2068
    %2236 = vmatpush1.msra.mxu0 %v2067
    %2237 = vmatprep.subr.mxu0 %v2064
    %2238 = vmatpush1.msra.mxu0 %v2063
    %2239 = vmatprep.subr.mxu0 %v2060
    %2240 = vmatpush1.msra.mxu0 %v2059
    %2241 = vmatprep.subr.mxu0 %v2184
    %2242 = vmatpush2.msra.mxu0 %v2183
    %2243 = vmatprep.subr.mxu0 %v2180
    %2244 = vmatpush2.msra.mxu0 %v2179
    %2245 = vmatprep.subr.mxu0 %v2176
    %2246 = vmatpush2.msra.mxu0 %v2175
    %2247 = vmatprep.subr.mxu0 %v2172
    %2248 = vmatpush2.msra.mxu0 %v2171
    %2249 = vmatprep.subr.mxu0 %v2168
    %2250 = vmatpush2.msra.mxu0 %v2167
    %2251 = vmatprep.subr.mxu0 %v2164
    %2252 = vmatpush2.msra.mxu0 %v2163
    %2253 = vmatprep.subr.mxu0 %v2160
    %2254 = vmatpush2.msra.mxu0 %v2159
    %2255 = vmatprep.subr.mxu0 %v2156
    %2256 = vmatpush2.msra.mxu0 %v2155
    %2257 = vmatprep.subr.mxu0 %v2152
    %2258 = vmatpush2.msra.mxu0 %v2151
    %2259 = vmatprep.subr.mxu0 %v2148
    %2260 = vmatpush2.msra.mxu0 %v2147
    %2261 = vmatprep.subr.mxu0 %v2144
    %2262 = vmatpush2.msra.mxu0 %v2143
    %2263 = vmatprep.subr.mxu0 %v2140
    %2264 = vmatpush2.msra.mxu0 %v2139
    %2265 = vmatprep.subr.mxu0 %v2136
    %2266 = vmatpush2.msra.mxu0 %v2135
    %2267 = vmatprep.subr.mxu0 %v2132
    %2268 = vmatpush2.msra.mxu0 %v2131
    %2269 = vmatprep.subr.mxu0 %v2128
    %2270 = vmatpush2.msra.mxu0 %v2127
    %2271 = vmatprep.subr.mxu0 %v2124
    %2272 = vmatpush2.msra.mxu0 %v2123
    %2273 = vmatprep.mubr.f32.mxu0 %v2058
    %2274 = vmatmul.mubr.f32.gmra.mxu0 %v2056
    %v2275 = vpop.f32.mrf.mxu0
    %v2276 = vadd.f32 %v2192, %v2275
    %v2277 = vpop.f32.mrf.mxu0
    %v2278 = vadd.f32 %v2196, %v2277
    %2279 = vdwg.mxu0
    %2280 = vmatprep.subr.mxu0 %v2122
    %2281 = vmatpush1.msra.mxu0 %v2121
    %2282 = vmatprep.subr.mxu0 %v2118
    %2283 = vmatpush1.msra.mxu0 %v2117
    %2284 = vmatprep.subr.mxu0 %v2114
    %2285 = vmatpush1.msra.mxu0 %v2113
    %2286 = vmatprep.subr.mxu0 %v2110
    %2287 = vmatpush1.msra.mxu0 %v2109
    %2288 = vmatprep.subr.mxu0 %v2106
    %2289 = vmatpush1.msra.mxu0 %v2105
    %2290 = vmatprep.subr.mxu0 %v2102
    %2291 = vmatpush1.msra.mxu0 %v2101
    %2292 = vmatprep.subr.mxu0 %v2098
    %2293 = vmatpush1.msra.mxu0 %v2097
    %2294 = vmatprep.subr.mxu0 %v2094
    %2295 = vmatpush1.msra.mxu0 %v2093
    %2296 = vmatprep.subr.mxu0 %v2090
    %2297 = vmatpush1.msra.mxu0 %v2089
    %2298 = vmatprep.subr.mxu0 %v2086
    %2299 = vmatpush1.msra.mxu0 %v2085
    %2300 = vmatprep.subr.mxu0 %v2082
    %2301 = vmatpush1.msra.mxu0 %v2081
    %2302 = vmatprep.subr.mxu0 %v2078
    %2303 = vmatpush1.msra.mxu0 %v2077
    %2304 = vmatprep.subr.mxu0 %v2074
    %2305 = vmatpush1.msra.mxu0 %v2073
    %2306 = vmatprep.subr.mxu0 %v2070
    %2307 = vmatpush1.msra.mxu0 %v2069
    %2308 = vmatprep.subr.mxu0 %v2066
    %2309 = vmatpush1.msra.mxu0 %v2065
    %2310 = vmatprep.subr.mxu0 %v2062
    %2311 = vmatpush1.msra.mxu0 %v2061
    %2312 = vmatprep.subr.mxu0 %v2186
    %2313 = vmatpush2.msra.mxu0 %v2185
    %2314 = vmatprep.subr.mxu0 %v2182
    %2315 = vmatpush2.msra.mxu0 %v2181
    %2316 = vmatprep.subr.mxu0 %v2178
    %2317 = vmatpush2.msra.mxu0 %v2177
    %2318 = vmatprep.subr.mxu0 %v2174
    %2319 = vmatpush2.msra.mxu0 %v2173
    %2320 = vmatprep.subr.mxu0 %v2170
    %2321 = vmatpush2.msra.mxu0 %v2169
    %2322 = vmatprep.subr.mxu0 %v2166
    %2323 = vmatpush2.msra.mxu0 %v2165
    %2324 = vmatprep.subr.mxu0 %v2162
    %2325 = vmatpush2.msra.mxu0 %v2161
    %2326 = vmatprep.subr.mxu0 %v2158
    %2327 = vmatpush2.msra.mxu0 %v2157
    %2328 = vmatprep.subr.mxu0 %v2154
    %2329 = vmatpush2.msra.mxu0 %v2153
    %2330 = vmatprep.subr.mxu0 %v2150
    %2331 = vmatpush2.msra.mxu0 %v2149
    %2332 = vmatprep.subr.mxu0 %v2146
    %2333 = vmatpush2.msra.mxu0 %v2145
    %2334 = vmatprep.subr.mxu0 %v2142
    %2335 = vmatpush2.msra.mxu0 %v2141
    %2336 = vmatprep.subr.mxu0 %v2138
    %2337 = vmatpush2.msra.mxu0 %v2137
    %2338 = vmatprep.subr.mxu0 %v2134
    %2339 = vmatpush2.msra.mxu0 %v2133
    %2340 = vmatprep.subr.mxu0 %v2130
    %2341 = vmatpush2.msra.mxu0 %v2129
    %2342 = vmatprep.subr.mxu0 %v2126
    %2343 = vmatpush2.msra.mxu0 %v2125
    %2344 = vmatprep.mubr.f32.mxu0 %v2058
    %2345 = vmatmul.mubr.f32.gmra.mxu0 %v2056
    %v2346 = vpop.f32.mrf.mxu0
    %v2347 = vadd.f32 %v2200, %v2346
    %v2348 = vpop.f32.mrf.mxu0
    %v2349 = vadd.f32 %v2204, %v2348
    %2350 = vdwg.mxu0
    %v2351 = vxor.u32 %v2276, 2147483648
    %v2352 = vmul.f32 %v2351, 1.442695
    %v2353 = vpow.pop %v2352
    %v2354 = vadd.f32 %v2353, 1.0
    %v2355 = vrcp.pop %v2354
    %v2356 = vmul.f32 1.0, %v2355
    %v2357 = vxor.u32 %v2278, 2147483648
    %v2358 = vmul.f32 %v2357, 1.442695
    %v2359 = vpow.pop %v2358
    %v2360 = vadd.f32 %v2359, 1.0
    %v2361 = vrcp.pop %v2360
    %v2362 = vmul.f32 1.0, %v2361
    %v2363 = vtanh.pop %v2347
    %v2364 = vxor.u32 %v2349, 2147483648
    %v2365 = vmul.f32 %v2364, 1.442695
    %v2366 = vpow.pop %v2365
    %v2367 = vadd.f32 %v2366, 1.0
    %v2368 = vrcp.pop %v2367
    %v2369 = vmul.f32 1.0, %v2368
    %v2370 = vmul.f32 %v2362, %v2057
    %v2371 = vmul.f32 %v2356, %v2363
    %v2372 = vadd.f32 %v2370, %v2371
    %v2373 = vtanh.pop %v2372
    %v2374 = vmul.f32 %v2369, %v2373
    %2375 = vst [vmem:[#allocation2] sm:$0xff] %v2374
    %2376 = vst [vmem:[#allocation3] sm:$0xff] %v2372
    %v2377 = vld [vmem:[%s444] sm:$0xff]
    %v2378 = vld [vmem:[%s446] sm:$0xff]
    %v2379 = vld [vmem:[#allocation10] sm:$0xff]
    %v2380 = vld [vmem:[#allocation10 + $0x8] sm:$0xff]
    %v2381 = vld [vmem:[#allocation10 + $0x10] sm:$0xff]
    %v2382 = vld [vmem:[#allocation10 + $0x18] sm:$0xff]
    %v2383 = vld [vmem:[#allocation10 + $0x20] sm:$0xff]
    %v2384 = vld [vmem:[#allocation10 + $0x28] sm:$0xff]
    %v2385 = vld [vmem:[#allocation10 + $0x30] sm:$0xff]
    %v2386 = vld [vmem:[#allocation10 + $0x38] sm:$0xff]
    %v2387 = vld [vmem:[#allocation10 + $0x40] sm:$0xff]
    %v2388 = vld [vmem:[#allocation10 + $0x48] sm:$0xff]
    %v2389 = vld [vmem:[#allocation10 + $0x50] sm:$0xff]
    %v2390 = vld [vmem:[#allocation10 + $0x58] sm:$0xff]
    %v2391 = vld [vmem:[#allocation10 + $0x60] sm:$0xff]
    %v2392 = vld [vmem:[#allocation10 + $0x68] sm:$0xff]
    %v2393 = vld [vmem:[#allocation10 + $0x70] sm:$0xff]
    %v2394 = vld [vmem:[#allocation10 + $0x78] sm:$0xff]
    %v2395 = vld [vmem:[#allocation10 + $0x80] sm:$0xff]
    %v2396 = vld [vmem:[#allocation10 + $0x88] sm:$0xff]
    %v2397 = vld [vmem:[#allocation10 + $0x90] sm:$0xff]
    %v2398 = vld [vmem:[#allocation10 + $0x98] sm:$0xff]
    %v2399 = vld [vmem:[#allocation10 + $0xa0] sm:$0xff]
    %v2400 = vld [vmem:[#allocation10 + $0xa8] sm:$0xff]
    %v2401 = vld [vmem:[#allocation10 + $0xb0] sm:$0xff]
    %v2402 = vld [vmem:[#allocation10 + $0xb8] sm:$0xff]
    %v2403 = vld [vmem:[#allocation10 + $0xc0] sm:$0xff]
    %v2404 = vld [vmem:[#allocation10 + $0xc8] sm:$0xff]
    %v2405 = vld [vmem:[#allocation10 + $0xd0] sm:$0xff]
    %v2406 = vld [vmem:[#allocation10 + $0xd8] sm:$0xff]
    %v2407 = vld [vmem:[#allocation10 + $0xe0] sm:$0xff]
    %v2408 = vld [vmem:[#allocation10 + $0xe8] sm:$0xff]
    %v2409 = vld [vmem:[#allocation10 + $0xf0] sm:$0xff]
    %v2410 = vld [vmem:[#allocation10 + $0xf8] sm:$0xff]
    %v2411 = vld [vmem:[#allocation10 + $0x100] sm:$0xff]
    %v2412 = vld [vmem:[#allocation10 + $0x108] sm:$0xff]
    %v2413 = vld [vmem:[#allocation10 + $0x110] sm:$0xff]
    %v2414 = vld [vmem:[#allocation10 + $0x118] sm:$0xff]
    %v2415 = vld [vmem:[#allocation10 + $0x120] sm:$0xff]
    %v2416 = vld [vmem:[#allocation10 + $0x128] sm:$0xff]
    %v2417 = vld [vmem:[#allocation10 + $0x130] sm:$0xff]
    %v2418 = vld [vmem:[#allocation10 + $0x138] sm:$0xff]
    %v2419 = vld [vmem:[#allocation10 + $0x140] sm:$0xff]
    %v2420 = vld [vmem:[#allocation10 + $0x148] sm:$0xff]
    %v2421 = vld [vmem:[#allocation10 + $0x150] sm:$0xff]
    %v2422 = vld [vmem:[#allocation10 + $0x158] sm:$0xff]
    %v2423 = vld [vmem:[#allocation10 + $0x160] sm:$0xff]
    %v2424 = vld [vmem:[#allocation10 + $0x168] sm:$0xff]
    %v2425 = vld [vmem:[#allocation10 + $0x170] sm:$0xff]
    %v2426 = vld [vmem:[#allocation10 + $0x178] sm:$0xff]
    %v2427 = vld [vmem:[#allocation10 + $0x180] sm:$0xff]
    %v2428 = vld [vmem:[#allocation10 + $0x188] sm:$0xff]
    %v2429 = vld [vmem:[#allocation10 + $0x190] sm:$0xff]
    %v2430 = vld [vmem:[#allocation10 + $0x198] sm:$0xff]
    %v2431 = vld [vmem:[#allocation10 + $0x1a0] sm:$0xff]
    %v2432 = vld [vmem:[#allocation10 + $0x1a8] sm:$0xff]
    %v2433 = vld [vmem:[#allocation10 + $0x1b0] sm:$0xff]
    %v2434 = vld [vmem:[#allocation10 + $0x1b8] sm:$0xff]
    %v2435 = vld [vmem:[#allocation10 + $0x1c0] sm:$0xff]
    %v2436 = vld [vmem:[#allocation10 + $0x1c8] sm:$0xff]
    %v2437 = vld [vmem:[#allocation10 + $0x1d0] sm:$0xff]
    %v2438 = vld [vmem:[#allocation10 + $0x1d8] sm:$0xff]
    %v2439 = vld [vmem:[#allocation10 + $0x1e0] sm:$0xff]
    %v2440 = vld [vmem:[#allocation10 + $0x1e8] sm:$0xff]
    %v2441 = vld [vmem:[#allocation10 + $0x1f0] sm:$0xff]
    %v2442 = vld [vmem:[#allocation10 + $0x1f8] sm:$0xff]
    %v2443 = vld [vmem:[#allocation10 + $0x200] sm:$0xff]
    %v2444 = vld [vmem:[#allocation10 + $0x208] sm:$0xff]
    %v2445 = vld [vmem:[#allocation10 + $0x210] sm:$0xff]
    %v2446 = vld [vmem:[#allocation10 + $0x218] sm:$0xff]
    %v2447 = vld [vmem:[#allocation10 + $0x220] sm:$0xff]
    %v2448 = vld [vmem:[#allocation10 + $0x228] sm:$0xff]
    %v2449 = vld [vmem:[#allocation10 + $0x230] sm:$0xff]
    %v2450 = vld [vmem:[#allocation10 + $0x238] sm:$0xff]
    %v2451 = vld [vmem:[#allocation10 + $0x240] sm:$0xff]
    %v2452 = vld [vmem:[#allocation10 + $0x248] sm:$0xff]
    %v2453 = vld [vmem:[#allocation10 + $0x250] sm:$0xff]
    %v2454 = vld [vmem:[#allocation10 + $0x258] sm:$0xff]
    %v2455 = vld [vmem:[#allocation10 + $0x260] sm:$0xff]
    %v2456 = vld [vmem:[#allocation10 + $0x268] sm:$0xff]
    %v2457 = vld [vmem:[#allocation10 + $0x270] sm:$0xff]
    %v2458 = vld [vmem:[#allocation10 + $0x278] sm:$0xff]
    %v2459 = vld [vmem:[#allocation10 + $0x280] sm:$0xff]
    %v2460 = vld [vmem:[#allocation10 + $0x288] sm:$0xff]
    %v2461 = vld [vmem:[#allocation10 + $0x290] sm:$0xff]
    %v2462 = vld [vmem:[#allocation10 + $0x298] sm:$0xff]
    %v2463 = vld [vmem:[#allocation10 + $0x2a0] sm:$0xff]
    %v2464 = vld [vmem:[#allocation10 + $0x2a8] sm:$0xff]
    %v2465 = vld [vmem:[#allocation10 + $0x2b0] sm:$0xff]
    %v2466 = vld [vmem:[#allocation10 + $0x2b8] sm:$0xff]
    %v2467 = vld [vmem:[#allocation10 + $0x2c0] sm:$0xff]
    %v2468 = vld [vmem:[#allocation10 + $0x2c8] sm:$0xff]
    %v2469 = vld [vmem:[#allocation10 + $0x2d0] sm:$0xff]
    %v2470 = vld [vmem:[#allocation10 + $0x2d8] sm:$0xff]
    %v2471 = vld [vmem:[#allocation10 + $0x2e0] sm:$0xff]
    %v2472 = vld [vmem:[#allocation10 + $0x2e8] sm:$0xff]
    %v2473 = vld [vmem:[#allocation10 + $0x2f0] sm:$0xff]
    %v2474 = vld [vmem:[#allocation10 + $0x2f8] sm:$0xff]
    %v2475 = vld [vmem:[#allocation10 + $0x300] sm:$0xff]
    %v2476 = vld [vmem:[#allocation10 + $0x308] sm:$0xff]
    %v2477 = vld [vmem:[#allocation10 + $0x310] sm:$0xff]
    %v2478 = vld [vmem:[#allocation10 + $0x318] sm:$0xff]
    %v2479 = vld [vmem:[#allocation10 + $0x320] sm:$0xff]
    %v2480 = vld [vmem:[#allocation10 + $0x328] sm:$0xff]
    %v2481 = vld [vmem:[#allocation10 + $0x330] sm:$0xff]
    %v2482 = vld [vmem:[#allocation10 + $0x338] sm:$0xff]
    %v2483 = vld [vmem:[#allocation10 + $0x340] sm:$0xff]
    %v2484 = vld [vmem:[#allocation10 + $0x348] sm:$0xff]
    %v2485 = vld [vmem:[#allocation10 + $0x350] sm:$0xff]
    %v2486 = vld [vmem:[#allocation10 + $0x358] sm:$0xff]
    %v2487 = vld [vmem:[#allocation10 + $0x360] sm:$0xff]
    %v2488 = vld [vmem:[#allocation10 + $0x368] sm:$0xff]
    %v2489 = vld [vmem:[#allocation10 + $0x370] sm:$0xff]
    %v2490 = vld [vmem:[#allocation10 + $0x378] sm:$0xff]
    %v2491 = vld [vmem:[#allocation10 + $0x380] sm:$0xff]
    %v2492 = vld [vmem:[#allocation10 + $0x388] sm:$0xff]
    %v2493 = vld [vmem:[#allocation10 + $0x390] sm:$0xff]
    %v2494 = vld [vmem:[#allocation10 + $0x398] sm:$0xff]
    %v2495 = vld [vmem:[#allocation10 + $0x3a0] sm:$0xff]
    %v2496 = vld [vmem:[#allocation10 + $0x3a8] sm:$0xff]
    %v2497 = vld [vmem:[#allocation10 + $0x3b0] sm:$0xff]
    %v2498 = vld [vmem:[#allocation10 + $0x3b8] sm:$0xff]
    %v2499 = vld [vmem:[#allocation10 + $0x3c0] sm:$0xff]
    %v2500 = vld [vmem:[#allocation10 + $0x3c8] sm:$0xff]
    %v2501 = vld [vmem:[#allocation10 + $0x3d0] sm:$0xff]
    %v2502 = vld [vmem:[#allocation10 + $0x3d8] sm:$0xff]
    %v2503 = vld [vmem:[#allocation10 + $0x3e0] sm:$0xff]
    %v2504 = vld [vmem:[#allocation10 + $0x3e8] sm:$0xff]
    %v2505 = vld [vmem:[#allocation10 + $0x3f0] sm:$0xff]
    %v2506 = vld [vmem:[#allocation10 + $0x3f8] sm:$0xff]
    %v2507 = vld [vmem:[%s4] sm:$0xf]
    %v2509 = vlaneseq
    %v2510 = vshrl.u32 %v2509, 7
    %v2511 = vsub.s32 0, %v2510
    %v2512 = vrot.slane %v2507, %v2511
    %v2513 = vlaneseq
    %v2514 = vshrl.u32 %v2513, 7
    %v2515 = vsub.s32 1, %v2514
    %v2516 = vrot.slane %v2507, %v2515
    %v2517 = vlaneseq
    %v2518 = vshrl.u32 %v2517, 7
    %v2519 = vsub.s32 2, %v2518
    %v2520 = vrot.slane %v2507, %v2519
    %v2521 = vlaneseq
    %v2522 = vshrl.u32 %v2521, 7
    %v2523 = vsub.s32 3, %v2522
    %v2524 = vrot.slane %v2507, %v2523
    %2529 = vmatprep.subr.mxu0 %v2440
    %2530 = vmatpush1.msra.mxu0 %v2439
    %2531 = vmatprep.subr.mxu0 %v2436
    %2532 = vmatpush1.msra.mxu0 %v2435
    %2533 = vmatprep.subr.mxu0 %v2432
    %2534 = vmatpush1.msra.mxu0 %v2431
    %2535 = vmatprep.subr.mxu0 %v2428
    %2536 = vmatpush1.msra.mxu0 %v2427
    %2537 = vmatprep.subr.mxu0 %v2424
    %2538 = vmatpush1.msra.mxu0 %v2423
    %2539 = vmatprep.subr.mxu0 %v2420
    %2540 = vmatpush1.msra.mxu0 %v2419
    %2541 = vmatprep.subr.mxu0 %v2416
    %2542 = vmatpush1.msra.mxu0 %v2415
    %2543 = vmatprep.subr.mxu0 %v2412
    %2544 = vmatpush1.msra.mxu0 %v2411
    %2545 = vmatprep.subr.mxu0 %v2408
    %2546 = vmatpush1.msra.mxu0 %v2407
    %2547 = vmatprep.subr.mxu0 %v2404
    %2548 = vmatpush1.msra.mxu0 %v2403
    %2549 = vmatprep.subr.mxu0 %v2400
    %2550 = vmatpush1.msra.mxu0 %v2399
    %2551 = vmatprep.subr.mxu0 %v2396
    %2552 = vmatpush1.msra.mxu0 %v2395
    %2553 = vmatprep.subr.mxu0 %v2392
    %2554 = vmatpush1.msra.mxu0 %v2391
    %2555 = vmatprep.subr.mxu0 %v2388
    %2556 = vmatpush1.msra.mxu0 %v2387
    %2557 = vmatprep.subr.mxu0 %v2384
    %2558 = vmatpush1.msra.mxu0 %v2383
    %2559 = vmatprep.subr.mxu0 %v2380
    %2560 = vmatpush1.msra.mxu0 %v2379
    %2561 = vmatprep.subr.mxu0 %v2504
    %2562 = vmatpush2.msra.mxu0 %v2503
    %2563 = vmatprep.subr.mxu0 %v2500
    %2564 = vmatpush2.msra.mxu0 %v2499
    %2565 = vmatprep.subr.mxu0 %v2496
    %2566 = vmatpush2.msra.mxu0 %v2495
    %2567 = vmatprep.subr.mxu0 %v2492
    %2568 = vmatpush2.msra.mxu0 %v2491
    %2569 = vmatprep.subr.mxu0 %v2488
    %2570 = vmatpush2.msra.mxu0 %v2487
    %2571 = vmatprep.subr.mxu0 %v2484
    %2572 = vmatpush2.msra.mxu0 %v2483
    %2573 = vmatprep.subr.mxu0 %v2480
    %2574 = vmatpush2.msra.mxu0 %v2479
    %2575 = vmatprep.subr.mxu0 %v2476
    %2576 = vmatpush2.msra.mxu0 %v2475
    %2577 = vmatprep.subr.mxu0 %v2472
    %2578 = vmatpush2.msra.mxu0 %v2471
    %2579 = vmatprep.subr.mxu0 %v2468
    %2580 = vmatpush2.msra.mxu0 %v2467
    %2581 = vmatprep.subr.mxu0 %v2464
    %2582 = vmatpush2.msra.mxu0 %v2463
    %2583 = vmatprep.subr.mxu0 %v2460
    %2584 = vmatpush2.msra.mxu0 %v2459
    %2585 = vmatprep.subr.mxu0 %v2456
    %2586 = vmatpush2.msra.mxu0 %v2455
    %2587 = vmatprep.subr.mxu0 %v2452
    %2588 = vmatpush2.msra.mxu0 %v2451
    %2589 = vmatprep.subr.mxu0 %v2448
    %2590 = vmatpush2.msra.mxu0 %v2447
    %2591 = vmatprep.subr.mxu0 %v2444
    %2592 = vmatpush2.msra.mxu0 %v2443
    %2593 = vmatprep.mubr.f32.mxu0 %v2378
    %2594 = vmatmul.mubr.f32.gmra.mxu0 %v2374
    %v2595 = vpop.f32.mrf.mxu0
    %v2596 = vadd.f32 %v2512, %v2595
    %v2597 = vpop.f32.mrf.mxu0
    %v2598 = vadd.f32 %v2516, %v2597
    %2599 = vdwg.mxu0
    %2600 = vmatprep.subr.mxu0 %v2442
    %2601 = vmatpush1.msra.mxu0 %v2441
    %2602 = vmatprep.subr.mxu0 %v2438
    %2603 = vmatpush1.msra.mxu0 %v2437
    %2604 = vmatprep.subr.mxu0 %v2434
    %2605 = vmatpush1.msra.mxu0 %v2433
    %2606 = vmatprep.subr.mxu0 %v2430
    %2607 = vmatpush1.msra.mxu0 %v2429
    %2608 = vmatprep.subr.mxu0 %v2426
    %2609 = vmatpush1.msra.mxu0 %v2425
    %2610 = vmatprep.subr.mxu0 %v2422
    %2611 = vmatpush1.msra.mxu0 %v2421
    %2612 = vmatprep.subr.mxu0 %v2418
    %2613 = vmatpush1.msra.mxu0 %v2417
    %2614 = vmatprep.subr.mxu0 %v2414
    %2615 = vmatpush1.msra.mxu0 %v2413
    %2616 = vmatprep.subr.mxu0 %v2410
    %2617 = vmatpush1.msra.mxu0 %v2409
    %2618 = vmatprep.subr.mxu0 %v2406
    %2619 = vmatpush1.msra.mxu0 %v2405
    %2620 = vmatprep.subr.mxu0 %v2402
    %2621 = vmatpush1.msra.mxu0 %v2401
    %2622 = vmatprep.subr.mxu0 %v2398
    %2623 = vmatpush1.msra.mxu0 %v2397
    %2624 = vmatprep.subr.mxu0 %v2394
    %2625 = vmatpush1.msra.mxu0 %v2393
    %2626 = vmatprep.subr.mxu0 %v2390
    %2627 = vmatpush1.msra.mxu0 %v2389
    %2628 = vmatprep.subr.mxu0 %v2386
    %2629 = vmatpush1.msra.mxu0 %v2385
    %2630 = vmatprep.subr.mxu0 %v2382
    %2631 = vmatpush1.msra.mxu0 %v2381
    %2632 = vmatprep.subr.mxu0 %v2506
    %2633 = vmatpush2.msra.mxu0 %v2505
    %2634 = vmatprep.subr.mxu0 %v2502
    %2635 = vmatpush2.msra.mxu0 %v2501
    %2636 = vmatprep.subr.mxu0 %v2498
    %2637 = vmatpush2.msra.mxu0 %v2497
    %2638 = vmatprep.subr.mxu0 %v2494
    %2639 = vmatpush2.msra.mxu0 %v2493
    %2640 = vmatprep.subr.mxu0 %v2490
    %2641 = vmatpush2.msra.mxu0 %v2489
    %2642 = vmatprep.subr.mxu0 %v2486
    %2643 = vmatpush2.msra.mxu0 %v2485
    %2644 = vmatprep.subr.mxu0 %v2482
    %2645 = vmatpush2.msra.mxu0 %v2481
    %2646 = vmatprep.subr.mxu0 %v2478
    %2647 = vmatpush2.msra.mxu0 %v2477
    %2648 = vmatprep.subr.mxu0 %v2474
    %2649 = vmatpush2.msra.mxu0 %v2473
    %2650 = vmatprep.subr.mxu0 %v2470
    %2651 = vmatpush2.msra.mxu0 %v2469
    %2652 = vmatprep.subr.mxu0 %v2466
    %2653 = vmatpush2.msra.mxu0 %v2465
    %2654 = vmatprep.subr.mxu0 %v2462
    %2655 = vmatpush2.msra.mxu0 %v2461
    %2656 = vmatprep.subr.mxu0 %v2458
    %2657 = vmatpush2.msra.mxu0 %v2457
    %2658 = vmatprep.subr.mxu0 %v2454
    %2659 = vmatpush2.msra.mxu0 %v2453
    %2660 = vmatprep.subr.mxu0 %v2450
    %2661 = vmatpush2.msra.mxu0 %v2449
    %2662 = vmatprep.subr.mxu0 %v2446
    %2663 = vmatpush2.msra.mxu0 %v2445
    %2664 = vmatprep.mubr.f32.mxu0 %v2378
    %2665 = vmatmul.mubr.f32.gmra.mxu0 %v2374
    %v2666 = vpop.f32.mrf.mxu0
    %v2667 = vadd.f32 %v2520, %v2666
    %v2668 = vpop.f32.mrf.mxu0
    %v2669 = vadd.f32 %v2524, %v2668
    %2670 = vdwg.mxu0
    %v2671 = vxor.u32 %v2596, 2147483648
    %v2672 = vmul.f32 %v2671, 1.442695
    %v2673 = vpow.pop %v2672
    %v2674 = vadd.f32 %v2673, 1.0
    %v2675 = vrcp.pop %v2674
    %v2676 = vmul.f32 1.0, %v2675
    %v2677 = vxor.u32 %v2598, 2147483648
    %v2678 = vmul.f32 %v2677, 1.442695
    %v2679 = vpow.pop %v2678
    %v2680 = vadd.f32 %v2679, 1.0
    %v2681 = vrcp.pop %v2680
    %v2682 = vmul.f32 1.0, %v2681
    %v2683 = vtanh.pop %v2667
    %v2684 = vxor.u32 %v2669, 2147483648
    %v2685 = vmul.f32 %v2684, 1.442695
    %v2686 = vpow.pop %v2685
    %v2687 = vadd.f32 %v2686, 1.0
    %v2688 = vrcp.pop %v2687
    %v2689 = vmul.f32 1.0, %v2688
    %v2690 = vmul.f32 %v2682, %v2377
    %v2691 = vmul.f32 %v2676, %v2683
    %v2692 = vadd.f32 %v2690, %v2691
    %v2693 = vtanh.pop %v2692
    %v2694 = vmul.f32 %v2689, %v2693
    %2695 = vst [vmem:[%s446] sm:$0xff] %v2694
    %2696 = vst [vmem:[%s444] sm:$0xff] %v2692
    %s2697 = scalar_lea.vmem [#allocation15], 24
    %2698 = vst [vmem:[%s2697] sm:$0xff] %v2694
    %s2699 = scalar_lea.vmem [#allocation4], 32
    %v2700 = vld [vmem:[%s2699] sm:$0xff]
    %v2701 = vld [vmem:[#allocation3] sm:$0xff]
    %v2702 = vld [vmem:[#allocation2] sm:$0xff]
    %v2703 = vld [vmem:[#allocation7] sm:$0xff]
    %v2704 = vld [vmem:[#allocation7 + $0x8] sm:$0xff]
    %v2705 = vld [vmem:[#allocation7 + $0x10] sm:$0xff]
    %v2706 = vld [vmem:[#allocation7 + $0x18] sm:$0xff]
    %v2707 = vld [vmem:[#allocation7 + $0x20] sm:$0xff]
    %v2708 = vld [vmem:[#allocation7 + $0x28] sm:$0xff]
    %v2709 = vld [vmem:[#allocation7 + $0x30] sm:$0xff]
    %v2710 = vld [vmem:[#allocation7 + $0x38] sm:$0xff]
    %v2711 = vld [vmem:[#allocation7 + $0x40] sm:$0xff]
    %v2712 = vld [vmem:[#allocation7 + $0x48] sm:$0xff]
    %v2713 = vld [vmem:[#allocation7 + $0x50] sm:$0xff]
    %v2714 = vld [vmem:[#allocation7 + $0x58] sm:$0xff]
    %v2715 = vld [vmem:[#allocation7 + $0x60] sm:$0xff]
    %v2716 = vld [vmem:[#allocation7 + $0x68] sm:$0xff]
    %v2717 = vld [vmem:[#allocation7 + $0x70] sm:$0xff]
    %v2718 = vld [vmem:[#allocation7 + $0x78] sm:$0xff]
    %v2719 = vld [vmem:[#allocation7 + $0x80] sm:$0xff]
    %v2720 = vld [vmem:[#allocation7 + $0x88] sm:$0xff]
    %v2721 = vld [vmem:[#allocation7 + $0x90] sm:$0xff]
    %v2722 = vld [vmem:[#allocation7 + $0x98] sm:$0xff]
    %v2723 = vld [vmem:[#allocation7 + $0xa0] sm:$0xff]
    %v2724 = vld [vmem:[#allocation7 + $0xa8] sm:$0xff]
    %v2725 = vld [vmem:[#allocation7 + $0xb0] sm:$0xff]
    %v2726 = vld [vmem:[#allocation7 + $0xb8] sm:$0xff]
    %v2727 = vld [vmem:[#allocation7 + $0xc0] sm:$0xff]
    %v2728 = vld [vmem:[#allocation7 + $0xc8] sm:$0xff]
    %v2729 = vld [vmem:[#allocation7 + $0xd0] sm:$0xff]
    %v2730 = vld [vmem:[#allocation7 + $0xd8] sm:$0xff]
    %v2731 = vld [vmem:[#allocation7 + $0xe0] sm:$0xff]
    %v2732 = vld [vmem:[#allocation7 + $0xe8] sm:$0xff]
    %v2733 = vld [vmem:[#allocation7 + $0xf0] sm:$0xff]
    %v2734 = vld [vmem:[#allocation7 + $0xf8] sm:$0xff]
    %v2735 = vld [vmem:[#allocation7 + $0x100] sm:$0xff]
    %v2736 = vld [vmem:[#allocation7 + $0x108] sm:$0xff]
    %v2737 = vld [vmem:[#allocation7 + $0x110] sm:$0xff]
    %v2738 = vld [vmem:[#allocation7 + $0x118] sm:$0xff]
    %v2739 = vld [vmem:[#allocation7 + $0x120] sm:$0xff]
    %v2740 = vld [vmem:[#allocation7 + $0x128] sm:$0xff]
    %v2741 = vld [vmem:[#allocation7 + $0x130] sm:$0xff]
    %v2742 = vld [vmem:[#allocation7 + $0x138] sm:$0xff]
    %v2743 = vld [vmem:[#allocation7 + $0x140] sm:$0xff]
    %v2744 = vld [vmem:[#allocation7 + $0x148] sm:$0xff]
    %v2745 = vld [vmem:[#allocation7 + $0x150] sm:$0xff]
    %v2746 = vld [vmem:[#allocation7 + $0x158] sm:$0xff]
    %v2747 = vld [vmem:[#allocation7 + $0x160] sm:$0xff]
    %v2748 = vld [vmem:[#allocation7 + $0x168] sm:$0xff]
    %v2749 = vld [vmem:[#allocation7 + $0x170] sm:$0xff]
    %v2750 = vld [vmem:[#allocation7 + $0x178] sm:$0xff]
    %v2751 = vld [vmem:[#allocation7 + $0x180] sm:$0xff]
    %v2752 = vld [vmem:[#allocation7 + $0x188] sm:$0xff]
    %v2753 = vld [vmem:[#allocation7 + $0x190] sm:$0xff]
    %v2754 = vld [vmem:[#allocation7 + $0x198] sm:$0xff]
    %v2755 = vld [vmem:[#allocation7 + $0x1a0] sm:$0xff]
    %v2756 = vld [vmem:[#allocation7 + $0x1a8] sm:$0xff]
    %v2757 = vld [vmem:[#allocation7 + $0x1b0] sm:$0xff]
    %v2758 = vld [vmem:[#allocation7 + $0x1b8] sm:$0xff]
    %v2759 = vld [vmem:[#allocation7 + $0x1c0] sm:$0xff]
    %v2760 = vld [vmem:[#allocation7 + $0x1c8] sm:$0xff]
    %v2761 = vld [vmem:[#allocation7 + $0x1d0] sm:$0xff]
    %v2762 = vld [vmem:[#allocation7 + $0x1d8] sm:$0xff]
    %v2763 = vld [vmem:[#allocation7 + $0x1e0] sm:$0xff]
    %v2764 = vld [vmem:[#allocation7 + $0x1e8] sm:$0xff]
    %v2765 = vld [vmem:[#allocation7 + $0x1f0] sm:$0xff]
    %v2766 = vld [vmem:[#allocation7 + $0x1f8] sm:$0xff]
    %v2767 = vld [vmem:[#allocation7 + $0x200] sm:$0xff]
    %v2768 = vld [vmem:[#allocation7 + $0x208] sm:$0xff]
    %v2769 = vld [vmem:[#allocation7 + $0x210] sm:$0xff]
    %v2770 = vld [vmem:[#allocation7 + $0x218] sm:$0xff]
    %v2771 = vld [vmem:[#allocation7 + $0x220] sm:$0xff]
    %v2772 = vld [vmem:[#allocation7 + $0x228] sm:$0xff]
    %v2773 = vld [vmem:[#allocation7 + $0x230] sm:$0xff]
    %v2774 = vld [vmem:[#allocation7 + $0x238] sm:$0xff]
    %v2775 = vld [vmem:[#allocation7 + $0x240] sm:$0xff]
    %v2776 = vld [vmem:[#allocation7 + $0x248] sm:$0xff]
    %v2777 = vld [vmem:[#allocation7 + $0x250] sm:$0xff]
    %v2778 = vld [vmem:[#allocation7 + $0x258] sm:$0xff]
    %v2779 = vld [vmem:[#allocation7 + $0x260] sm:$0xff]
    %v2780 = vld [vmem:[#allocation7 + $0x268] sm:$0xff]
    %v2781 = vld [vmem:[#allocation7 + $0x270] sm:$0xff]
    %v2782 = vld [vmem:[#allocation7 + $0x278] sm:$0xff]
    %v2783 = vld [vmem:[#allocation7 + $0x280] sm:$0xff]
    %v2784 = vld [vmem:[#allocation7 + $0x288] sm:$0xff]
    %v2785 = vld [vmem:[#allocation7 + $0x290] sm:$0xff]
    %v2786 = vld [vmem:[#allocation7 + $0x298] sm:$0xff]
    %v2787 = vld [vmem:[#allocation7 + $0x2a0] sm:$0xff]
    %v2788 = vld [vmem:[#allocation7 + $0x2a8] sm:$0xff]
    %v2789 = vld [vmem:[#allocation7 + $0x2b0] sm:$0xff]
    %v2790 = vld [vmem:[#allocation7 + $0x2b8] sm:$0xff]
    %v2791 = vld [vmem:[#allocation7 + $0x2c0] sm:$0xff]
    %v2792 = vld [vmem:[#allocation7 + $0x2c8] sm:$0xff]
    %v2793 = vld [vmem:[#allocation7 + $0x2d0] sm:$0xff]
    %v2794 = vld [vmem:[#allocation7 + $0x2d8] sm:$0xff]
    %v2795 = vld [vmem:[#allocation7 + $0x2e0] sm:$0xff]
    %v2796 = vld [vmem:[#allocation7 + $0x2e8] sm:$0xff]
    %v2797 = vld [vmem:[#allocation7 + $0x2f0] sm:$0xff]
    %v2798 = vld [vmem:[#allocation7 + $0x2f8] sm:$0xff]
    %v2799 = vld [vmem:[#allocation7 + $0x300] sm:$0xff]
    %v2800 = vld [vmem:[#allocation7 + $0x308] sm:$0xff]
    %v2801 = vld [vmem:[#allocation7 + $0x310] sm:$0xff]
    %v2802 = vld [vmem:[#allocation7 + $0x318] sm:$0xff]
    %v2803 = vld [vmem:[#allocation7 + $0x320] sm:$0xff]
    %v2804 = vld [vmem:[#allocation7 + $0x328] sm:$0xff]
    %v2805 = vld [vmem:[#allocation7 + $0x330] sm:$0xff]
    %v2806 = vld [vmem:[#allocation7 + $0x338] sm:$0xff]
    %v2807 = vld [vmem:[#allocation7 + $0x340] sm:$0xff]
    %v2808 = vld [vmem:[#allocation7 + $0x348] sm:$0xff]
    %v2809 = vld [vmem:[#allocation7 + $0x350] sm:$0xff]
    %v2810 = vld [vmem:[#allocation7 + $0x358] sm:$0xff]
    %v2811 = vld [vmem:[#allocation7 + $0x360] sm:$0xff]
    %v2812 = vld [vmem:[#allocation7 + $0x368] sm:$0xff]
    %v2813 = vld [vmem:[#allocation7 + $0x370] sm:$0xff]
    %v2814 = vld [vmem:[#allocation7 + $0x378] sm:$0xff]
    %v2815 = vld [vmem:[#allocation7 + $0x380] sm:$0xff]
    %v2816 = vld [vmem:[#allocation7 + $0x388] sm:$0xff]
    %v2817 = vld [vmem:[#allocation7 + $0x390] sm:$0xff]
    %v2818 = vld [vmem:[#allocation7 + $0x398] sm:$0xff]
    %v2819 = vld [vmem:[#allocation7 + $0x3a0] sm:$0xff]
    %v2820 = vld [vmem:[#allocation7 + $0x3a8] sm:$0xff]
    %v2821 = vld [vmem:[#allocation7 + $0x3b0] sm:$0xff]
    %v2822 = vld [vmem:[#allocation7 + $0x3b8] sm:$0xff]
    %v2823 = vld [vmem:[#allocation7 + $0x3c0] sm:$0xff]
    %v2824 = vld [vmem:[#allocation7 + $0x3c8] sm:$0xff]
    %v2825 = vld [vmem:[#allocation7 + $0x3d0] sm:$0xff]
    %v2826 = vld [vmem:[#allocation7 + $0x3d8] sm:$0xff]
    %v2827 = vld [vmem:[#allocation7 + $0x3e0] sm:$0xff]
    %v2828 = vld [vmem:[#allocation7 + $0x3e8] sm:$0xff]
    %v2829 = vld [vmem:[#allocation7 + $0x3f0] sm:$0xff]
    %v2830 = vld [vmem:[#allocation7 + $0x3f8] sm:$0xff]
    %v2831 = vld [vmem:[#allocation9] sm:$0xf]
    %v2833 = vlaneseq
    %v2834 = vshrl.u32 %v2833, 7
    %v2835 = vsub.s32 0, %v2834
    %v2836 = vrot.slane %v2831, %v2835
    %v2837 = vlaneseq
    %v2838 = vshrl.u32 %v2837, 7
    %v2839 = vsub.s32 1, %v2838
    %v2840 = vrot.slane %v2831, %v2839
    %v2841 = vlaneseq
    %v2842 = vshrl.u32 %v2841, 7
    %v2843 = vsub.s32 2, %v2842
    %v2844 = vrot.slane %v2831, %v2843
    %v2845 = vlaneseq
    %v2846 = vshrl.u32 %v2845, 7
    %v2847 = vsub.s32 3, %v2846
    %v2848 = vrot.slane %v2831, %v2847
    %2853 = vmatprep.subr.mxu0 %v2764
    %2854 = vmatpush1.msra.mxu0 %v2763
    %2855 = vmatprep.subr.mxu0 %v2760
    %2856 = vmatpush1.msra.mxu0 %v2759
    %2857 = vmatprep.subr.mxu0 %v2756
    %2858 = vmatpush1.msra.mxu0 %v2755
    %2859 = vmatprep.subr.mxu0 %v2752
    %2860 = vmatpush1.msra.mxu0 %v2751
    %2861 = vmatprep.subr.mxu0 %v2748
    %2862 = vmatpush1.msra.mxu0 %v2747
    %2863 = vmatprep.subr.mxu0 %v2744
    %2864 = vmatpush1.msra.mxu0 %v2743
    %2865 = vmatprep.subr.mxu0 %v2740
    %2866 = vmatpush1.msra.mxu0 %v2739
    %2867 = vmatprep.subr.mxu0 %v2736
    %2868 = vmatpush1.msra.mxu0 %v2735
    %2869 = vmatprep.subr.mxu0 %v2732
    %2870 = vmatpush1.msra.mxu0 %v2731
    %2871 = vmatprep.subr.mxu0 %v2728
    %2872 = vmatpush1.msra.mxu0 %v2727
    %2873 = vmatprep.subr.mxu0 %v2724
    %2874 = vmatpush1.msra.mxu0 %v2723
    %2875 = vmatprep.subr.mxu0 %v2720
    %2876 = vmatpush1.msra.mxu0 %v2719
    %2877 = vmatprep.subr.mxu0 %v2716
    %2878 = vmatpush1.msra.mxu0 %v2715
    %2879 = vmatprep.subr.mxu0 %v2712
    %2880 = vmatpush1.msra.mxu0 %v2711
    %2881 = vmatprep.subr.mxu0 %v2708
    %2882 = vmatpush1.msra.mxu0 %v2707
    %2883 = vmatprep.subr.mxu0 %v2704
    %2884 = vmatpush1.msra.mxu0 %v2703
    %2885 = vmatprep.subr.mxu0 %v2828
    %2886 = vmatpush2.msra.mxu0 %v2827
    %2887 = vmatprep.subr.mxu0 %v2824
    %2888 = vmatpush2.msra.mxu0 %v2823
    %2889 = vmatprep.subr.mxu0 %v2820
    %2890 = vmatpush2.msra.mxu0 %v2819
    %2891 = vmatprep.subr.mxu0 %v2816
    %2892 = vmatpush2.msra.mxu0 %v2815
    %2893 = vmatprep.subr.mxu0 %v2812
    %2894 = vmatpush2.msra.mxu0 %v2811
    %2895 = vmatprep.subr.mxu0 %v2808
    %2896 = vmatpush2.msra.mxu0 %v2807
    %2897 = vmatprep.subr.mxu0 %v2804
    %2898 = vmatpush2.msra.mxu0 %v2803
    %2899 = vmatprep.subr.mxu0 %v2800
    %2900 = vmatpush2.msra.mxu0 %v2799
    %2901 = vmatprep.subr.mxu0 %v2796
    %2902 = vmatpush2.msra.mxu0 %v2795
    %2903 = vmatprep.subr.mxu0 %v2792
    %2904 = vmatpush2.msra.mxu0 %v2791
    %2905 = vmatprep.subr.mxu0 %v2788
    %2906 = vmatpush2.msra.mxu0 %v2787
    %2907 = vmatprep.subr.mxu0 %v2784
    %2908 = vmatpush2.msra.mxu0 %v2783
    %2909 = vmatprep.subr.mxu0 %v2780
    %2910 = vmatpush2.msra.mxu0 %v2779
    %2911 = vmatprep.subr.mxu0 %v2776
    %2912 = vmatpush2.msra.mxu0 %v2775
    %2913 = vmatprep.subr.mxu0 %v2772
    %2914 = vmatpush2.msra.mxu0 %v2771
    %2915 = vmatprep.subr.mxu0 %v2768
    %2916 = vmatpush2.msra.mxu0 %v2767
    %2917 = vmatprep.mubr.f32.mxu0 %v2702
    %2918 = vmatmul.mubr.f32.gmra.mxu0 %v2700
    %v2919 = vpop.f32.mrf.mxu0
    %v2920 = vadd.f32 %v2836, %v2919
    %v2921 = vpop.f32.mrf.mxu0
    %v2922 = vadd.f32 %v2840, %v2921
    %2923 = vdwg.mxu0
    %2924 = vmatprep.subr.mxu0 %v2766
    %2925 = vmatpush1.msra.mxu0 %v2765
    %2926 = vmatprep.subr.mxu0 %v2762
    %2927 = vmatpush1.msra.mxu0 %v2761
    %2928 = vmatprep.subr.mxu0 %v2758
    %2929 = vmatpush1.msra.mxu0 %v2757
    %2930 = vmatprep.subr.mxu0 %v2754
    %2931 = vmatpush1.msra.mxu0 %v2753
    %2932 = vmatprep.subr.mxu0 %v2750
    %2933 = vmatpush1.msra.mxu0 %v2749
    %2934 = vmatprep.subr.mxu0 %v2746
    %2935 = vmatpush1.msra.mxu0 %v2745
    %2936 = vmatprep.subr.mxu0 %v2742
    %2937 = vmatpush1.msra.mxu0 %v2741
    %2938 = vmatprep.subr.mxu0 %v2738
    %2939 = vmatpush1.msra.mxu0 %v2737
    %2940 = vmatprep.subr.mxu0 %v2734
    %2941 = vmatpush1.msra.mxu0 %v2733
    %2942 = vmatprep.subr.mxu0 %v2730
    %2943 = vmatpush1.msra.mxu0 %v2729
    %2944 = vmatprep.subr.mxu0 %v2726
    %2945 = vmatpush1.msra.mxu0 %v2725
    %2946 = vmatprep.subr.mxu0 %v2722
    %2947 = vmatpush1.msra.mxu0 %v2721
    %2948 = vmatprep.subr.mxu0 %v2718
    %2949 = vmatpush1.msra.mxu0 %v2717
    %2950 = vmatprep.subr.mxu0 %v2714
    %2951 = vmatpush1.msra.mxu0 %v2713
    %2952 = vmatprep.subr.mxu0 %v2710
    %2953 = vmatpush1.msra.mxu0 %v2709
    %2954 = vmatprep.subr.mxu0 %v2706
    %2955 = vmatpush1.msra.mxu0 %v2705
    %2956 = vmatprep.subr.mxu0 %v2830
    %2957 = vmatpush2.msra.mxu0 %v2829
    %2958 = vmatprep.subr.mxu0 %v2826
    %2959 = vmatpush2.msra.mxu0 %v2825
    %2960 = vmatprep.subr.mxu0 %v2822
    %2961 = vmatpush2.msra.mxu0 %v2821
    %2962 = vmatprep.subr.mxu0 %v2818
    %2963 = vmatpush2.msra.mxu0 %v2817
    %2964 = vmatprep.subr.mxu0 %v2814
    %2965 = vmatpush2.msra.mxu0 %v2813
    %2966 = vmatprep.subr.mxu0 %v2810
    %2967 = vmatpush2.msra.mxu0 %v2809
    %2968 = vmatprep.subr.mxu0 %v2806
    %2969 = vmatpush2.msra.mxu0 %v2805
    %2970 = vmatprep.subr.mxu0 %v2802
    %2971 = vmatpush2.msra.mxu0 %v2801
    %2972 = vmatprep.subr.mxu0 %v2798
    %2973 = vmatpush2.msra.mxu0 %v2797
    %2974 = vmatprep.subr.mxu0 %v2794
    %2975 = vmatpush2.msra.mxu0 %v2793
    %2976 = vmatprep.subr.mxu0 %v2790
    %2977 = vmatpush2.msra.mxu0 %v2789
    %2978 = vmatprep.subr.mxu0 %v2786
    %2979 = vmatpush2.msra.mxu0 %v2785
    %2980 = vmatprep.subr.mxu0 %v2782
    %2981 = vmatpush2.msra.mxu0 %v2781
    %2982 = vmatprep.subr.mxu0 %v2778
    %2983 = vmatpush2.msra.mxu0 %v2777
    %2984 = vmatprep.subr.mxu0 %v2774
    %2985 = vmatpush2.msra.mxu0 %v2773
    %2986 = vmatprep.subr.mxu0 %v2770
    %2987 = vmatpush2.msra.mxu0 %v2769
    %2988 = vmatprep.mubr.f32.mxu0 %v2702
    %2989 = vmatmul.mubr.f32.gmra.mxu0 %v2700
    %v2990 = vpop.f32.mrf.mxu0
    %v2991 = vadd.f32 %v2844, %v2990
    %v2992 = vpop.f32.mrf.mxu0
    %v2993 = vadd.f32 %v2848, %v2992
    %2994 = vdwg.mxu0
    %v2995 = vxor.u32 %v2920, 2147483648
    %v2996 = vmul.f32 %v2995, 1.442695
    %v2997 = vpow.pop %v2996
    %v2998 = vadd.f32 %v2997, 1.0
    %v2999 = vrcp.pop %v2998
    %v3000 = vmul.f32 1.0, %v2999
    %v3001 = vxor.u32 %v2922, 2147483648
    %v3002 = vmul.f32 %v3001, 1.442695
    %v3003 = vpow.pop %v3002
    %v3004 = vadd.f32 %v3003, 1.0
    %v3005 = vrcp.pop %v3004
    %v3006 = vmul.f32 1.0, %v3005
    %v3007 = vtanh.pop %v2991
    %v3008 = vxor.u32 %v2993, 2147483648
    %v3009 = vmul.f32 %v3008, 1.442695
    %v3010 = vpow.pop %v3009
    %v3011 = vadd.f32 %v3010, 1.0
    %v3012 = vrcp.pop %v3011
    %v3013 = vmul.f32 1.0, %v3012
    %v3014 = vmul.f32 %v3006, %v2701
    %v3015 = vmul.f32 %v3000, %v3007
    %v3016 = vadd.f32 %v3014, %v3015
    %v3017 = vtanh.pop %v3016
    %v3018 = vmul.f32 %v3013, %v3017
    %3019 = vst [vmem:[#allocation2] sm:$0xff] %v3018
    %3020 = vst [vmem:[#allocation3] sm:$0xff] %v3016
    %v3021 = vld [vmem:[%s444] sm:$0xff]
    %v3022 = vld [vmem:[%s446] sm:$0xff]
    %v3023 = vld [vmem:[#allocation10] sm:$0xff]
    %v3024 = vld [vmem:[#allocation10 + $0x8] sm:$0xff]
    %v3025 = vld [vmem:[#allocation10 + $0x10] sm:$0xff]
    %v3026 = vld [vmem:[#allocation10 + $0x18] sm:$0xff]
    %v3027 = vld [vmem:[#allocation10 + $0x20] sm:$0xff]
    %v3028 = vld [vmem:[#allocation10 + $0x28] sm:$0xff]
    %v3029 = vld [vmem:[#allocation10 + $0x30] sm:$0xff]
    %v3030 = vld [vmem:[#allocation10 + $0x38] sm:$0xff]
    %v3031 = vld [vmem:[#allocation10 + $0x40] sm:$0xff]
    %v3032 = vld [vmem:[#allocation10 + $0x48] sm:$0xff]
    %v3033 = vld [vmem:[#allocation10 + $0x50] sm:$0xff]
    %v3034 = vld [vmem:[#allocation10 + $0x58] sm:$0xff]
    %v3035 = vld [vmem:[#allocation10 + $0x60] sm:$0xff]
    %v3036 = vld [vmem:[#allocation10 + $0x68] sm:$0xff]
    %v3037 = vld [vmem:[#allocation10 + $0x70] sm:$0xff]
    %v3038 = vld [vmem:[#allocation10 + $0x78] sm:$0xff]
    %v3039 = vld [vmem:[#allocation10 + $0x80] sm:$0xff]
    %v3040 = vld [vmem:[#allocation10 + $0x88] sm:$0xff]
    %v3041 = vld [vmem:[#allocation10 + $0x90] sm:$0xff]
    %v3042 = vld [vmem:[#allocation10 + $0x98] sm:$0xff]
    %v3043 = vld [vmem:[#allocation10 + $0xa0] sm:$0xff]
    %v3044 = vld [vmem:[#allocation10 + $0xa8] sm:$0xff]
    %v3045 = vld [vmem:[#allocation10 + $0xb0] sm:$0xff]
    %v3046 = vld [vmem:[#allocation10 + $0xb8] sm:$0xff]
    %v3047 = vld [vmem:[#allocation10 + $0xc0] sm:$0xff]
    %v3048 = vld [vmem:[#allocation10 + $0xc8] sm:$0xff]
    %v3049 = vld [vmem:[#allocation10 + $0xd0] sm:$0xff]
    %v3050 = vld [vmem:[#allocation10 + $0xd8] sm:$0xff]
    %v3051 = vld [vmem:[#allocation10 + $0xe0] sm:$0xff]
    %v3052 = vld [vmem:[#allocation10 + $0xe8] sm:$0xff]
    %v3053 = vld [vmem:[#allocation10 + $0xf0] sm:$0xff]
    %v3054 = vld [vmem:[#allocation10 + $0xf8] sm:$0xff]
    %v3055 = vld [vmem:[#allocation10 + $0x100] sm:$0xff]
    %v3056 = vld [vmem:[#allocation10 + $0x108] sm:$0xff]
    %v3057 = vld [vmem:[#allocation10 + $0x110] sm:$0xff]
    %v3058 = vld [vmem:[#allocation10 + $0x118] sm:$0xff]
    %v3059 = vld [vmem:[#allocation10 + $0x120] sm:$0xff]
    %v3060 = vld [vmem:[#allocation10 + $0x128] sm:$0xff]
    %v3061 = vld [vmem:[#allocation10 + $0x130] sm:$0xff]
    %v3062 = vld [vmem:[#allocation10 + $0x138] sm:$0xff]
    %v3063 = vld [vmem:[#allocation10 + $0x140] sm:$0xff]
    %v3064 = vld [vmem:[#allocation10 + $0x148] sm:$0xff]
    %v3065 = vld [vmem:[#allocation10 + $0x150] sm:$0xff]
    %v3066 = vld [vmem:[#allocation10 + $0x158] sm:$0xff]
    %v3067 = vld [vmem:[#allocation10 + $0x160] sm:$0xff]
    %v3068 = vld [vmem:[#allocation10 + $0x168] sm:$0xff]
    %v3069 = vld [vmem:[#allocation10 + $0x170] sm:$0xff]
    %v3070 = vld [vmem:[#allocation10 + $0x178] sm:$0xff]
    %v3071 = vld [vmem:[#allocation10 + $0x180] sm:$0xff]
    %v3072 = vld [vmem:[#allocation10 + $0x188] sm:$0xff]
    %v3073 = vld [vmem:[#allocation10 + $0x190] sm:$0xff]
    %v3074 = vld [vmem:[#allocation10 + $0x198] sm:$0xff]
    %v3075 = vld [vmem:[#allocation10 + $0x1a0] sm:$0xff]
    %v3076 = vld [vmem:[#allocation10 + $0x1a8] sm:$0xff]
    %v3077 = vld [vmem:[#allocation10 + $0x1b0] sm:$0xff]
    %v3078 = vld [vmem:[#allocation10 + $0x1b8] sm:$0xff]
    %v3079 = vld [vmem:[#allocation10 + $0x1c0] sm:$0xff]
    %v3080 = vld [vmem:[#allocation10 + $0x1c8] sm:$0xff]
    %v3081 = vld [vmem:[#allocation10 + $0x1d0] sm:$0xff]
    %v3082 = vld [vmem:[#allocation10 + $0x1d8] sm:$0xff]
    %v3083 = vld [vmem:[#allocation10 + $0x1e0] sm:$0xff]
    %v3084 = vld [vmem:[#allocation10 + $0x1e8] sm:$0xff]
    %v3085 = vld [vmem:[#allocation10 + $0x1f0] sm:$0xff]
    %v3086 = vld [vmem:[#allocation10 + $0x1f8] sm:$0xff]
    %v3087 = vld [vmem:[#allocation10 + $0x200] sm:$0xff]
    %v3088 = vld [vmem:[#allocation10 + $0x208] sm:$0xff]
    %v3089 = vld [vmem:[#allocation10 + $0x210] sm:$0xff]
    %v3090 = vld [vmem:[#allocation10 + $0x218] sm:$0xff]
    %v3091 = vld [vmem:[#allocation10 + $0x220] sm:$0xff]
    %v3092 = vld [vmem:[#allocation10 + $0x228] sm:$0xff]
    %v3093 = vld [vmem:[#allocation10 + $0x230] sm:$0xff]
    %v3094 = vld [vmem:[#allocation10 + $0x238] sm:$0xff]
    %v3095 = vld [vmem:[#allocation10 + $0x240] sm:$0xff]
    %v3096 = vld [vmem:[#allocation10 + $0x248] sm:$0xff]
    %v3097 = vld [vmem:[#allocation10 + $0x250] sm:$0xff]
    %v3098 = vld [vmem:[#allocation10 + $0x258] sm:$0xff]
    %v3099 = vld [vmem:[#allocation10 + $0x260] sm:$0xff]
    %v3100 = vld [vmem:[#allocation10 + $0x268] sm:$0xff]
    %v3101 = vld [vmem:[#allocation10 + $0x270] sm:$0xff]
    %v3102 = vld [vmem:[#allocation10 + $0x278] sm:$0xff]
    %v3103 = vld [vmem:[#allocation10 + $0x280] sm:$0xff]
    %v3104 = vld [vmem:[#allocation10 + $0x288] sm:$0xff]
    %v3105 = vld [vmem:[#allocation10 + $0x290] sm:$0xff]
    %v3106 = vld [vmem:[#allocation10 + $0x298] sm:$0xff]
    %v3107 = vld [vmem:[#allocation10 + $0x2a0] sm:$0xff]
    %v3108 = vld [vmem:[#allocation10 + $0x2a8] sm:$0xff]
    %v3109 = vld [vmem:[#allocation10 + $0x2b0] sm:$0xff]
    %v3110 = vld [vmem:[#allocation10 + $0x2b8] sm:$0xff]
    %v3111 = vld [vmem:[#allocation10 + $0x2c0] sm:$0xff]
    %v3112 = vld [vmem:[#allocation10 + $0x2c8] sm:$0xff]
    %v3113 = vld [vmem:[#allocation10 + $0x2d0] sm:$0xff]
    %v3114 = vld [vmem:[#allocation10 + $0x2d8] sm:$0xff]
    %v3115 = vld [vmem:[#allocation10 + $0x2e0] sm:$0xff]
    %v3116 = vld [vmem:[#allocation10 + $0x2e8] sm:$0xff]
    %v3117 = vld [vmem:[#allocation10 + $0x2f0] sm:$0xff]
    %v3118 = vld [vmem:[#allocation10 + $0x2f8] sm:$0xff]
    %v3119 = vld [vmem:[#allocation10 + $0x300] sm:$0xff]
    %v3120 = vld [vmem:[#allocation10 + $0x308] sm:$0xff]
    %v3121 = vld [vmem:[#allocation10 + $0x310] sm:$0xff]
    %v3122 = vld [vmem:[#allocation10 + $0x318] sm:$0xff]
    %v3123 = vld [vmem:[#allocation10 + $0x320] sm:$0xff]
    %v3124 = vld [vmem:[#allocation10 + $0x328] sm:$0xff]
    %v3125 = vld [vmem:[#allocation10 + $0x330] sm:$0xff]
    %v3126 = vld [vmem:[#allocation10 + $0x338] sm:$0xff]
    %v3127 = vld [vmem:[#allocation10 + $0x340] sm:$0xff]
    %v3128 = vld [vmem:[#allocation10 + $0x348] sm:$0xff]
    %v3129 = vld [vmem:[#allocation10 + $0x350] sm:$0xff]
    %v3130 = vld [vmem:[#allocation10 + $0x358] sm:$0xff]
    %v3131 = vld [vmem:[#allocation10 + $0x360] sm:$0xff]
    %v3132 = vld [vmem:[#allocation10 + $0x368] sm:$0xff]
    %v3133 = vld [vmem:[#allocation10 + $0x370] sm:$0xff]
    %v3134 = vld [vmem:[#allocation10 + $0x378] sm:$0xff]
    %v3135 = vld [vmem:[#allocation10 + $0x380] sm:$0xff]
    %v3136 = vld [vmem:[#allocation10 + $0x388] sm:$0xff]
    %v3137 = vld [vmem:[#allocation10 + $0x390] sm:$0xff]
    %v3138 = vld [vmem:[#allocation10 + $0x398] sm:$0xff]
    %v3139 = vld [vmem:[#allocation10 + $0x3a0] sm:$0xff]
    %v3140 = vld [vmem:[#allocation10 + $0x3a8] sm:$0xff]
    %v3141 = vld [vmem:[#allocation10 + $0x3b0] sm:$0xff]
    %v3142 = vld [vmem:[#allocation10 + $0x3b8] sm:$0xff]
    %v3143 = vld [vmem:[#allocation10 + $0x3c0] sm:$0xff]
    %v3144 = vld [vmem:[#allocation10 + $0x3c8] sm:$0xff]
    %v3145 = vld [vmem:[#allocation10 + $0x3d0] sm:$0xff]
    %v3146 = vld [vmem:[#allocation10 + $0x3d8] sm:$0xff]
    %v3147 = vld [vmem:[#allocation10 + $0x3e0] sm:$0xff]
    %v3148 = vld [vmem:[#allocation10 + $0x3e8] sm:$0xff]
    %v3149 = vld [vmem:[#allocation10 + $0x3f0] sm:$0xff]
    %v3150 = vld [vmem:[#allocation10 + $0x3f8] sm:$0xff]
    %v3151 = vld [vmem:[%s4] sm:$0xf]
    %v3153 = vlaneseq
    %v3154 = vshrl.u32 %v3153, 7
    %v3155 = vsub.s32 0, %v3154
    %v3156 = vrot.slane %v3151, %v3155
    %v3157 = vlaneseq
    %v3158 = vshrl.u32 %v3157, 7
    %v3159 = vsub.s32 1, %v3158
    %v3160 = vrot.slane %v3151, %v3159
    %v3161 = vlaneseq
    %v3162 = vshrl.u32 %v3161, 7
    %v3163 = vsub.s32 2, %v3162
    %v3164 = vrot.slane %v3151, %v3163
    %v3165 = vlaneseq
    %v3166 = vshrl.u32 %v3165, 7
    %v3167 = vsub.s32 3, %v3166
    %v3168 = vrot.slane %v3151, %v3167
    %3173 = vmatprep.subr.mxu0 %v3084
    %3174 = vmatpush1.msra.mxu0 %v3083
    %3175 = vmatprep.subr.mxu0 %v3080
    %3176 = vmatpush1.msra.mxu0 %v3079
    %3177 = vmatprep.subr.mxu0 %v3076
    %3178 = vmatpush1.msra.mxu0 %v3075
    %3179 = vmatprep.subr.mxu0 %v3072
    %3180 = vmatpush1.msra.mxu0 %v3071
    %3181 = vmatprep.subr.mxu0 %v3068
    %3182 = vmatpush1.msra.mxu0 %v3067
    %3183 = vmatprep.subr.mxu0 %v3064
    %3184 = vmatpush1.msra.mxu0 %v3063
    %3185 = vmatprep.subr.mxu0 %v3060
    %3186 = vmatpush1.msra.mxu0 %v3059
    %3187 = vmatprep.subr.mxu0 %v3056
    %3188 = vmatpush1.msra.mxu0 %v3055
    %3189 = vmatprep.subr.mxu0 %v3052
    %3190 = vmatpush1.msra.mxu0 %v3051
    %3191 = vmatprep.subr.mxu0 %v3048
    %3192 = vmatpush1.msra.mxu0 %v3047
    %3193 = vmatprep.subr.mxu0 %v3044
    %3194 = vmatpush1.msra.mxu0 %v3043
    %3195 = vmatprep.subr.mxu0 %v3040
    %3196 = vmatpush1.msra.mxu0 %v3039
    %3197 = vmatprep.subr.mxu0 %v3036
    %3198 = vmatpush1.msra.mxu0 %v3035
    %3199 = vmatprep.subr.mxu0 %v3032
    %3200 = vmatpush1.msra.mxu0 %v3031
    %3201 = vmatprep.subr.mxu0 %v3028
    %3202 = vmatpush1.msra.mxu0 %v3027
    %3203 = vmatprep.subr.mxu0 %v3024
    %3204 = vmatpush1.msra.mxu0 %v3023
    %3205 = vmatprep.subr.mxu0 %v3148
    %3206 = vmatpush2.msra.mxu0 %v3147
    %3207 = vmatprep.subr.mxu0 %v3144
    %3208 = vmatpush2.msra.mxu0 %v3143
    %3209 = vmatprep.subr.mxu0 %v3140
    %3210 = vmatpush2.msra.mxu0 %v3139
    %3211 = vmatprep.subr.mxu0 %v3136
    %3212 = vmatpush2.msra.mxu0 %v3135
    %3213 = vmatprep.subr.mxu0 %v3132
    %3214 = vmatpush2.msra.mxu0 %v3131
    %3215 = vmatprep.subr.mxu0 %v3128
    %3216 = vmatpush2.msra.mxu0 %v3127
    %3217 = vmatprep.subr.mxu0 %v3124
    %3218 = vmatpush2.msra.mxu0 %v3123
    %3219 = vmatprep.subr.mxu0 %v3120
    %3220 = vmatpush2.msra.mxu0 %v3119
    %3221 = vmatprep.subr.mxu0 %v3116
    %3222 = vmatpush2.msra.mxu0 %v3115
    %3223 = vmatprep.subr.mxu0 %v3112
    %3224 = vmatpush2.msra.mxu0 %v3111
    %3225 = vmatprep.subr.mxu0 %v3108
    %3226 = vmatpush2.msra.mxu0 %v3107
    %3227 = vmatprep.subr.mxu0 %v3104
    %3228 = vmatpush2.msra.mxu0 %v3103
    %3229 = vmatprep.subr.mxu0 %v3100
    %3230 = vmatpush2.msra.mxu0 %v3099
    %3231 = vmatprep.subr.mxu0 %v3096
    %3232 = vmatpush2.msra.mxu0 %v3095
    %3233 = vmatprep.subr.mxu0 %v3092
    %3234 = vmatpush2.msra.mxu0 %v3091
    %3235 = vmatprep.subr.mxu0 %v3088
    %3236 = vmatpush2.msra.mxu0 %v3087
    %3237 = vmatprep.mubr.f32.mxu0 %v3022
    %3238 = vmatmul.mubr.f32.gmra.mxu0 %v3018
    %v3239 = vpop.f32.mrf.mxu0
    %v3240 = vadd.f32 %v3156, %v3239
    %v3241 = vpop.f32.mrf.mxu0
    %v3242 = vadd.f32 %v3160, %v3241
    %3243 = vdwg.mxu0
    %3244 = vmatprep.subr.mxu0 %v3086
    %3245 = vmatpush1.msra.mxu0 %v3085
    %3246 = vmatprep.subr.mxu0 %v3082
    %3247 = vmatpush1.msra.mxu0 %v3081
    %3248 = vmatprep.subr.mxu0 %v3078
    %3249 = vmatpush1.msra.mxu0 %v3077
    %3250 = vmatprep.subr.mxu0 %v3074
    %3251 = vmatpush1.msra.mxu0 %v3073
    %3252 = vmatprep.subr.mxu0 %v3070
    %3253 = vmatpush1.msra.mxu0 %v3069
    %3254 = vmatprep.subr.mxu0 %v3066
    %3255 = vmatpush1.msra.mxu0 %v3065
    %3256 = vmatprep.subr.mxu0 %v3062
    %3257 = vmatpush1.msra.mxu0 %v3061
    %3258 = vmatprep.subr.mxu0 %v3058
    %3259 = vmatpush1.msra.mxu0 %v3057
    %3260 = vmatprep.subr.mxu0 %v3054
    %3261 = vmatpush1.msra.mxu0 %v3053
    %3262 = vmatprep.subr.mxu0 %v3050
    %3263 = vmatpush1.msra.mxu0 %v3049
    %3264 = vmatprep.subr.mxu0 %v3046
    %3265 = vmatpush1.msra.mxu0 %v3045
    %3266 = vmatprep.subr.mxu0 %v3042
    %3267 = vmatpush1.msra.mxu0 %v3041
    %3268 = vmatprep.subr.mxu0 %v3038
    %3269 = vmatpush1.msra.mxu0 %v3037
    %3270 = vmatprep.subr.mxu0 %v3034
    %3271 = vmatpush1.msra.mxu0 %v3033
    %3272 = vmatprep.subr.mxu0 %v3030
    %3273 = vmatpush1.msra.mxu0 %v3029
    %3274 = vmatprep.subr.mxu0 %v3026
    %3275 = vmatpush1.msra.mxu0 %v3025
    %3276 = vmatprep.subr.mxu0 %v3150
    %3277 = vmatpush2.msra.mxu0 %v3149
    %3278 = vmatprep.subr.mxu0 %v3146
    %3279 = vmatpush2.msra.mxu0 %v3145
    %3280 = vmatprep.subr.mxu0 %v3142
    %3281 = vmatpush2.msra.mxu0 %v3141
    %3282 = vmatprep.subr.mxu0 %v3138
    %3283 = vmatpush2.msra.mxu0 %v3137
    %3284 = vmatprep.subr.mxu0 %v3134
    %3285 = vmatpush2.msra.mxu0 %v3133
    %3286 = vmatprep.subr.mxu0 %v3130
    %3287 = vmatpush2.msra.mxu0 %v3129
    %3288 = vmatprep.subr.mxu0 %v3126
    %3289 = vmatpush2.msra.mxu0 %v3125
    %3290 = vmatprep.subr.mxu0 %v3122
    %3291 = vmatpush2.msra.mxu0 %v3121
    %3292 = vmatprep.subr.mxu0 %v3118
    %3293 = vmatpush2.msra.mxu0 %v3117
    %3294 = vmatprep.subr.mxu0 %v3114
    %3295 = vmatpush2.msra.mxu0 %v3113
    %3296 = vmatprep.subr.mxu0 %v3110
    %3297 = vmatpush2.msra.mxu0 %v3109
    %3298 = vmatprep.subr.mxu0 %v3106
    %3299 = vmatpush2.msra.mxu0 %v3105
    %3300 = vmatprep.subr.mxu0 %v3102
    %3301 = vmatpush2.msra.mxu0 %v3101
    %3302 = vmatprep.subr.mxu0 %v3098
    %3303 = vmatpush2.msra.mxu0 %v3097
    %3304 = vmatprep.subr.mxu0 %v3094
    %3305 = vmatpush2.msra.mxu0 %v3093
    %3306 = vmatprep.subr.mxu0 %v3090
    %3307 = vmatpush2.msra.mxu0 %v3089
    %3308 = vmatprep.mubr.f32.mxu0 %v3022
    %3309 = vmatmul.mubr.f32.gmra.mxu0 %v3018
    %v3310 = vpop.f32.mrf.mxu0
    %v3311 = vadd.f32 %v3164, %v3310
    %v3312 = vpop.f32.mrf.mxu0
    %v3313 = vadd.f32 %v3168, %v3312
    %3314 = vdwg.mxu0
    %v3315 = vxor.u32 %v3240, 2147483648
    %v3316 = vmul.f32 %v3315, 1.442695
    %v3317 = vpow.pop %v3316
    %v3318 = vadd.f32 %v3317, 1.0
    %v3319 = vrcp.pop %v3318
    %v3320 = vmul.f32 1.0, %v3319
    %v3321 = vxor.u32 %v3242, 2147483648
    %v3322 = vmul.f32 %v3321, 1.442695
    %v3323 = vpow.pop %v3322
    %v3324 = vadd.f32 %v3323, 1.0
    %v3325 = vrcp.pop %v3324
    %v3326 = vmul.f32 1.0, %v3325
    %v3327 = vtanh.pop %v3311
    %v3328 = vxor.u32 %v3313, 2147483648
    %v3329 = vmul.f32 %v3328, 1.442695
    %v3330 = vpow.pop %v3329
    %v3331 = vadd.f32 %v3330, 1.0
    %v3332 = vrcp.pop %v3331
    %v3333 = vmul.f32 1.0, %v3332
    %v3334 = vmul.f32 %v3326, %v3021
    %v3335 = vmul.f32 %v3320, %v3327
    %v3336 = vadd.f32 %v3334, %v3335
    %v3337 = vtanh.pop %v3336
    %v3338 = vmul.f32 %v3333, %v3337
    %3339 = vst [vmem:[%s446] sm:$0xff] %v3338
    %3340 = vst [vmem:[%s444] sm:$0xff] %v3336
    %s3341 = scalar_lea.vmem [#allocation15], 32
    %3342 = vst [vmem:[%s3341] sm:$0xff] %v3338
    %s3343 = scalar_lea.vmem [#allocation4], 40
    %v3344 = vld [vmem:[%s3343] sm:$0xff]
    %v3345 = vld [vmem:[#allocation3] sm:$0xff]
    %v3346 = vld [vmem:[#allocation2] sm:$0xff]
    %v3347 = vld [vmem:[#allocation7] sm:$0xff]
    %v3348 = vld [vmem:[#allocation7 + $0x8] sm:$0xff]
    %v3349 = vld [vmem:[#allocation7 + $0x10] sm:$0xff]
    %v3350 = vld [vmem:[#allocation7 + $0x18] sm:$0xff]
    %v3351 = vld [vmem:[#allocation7 + $0x20] sm:$0xff]
    %v3352 = vld [vmem:[#allocation7 + $0x28] sm:$0xff]
    %v3353 = vld [vmem:[#allocation7 + $0x30] sm:$0xff]
    %v3354 = vld [vmem:[#allocation7 + $0x38] sm:$0xff]
    %v3355 = vld [vmem:[#allocation7 + $0x40] sm:$0xff]
    %v3356 = vld [vmem:[#allocation7 + $0x48] sm:$0xff]
    %v3357 = vld [vmem:[#allocation7 + $0x50] sm:$0xff]
    %v3358 = vld [vmem:[#allocation7 + $0x58] sm:$0xff]
    %v3359 = vld [vmem:[#allocation7 + $0x60] sm:$0xff]
    %v3360 = vld [vmem:[#allocation7 + $0x68] sm:$0xff]
    %v3361 = vld [vmem:[#allocation7 + $0x70] sm:$0xff]
    %v3362 = vld [vmem:[#allocation7 + $0x78] sm:$0xff]
    %v3363 = vld [vmem:[#allocation7 + $0x80] sm:$0xff]
    %v3364 = vld [vmem:[#allocation7 + $0x88] sm:$0xff]
    %v3365 = vld [vmem:[#allocation7 + $0x90] sm:$0xff]
    %v3366 = vld [vmem:[#allocation7 + $0x98] sm:$0xff]
    %v3367 = vld [vmem:[#allocation7 + $0xa0] sm:$0xff]
    %v3368 = vld [vmem:[#allocation7 + $0xa8] sm:$0xff]
    %v3369 = vld [vmem:[#allocation7 + $0xb0] sm:$0xff]
    %v3370 = vld [vmem:[#allocation7 + $0xb8] sm:$0xff]
    %v3371 = vld [vmem:[#allocation7 + $0xc0] sm:$0xff]
    %v3372 = vld [vmem:[#allocation7 + $0xc8] sm:$0xff]
    %v3373 = vld [vmem:[#allocation7 + $0xd0] sm:$0xff]
    %v3374 = vld [vmem:[#allocation7 + $0xd8] sm:$0xff]
    %v3375 = vld [vmem:[#allocation7 + $0xe0] sm:$0xff]
    %v3376 = vld [vmem:[#allocation7 + $0xe8] sm:$0xff]
    %v3377 = vld [vmem:[#allocation7 + $0xf0] sm:$0xff]
    %v3378 = vld [vmem:[#allocation7 + $0xf8] sm:$0xff]
    %v3379 = vld [vmem:[#allocation7 + $0x100] sm:$0xff]
    %v3380 = vld [vmem:[#allocation7 + $0x108] sm:$0xff]
    %v3381 = vld [vmem:[#allocation7 + $0x110] sm:$0xff]
    %v3382 = vld [vmem:[#allocation7 + $0x118] sm:$0xff]
    %v3383 = vld [vmem:[#allocation7 + $0x120] sm:$0xff]
    %v3384 = vld [vmem:[#allocation7 + $0x128] sm:$0xff]
    %v3385 = vld [vmem:[#allocation7 + $0x130] sm:$0xff]
    %v3386 = vld [vmem:[#allocation7 + $0x138] sm:$0xff]
    %v3387 = vld [vmem:[#allocation7 + $0x140] sm:$0xff]
    %v3388 = vld [vmem:[#allocation7 + $0x148] sm:$0xff]
    %v3389 = vld [vmem:[#allocation7 + $0x150] sm:$0xff]
    %v3390 = vld [vmem:[#allocation7 + $0x158] sm:$0xff]
    %v3391 = vld [vmem:[#allocation7 + $0x160] sm:$0xff]
    %v3392 = vld [vmem:[#allocation7 + $0x168] sm:$0xff]
    %v3393 = vld [vmem:[#allocation7 + $0x170] sm:$0xff]
    %v3394 = vld [vmem:[#allocation7 + $0x178] sm:$0xff]
    %v3395 = vld [vmem:[#allocation7 + $0x180] sm:$0xff]
    %v3396 = vld [vmem:[#allocation7 + $0x188] sm:$0xff]
    %v3397 = vld [vmem:[#allocation7 + $0x190] sm:$0xff]
    %v3398 = vld [vmem:[#allocation7 + $0x198] sm:$0xff]
    %v3399 = vld [vmem:[#allocation7 + $0x1a0] sm:$0xff]
    %v3400 = vld [vmem:[#allocation7 + $0x1a8] sm:$0xff]
    %v3401 = vld [vmem:[#allocation7 + $0x1b0] sm:$0xff]
    %v3402 = vld [vmem:[#allocation7 + $0x1b8] sm:$0xff]
    %v3403 = vld [vmem:[#allocation7 + $0x1c0] sm:$0xff]
    %v3404 = vld [vmem:[#allocation7 + $0x1c8] sm:$0xff]
    %v3405 = vld [vmem:[#allocation7 + $0x1d0] sm:$0xff]
    %v3406 = vld [vmem:[#allocation7 + $0x1d8] sm:$0xff]
    %v3407 = vld [vmem:[#allocation7 + $0x1e0] sm:$0xff]
    %v3408 = vld [vmem:[#allocation7 + $0x1e8] sm:$0xff]
    %v3409 = vld [vmem:[#allocation7 + $0x1f0] sm:$0xff]
    %v3410 = vld [vmem:[#allocation7 + $0x1f8] sm:$0xff]
    %v3411 = vld [vmem:[#allocation7 + $0x200] sm:$0xff]
    %v3412 = vld [vmem:[#allocation7 + $0x208] sm:$0xff]
    %v3413 = vld [vmem:[#allocation7 + $0x210] sm:$0xff]
    %v3414 = vld [vmem:[#allocation7 + $0x218] sm:$0xff]
    %v3415 = vld [vmem:[#allocation7 + $0x220] sm:$0xff]
    %v3416 = vld [vmem:[#allocation7 + $0x228] sm:$0xff]
    %v3417 = vld [vmem:[#allocation7 + $0x230] sm:$0xff]
    %v3418 = vld [vmem:[#allocation7 + $0x238] sm:$0xff]
    %v3419 = vld [vmem:[#allocation7 + $0x240] sm:$0xff]
    %v3420 = vld [vmem:[#allocation7 + $0x248] sm:$0xff]
    %v3421 = vld [vmem:[#allocation7 + $0x250] sm:$0xff]
    %v3422 = vld [vmem:[#allocation7 + $0x258] sm:$0xff]
    %v3423 = vld [vmem:[#allocation7 + $0x260] sm:$0xff]
    %v3424 = vld [vmem:[#allocation7 + $0x268] sm:$0xff]
    %v3425 = vld [vmem:[#allocation7 + $0x270] sm:$0xff]
    %v3426 = vld [vmem:[#allocation7 + $0x278] sm:$0xff]
    %v3427 = vld [vmem:[#allocation7 + $0x280] sm:$0xff]
    %v3428 = vld [vmem:[#allocation7 + $0x288] sm:$0xff]
    %v3429 = vld [vmem:[#allocation7 + $0x290] sm:$0xff]
    %v3430 = vld [vmem:[#allocation7 + $0x298] sm:$0xff]
    %v3431 = vld [vmem:[#allocation7 + $0x2a0] sm:$0xff]
    %v3432 = vld [vmem:[#allocation7 + $0x2a8] sm:$0xff]
    %v3433 = vld [vmem:[#allocation7 + $0x2b0] sm:$0xff]
    %v3434 = vld [vmem:[#allocation7 + $0x2b8] sm:$0xff]
    %v3435 = vld [vmem:[#allocation7 + $0x2c0] sm:$0xff]
    %v3436 = vld [vmem:[#allocation7 + $0x2c8] sm:$0xff]
    %v3437 = vld [vmem:[#allocation7 + $0x2d0] sm:$0xff]
    %v3438 = vld [vmem:[#allocation7 + $0x2d8] sm:$0xff]
    %v3439 = vld [vmem:[#allocation7 + $0x2e0] sm:$0xff]
    %v3440 = vld [vmem:[#allocation7 + $0x2e8] sm:$0xff]
    %v3441 = vld [vmem:[#allocation7 + $0x2f0] sm:$0xff]
    %v3442 = vld [vmem:[#allocation7 + $0x2f8] sm:$0xff]
    %v3443 = vld [vmem:[#allocation7 + $0x300] sm:$0xff]
    %v3444 = vld [vmem:[#allocation7 + $0x308] sm:$0xff]
    %v3445 = vld [vmem:[#allocation7 + $0x310] sm:$0xff]
    %v3446 = vld [vmem:[#allocation7 + $0x318] sm:$0xff]
    %v3447 = vld [vmem:[#allocation7 + $0x320] sm:$0xff]
    %v3448 = vld [vmem:[#allocation7 + $0x328] sm:$0xff]
    %v3449 = vld [vmem:[#allocation7 + $0x330] sm:$0xff]
    %v3450 = vld [vmem:[#allocation7 + $0x338] sm:$0xff]
    %v3451 = vld [vmem:[#allocation7 + $0x340] sm:$0xff]
    %v3452 = vld [vmem:[#allocation7 + $0x348] sm:$0xff]
    %v3453 = vld [vmem:[#allocation7 + $0x350] sm:$0xff]
    %v3454 = vld [vmem:[#allocation7 + $0x358] sm:$0xff]
    %v3455 = vld [vmem:[#allocation7 + $0x360] sm:$0xff]
    %v3456 = vld [vmem:[#allocation7 + $0x368] sm:$0xff]
    %v3457 = vld [vmem:[#allocation7 + $0x370] sm:$0xff]
    %v3458 = vld [vmem:[#allocation7 + $0x378] sm:$0xff]
    %v3459 = vld [vmem:[#allocation7 + $0x380] sm:$0xff]
    %v3460 = vld [vmem:[#allocation7 + $0x388] sm:$0xff]
    %v3461 = vld [vmem:[#allocation7 + $0x390] sm:$0xff]
    %v3462 = vld [vmem:[#allocation7 + $0x398] sm:$0xff]
    %v3463 = vld [vmem:[#allocation7 + $0x3a0] sm:$0xff]
    %v3464 = vld [vmem:[#allocation7 + $0x3a8] sm:$0xff]
    %v3465 = vld [vmem:[#allocation7 + $0x3b0] sm:$0xff]
    %v3466 = vld [vmem:[#allocation7 + $0x3b8] sm:$0xff]
    %v3467 = vld [vmem:[#allocation7 + $0x3c0] sm:$0xff]
    %v3468 = vld [vmem:[#allocation7 + $0x3c8] sm:$0xff]
    %v3469 = vld [vmem:[#allocation7 + $0x3d0] sm:$0xff]
    %v3470 = vld [vmem:[#allocation7 + $0x3d8] sm:$0xff]
    %v3471 = vld [vmem:[#allocation7 + $0x3e0] sm:$0xff]
    %v3472 = vld [vmem:[#allocation7 + $0x3e8] sm:$0xff]
    %v3473 = vld [vmem:[#allocation7 + $0x3f0] sm:$0xff]
    %v3474 = vld [vmem:[#allocation7 + $0x3f8] sm:$0xff]
    %v3475 = vld [vmem:[#allocation9] sm:$0xf]
    %v3477 = vlaneseq
    %v3478 = vshrl.u32 %v3477, 7
    %v3479 = vsub.s32 0, %v3478
    %v3480 = vrot.slane %v3475, %v3479
    %v3481 = vlaneseq
    %v3482 = vshrl.u32 %v3481, 7
    %v3483 = vsub.s32 1, %v3482
    %v3484 = vrot.slane %v3475, %v3483
    %v3485 = vlaneseq
    %v3486 = vshrl.u32 %v3485, 7
    %v3487 = vsub.s32 2, %v3486
    %v3488 = vrot.slane %v3475, %v3487
    %v3489 = vlaneseq
    %v3490 = vshrl.u32 %v3489, 7
    %v3491 = vsub.s32 3, %v3490
    %v3492 = vrot.slane %v3475, %v3491
    %3497 = vmatprep.subr.mxu0 %v3408
    %3498 = vmatpush1.msra.mxu0 %v3407
    %3499 = vmatprep.subr.mxu0 %v3404
    %3500 = vmatpush1.msra.mxu0 %v3403
    %3501 = vmatprep.subr.mxu0 %v3400
    %3502 = vmatpush1.msra.mxu0 %v3399
    %3503 = vmatprep.subr.mxu0 %v3396
    %3504 = vmatpush1.msra.mxu0 %v3395
    %3505 = vmatprep.subr.mxu0 %v3392
    %3506 = vmatpush1.msra.mxu0 %v3391
    %3507 = vmatprep.subr.mxu0 %v3388
    %3508 = vmatpush1.msra.mxu0 %v3387
    %3509 = vmatprep.subr.mxu0 %v3384
    %3510 = vmatpush1.msra.mxu0 %v3383
    %3511 = vmatprep.subr.mxu0 %v3380
    %3512 = vmatpush1.msra.mxu0 %v3379
    %3513 = vmatprep.subr.mxu0 %v3376
    %3514 = vmatpush1.msra.mxu0 %v3375
    %3515 = vmatprep.subr.mxu0 %v3372
    %3516 = vmatpush1.msra.mxu0 %v3371
    %3517 = vmatprep.subr.mxu0 %v3368
    %3518 = vmatpush1.msra.mxu0 %v3367
    %3519 = vmatprep.subr.mxu0 %v3364
    %3520 = vmatpush1.msra.mxu0 %v3363
    %3521 = vmatprep.subr.mxu0 %v3360
    %3522 = vmatpush1.msra.mxu0 %v3359
    %3523 = vmatprep.subr.mxu0 %v3356
    %3524 = vmatpush1.msra.mxu0 %v3355
    %3525 = vmatprep.subr.mxu0 %v3352
    %3526 = vmatpush1.msra.mxu0 %v3351
    %3527 = vmatprep.subr.mxu0 %v3348
    %3528 = vmatpush1.msra.mxu0 %v3347
    %3529 = vmatprep.subr.mxu0 %v3472
    %3530 = vmatpush2.msra.mxu0 %v3471
    %3531 = vmatprep.subr.mxu0 %v3468
    %3532 = vmatpush2.msra.mxu0 %v3467
    %3533 = vmatprep.subr.mxu0 %v3464
    %3534 = vmatpush2.msra.mxu0 %v3463
    %3535 = vmatprep.subr.mxu0 %v3460
    %3536 = vmatpush2.msra.mxu0 %v3459
    %3537 = vmatprep.subr.mxu0 %v3456
    %3538 = vmatpush2.msra.mxu0 %v3455
    %3539 = vmatprep.subr.mxu0 %v3452
    %3540 = vmatpush2.msra.mxu0 %v3451
    %3541 = vmatprep.subr.mxu0 %v3448
    %3542 = vmatpush2.msra.mxu0 %v3447
    %3543 = vmatprep.subr.mxu0 %v3444
    %3544 = vmatpush2.msra.mxu0 %v3443
    %3545 = vmatprep.subr.mxu0 %v3440
    %3546 = vmatpush2.msra.mxu0 %v3439
    %3547 = vmatprep.subr.mxu0 %v3436
    %3548 = vmatpush2.msra.mxu0 %v3435
    %3549 = vmatprep.subr.mxu0 %v3432
    %3550 = vmatpush2.msra.mxu0 %v3431
    %3551 = vmatprep.subr.mxu0 %v3428
    %3552 = vmatpush2.msra.mxu0 %v3427
    %3553 = vmatprep.subr.mxu0 %v3424
    %3554 = vmatpush2.msra.mxu0 %v3423
    %3555 = vmatprep.subr.mxu0 %v3420
    %3556 = vmatpush2.msra.mxu0 %v3419
    %3557 = vmatprep.subr.mxu0 %v3416
    %3558 = vmatpush2.msra.mxu0 %v3415
    %3559 = vmatprep.subr.mxu0 %v3412
    %3560 = vmatpush2.msra.mxu0 %v3411
    %3561 = vmatprep.mubr.f32.mxu0 %v3346
    %3562 = vmatmul.mubr.f32.gmra.mxu0 %v3344
    %v3563 = vpop.f32.mrf.mxu0
    %v3564 = vadd.f32 %v3480, %v3563
    %v3565 = vpop.f32.mrf.mxu0
    %v3566 = vadd.f32 %v3484, %v3565
    %3567 = vdwg.mxu0
    %3568 = vmatprep.subr.mxu0 %v3410
    %3569 = vmatpush1.msra.mxu0 %v3409
    %3570 = vmatprep.subr.mxu0 %v3406
    %3571 = vmatpush1.msra.mxu0 %v3405
    %3572 = vmatprep.subr.mxu0 %v3402
    %3573 = vmatpush1.msra.mxu0 %v3401
    %3574 = vmatprep.subr.mxu0 %v3398
    %3575 = vmatpush1.msra.mxu0 %v3397
    %3576 = vmatprep.subr.mxu0 %v3394
    %3577 = vmatpush1.msra.mxu0 %v3393
    %3578 = vmatprep.subr.mxu0 %v3390
    %3579 = vmatpush1.msra.mxu0 %v3389
    %3580 = vmatprep.subr.mxu0 %v3386
    %3581 = vmatpush1.msra.mxu0 %v3385
    %3582 = vmatprep.subr.mxu0 %v3382
    %3583 = vmatpush1.msra.mxu0 %v3381
    %3584 = vmatprep.subr.mxu0 %v3378
    %3585 = vmatpush1.msra.mxu0 %v3377
    %3586 = vmatprep.subr.mxu0 %v3374
    %3587 = vmatpush1.msra.mxu0 %v3373
    %3588 = vmatprep.subr.mxu0 %v3370
    %3589 = vmatpush1.msra.mxu0 %v3369
    %3590 = vmatprep.subr.mxu0 %v3366
    %3591 = vmatpush1.msra.mxu0 %v3365
    %3592 = vmatprep.subr.mxu0 %v3362
    %3593 = vmatpush1.msra.mxu0 %v3361
    %3594 = vmatprep.subr.mxu0 %v3358
    %3595 = vmatpush1.msra.mxu0 %v3357
    %3596 = vmatprep.subr.mxu0 %v3354
    %3597 = vmatpush1.msra.mxu0 %v3353
    %3598 = vmatprep.subr.mxu0 %v3350
    %3599 = vmatpush1.msra.mxu0 %v3349
    %3600 = vmatprep.subr.mxu0 %v3474
    %3601 = vmatpush2.msra.mxu0 %v3473
    %3602 = vmatprep.subr.mxu0 %v3470
    %3603 = vmatpush2.msra.mxu0 %v3469
    %3604 = vmatprep.subr.mxu0 %v3466
    %3605 = vmatpush2.msra.mxu0 %v3465
    %3606 = vmatprep.subr.mxu0 %v3462
    %3607 = vmatpush2.msra.mxu0 %v3461
    %3608 = vmatprep.subr.mxu0 %v3458
    %3609 = vmatpush2.msra.mxu0 %v3457
    %3610 = vmatprep.subr.mxu0 %v3454
    %3611 = vmatpush2.msra.mxu0 %v3453
    %3612 = vmatprep.subr.mxu0 %v3450
    %3613 = vmatpush2.msra.mxu0 %v3449
    %3614 = vmatprep.subr.mxu0 %v3446
    %3615 = vmatpush2.msra.mxu0 %v3445
    %3616 = vmatprep.subr.mxu0 %v3442
    %3617 = vmatpush2.msra.mxu0 %v3441
    %3618 = vmatprep.subr.mxu0 %v3438
    %3619 = vmatpush2.msra.mxu0 %v3437
    %3620 = vmatprep.subr.mxu0 %v3434
    %3621 = vmatpush2.msra.mxu0 %v3433
    %3622 = vmatprep.subr.mxu0 %v3430
    %3623 = vmatpush2.msra.mxu0 %v3429
    %3624 = vmatprep.subr.mxu0 %v3426
    %3625 = vmatpush2.msra.mxu0 %v3425
    %3626 = vmatprep.subr.mxu0 %v3422
    %3627 = vmatpush2.msra.mxu0 %v3421
    %3628 = vmatprep.subr.mxu0 %v3418
    %3629 = vmatpush2.msra.mxu0 %v3417
    %3630 = vmatprep.subr.mxu0 %v3414
    %3631 = vmatpush2.msra.mxu0 %v3413
    %3632 = vmatprep.mubr.f32.mxu0 %v3346
    %3633 = vmatmul.mubr.f32.gmra.mxu0 %v3344
    %v3634 = vpop.f32.mrf.mxu0
    %v3635 = vadd.f32 %v3488, %v3634
    %v3636 = vpop.f32.mrf.mxu0
    %v3637 = vadd.f32 %v3492, %v3636
    %3638 = vdwg.mxu0
    %v3639 = vxor.u32 %v3564, 2147483648
    %v3640 = vmul.f32 %v3639, 1.442695
    %v3641 = vpow.pop %v3640
    %v3642 = vadd.f32 %v3641, 1.0
    %v3643 = vrcp.pop %v3642
    %v3644 = vmul.f32 1.0, %v3643
    %v3645 = vxor.u32 %v3566, 2147483648
    %v3646 = vmul.f32 %v3645, 1.442695
    %v3647 = vpow.pop %v3646
    %v3648 = vadd.f32 %v3647, 1.0
    %v3649 = vrcp.pop %v3648
    %v3650 = vmul.f32 1.0, %v3649
    %v3651 = vtanh.pop %v3635
    %v3652 = vxor.u32 %v3637, 2147483648
    %v3653 = vmul.f32 %v3652, 1.442695
    %v3654 = vpow.pop %v3653
    %v3655 = vadd.f32 %v3654, 1.0
    %v3656 = vrcp.pop %v3655
    %v3657 = vmul.f32 1.0, %v3656
    %v3658 = vmul.f32 %v3650, %v3345
    %v3659 = vmul.f32 %v3644, %v3651
    %v3660 = vadd.f32 %v3658, %v3659
    %v3661 = vtanh.pop %v3660
    %v3662 = vmul.f32 %v3657, %v3661
    %3663 = vst [vmem:[#allocation2] sm:$0xff] %v3662
    %3664 = vst [vmem:[#allocation3] sm:$0xff] %v3660
    %v3665 = vld [vmem:[%s444] sm:$0xff]
    %v3666 = vld [vmem:[%s446] sm:$0xff]
    %v3667 = vld [vmem:[#allocation10] sm:$0xff]
    %v3668 = vld [vmem:[#allocation10 + $0x8] sm:$0xff]
    %v3669 = vld [vmem:[#allocation10 + $0x10] sm:$0xff]
    %v3670 = vld [vmem:[#allocation10 + $0x18] sm:$0xff]
    %v3671 = vld [vmem:[#allocation10 + $0x20] sm:$0xff]
    %v3672 = vld [vmem:[#allocation10 + $0x28] sm:$0xff]
    %v3673 = vld [vmem:[#allocation10 + $0x30] sm:$0xff]
    %v3674 = vld [vmem:[#allocation10 + $0x38] sm:$0xff]
    %v3675 = vld [vmem:[#allocation10 + $0x40] sm:$0xff]
    %v3676 = vld [vmem:[#allocation10 + $0x48] sm:$0xff]
    %v3677 = vld [vmem:[#allocation10 + $0x50] sm:$0xff]
    %v3678 = vld [vmem:[#allocation10 + $0x58] sm:$0xff]
    %v3679 = vld [vmem:[#allocation10 + $0x60] sm:$0xff]
    %v3680 = vld [vmem:[#allocation10 + $0x68] sm:$0xff]
    %v3681 = vld [vmem:[#allocation10 + $0x70] sm:$0xff]
    %v3682 = vld [vmem:[#allocation10 + $0x78] sm:$0xff]
    %v3683 = vld [vmem:[#allocation10 + $0x80] sm:$0xff]
    %v3684 = vld [vmem:[#allocation10 + $0x88] sm:$0xff]
    %v3685 = vld [vmem:[#allocation10 + $0x90] sm:$0xff]
    %v3686 = vld [vmem:[#allocation10 + $0x98] sm:$0xff]
    %v3687 = vld [vmem:[#allocation10 + $0xa0] sm:$0xff]
    %v3688 = vld [vmem:[#allocation10 + $0xa8] sm:$0xff]
    %v3689 = vld [vmem:[#allocation10 + $0xb0] sm:$0xff]
    %v3690 = vld [vmem:[#allocation10 + $0xb8] sm:$0xff]
    %v3691 = vld [vmem:[#allocation10 + $0xc0] sm:$0xff]
    %v3692 = vld [vmem:[#allocation10 + $0xc8] sm:$0xff]
    %v3693 = vld [vmem:[#allocation10 + $0xd0] sm:$0xff]
    %v3694 = vld [vmem:[#allocation10 + $0xd8] sm:$0xff]
    %v3695 = vld [vmem:[#allocation10 + $0xe0] sm:$0xff]
    %v3696 = vld [vmem:[#allocation10 + $0xe8] sm:$0xff]
    %v3697 = vld [vmem:[#allocation10 + $0xf0] sm:$0xff]
    %v3698 = vld [vmem:[#allocation10 + $0xf8] sm:$0xff]
    %v3699 = vld [vmem:[#allocation10 + $0x100] sm:$0xff]
    %v3700 = vld [vmem:[#allocation10 + $0x108] sm:$0xff]
    %v3701 = vld [vmem:[#allocation10 + $0x110] sm:$0xff]
    %v3702 = vld [vmem:[#allocation10 + $0x118] sm:$0xff]
    %v3703 = vld [vmem:[#allocation10 + $0x120] sm:$0xff]
    %v3704 = vld [vmem:[#allocation10 + $0x128] sm:$0xff]
    %v3705 = vld [vmem:[#allocation10 + $0x130] sm:$0xff]
    %v3706 = vld [vmem:[#allocation10 + $0x138] sm:$0xff]
    %v3707 = vld [vmem:[#allocation10 + $0x140] sm:$0xff]
    %v3708 = vld [vmem:[#allocation10 + $0x148] sm:$0xff]
    %v3709 = vld [vmem:[#allocation10 + $0x150] sm:$0xff]
    %v3710 = vld [vmem:[#allocation10 + $0x158] sm:$0xff]
    %v3711 = vld [vmem:[#allocation10 + $0x160] sm:$0xff]
    %v3712 = vld [vmem:[#allocation10 + $0x168] sm:$0xff]
    %v3713 = vld [vmem:[#allocation10 + $0x170] sm:$0xff]
    %v3714 = vld [vmem:[#allocation10 + $0x178] sm:$0xff]
    %v3715 = vld [vmem:[#allocation10 + $0x180] sm:$0xff]
    %v3716 = vld [vmem:[#allocation10 + $0x188] sm:$0xff]
    %v3717 = vld [vmem:[#allocation10 + $0x190] sm:$0xff]
    %v3718 = vld [vmem:[#allocation10 + $0x198] sm:$0xff]
    %v3719 = vld [vmem:[#allocation10 + $0x1a0] sm:$0xff]
    %v3720 = vld [vmem:[#allocation10 + $0x1a8] sm:$0xff]
    %v3721 = vld [vmem:[#allocation10 + $0x1b0] sm:$0xff]
    %v3722 = vld [vmem:[#allocation10 + $0x1b8] sm:$0xff]
    %v3723 = vld [vmem:[#allocation10 + $0x1c0] sm:$0xff]
    %v3724 = vld [vmem:[#allocation10 + $0x1c8] sm:$0xff]
    %v3725 = vld [vmem:[#allocation10 + $0x1d0] sm:$0xff]
    %v3726 = vld [vmem:[#allocation10 + $0x1d8] sm:$0xff]
    %v3727 = vld [vmem:[#allocation10 + $0x1e0] sm:$0xff]
    %v3728 = vld [vmem:[#allocation10 + $0x1e8] sm:$0xff]
    %v3729 = vld [vmem:[#allocation10 + $0x1f0] sm:$0xff]
    %v3730 = vld [vmem:[#allocation10 + $0x1f8] sm:$0xff]
    %v3731 = vld [vmem:[#allocation10 + $0x200] sm:$0xff]
    %v3732 = vld [vmem:[#allocation10 + $0x208] sm:$0xff]
    %v3733 = vld [vmem:[#allocation10 + $0x210] sm:$0xff]
    %v3734 = vld [vmem:[#allocation10 + $0x218] sm:$0xff]
    %v3735 = vld [vmem:[#allocation10 + $0x220] sm:$0xff]
    %v3736 = vld [vmem:[#allocation10 + $0x228] sm:$0xff]
    %v3737 = vld [vmem:[#allocation10 + $0x230] sm:$0xff]
    %v3738 = vld [vmem:[#allocation10 + $0x238] sm:$0xff]
    %v3739 = vld [vmem:[#allocation10 + $0x240] sm:$0xff]
    %v3740 = vld [vmem:[#allocation10 + $0x248] sm:$0xff]
    %v3741 = vld [vmem:[#allocation10 + $0x250] sm:$0xff]
    %v3742 = vld [vmem:[#allocation10 + $0x258] sm:$0xff]
    %v3743 = vld [vmem:[#allocation10 + $0x260] sm:$0xff]
    %v3744 = vld [vmem:[#allocation10 + $0x268] sm:$0xff]
    %v3745 = vld [vmem:[#allocation10 + $0x270] sm:$0xff]
    %v3746 = vld [vmem:[#allocation10 + $0x278] sm:$0xff]
    %v3747 = vld [vmem:[#allocation10 + $0x280] sm:$0xff]
    %v3748 = vld [vmem:[#allocation10 + $0x288] sm:$0xff]
    %v3749 = vld [vmem:[#allocation10 + $0x290] sm:$0xff]
    %v3750 = vld [vmem:[#allocation10 + $0x298] sm:$0xff]
    %v3751 = vld [vmem:[#allocation10 + $0x2a0] sm:$0xff]
    %v3752 = vld [vmem:[#allocation10 + $0x2a8] sm:$0xff]
    %v3753 = vld [vmem:[#allocation10 + $0x2b0] sm:$0xff]
    %v3754 = vld [vmem:[#allocation10 + $0x2b8] sm:$0xff]
    %v3755 = vld [vmem:[#allocation10 + $0x2c0] sm:$0xff]
    %v3756 = vld [vmem:[#allocation10 + $0x2c8] sm:$0xff]
    %v3757 = vld [vmem:[#allocation10 + $0x2d0] sm:$0xff]
    %v3758 = vld [vmem:[#allocation10 + $0x2d8] sm:$0xff]
    %v3759 = vld [vmem:[#allocation10 + $0x2e0] sm:$0xff]
    %v3760 = vld [vmem:[#allocation10 + $0x2e8] sm:$0xff]
    %v3761 = vld [vmem:[#allocation10 + $0x2f0] sm:$0xff]
    %v3762 = vld [vmem:[#allocation10 + $0x2f8] sm:$0xff]
    %v3763 = vld [vmem:[#allocation10 + $0x300] sm:$0xff]
    %v3764 = vld [vmem:[#allocation10 + $0x308] sm:$0xff]
    %v3765 = vld [vmem:[#allocation10 + $0x310] sm:$0xff]
    %v3766 = vld [vmem:[#allocation10 + $0x318] sm:$0xff]
    %v3767 = vld [vmem:[#allocation10 + $0x320] sm:$0xff]
    %v3768 = vld [vmem:[#allocation10 + $0x328] sm:$0xff]
    %v3769 = vld [vmem:[#allocation10 + $0x330] sm:$0xff]
    %v3770 = vld [vmem:[#allocation10 + $0x338] sm:$0xff]
    %v3771 = vld [vmem:[#allocation10 + $0x340] sm:$0xff]
    %v3772 = vld [vmem:[#allocation10 + $0x348] sm:$0xff]
    %v3773 = vld [vmem:[#allocation10 + $0x350] sm:$0xff]
    %v3774 = vld [vmem:[#allocation10 + $0x358] sm:$0xff]
    %v3775 = vld [vmem:[#allocation10 + $0x360] sm:$0xff]
    %v3776 = vld [vmem:[#allocation10 + $0x368] sm:$0xff]
    %v3777 = vld [vmem:[#allocation10 + $0x370] sm:$0xff]
    %v3778 = vld [vmem:[#allocation10 + $0x378] sm:$0xff]
    %v3779 = vld [vmem:[#allocation10 + $0x380] sm:$0xff]
    %v3780 = vld [vmem:[#allocation10 + $0x388] sm:$0xff]
    %v3781 = vld [vmem:[#allocation10 + $0x390] sm:$0xff]
    %v3782 = vld [vmem:[#allocation10 + $0x398] sm:$0xff]
    %v3783 = vld [vmem:[#allocation10 + $0x3a0] sm:$0xff]
    %v3784 = vld [vmem:[#allocation10 + $0x3a8] sm:$0xff]
    %v3785 = vld [vmem:[#allocation10 + $0x3b0] sm:$0xff]
    %v3786 = vld [vmem:[#allocation10 + $0x3b8] sm:$0xff]
    %v3787 = vld [vmem:[#allocation10 + $0x3c0] sm:$0xff]
    %v3788 = vld [vmem:[#allocation10 + $0x3c8] sm:$0xff]
    %v3789 = vld [vmem:[#allocation10 + $0x3d0] sm:$0xff]
    %v3790 = vld [vmem:[#allocation10 + $0x3d8] sm:$0xff]
    %v3791 = vld [vmem:[#allocation10 + $0x3e0] sm:$0xff]
    %v3792 = vld [vmem:[#allocation10 + $0x3e8] sm:$0xff]
    %v3793 = vld [vmem:[#allocation10 + $0x3f0] sm:$0xff]
    %v3794 = vld [vmem:[#allocation10 + $0x3f8] sm:$0xff]
    %v3795 = vld [vmem:[%s4] sm:$0xf]
    %v3797 = vlaneseq
    %v3798 = vshrl.u32 %v3797, 7
    %v3799 = vsub.s32 0, %v3798
    %v3800 = vrot.slane %v3795, %v3799
    %v3801 = vlaneseq
    %v3802 = vshrl.u32 %v3801, 7
    %v3803 = vsub.s32 1, %v3802
    %v3804 = vrot.slane %v3795, %v3803
    %v3805 = vlaneseq
    %v3806 = vshrl.u32 %v3805, 7
    %v3807 = vsub.s32 2, %v3806
    %v3808 = vrot.slane %v3795, %v3807
    %v3809 = vlaneseq
    %v3810 = vshrl.u32 %v3809, 7
    %v3811 = vsub.s32 3, %v3810
    %v3812 = vrot.slane %v3795, %v3811
    %3817 = vmatprep.subr.mxu0 %v3728
    %3818 = vmatpush1.msra.mxu0 %v3727
    %3819 = vmatprep.subr.mxu0 %v3724
    %3820 = vmatpush1.msra.mxu0 %v3723
    %3821 = vmatprep.subr.mxu0 %v3720
    %3822 = vmatpush1.msra.mxu0 %v3719
    %3823 = vmatprep.subr.mxu0 %v3716
    %3824 = vmatpush1.msra.mxu0 %v3715
    %3825 = vmatprep.subr.mxu0 %v3712
    %3826 = vmatpush1.msra.mxu0 %v3711
    %3827 = vmatprep.subr.mxu0 %v3708
    %3828 = vmatpush1.msra.mxu0 %v3707
    %3829 = vmatprep.subr.mxu0 %v3704
    %3830 = vmatpush1.msra.mxu0 %v3703
    %3831 = vmatprep.subr.mxu0 %v3700
    %3832 = vmatpush1.msra.mxu0 %v3699
    %3833 = vmatprep.subr.mxu0 %v3696
    %3834 = vmatpush1.msra.mxu0 %v3695
    %3835 = vmatprep.subr.mxu0 %v3692
    %3836 = vmatpush1.msra.mxu0 %v3691
    %3837 = vmatprep.subr.mxu0 %v3688
    %3838 = vmatpush1.msra.mxu0 %v3687
    %3839 = vmatprep.subr.mxu0 %v3684
    %3840 = vmatpush1.msra.mxu0 %v3683
    %3841 = vmatprep.subr.mxu0 %v3680
    %3842 = vmatpush1.msra.mxu0 %v3679
    %3843 = vmatprep.subr.mxu0 %v3676
    %3844 = vmatpush1.msra.mxu0 %v3675
    %3845 = vmatprep.subr.mxu0 %v3672
    %3846 = vmatpush1.msra.mxu0 %v3671
    %3847 = vmatprep.subr.mxu0 %v3668
    %3848 = vmatpush1.msra.mxu0 %v3667
    %3849 = vmatprep.subr.mxu0 %v3792
    %3850 = vmatpush2.msra.mxu0 %v3791
    %3851 = vmatprep.subr.mxu0 %v3788
    %3852 = vmatpush2.msra.mxu0 %v3787
    %3853 = vmatprep.subr.mxu0 %v3784
    %3854 = vmatpush2.msra.mxu0 %v3783
    %3855 = vmatprep.subr.mxu0 %v3780
    %3856 = vmatpush2.msra.mxu0 %v3779
    %3857 = vmatprep.subr.mxu0 %v3776
    %3858 = vmatpush2.msra.mxu0 %v3775
    %3859 = vmatprep.subr.mxu0 %v3772
    %3860 = vmatpush2.msra.mxu0 %v3771
    %3861 = vmatprep.subr.mxu0 %v3768
    %3862 = vmatpush2.msra.mxu0 %v3767
    %3863 = vmatprep.subr.mxu0 %v3764
    %3864 = vmatpush2.msra.mxu0 %v3763
    %3865 = vmatprep.subr.mxu0 %v3760
    %3866 = vmatpush2.msra.mxu0 %v3759
    %3867 = vmatprep.subr.mxu0 %v3756
    %3868 = vmatpush2.msra.mxu0 %v3755
    %3869 = vmatprep.subr.mxu0 %v3752
    %3870 = vmatpush2.msra.mxu0 %v3751
    %3871 = vmatprep.subr.mxu0 %v3748
    %3872 = vmatpush2.msra.mxu0 %v3747
    %3873 = vmatprep.subr.mxu0 %v3744
    %3874 = vmatpush2.msra.mxu0 %v3743
    %3875 = vmatprep.subr.mxu0 %v3740
    %3876 = vmatpush2.msra.mxu0 %v3739
    %3877 = vmatprep.subr.mxu0 %v3736
    %3878 = vmatpush2.msra.mxu0 %v3735
    %3879 = vmatprep.subr.mxu0 %v3732
    %3880 = vmatpush2.msra.mxu0 %v3731
    %3881 = vmatprep.mubr.f32.mxu0 %v3666
    %3882 = vmatmul.mubr.f32.gmra.mxu0 %v3662
    %v3883 = vpop.f32.mrf.mxu0
    %v3884 = vadd.f32 %v3800, %v3883
    %v3885 = vpop.f32.mrf.mxu0
    %v3886 = vadd.f32 %v3804, %v3885
    %3887 = vdwg.mxu0
    %3888 = vmatprep.subr.mxu0 %v3730
    %3889 = vmatpush1.msra.mxu0 %v3729
    %3890 = vmatprep.subr.mxu0 %v3726
    %3891 = vmatpush1.msra.mxu0 %v3725
    %3892 = vmatprep.subr.mxu0 %v3722
    %3893 = vmatpush1.msra.mxu0 %v3721
    %3894 = vmatprep.subr.mxu0 %v3718
    %3895 = vmatpush1.msra.mxu0 %v3717
    %3896 = vmatprep.subr.mxu0 %v3714
    %3897 = vmatpush1.msra.mxu0 %v3713
    %3898 = vmatprep.subr.mxu0 %v3710
    %3899 = vmatpush1.msra.mxu0 %v3709
    %3900 = vmatprep.subr.mxu0 %v3706
    %3901 = vmatpush1.msra.mxu0 %v3705
    %3902 = vmatprep.subr.mxu0 %v3702
    %3903 = vmatpush1.msra.mxu0 %v3701
    %3904 = vmatprep.subr.mxu0 %v3698
    %3905 = vmatpush1.msra.mxu0 %v3697
    %3906 = vmatprep.subr.mxu0 %v3694
    %3907 = vmatpush1.msra.mxu0 %v3693
    %3908 = vmatprep.subr.mxu0 %v3690
    %3909 = vmatpush1.msra.mxu0 %v3689
    %3910 = vmatprep.subr.mxu0 %v3686
    %3911 = vmatpush1.msra.mxu0 %v3685
    %3912 = vmatprep.subr.mxu0 %v3682
    %3913 = vmatpush1.msra.mxu0 %v3681
    %3914 = vmatprep.subr.mxu0 %v3678
    %3915 = vmatpush1.msra.mxu0 %v3677
    %3916 = vmatprep.subr.mxu0 %v3674
    %3917 = vmatpush1.msra.mxu0 %v3673
    %3918 = vmatprep.subr.mxu0 %v3670
    %3919 = vmatpush1.msra.mxu0 %v3669
    %3920 = vmatprep.subr.mxu0 %v3794
    %3921 = vmatpush2.msra.mxu0 %v3793
    %3922 = vmatprep.subr.mxu0 %v3790
    %3923 = vmatpush2.msra.mxu0 %v3789
    %3924 = vmatprep.subr.mxu0 %v3786
    %3925 = vmatpush2.msra.mxu0 %v3785
    %3926 = vmatprep.subr.mxu0 %v3782
    %3927 = vmatpush2.msra.mxu0 %v3781
    %3928 = vmatprep.subr.mxu0 %v3778
    %3929 = vmatpush2.msra.mxu0 %v3777
    %3930 = vmatprep.subr.mxu0 %v3774
    %3931 = vmatpush2.msra.mxu0 %v3773
    %3932 = vmatprep.subr.mxu0 %v3770
    %3933 = vmatpush2.msra.mxu0 %v3769
    %3934 = vmatprep.subr.mxu0 %v3766
    %3935 = vmatpush2.msra.mxu0 %v3765
    %3936 = vmatprep.subr.mxu0 %v3762
    %3937 = vmatpush2.msra.mxu0 %v3761
    %3938 = vmatprep.subr.mxu0 %v3758
    %3939 = vmatpush2.msra.mxu0 %v3757
    %3940 = vmatprep.subr.mxu0 %v3754
    %3941 = vmatpush2.msra.mxu0 %v3753
    %3942 = vmatprep.subr.mxu0 %v3750
    %3943 = vmatpush2.msra.mxu0 %v3749
    %3944 = vmatprep.subr.mxu0 %v3746
    %3945 = vmatpush2.msra.mxu0 %v3745
    %3946 = vmatprep.subr.mxu0 %v3742
    %3947 = vmatpush2.msra.mxu0 %v3741
    %3948 = vmatprep.subr.mxu0 %v3738
    %3949 = vmatpush2.msra.mxu0 %v3737
    %3950 = vmatprep.subr.mxu0 %v3734
    %3951 = vmatpush2.msra.mxu0 %v3733
    %3952 = vmatprep.mubr.f32.mxu0 %v3666
    %3953 = vmatmul.mubr.f32.gmra.mxu0 %v3662
    %v3954 = vpop.f32.mrf.mxu0
    %v3955 = vadd.f32 %v3808, %v3954
    %v3956 = vpop.f32.mrf.mxu0
    %v3957 = vadd.f32 %v3812, %v3956
    %3958 = vdwg.mxu0
    %v3959 = vxor.u32 %v3884, 2147483648
    %v3960 = vmul.f32 %v3959, 1.442695
    %v3961 = vpow.pop %v3960
    %v3962 = vadd.f32 %v3961, 1.0
    %v3963 = vrcp.pop %v3962
    %v3964 = vmul.f32 1.0, %v3963
    %v3965 = vxor.u32 %v3886, 2147483648
    %v3966 = vmul.f32 %v3965, 1.442695
    %v3967 = vpow.pop %v3966
    %v3968 = vadd.f32 %v3967, 1.0
    %v3969 = vrcp.pop %v3968
    %v3970 = vmul.f32 1.0, %v3969
    %v3971 = vtanh.pop %v3955
    %v3972 = vxor.u32 %v3957, 2147483648
    %v3973 = vmul.f32 %v3972, 1.442695
    %v3974 = vpow.pop %v3973
    %v3975 = vadd.f32 %v3974, 1.0
    %v3976 = vrcp.pop %v3975
    %v3977 = vmul.f32 1.0, %v3976
    %v3978 = vmul.f32 %v3970, %v3665
    %v3979 = vmul.f32 %v3964, %v3971
    %v3980 = vadd.f32 %v3978, %v3979
    %v3981 = vtanh.pop %v3980
    %v3982 = vmul.f32 %v3977, %v3981
    %3983 = vst [vmem:[%s446] sm:$0xff] %v3982
    %3984 = vst [vmem:[%s444] sm:$0xff] %v3980
    %s3985 = scalar_lea.vmem [#allocation15], 40
    %3986 = vst [vmem:[%s3985] sm:$0xff] %v3982
    %s3987 = scalar_lea.vmem [#allocation4], 48
    %v3988 = vld [vmem:[%s3987] sm:$0xff]
    %v3989 = vld [vmem:[#allocation3] sm:$0xff]
    %v3990 = vld [vmem:[#allocation2] sm:$0xff]
    %v3991 = vld [vmem:[#allocation7] sm:$0xff]
    %v3992 = vld [vmem:[#allocation7 + $0x8] sm:$0xff]
    %v3993 = vld [vmem:[#allocation7 + $0x10] sm:$0xff]
    %v3994 = vld [vmem:[#allocation7 + $0x18] sm:$0xff]
    %v3995 = vld [vmem:[#allocation7 + $0x20] sm:$0xff]
    %v3996 = vld [vmem:[#allocation7 + $0x28] sm:$0xff]
    %v3997 = vld [vmem:[#allocation7 + $0x30] sm:$0xff]
    %v3998 = vld [vmem:[#allocation7 + $0x38] sm:$0xff]
    %v3999 = vld [vmem:[#allocation7 + $0x40] sm:$0xff]
    %v4000 = vld [vmem:[#allocation7 + $0x48] sm:$0xff]
    %v4001 = vld [vmem:[#allocation7 + $0x50] sm:$0xff]
    %v4002 = vld [vmem:[#allocation7 + $0x58] sm:$0xff]
    %v4003 = vld [vmem:[#allocation7 + $0x60] sm:$0xff]
    %v4004 = vld [vmem:[#allocation7 + $0x68] sm:$0xff]
    %v4005 = vld [vmem:[#allocation7 + $0x70] sm:$0xff]
    %v4006 = vld [vmem:[#allocation7 + $0x78] sm:$0xff]
    %v4007 = vld [vmem:[#allocation7 + $0x80] sm:$0xff]
    %v4008 = vld [vmem:[#allocation7 + $0x88] sm:$0xff]
    %v4009 = vld [vmem:[#allocation7 + $0x90] sm:$0xff]
    %v4010 = vld [vmem:[#allocation7 + $0x98] sm:$0xff]
    %v4011 = vld [vmem:[#allocation7 + $0xa0] sm:$0xff]
    %v4012 = vld [vmem:[#allocation7 + $0xa8] sm:$0xff]
    %v4013 = vld [vmem:[#allocation7 + $0xb0] sm:$0xff]
    %v4014 = vld [vmem:[#allocation7 + $0xb8] sm:$0xff]
    %v4015 = vld [vmem:[#allocation7 + $0xc0] sm:$0xff]
    %v4016 = vld [vmem:[#allocation7 + $0xc8] sm:$0xff]
    %v4017 = vld [vmem:[#allocation7 + $0xd0] sm:$0xff]
    %v4018 = vld [vmem:[#allocation7 + $0xd8] sm:$0xff]
    %v4019 = vld [vmem:[#allocation7 + $0xe0] sm:$0xff]
    %v4020 = vld [vmem:[#allocation7 + $0xe8] sm:$0xff]
    %v4021 = vld [vmem:[#allocation7 + $0xf0] sm:$0xff]
    %v4022 = vld [vmem:[#allocation7 + $0xf8] sm:$0xff]
    %v4023 = vld [vmem:[#allocation7 + $0x100] sm:$0xff]
    %v4024 = vld [vmem:[#allocation7 + $0x108] sm:$0xff]
    %v4025 = vld [vmem:[#allocation7 + $0x110] sm:$0xff]
    %v4026 = vld [vmem:[#allocation7 + $0x118] sm:$0xff]
    %v4027 = vld [vmem:[#allocation7 + $0x120] sm:$0xff]
    %v4028 = vld [vmem:[#allocation7 + $0x128] sm:$0xff]
    %v4029 = vld [vmem:[#allocation7 + $0x130] sm:$0xff]
    %v4030 = vld [vmem:[#allocation7 + $0x138] sm:$0xff]
    %v4031 = vld [vmem:[#allocation7 + $0x140] sm:$0xff]
    %v4032 = vld [vmem:[#allocation7 + $0x148] sm:$0xff]
    %v4033 = vld [vmem:[#allocation7 + $0x150] sm:$0xff]
    %v4034 = vld [vmem:[#allocation7 + $0x158] sm:$0xff]
    %v4035 = vld [vmem:[#allocation7 + $0x160] sm:$0xff]
    %v4036 = vld [vmem:[#allocation7 + $0x168] sm:$0xff]
    %v4037 = vld [vmem:[#allocation7 + $0x170] sm:$0xff]
    %v4038 = vld [vmem:[#allocation7 + $0x178] sm:$0xff]
    %v4039 = vld [vmem:[#allocation7 + $0x180] sm:$0xff]
    %v4040 = vld [vmem:[#allocation7 + $0x188] sm:$0xff]
    %v4041 = vld [vmem:[#allocation7 + $0x190] sm:$0xff]
    %v4042 = vld [vmem:[#allocation7 + $0x198] sm:$0xff]
    %v4043 = vld [vmem:[#allocation7 + $0x1a0] sm:$0xff]
    %v4044 = vld [vmem:[#allocation7 + $0x1a8] sm:$0xff]
    %v4045 = vld [vmem:[#allocation7 + $0x1b0] sm:$0xff]
    %v4046 = vld [vmem:[#allocation7 + $0x1b8] sm:$0xff]
    %v4047 = vld [vmem:[#allocation7 + $0x1c0] sm:$0xff]
    %v4048 = vld [vmem:[#allocation7 + $0x1c8] sm:$0xff]
    %v4049 = vld [vmem:[#allocation7 + $0x1d0] sm:$0xff]
    %v4050 = vld [vmem:[#allocation7 + $0x1d8] sm:$0xff]
    %v4051 = vld [vmem:[#allocation7 + $0x1e0] sm:$0xff]
    %v4052 = vld [vmem:[#allocation7 + $0x1e8] sm:$0xff]
    %v4053 = vld [vmem:[#allocation7 + $0x1f0] sm:$0xff]
    %v4054 = vld [vmem:[#allocation7 + $0x1f8] sm:$0xff]
    %v4055 = vld [vmem:[#allocation7 + $0x200] sm:$0xff]
    %v4056 = vld [vmem:[#allocation7 + $0x208] sm:$0xff]
    %v4057 = vld [vmem:[#allocation7 + $0x210] sm:$0xff]
    %v4058 = vld [vmem:[#allocation7 + $0x218] sm:$0xff]
    %v4059 = vld [vmem:[#allocation7 + $0x220] sm:$0xff]
    %v4060 = vld [vmem:[#allocation7 + $0x228] sm:$0xff]
    %v4061 = vld [vmem:[#allocation7 + $0x230] sm:$0xff]
    %v4062 = vld [vmem:[#allocation7 + $0x238] sm:$0xff]
    %v4063 = vld [vmem:[#allocation7 + $0x240] sm:$0xff]
    %v4064 = vld [vmem:[#allocation7 + $0x248] sm:$0xff]
    %v4065 = vld [vmem:[#allocation7 + $0x250] sm:$0xff]
    %v4066 = vld [vmem:[#allocation7 + $0x258] sm:$0xff]
    %v4067 = vld [vmem:[#allocation7 + $0x260] sm:$0xff]
    %v4068 = vld [vmem:[#allocation7 + $0x268] sm:$0xff]
    %v4069 = vld [vmem:[#allocation7 + $0x270] sm:$0xff]
    %v4070 = vld [vmem:[#allocation7 + $0x278] sm:$0xff]
    %v4071 = vld [vmem:[#allocation7 + $0x280] sm:$0xff]
    %v4072 = vld [vmem:[#allocation7 + $0x288] sm:$0xff]
    %v4073 = vld [vmem:[#allocation7 + $0x290] sm:$0xff]
    %v4074 = vld [vmem:[#allocation7 + $0x298] sm:$0xff]
    %v4075 = vld [vmem:[#allocation7 + $0x2a0] sm:$0xff]
    %v4076 = vld [vmem:[#allocation7 + $0x2a8] sm:$0xff]
    %v4077 = vld [vmem:[#allocation7 + $0x2b0] sm:$0xff]
    %v4078 = vld [vmem:[#allocation7 + $0x2b8] sm:$0xff]
    %v4079 = vld [vmem:[#allocation7 + $0x2c0] sm:$0xff]
    %v4080 = vld [vmem:[#allocation7 + $0x2c8] sm:$0xff]
    %v4081 = vld [vmem:[#allocation7 + $0x2d0] sm:$0xff]
    %v4082 = vld [vmem:[#allocation7 + $0x2d8] sm:$0xff]
    %v4083 = vld [vmem:[#allocation7 + $0x2e0] sm:$0xff]
    %v4084 = vld [vmem:[#allocation7 + $0x2e8] sm:$0xff]
    %v4085 = vld [vmem:[#allocation7 + $0x2f0] sm:$0xff]
    %v4086 = vld [vmem:[#allocation7 + $0x2f8] sm:$0xff]
    %v4087 = vld [vmem:[#allocation7 + $0x300] sm:$0xff]
    %v4088 = vld [vmem:[#allocation7 + $0x308] sm:$0xff]
    %v4089 = vld [vmem:[#allocation7 + $0x310] sm:$0xff]
    %v4090 = vld [vmem:[#allocation7 + $0x318] sm:$0xff]
    %v4091 = vld [vmem:[#allocation7 + $0x320] sm:$0xff]
    %v4092 = vld [vmem:[#allocation7 + $0x328] sm:$0xff]
    %v4093 = vld [vmem:[#allocation7 + $0x330] sm:$0xff]
    %v4094 = vld [vmem:[#allocation7 + $0x338] sm:$0xff]
    %v4095 = vld [vmem:[#allocation7 + $0x340] sm:$0xff]
    %v4096 = vld [vmem:[#allocation7 + $0x348] sm:$0xff]
    %v4097 = vld [vmem:[#allocation7 + $0x350] sm:$0xff]
    %v4098 = vld [vmem:[#allocation7 + $0x358] sm:$0xff]
    %v4099 = vld [vmem:[#allocation7 + $0x360] sm:$0xff]
    %v4100 = vld [vmem:[#allocation7 + $0x368] sm:$0xff]
    %v4101 = vld [vmem:[#allocation7 + $0x370] sm:$0xff]
    %v4102 = vld [vmem:[#allocation7 + $0x378] sm:$0xff]
    %v4103 = vld [vmem:[#allocation7 + $0x380] sm:$0xff]
    %v4104 = vld [vmem:[#allocation7 + $0x388] sm:$0xff]
    %v4105 = vld [vmem:[#allocation7 + $0x390] sm:$0xff]
    %v4106 = vld [vmem:[#allocation7 + $0x398] sm:$0xff]
    %v4107 = vld [vmem:[#allocation7 + $0x3a0] sm:$0xff]
    %v4108 = vld [vmem:[#allocation7 + $0x3a8] sm:$0xff]
    %v4109 = vld [vmem:[#allocation7 + $0x3b0] sm:$0xff]
    %v4110 = vld [vmem:[#allocation7 + $0x3b8] sm:$0xff]
    %v4111 = vld [vmem:[#allocation7 + $0x3c0] sm:$0xff]
    %v4112 = vld [vmem:[#allocation7 + $0x3c8] sm:$0xff]
    %v4113 = vld [vmem:[#allocation7 + $0x3d0] sm:$0xff]
    %v4114 = vld [vmem:[#allocation7 + $0x3d8] sm:$0xff]
    %v4115 = vld [vmem:[#allocation7 + $0x3e0] sm:$0xff]
    %v4116 = vld [vmem:[#allocation7 + $0x3e8] sm:$0xff]
    %v4117 = vld [vmem:[#allocation7 + $0x3f0] sm:$0xff]
    %v4118 = vld [vmem:[#allocation7 + $0x3f8] sm:$0xff]
    %v4119 = vld [vmem:[#allocation9] sm:$0xf]
    %v4121 = vlaneseq
    %v4122 = vshrl.u32 %v4121, 7
    %v4123 = vsub.s32 0, %v4122
    %v4124 = vrot.slane %v4119, %v4123
    %v4125 = vlaneseq
    %v4126 = vshrl.u32 %v4125, 7
    %v4127 = vsub.s32 1, %v4126
    %v4128 = vrot.slane %v4119, %v4127
    %v4129 = vlaneseq
    %v4130 = vshrl.u32 %v4129, 7
    %v4131 = vsub.s32 2, %v4130
    %v4132 = vrot.slane %v4119, %v4131
    %v4133 = vlaneseq
    %v4134 = vshrl.u32 %v4133, 7
    %v4135 = vsub.s32 3, %v4134
    %v4136 = vrot.slane %v4119, %v4135
    %4141 = vmatprep.subr.mxu0 %v4052
    %4142 = vmatpush1.msra.mxu0 %v4051
    %4143 = vmatprep.subr.mxu0 %v4048
    %4144 = vmatpush1.msra.mxu0 %v4047
    %4145 = vmatprep.subr.mxu0 %v4044
    %4146 = vmatpush1.msra.mxu0 %v4043
    %4147 = vmatprep.subr.mxu0 %v4040
    %4148 = vmatpush1.msra.mxu0 %v4039
    %4149 = vmatprep.subr.mxu0 %v4036
    %4150 = vmatpush1.msra.mxu0 %v4035
    %4151 = vmatprep.subr.mxu0 %v4032
    %4152 = vmatpush1.msra.mxu0 %v4031
    %4153 = vmatprep.subr.mxu0 %v4028
    %4154 = vmatpush1.msra.mxu0 %v4027
    %4155 = vmatprep.subr.mxu0 %v4024
    %4156 = vmatpush1.msra.mxu0 %v4023
    %4157 = vmatprep.subr.mxu0 %v4020
    %4158 = vmatpush1.msra.mxu0 %v4019
    %4159 = vmatprep.subr.mxu0 %v4016
    %4160 = vmatpush1.msra.mxu0 %v4015
    %4161 = vmatprep.subr.mxu0 %v4012
    %4162 = vmatpush1.msra.mxu0 %v4011
    %4163 = vmatprep.subr.mxu0 %v4008
    %4164 = vmatpush1.msra.mxu0 %v4007
    %4165 = vmatprep.subr.mxu0 %v4004
    %4166 = vmatpush1.msra.mxu0 %v4003
    %4167 = vmatprep.subr.mxu0 %v4000
    %4168 = vmatpush1.msra.mxu0 %v3999
    %4169 = vmatprep.subr.mxu0 %v3996
    %4170 = vmatpush1.msra.mxu0 %v3995
    %4171 = vmatprep.subr.mxu0 %v3992
    %4172 = vmatpush1.msra.mxu0 %v3991
    %4173 = vmatprep.subr.mxu0 %v4116
    %4174 = vmatpush2.msra.mxu0 %v4115
    %4175 = vmatprep.subr.mxu0 %v4112
    %4176 = vmatpush2.msra.mxu0 %v4111
    %4177 = vmatprep.subr.mxu0 %v4108
    %4178 = vmatpush2.msra.mxu0 %v4107
    %4179 = vmatprep.subr.mxu0 %v4104
    %4180 = vmatpush2.msra.mxu0 %v4103
    %4181 = vmatprep.subr.mxu0 %v4100
    %4182 = vmatpush2.msra.mxu0 %v4099
    %4183 = vmatprep.subr.mxu0 %v4096
    %4184 = vmatpush2.msra.mxu0 %v4095
    %4185 = vmatprep.subr.mxu0 %v4092
    %4186 = vmatpush2.msra.mxu0 %v4091
    %4187 = vmatprep.subr.mxu0 %v4088
    %4188 = vmatpush2.msra.mxu0 %v4087
    %4189 = vmatprep.subr.mxu0 %v4084
    %4190 = vmatpush2.msra.mxu0 %v4083
    %4191 = vmatprep.subr.mxu0 %v4080
    %4192 = vmatpush2.msra.mxu0 %v4079
    %4193 = vmatprep.subr.mxu0 %v4076
    %4194 = vmatpush2.msra.mxu0 %v4075
    %4195 = vmatprep.subr.mxu0 %v4072
    %4196 = vmatpush2.msra.mxu0 %v4071
    %4197 = vmatprep.subr.mxu0 %v4068
    %4198 = vmatpush2.msra.mxu0 %v4067
    %4199 = vmatprep.subr.mxu0 %v4064
    %4200 = vmatpush2.msra.mxu0 %v4063
    %4201 = vmatprep.subr.mxu0 %v4060
    %4202 = vmatpush2.msra.mxu0 %v4059
    %4203 = vmatprep.subr.mxu0 %v4056
    %4204 = vmatpush2.msra.mxu0 %v4055
    %4205 = vmatprep.mubr.f32.mxu0 %v3990
    %4206 = vmatmul.mubr.f32.gmra.mxu0 %v3988
    %v4207 = vpop.f32.mrf.mxu0
    %v4208 = vadd.f32 %v4124, %v4207
    %v4209 = vpop.f32.mrf.mxu0
    %v4210 = vadd.f32 %v4128, %v4209
    %4211 = vdwg.mxu0
    %4212 = vmatprep.subr.mxu0 %v4054
    %4213 = vmatpush1.msra.mxu0 %v4053
    %4214 = vmatprep.subr.mxu0 %v4050
    %4215 = vmatpush1.msra.mxu0 %v4049
    %4216 = vmatprep.subr.mxu0 %v4046
    %4217 = vmatpush1.msra.mxu0 %v4045
    %4218 = vmatprep.subr.mxu0 %v4042
    %4219 = vmatpush1.msra.mxu0 %v4041
    %4220 = vmatprep.subr.mxu0 %v4038
    %4221 = vmatpush1.msra.mxu0 %v4037
    %4222 = vmatprep.subr.mxu0 %v4034
    %4223 = vmatpush1.msra.mxu0 %v4033
    %4224 = vmatprep.subr.mxu0 %v4030
    %4225 = vmatpush1.msra.mxu0 %v4029
    %4226 = vmatprep.subr.mxu0 %v4026
    %4227 = vmatpush1.msra.mxu0 %v4025
    %4228 = vmatprep.subr.mxu0 %v4022
    %4229 = vmatpush1.msra.mxu0 %v4021
    %4230 = vmatprep.subr.mxu0 %v4018
    %4231 = vmatpush1.msra.mxu0 %v4017
    %4232 = vmatprep.subr.mxu0 %v4014
    %4233 = vmatpush1.msra.mxu0 %v4013
    %4234 = vmatprep.subr.mxu0 %v4010
    %4235 = vmatpush1.msra.mxu0 %v4009
    %4236 = vmatprep.subr.mxu0 %v4006
    %4237 = vmatpush1.msra.mxu0 %v4005
    %4238 = vmatprep.subr.mxu0 %v4002
    %4239 = vmatpush1.msra.mxu0 %v4001
    %4240 = vmatprep.subr.mxu0 %v3998
    %4241 = vmatpush1.msra.mxu0 %v3997
    %4242 = vmatprep.subr.mxu0 %v3994
    %4243 = vmatpush1.msra.mxu0 %v3993
    %4244 = vmatprep.subr.mxu0 %v4118
    %4245 = vmatpush2.msra.mxu0 %v4117
    %4246 = vmatprep.subr.mxu0 %v4114
    %4247 = vmatpush2.msra.mxu0 %v4113
    %4248 = vmatprep.subr.mxu0 %v4110
    %4249 = vmatpush2.msra.mxu0 %v4109
    %4250 = vmatprep.subr.mxu0 %v4106
    %4251 = vmatpush2.msra.mxu0 %v4105
    %4252 = vmatprep.subr.mxu0 %v4102
    %4253 = vmatpush2.msra.mxu0 %v4101
    %4254 = vmatprep.subr.mxu0 %v4098
    %4255 = vmatpush2.msra.mxu0 %v4097
    %4256 = vmatprep.subr.mxu0 %v4094
    %4257 = vmatpush2.msra.mxu0 %v4093
    %4258 = vmatprep.subr.mxu0 %v4090
    %4259 = vmatpush2.msra.mxu0 %v4089
    %4260 = vmatprep.subr.mxu0 %v4086
    %4261 = vmatpush2.msra.mxu0 %v4085
    %4262 = vmatprep.subr.mxu0 %v4082
    %4263 = vmatpush2.msra.mxu0 %v4081
    %4264 = vmatprep.subr.mxu0 %v4078
    %4265 = vmatpush2.msra.mxu0 %v4077
    %4266 = vmatprep.subr.mxu0 %v4074
    %4267 = vmatpush2.msra.mxu0 %v4073
    %4268 = vmatprep.subr.mxu0 %v4070
    %4269 = vmatpush2.msra.mxu0 %v4069
    %4270 = vmatprep.subr.mxu0 %v4066
    %4271 = vmatpush2.msra.mxu0 %v4065
    %4272 = vmatprep.subr.mxu0 %v4062
    %4273 = vmatpush2.msra.mxu0 %v4061
    %4274 = vmatprep.subr.mxu0 %v4058
    %4275 = vmatpush2.msra.mxu0 %v4057
    %4276 = vmatprep.mubr.f32.mxu0 %v3990
    %4277 = vmatmul.mubr.f32.gmra.mxu0 %v3988
    %v4278 = vpop.f32.mrf.mxu0
    %v4279 = vadd.f32 %v4132, %v4278
    %v4280 = vpop.f32.mrf.mxu0
    %v4281 = vadd.f32 %v4136, %v4280
    %4282 = vdwg.mxu0
    %v4283 = vxor.u32 %v4208, 2147483648
    %v4284 = vmul.f32 %v4283, 1.442695
    %v4285 = vpow.pop %v4284
    %v4286 = vadd.f32 %v4285, 1.0
    %v4287 = vrcp.pop %v4286
    %v4288 = vmul.f32 1.0, %v4287
    %v4289 = vxor.u32 %v4210, 2147483648
    %v4290 = vmul.f32 %v4289, 1.442695
    %v4291 = vpow.pop %v4290
    %v4292 = vadd.f32 %v4291, 1.0
    %v4293 = vrcp.pop %v4292
    %v4294 = vmul.f32 1.0, %v4293
    %v4295 = vtanh.pop %v4279
    %v4296 = vxor.u32 %v4281, 2147483648
    %v4297 = vmul.f32 %v4296, 1.442695
    %v4298 = vpow.pop %v4297
    %v4299 = vadd.f32 %v4298, 1.0
    %v4300 = vrcp.pop %v4299
    %v4301 = vmul.f32 1.0, %v4300
    %v4302 = vmul.f32 %v4294, %v3989
    %v4303 = vmul.f32 %v4288, %v4295
    %v4304 = vadd.f32 %v4302, %v4303
    %v4305 = vtanh.pop %v4304
    %v4306 = vmul.f32 %v4301, %v4305
    %4307 = vst [vmem:[#allocation2] sm:$0xff] %v4306
    %4308 = vst [vmem:[#allocation3] sm:$0xff] %v4304
    %v4309 = vld [vmem:[%s444] sm:$0xff]
    %v4310 = vld [vmem:[%s446] sm:$0xff]
    %v4311 = vld [vmem:[#allocation10] sm:$0xff]
    %v4312 = vld [vmem:[#allocation10 + $0x8] sm:$0xff]
    %v4313 = vld [vmem:[#allocation10 + $0x10] sm:$0xff]
    %v4314 = vld [vmem:[#allocation10 + $0x18] sm:$0xff]
    %v4315 = vld [vmem:[#allocation10 + $0x20] sm:$0xff]
    %v4316 = vld [vmem:[#allocation10 + $0x28] sm:$0xff]
    %v4317 = vld [vmem:[#allocation10 + $0x30] sm:$0xff]
    %v4318 = vld [vmem:[#allocation10 + $0x38] sm:$0xff]
    %v4319 = vld [vmem:[#allocation10 + $0x40] sm:$0xff]
    %v4320 = vld [vmem:[#allocation10 + $0x48] sm:$0xff]
    %v4321 = vld [vmem:[#allocation10 + $0x50] sm:$0xff]
    %v4322 = vld [vmem:[#allocation10 + $0x58] sm:$0xff]
    %v4323 = vld [vmem:[#allocation10 + $0x60] sm:$0xff]
    %v4324 = vld [vmem:[#allocation10 + $0x68] sm:$0xff]
    %v4325 = vld [vmem:[#allocation10 + $0x70] sm:$0xff]
    %v4326 = vld [vmem:[#allocation10 + $0x78] sm:$0xff]
    %v4327 = vld [vmem:[#allocation10 + $0x80] sm:$0xff]
    %v4328 = vld [vmem:[#allocation10 + $0x88] sm:$0xff]
    %v4329 = vld [vmem:[#allocation10 + $0x90] sm:$0xff]
    %v4330 = vld [vmem:[#allocation10 + $0x98] sm:$0xff]
    %v4331 = vld [vmem:[#allocation10 + $0xa0] sm:$0xff]
    %v4332 = vld [vmem:[#allocation10 + $0xa8] sm:$0xff]
    %v4333 = vld [vmem:[#allocation10 + $0xb0] sm:$0xff]
    %v4334 = vld [vmem:[#allocation10 + $0xb8] sm:$0xff]
    %v4335 = vld [vmem:[#allocation10 + $0xc0] sm:$0xff]
    %v4336 = vld [vmem:[#allocation10 + $0xc8] sm:$0xff]
    %v4337 = vld [vmem:[#allocation10 + $0xd0] sm:$0xff]
    %v4338 = vld [vmem:[#allocation10 + $0xd8] sm:$0xff]
    %v4339 = vld [vmem:[#allocation10 + $0xe0] sm:$0xff]
    %v4340 = vld [vmem:[#allocation10 + $0xe8] sm:$0xff]
    %v4341 = vld [vmem:[#allocation10 + $0xf0] sm:$0xff]
    %v4342 = vld [vmem:[#allocation10 + $0xf8] sm:$0xff]
    %v4343 = vld [vmem:[#allocation10 + $0x100] sm:$0xff]
    %v4344 = vld [vmem:[#allocation10 + $0x108] sm:$0xff]
    %v4345 = vld [vmem:[#allocation10 + $0x110] sm:$0xff]
    %v4346 = vld [vmem:[#allocation10 + $0x118] sm:$0xff]
    %v4347 = vld [vmem:[#allocation10 + $0x120] sm:$0xff]
    %v4348 = vld [vmem:[#allocation10 + $0x128] sm:$0xff]
    %v4349 = vld [vmem:[#allocation10 + $0x130] sm:$0xff]
    %v4350 = vld [vmem:[#allocation10 + $0x138] sm:$0xff]
    %v4351 = vld [vmem:[#allocation10 + $0x140] sm:$0xff]
    %v4352 = vld [vmem:[#allocation10 + $0x148] sm:$0xff]
    %v4353 = vld [vmem:[#allocation10 + $0x150] sm:$0xff]
    %v4354 = vld [vmem:[#allocation10 + $0x158] sm:$0xff]
    %v4355 = vld [vmem:[#allocation10 + $0x160] sm:$0xff]
    %v4356 = vld [vmem:[#allocation10 + $0x168] sm:$0xff]
    %v4357 = vld [vmem:[#allocation10 + $0x170] sm:$0xff]
    %v4358 = vld [vmem:[#allocation10 + $0x178] sm:$0xff]
    %v4359 = vld [vmem:[#allocation10 + $0x180] sm:$0xff]
    %v4360 = vld [vmem:[#allocation10 + $0x188] sm:$0xff]
    %v4361 = vld [vmem:[#allocation10 + $0x190] sm:$0xff]
    %v4362 = vld [vmem:[#allocation10 + $0x198] sm:$0xff]
    %v4363 = vld [vmem:[#allocation10 + $0x1a0] sm:$0xff]
    %v4364 = vld [vmem:[#allocation10 + $0x1a8] sm:$0xff]
    %v4365 = vld [vmem:[#allocation10 + $0x1b0] sm:$0xff]
    %v4366 = vld [vmem:[#allocation10 + $0x1b8] sm:$0xff]
    %v4367 = vld [vmem:[#allocation10 + $0x1c0] sm:$0xff]
    %v4368 = vld [vmem:[#allocation10 + $0x1c8] sm:$0xff]
    %v4369 = vld [vmem:[#allocation10 + $0x1d0] sm:$0xff]
    %v4370 = vld [vmem:[#allocation10 + $0x1d8] sm:$0xff]
    %v4371 = vld [vmem:[#allocation10 + $0x1e0] sm:$0xff]
    %v4372 = vld [vmem:[#allocation10 + $0x1e8] sm:$0xff]
    %v4373 = vld [vmem:[#allocation10 + $0x1f0] sm:$0xff]
    %v4374 = vld [vmem:[#allocation10 + $0x1f8] sm:$0xff]
    %v4375 = vld [vmem:[#allocation10 + $0x200] sm:$0xff]
    %v4376 = vld [vmem:[#allocation10 + $0x208] sm:$0xff]
    %v4377 = vld [vmem:[#allocation10 + $0x210] sm:$0xff]
    %v4378 = vld [vmem:[#allocation10 + $0x218] sm:$0xff]
    %v4379 = vld [vmem:[#allocation10 + $0x220] sm:$0xff]
    %v4380 = vld [vmem:[#allocation10 + $0x228] sm:$0xff]
    %v4381 = vld [vmem:[#allocation10 + $0x230] sm:$0xff]
    %v4382 = vld [vmem:[#allocation10 + $0x238] sm:$0xff]
    %v4383 = vld [vmem:[#allocation10 + $0x240] sm:$0xff]
    %v4384 = vld [vmem:[#allocation10 + $0x248] sm:$0xff]
    %v4385 = vld [vmem:[#allocation10 + $0x250] sm:$0xff]
    %v4386 = vld [vmem:[#allocation10 + $0x258] sm:$0xff]
    %v4387 = vld [vmem:[#allocation10 + $0x260] sm:$0xff]
    %v4388 = vld [vmem:[#allocation10 + $0x268] sm:$0xff]
    %v4389 = vld [vmem:[#allocation10 + $0x270] sm:$0xff]
    %v4390 = vld [vmem:[#allocation10 + $0x278] sm:$0xff]
    %v4391 = vld [vmem:[#allocation10 + $0x280] sm:$0xff]
    %v4392 = vld [vmem:[#allocation10 + $0x288] sm:$0xff]
    %v4393 = vld [vmem:[#allocation10 + $0x290] sm:$0xff]
    %v4394 = vld [vmem:[#allocation10 + $0x298] sm:$0xff]
    %v4395 = vld [vmem:[#allocation10 + $0x2a0] sm:$0xff]
    %v4396 = vld [vmem:[#allocation10 + $0x2a8] sm:$0xff]
    %v4397 = vld [vmem:[#allocation10 + $0x2b0] sm:$0xff]
    %v4398 = vld [vmem:[#allocation10 + $0x2b8] sm:$0xff]
    %v4399 = vld [vmem:[#allocation10 + $0x2c0] sm:$0xff]
    %v4400 = vld [vmem:[#allocation10 + $0x2c8] sm:$0xff]
    %v4401 = vld [vmem:[#allocation10 + $0x2d0] sm:$0xff]
    %v4402 = vld [vmem:[#allocation10 + $0x2d8] sm:$0xff]
    %v4403 = vld [vmem:[#allocation10 + $0x2e0] sm:$0xff]
    %v4404 = vld [vmem:[#allocation10 + $0x2e8] sm:$0xff]
    %v4405 = vld [vmem:[#allocation10 + $0x2f0] sm:$0xff]
    %v4406 = vld [vmem:[#allocation10 + $0x2f8] sm:$0xff]
    %v4407 = vld [vmem:[#allocation10 + $0x300] sm:$0xff]
    %v4408 = vld [vmem:[#allocation10 + $0x308] sm:$0xff]
    %v4409 = vld [vmem:[#allocation10 + $0x310] sm:$0xff]
    %v4410 = vld [vmem:[#allocation10 + $0x318] sm:$0xff]
    %v4411 = vld [vmem:[#allocation10 + $0x320] sm:$0xff]
    %v4412 = vld [vmem:[#allocation10 + $0x328] sm:$0xff]
    %v4413 = vld [vmem:[#allocation10 + $0x330] sm:$0xff]
    %v4414 = vld [vmem:[#allocation10 + $0x338] sm:$0xff]
    %v4415 = vld [vmem:[#allocation10 + $0x340] sm:$0xff]
    %v4416 = vld [vmem:[#allocation10 + $0x348] sm:$0xff]
    %v4417 = vld [vmem:[#allocation10 + $0x350] sm:$0xff]
    %v4418 = vld [vmem:[#allocation10 + $0x358] sm:$0xff]
    %v4419 = vld [vmem:[#allocation10 + $0x360] sm:$0xff]
    %v4420 = vld [vmem:[#allocation10 + $0x368] sm:$0xff]
    %v4421 = vld [vmem:[#allocation10 + $0x370] sm:$0xff]
    %v4422 = vld [vmem:[#allocation10 + $0x378] sm:$0xff]
    %v4423 = vld [vmem:[#allocation10 + $0x380] sm:$0xff]
    %v4424 = vld [vmem:[#allocation10 + $0x388] sm:$0xff]
    %v4425 = vld [vmem:[#allocation10 + $0x390] sm:$0xff]
    %v4426 = vld [vmem:[#allocation10 + $0x398] sm:$0xff]
    %v4427 = vld [vmem:[#allocation10 + $0x3a0] sm:$0xff]
    %v4428 = vld [vmem:[#allocation10 + $0x3a8] sm:$0xff]
    %v4429 = vld [vmem:[#allocation10 + $0x3b0] sm:$0xff]
    %v4430 = vld [vmem:[#allocation10 + $0x3b8] sm:$0xff]
    %v4431 = vld [vmem:[#allocation10 + $0x3c0] sm:$0xff]
    %v4432 = vld [vmem:[#allocation10 + $0x3c8] sm:$0xff]
    %v4433 = vld [vmem:[#allocation10 + $0x3d0] sm:$0xff]
    %v4434 = vld [vmem:[#allocation10 + $0x3d8] sm:$0xff]
    %v4435 = vld [vmem:[#allocation10 + $0x3e0] sm:$0xff]
    %v4436 = vld [vmem:[#allocation10 + $0x3e8] sm:$0xff]
    %v4437 = vld [vmem:[#allocation10 + $0x3f0] sm:$0xff]
    %v4438 = vld [vmem:[#allocation10 + $0x3f8] sm:$0xff]
    %v4439 = vld [vmem:[%s4] sm:$0xf]
    %v4441 = vlaneseq
    %v4442 = vshrl.u32 %v4441, 7
    %v4443 = vsub.s32 0, %v4442
    %v4444 = vrot.slane %v4439, %v4443
    %v4445 = vlaneseq
    %v4446 = vshrl.u32 %v4445, 7
    %v4447 = vsub.s32 1, %v4446
    %v4448 = vrot.slane %v4439, %v4447
    %v4449 = vlaneseq
    %v4450 = vshrl.u32 %v4449, 7
    %v4451 = vsub.s32 2, %v4450
    %v4452 = vrot.slane %v4439, %v4451
    %v4453 = vlaneseq
    %v4454 = vshrl.u32 %v4453, 7
    %v4455 = vsub.s32 3, %v4454
    %v4456 = vrot.slane %v4439, %v4455
    %4461 = vmatprep.subr.mxu0 %v4372
    %4462 = vmatpush1.msra.mxu0 %v4371
    %4463 = vmatprep.subr.mxu0 %v4368
    %4464 = vmatpush1.msra.mxu0 %v4367
    %4465 = vmatprep.subr.mxu0 %v4364
    %4466 = vmatpush1.msra.mxu0 %v4363
    %4467 = vmatprep.subr.mxu0 %v4360
    %4468 = vmatpush1.msra.mxu0 %v4359
    %4469 = vmatprep.subr.mxu0 %v4356
    %4470 = vmatpush1.msra.mxu0 %v4355
    %4471 = vmatprep.subr.mxu0 %v4352
    %4472 = vmatpush1.msra.mxu0 %v4351
    %4473 = vmatprep.subr.mxu0 %v4348
    %4474 = vmatpush1.msra.mxu0 %v4347
    %4475 = vmatprep.subr.mxu0 %v4344
    %4476 = vmatpush1.msra.mxu0 %v4343
    %4477 = vmatprep.subr.mxu0 %v4340
    %4478 = vmatpush1.msra.mxu0 %v4339
    %4479 = vmatprep.subr.mxu0 %v4336
    %4480 = vmatpush1.msra.mxu0 %v4335
    %4481 = vmatprep.subr.mxu0 %v4332
    %4482 = vmatpush1.msra.mxu0 %v4331
    %4483 = vmatprep.subr.mxu0 %v4328
    %4484 = vmatpush1.msra.mxu0 %v4327
    %4485 = vmatprep.subr.mxu0 %v4324
    %4486 = vmatpush1.msra.mxu0 %v4323
    %4487 = vmatprep.subr.mxu0 %v4320
    %4488 = vmatpush1.msra.mxu0 %v4319
    %4489 = vmatprep.subr.mxu0 %v4316
    %4490 = vmatpush1.msra.mxu0 %v4315
    %4491 = vmatprep.subr.mxu0 %v4312
    %4492 = vmatpush1.msra.mxu0 %v4311
    %4493 = vmatprep.subr.mxu0 %v4436
    %4494 = vmatpush2.msra.mxu0 %v4435
    %4495 = vmatprep.subr.mxu0 %v4432
    %4496 = vmatpush2.msra.mxu0 %v4431
    %4497 = vmatprep.subr.mxu0 %v4428
    %4498 = vmatpush2.msra.mxu0 %v4427
    %4499 = vmatprep.subr.mxu0 %v4424
    %4500 = vmatpush2.msra.mxu0 %v4423
    %4501 = vmatprep.subr.mxu0 %v4420
    %4502 = vmatpush2.msra.mxu0 %v4419
    %4503 = vmatprep.subr.mxu0 %v4416
    %4504 = vmatpush2.msra.mxu0 %v4415
    %4505 = vmatprep.subr.mxu0 %v4412
    %4506 = vmatpush2.msra.mxu0 %v4411
    %4507 = vmatprep.subr.mxu0 %v4408
    %4508 = vmatpush2.msra.mxu0 %v4407
    %4509 = vmatprep.subr.mxu0 %v4404
    %4510 = vmatpush2.msra.mxu0 %v4403
    %4511 = vmatprep.subr.mxu0 %v4400
    %4512 = vmatpush2.msra.mxu0 %v4399
    %4513 = vmatprep.subr.mxu0 %v4396
    %4514 = vmatpush2.msra.mxu0 %v4395
    %4515 = vmatprep.subr.mxu0 %v4392
    %4516 = vmatpush2.msra.mxu0 %v4391
    %4517 = vmatprep.subr.mxu0 %v4388
    %4518 = vmatpush2.msra.mxu0 %v4387
    %4519 = vmatprep.subr.mxu0 %v4384
    %4520 = vmatpush2.msra.mxu0 %v4383
    %4521 = vmatprep.subr.mxu0 %v4380
    %4522 = vmatpush2.msra.mxu0 %v4379
    %4523 = vmatprep.subr.mxu0 %v4376
    %4524 = vmatpush2.msra.mxu0 %v4375
    %4525 = vmatprep.mubr.f32.mxu0 %v4310
    %4526 = vmatmul.mubr.f32.gmra.mxu0 %v4306
    %v4527 = vpop.f32.mrf.mxu0
    %v4528 = vadd.f32 %v4444, %v4527
    %v4529 = vpop.f32.mrf.mxu0
    %v4530 = vadd.f32 %v4448, %v4529
    %4531 = vdwg.mxu0
    %4532 = vmatprep.subr.mxu0 %v4374
    %4533 = vmatpush1.msra.mxu0 %v4373
    %4534 = vmatprep.subr.mxu0 %v4370
    %4535 = vmatpush1.msra.mxu0 %v4369
    %4536 = vmatprep.subr.mxu0 %v4366
    %4537 = vmatpush1.msra.mxu0 %v4365
    %4538 = vmatprep.subr.mxu0 %v4362
    %4539 = vmatpush1.msra.mxu0 %v4361
    %4540 = vmatprep.subr.mxu0 %v4358
    %4541 = vmatpush1.msra.mxu0 %v4357
    %4542 = vmatprep.subr.mxu0 %v4354
    %4543 = vmatpush1.msra.mxu0 %v4353
    %4544 = vmatprep.subr.mxu0 %v4350
    %4545 = vmatpush1.msra.mxu0 %v4349
    %4546 = vmatprep.subr.mxu0 %v4346
    %4547 = vmatpush1.msra.mxu0 %v4345
    %4548 = vmatprep.subr.mxu0 %v4342
    %4549 = vmatpush1.msra.mxu0 %v4341
    %4550 = vmatprep.subr.mxu0 %v4338
    %4551 = vmatpush1.msra.mxu0 %v4337
    %4552 = vmatprep.subr.mxu0 %v4334
    %4553 = vmatpush1.msra.mxu0 %v4333
    %4554 = vmatprep.subr.mxu0 %v4330
    %4555 = vmatpush1.msra.mxu0 %v4329
    %4556 = vmatprep.subr.mxu0 %v4326
    %4557 = vmatpush1.msra.mxu0 %v4325
    %4558 = vmatprep.subr.mxu0 %v4322
    %4559 = vmatpush1.msra.mxu0 %v4321
    %4560 = vmatprep.subr.mxu0 %v4318
    %4561 = vmatpush1.msra.mxu0 %v4317
    %4562 = vmatprep.subr.mxu0 %v4314
    %4563 = vmatpush1.msra.mxu0 %v4313
    %4564 = vmatprep.subr.mxu0 %v4438
    %4565 = vmatpush2.msra.mxu0 %v4437
    %4566 = vmatprep.subr.mxu0 %v4434
    %4567 = vmatpush2.msra.mxu0 %v4433
    %4568 = vmatprep.subr.mxu0 %v4430
    %4569 = vmatpush2.msra.mxu0 %v4429
    %4570 = vmatprep.subr.mxu0 %v4426
    %4571 = vmatpush2.msra.mxu0 %v4425
    %4572 = vmatprep.subr.mxu0 %v4422
    %4573 = vmatpush2.msra.mxu0 %v4421
    %4574 = vmatprep.subr.mxu0 %v4418
    %4575 = vmatpush2.msra.mxu0 %v4417
    %4576 = vmatprep.subr.mxu0 %v4414
    %4577 = vmatpush2.msra.mxu0 %v4413
    %4578 = vmatprep.subr.mxu0 %v4410
    %4579 = vmatpush2.msra.mxu0 %v4409
    %4580 = vmatprep.subr.mxu0 %v4406
    %4581 = vmatpush2.msra.mxu0 %v4405
    %4582 = vmatprep.subr.mxu0 %v4402
    %4583 = vmatpush2.msra.mxu0 %v4401
    %4584 = vmatprep.subr.mxu0 %v4398
    %4585 = vmatpush2.msra.mxu0 %v4397
    %4586 = vmatprep.subr.mxu0 %v4394
    %4587 = vmatpush2.msra.mxu0 %v4393
    %4588 = vmatprep.subr.mxu0 %v4390
    %4589 = vmatpush2.msra.mxu0 %v4389
    %4590 = vmatprep.subr.mxu0 %v4386
    %4591 = vmatpush2.msra.mxu0 %v4385
    %4592 = vmatprep.subr.mxu0 %v4382
    %4593 = vmatpush2.msra.mxu0 %v4381
    %4594 = vmatprep.subr.mxu0 %v4378
    %4595 = vmatpush2.msra.mxu0 %v4377
    %4596 = vmatprep.mubr.f32.mxu0 %v4310
    %4597 = vmatmul.mubr.f32.gmra.mxu0 %v4306
    %v4598 = vpop.f32.mrf.mxu0
    %v4599 = vadd.f32 %v4452, %v4598
    %v4600 = vpop.f32.mrf.mxu0
    %v4601 = vadd.f32 %v4456, %v4600
    %4602 = vdwg.mxu0
    %v4603 = vxor.u32 %v4528, 2147483648
    %v4604 = vmul.f32 %v4603, 1.442695
    %v4605 = vpow.pop %v4604
    %v4606 = vadd.f32 %v4605, 1.0
    %v4607 = vrcp.pop %v4606
    %v4608 = vmul.f32 1.0, %v4607
    %v4609 = vxor.u32 %v4530, 2147483648
    %v4610 = vmul.f32 %v4609, 1.442695
    %v4611 = vpow.pop %v4610
    %v4612 = vadd.f32 %v4611, 1.0
    %v4613 = vrcp.pop %v4612
    %v4614 = vmul.f32 1.0, %v4613
    %v4615 = vtanh.pop %v4599
    %v4616 = vxor.u32 %v4601, 2147483648
    %v4617 = vmul.f32 %v4616, 1.442695
    %v4618 = vpow.pop %v4617
    %v4619 = vadd.f32 %v4618, 1.0
    %v4620 = vrcp.pop %v4619
    %v4621 = vmul.f32 1.0, %v4620
    %v4622 = vmul.f32 %v4614, %v4309
    %v4623 = vmul.f32 %v4608, %v4615
    %v4624 = vadd.f32 %v4622, %v4623
    %v4625 = vtanh.pop %v4624
    %v4626 = vmul.f32 %v4621, %v4625
    %4627 = vst [vmem:[%s446] sm:$0xff] %v4626
    %4628 = vst [vmem:[%s444] sm:$0xff] %v4624
    %s4629 = scalar_lea.vmem [#allocation15], 48
    %4630 = vst [vmem:[%s4629] sm:$0xff] %v4626
    %s4631 = scalar_lea.vmem [#allocation4], 56
    %v4632 = vld [vmem:[%s4631] sm:$0xff]
    %v4633 = vld [vmem:[#allocation3] sm:$0xff]
    %v4634 = vld [vmem:[#allocation2] sm:$0xff]
    %v4635 = vld [vmem:[#allocation7] sm:$0xff]
    %v4636 = vld [vmem:[#allocation7 + $0x8] sm:$0xff]
    %v4637 = vld [vmem:[#allocation7 + $0x10] sm:$0xff]
    %v4638 = vld [vmem:[#allocation7 + $0x18] sm:$0xff]
    %v4639 = vld [vmem:[#allocation7 + $0x20] sm:$0xff]
    %v4640 = vld [vmem:[#allocation7 + $0x28] sm:$0xff]
    %v4641 = vld [vmem:[#allocation7 + $0x30] sm:$0xff]
    %v4642 = vld [vmem:[#allocation7 + $0x38] sm:$0xff]
    %v4643 = vld [vmem:[#allocation7 + $0x40] sm:$0xff]
    %v4644 = vld [vmem:[#allocation7 + $0x48] sm:$0xff]
    %v4645 = vld [vmem:[#allocation7 + $0x50] sm:$0xff]
    %v4646 = vld [vmem:[#allocation7 + $0x58] sm:$0xff]
    %v4647 = vld [vmem:[#allocation7 + $0x60] sm:$0xff]
    %v4648 = vld [vmem:[#allocation7 + $0x68] sm:$0xff]
    %v4649 = vld [vmem:[#allocation7 + $0x70] sm:$0xff]
    %v4650 = vld [vmem:[#allocation7 + $0x78] sm:$0xff]
    %v4651 = vld [vmem:[#allocation7 + $0x80] sm:$0xff]
    %v4652 = vld [vmem:[#allocation7 + $0x88] sm:$0xff]
    %v4653 = vld [vmem:[#allocation7 + $0x90] sm:$0xff]
    %v4654 = vld [vmem:[#allocation7 + $0x98] sm:$0xff]
    %v4655 = vld [vmem:[#allocation7 + $0xa0] sm:$0xff]
    %v4656 = vld [vmem:[#allocation7 + $0xa8] sm:$0xff]
    %v4657 = vld [vmem:[#allocation7 + $0xb0] sm:$0xff]
    %v4658 = vld [vmem:[#allocation7 + $0xb8] sm:$0xff]
    %v4659 = vld [vmem:[#allocation7 + $0xc0] sm:$0xff]
    %v4660 = vld [vmem:[#allocation7 + $0xc8] sm:$0xff]
    %v4661 = vld [vmem:[#allocation7 + $0xd0] sm:$0xff]
    %v4662 = vld [vmem:[#allocation7 + $0xd8] sm:$0xff]
    %v4663 = vld [vmem:[#allocation7 + $0xe0] sm:$0xff]
    %v4664 = vld [vmem:[#allocation7 + $0xe8] sm:$0xff]
    %v4665 = vld [vmem:[#allocation7 + $0xf0] sm:$0xff]
    %v4666 = vld [vmem:[#allocation7 + $0xf8] sm:$0xff]
    %v4667 = vld [vmem:[#allocation7 + $0x100] sm:$0xff]
    %v4668 = vld [vmem:[#allocation7 + $0x108] sm:$0xff]
    %v4669 = vld [vmem:[#allocation7 + $0x110] sm:$0xff]
    %v4670 = vld [vmem:[#allocation7 + $0x118] sm:$0xff]
    %v4671 = vld [vmem:[#allocation7 + $0x120] sm:$0xff]
    %v4672 = vld [vmem:[#allocation7 + $0x128] sm:$0xff]
    %v4673 = vld [vmem:[#allocation7 + $0x130] sm:$0xff]
    %v4674 = vld [vmem:[#allocation7 + $0x138] sm:$0xff]
    %v4675 = vld [vmem:[#allocation7 + $0x140] sm:$0xff]
    %v4676 = vld [vmem:[#allocation7 + $0x148] sm:$0xff]
    %v4677 = vld [vmem:[#allocation7 + $0x150] sm:$0xff]
    %v4678 = vld [vmem:[#allocation7 + $0x158] sm:$0xff]
    %v4679 = vld [vmem:[#allocation7 + $0x160] sm:$0xff]
    %v4680 = vld [vmem:[#allocation7 + $0x168] sm:$0xff]
    %v4681 = vld [vmem:[#allocation7 + $0x170] sm:$0xff]
    %v4682 = vld [vmem:[#allocation7 + $0x178] sm:$0xff]
    %v4683 = vld [vmem:[#allocation7 + $0x180] sm:$0xff]
    %v4684 = vld [vmem:[#allocation7 + $0x188] sm:$0xff]
    %v4685 = vld [vmem:[#allocation7 + $0x190] sm:$0xff]
    %v4686 = vld [vmem:[#allocation7 + $0x198] sm:$0xff]
    %v4687 = vld [vmem:[#allocation7 + $0x1a0] sm:$0xff]
    %v4688 = vld [vmem:[#allocation7 + $0x1a8] sm:$0xff]
    %v4689 = vld [vmem:[#allocation7 + $0x1b0] sm:$0xff]
    %v4690 = vld [vmem:[#allocation7 + $0x1b8] sm:$0xff]
    %v4691 = vld [vmem:[#allocation7 + $0x1c0] sm:$0xff]
    %v4692 = vld [vmem:[#allocation7 + $0x1c8] sm:$0xff]
    %v4693 = vld [vmem:[#allocation7 + $0x1d0] sm:$0xff]
    %v4694 = vld [vmem:[#allocation7 + $0x1d8] sm:$0xff]
    %v4695 = vld [vmem:[#allocation7 + $0x1e0] sm:$0xff]
    %v4696 = vld [vmem:[#allocation7 + $0x1e8] sm:$0xff]
    %v4697 = vld [vmem:[#allocation7 + $0x1f0] sm:$0xff]
    %v4698 = vld [vmem:[#allocation7 + $0x1f8] sm:$0xff]
    %v4699 = vld [vmem:[#allocation7 + $0x200] sm:$0xff]
    %v4700 = vld [vmem:[#allocation7 + $0x208] sm:$0xff]
    %v4701 = vld [vmem:[#allocation7 + $0x210] sm:$0xff]
    %v4702 = vld [vmem:[#allocation7 + $0x218] sm:$0xff]
    %v4703 = vld [vmem:[#allocation7 + $0x220] sm:$0xff]
    %v4704 = vld [vmem:[#allocation7 + $0x228] sm:$0xff]
    %v4705 = vld [vmem:[#allocation7 + $0x230] sm:$0xff]
    %v4706 = vld [vmem:[#allocation7 + $0x238] sm:$0xff]
    %v4707 = vld [vmem:[#allocation7 + $0x240] sm:$0xff]
    %v4708 = vld [vmem:[#allocation7 + $0x248] sm:$0xff]
    %v4709 = vld [vmem:[#allocation7 + $0x250] sm:$0xff]
    %v4710 = vld [vmem:[#allocation7 + $0x258] sm:$0xff]
    %v4711 = vld [vmem:[#allocation7 + $0x260] sm:$0xff]
    %v4712 = vld [vmem:[#allocation7 + $0x268] sm:$0xff]
    %v4713 = vld [vmem:[#allocation7 + $0x270] sm:$0xff]
    %v4714 = vld [vmem:[#allocation7 + $0x278] sm:$0xff]
    %v4715 = vld [vmem:[#allocation7 + $0x280] sm:$0xff]
    %v4716 = vld [vmem:[#allocation7 + $0x288] sm:$0xff]
    %v4717 = vld [vmem:[#allocation7 + $0x290] sm:$0xff]
    %v4718 = vld [vmem:[#allocation7 + $0x298] sm:$0xff]
    %v4719 = vld [vmem:[#allocation7 + $0x2a0] sm:$0xff]
    %v4720 = vld [vmem:[#allocation7 + $0x2a8] sm:$0xff]
    %v4721 = vld [vmem:[#allocation7 + $0x2b0] sm:$0xff]
    %v4722 = vld [vmem:[#allocation7 + $0x2b8] sm:$0xff]
    %v4723 = vld [vmem:[#allocation7 + $0x2c0] sm:$0xff]
    %v4724 = vld [vmem:[#allocation7 + $0x2c8] sm:$0xff]
    %v4725 = vld [vmem:[#allocation7 + $0x2d0] sm:$0xff]
    %v4726 = vld [vmem:[#allocation7 + $0x2d8] sm:$0xff]
    %v4727 = vld [vmem:[#allocation7 + $0x2e0] sm:$0xff]
    %v4728 = vld [vmem:[#allocation7 + $0x2e8] sm:$0xff]
    %v4729 = vld [vmem:[#allocation7 + $0x2f0] sm:$0xff]
    %v4730 = vld [vmem:[#allocation7 + $0x2f8] sm:$0xff]
    %v4731 = vld [vmem:[#allocation7 + $0x300] sm:$0xff]
    %v4732 = vld [vmem:[#allocation7 + $0x308] sm:$0xff]
    %v4733 = vld [vmem:[#allocation7 + $0x310] sm:$0xff]
    %v4734 = vld [vmem:[#allocation7 + $0x318] sm:$0xff]
    %v4735 = vld [vmem:[#allocation7 + $0x320] sm:$0xff]
    %v4736 = vld [vmem:[#allocation7 + $0x328] sm:$0xff]
    %v4737 = vld [vmem:[#allocation7 + $0x330] sm:$0xff]
    %v4738 = vld [vmem:[#allocation7 + $0x338] sm:$0xff]
    %v4739 = vld [vmem:[#allocation7 + $0x340] sm:$0xff]
    %v4740 = vld [vmem:[#allocation7 + $0x348] sm:$0xff]
    %v4741 = vld [vmem:[#allocation7 + $0x350] sm:$0xff]
    %v4742 = vld [vmem:[#allocation7 + $0x358] sm:$0xff]
    %v4743 = vld [vmem:[#allocation7 + $0x360] sm:$0xff]
    %v4744 = vld [vmem:[#allocation7 + $0x368] sm:$0xff]
    %v4745 = vld [vmem:[#allocation7 + $0x370] sm:$0xff]
    %v4746 = vld [vmem:[#allocation7 + $0x378] sm:$0xff]
    %v4747 = vld [vmem:[#allocation7 + $0x380] sm:$0xff]
    %v4748 = vld [vmem:[#allocation7 + $0x388] sm:$0xff]
    %v4749 = vld [vmem:[#allocation7 + $0x390] sm:$0xff]
    %v4750 = vld [vmem:[#allocation7 + $0x398] sm:$0xff]
    %v4751 = vld [vmem:[#allocation7 + $0x3a0] sm:$0xff]
    %v4752 = vld [vmem:[#allocation7 + $0x3a8] sm:$0xff]
    %v4753 = vld [vmem:[#allocation7 + $0x3b0] sm:$0xff]
    %v4754 = vld [vmem:[#allocation7 + $0x3b8] sm:$0xff]
    %v4755 = vld [vmem:[#allocation7 + $0x3c0] sm:$0xff]
    %v4756 = vld [vmem:[#allocation7 + $0x3c8] sm:$0xff]
    %v4757 = vld [vmem:[#allocation7 + $0x3d0] sm:$0xff]
    %v4758 = vld [vmem:[#allocation7 + $0x3d8] sm:$0xff]
    %v4759 = vld [vmem:[#allocation7 + $0x3e0] sm:$0xff]
    %v4760 = vld [vmem:[#allocation7 + $0x3e8] sm:$0xff]
    %v4761 = vld [vmem:[#allocation7 + $0x3f0] sm:$0xff]
    %v4762 = vld [vmem:[#allocation7 + $0x3f8] sm:$0xff]
    %v4763 = vld [vmem:[#allocation9] sm:$0xf]
    %v4765 = vlaneseq
    %v4766 = vshrl.u32 %v4765, 7
    %v4767 = vsub.s32 0, %v4766
    %v4768 = vrot.slane %v4763, %v4767
    %v4769 = vlaneseq
    %v4770 = vshrl.u32 %v4769, 7
    %v4771 = vsub.s32 1, %v4770
    %v4772 = vrot.slane %v4763, %v4771
    %v4773 = vlaneseq
    %v4774 = vshrl.u32 %v4773, 7
    %v4775 = vsub.s32 2, %v4774
    %v4776 = vrot.slane %v4763, %v4775
    %v4777 = vlaneseq
    %v4778 = vshrl.u32 %v4777, 7
    %v4779 = vsub.s32 3, %v4778
    %v4780 = vrot.slane %v4763, %v4779
    %4785 = vmatprep.subr.mxu0 %v4696
    %4786 = vmatpush1.msra.mxu0 %v4695
    %4787 = vmatprep.subr.mxu0 %v4692
    %4788 = vmatpush1.msra.mxu0 %v4691
    %4789 = vmatprep.subr.mxu0 %v4688
    %4790 = vmatpush1.msra.mxu0 %v4687
    %4791 = vmatprep.subr.mxu0 %v4684
    %4792 = vmatpush1.msra.mxu0 %v4683
    %4793 = vmatprep.subr.mxu0 %v4680
    %4794 = vmatpush1.msra.mxu0 %v4679
    %4795 = vmatprep.subr.mxu0 %v4676
    %4796 = vmatpush1.msra.mxu0 %v4675
    %4797 = vmatprep.subr.mxu0 %v4672
    %4798 = vmatpush1.msra.mxu0 %v4671
    %4799 = vmatprep.subr.mxu0 %v4668
    %4800 = vmatpush1.msra.mxu0 %v4667
    %4801 = vmatprep.subr.mxu0 %v4664
    %4802 = vmatpush1.msra.mxu0 %v4663
    %4803 = vmatprep.subr.mxu0 %v4660
    %4804 = vmatpush1.msra.mxu0 %v4659
    %4805 = vmatprep.subr.mxu0 %v4656
    %4806 = vmatpush1.msra.mxu0 %v4655
    %4807 = vmatprep.subr.mxu0 %v4652
    %4808 = vmatpush1.msra.mxu0 %v4651
    %4809 = vmatprep.subr.mxu0 %v4648
    %4810 = vmatpush1.msra.mxu0 %v4647
    %4811 = vmatprep.subr.mxu0 %v4644
    %4812 = vmatpush1.msra.mxu0 %v4643
    %4813 = vmatprep.subr.mxu0 %v4640
    %4814 = vmatpush1.msra.mxu0 %v4639
    %4815 = vmatprep.subr.mxu0 %v4636
    %4816 = vmatpush1.msra.mxu0 %v4635
    %4817 = vmatprep.subr.mxu0 %v4760
    %4818 = vmatpush2.msra.mxu0 %v4759
    %4819 = vmatprep.subr.mxu0 %v4756
    %4820 = vmatpush2.msra.mxu0 %v4755
    %4821 = vmatprep.subr.mxu0 %v4752
    %4822 = vmatpush2.msra.mxu0 %v4751
    %4823 = vmatprep.subr.mxu0 %v4748
    %4824 = vmatpush2.msra.mxu0 %v4747
    %4825 = vmatprep.subr.mxu0 %v4744
    %4826 = vmatpush2.msra.mxu0 %v4743
    %4827 = vmatprep.subr.mxu0 %v4740
    %4828 = vmatpush2.msra.mxu0 %v4739
    %4829 = vmatprep.subr.mxu0 %v4736
    %4830 = vmatpush2.msra.mxu0 %v4735
    %4831 = vmatprep.subr.mxu0 %v4732
    %4832 = vmatpush2.msra.mxu0 %v4731
    %4833 = vmatprep.subr.mxu0 %v4728
    %4834 = vmatpush2.msra.mxu0 %v4727
    %4835 = vmatprep.subr.mxu0 %v4724
    %4836 = vmatpush2.msra.mxu0 %v4723
    %4837 = vmatprep.subr.mxu0 %v4720
    %4838 = vmatpush2.msra.mxu0 %v4719
    %4839 = vmatprep.subr.mxu0 %v4716
    %4840 = vmatpush2.msra.mxu0 %v4715
    %4841 = vmatprep.subr.mxu0 %v4712
    %4842 = vmatpush2.msra.mxu0 %v4711
    %4843 = vmatprep.subr.mxu0 %v4708
    %4844 = vmatpush2.msra.mxu0 %v4707
    %4845 = vmatprep.subr.mxu0 %v4704
    %4846 = vmatpush2.msra.mxu0 %v4703
    %4847 = vmatprep.subr.mxu0 %v4700
    %4848 = vmatpush2.msra.mxu0 %v4699
    %4849 = vmatprep.mubr.f32.mxu0 %v4634
    %4850 = vmatmul.mubr.f32.gmra.mxu0 %v4632
    %v4851 = vpop.f32.mrf.mxu0
    %v4852 = vadd.f32 %v4768, %v4851
    %v4853 = vpop.f32.mrf.mxu0
    %v4854 = vadd.f32 %v4772, %v4853
    %4855 = vdwg.mxu0
    %4856 = vmatprep.subr.mxu0 %v4698
    %4857 = vmatpush1.msra.mxu0 %v4697
    %4858 = vmatprep.subr.mxu0 %v4694
    %4859 = vmatpush1.msra.mxu0 %v4693
    %4860 = vmatprep.subr.mxu0 %v4690
    %4861 = vmatpush1.msra.mxu0 %v4689
    %4862 = vmatprep.subr.mxu0 %v4686
    %4863 = vmatpush1.msra.mxu0 %v4685
    %4864 = vmatprep.subr.mxu0 %v4682
    %4865 = vmatpush1.msra.mxu0 %v4681
    %4866 = vmatprep.subr.mxu0 %v4678
    %4867 = vmatpush1.msra.mxu0 %v4677
    %4868 = vmatprep.subr.mxu0 %v4674
    %4869 = vmatpush1.msra.mxu0 %v4673
    %4870 = vmatprep.subr.mxu0 %v4670
    %4871 = vmatpush1.msra.mxu0 %v4669
    %4872 = vmatprep.subr.mxu0 %v4666
    %4873 = vmatpush1.msra.mxu0 %v4665
    %4874 = vmatprep.subr.mxu0 %v4662
    %4875 = vmatpush1.msra.mxu0 %v4661
    %4876 = vmatprep.subr.mxu0 %v4658
    %4877 = vmatpush1.msra.mxu0 %v4657
    %4878 = vmatprep.subr.mxu0 %v4654
    %4879 = vmatpush1.msra.mxu0 %v4653
    %4880 = vmatprep.subr.mxu0 %v4650
    %4881 = vmatpush1.msra.mxu0 %v4649
    %4882 = vmatprep.subr.mxu0 %v4646
    %4883 = vmatpush1.msra.mxu0 %v4645
    %4884 = vmatprep.subr.mxu0 %v4642
    %4885 = vmatpush1.msra.mxu0 %v4641
    %4886 = vmatprep.subr.mxu0 %v4638
    %4887 = vmatpush1.msra.mxu0 %v4637
    %4888 = vmatprep.subr.mxu0 %v4762
    %4889 = vmatpush2.msra.mxu0 %v4761
    %4890 = vmatprep.subr.mxu0 %v4758
    %4891 = vmatpush2.msra.mxu0 %v4757
    %4892 = vmatprep.subr.mxu0 %v4754
    %4893 = vmatpush2.msra.mxu0 %v4753
    %4894 = vmatprep.subr.mxu0 %v4750
    %4895 = vmatpush2.msra.mxu0 %v4749
    %4896 = vmatprep.subr.mxu0 %v4746
    %4897 = vmatpush2.msra.mxu0 %v4745
    %4898 = vmatprep.subr.mxu0 %v4742
    %4899 = vmatpush2.msra.mxu0 %v4741
    %4900 = vmatprep.subr.mxu0 %v4738
    %4901 = vmatpush2.msra.mxu0 %v4737
    %4902 = vmatprep.subr.mxu0 %v4734
    %4903 = vmatpush2.msra.mxu0 %v4733
    %4904 = vmatprep.subr.mxu0 %v4730
    %4905 = vmatpush2.msra.mxu0 %v4729
    %4906 = vmatprep.subr.mxu0 %v4726
    %4907 = vmatpush2.msra.mxu0 %v4725
    %4908 = vmatprep.subr.mxu0 %v4722
    %4909 = vmatpush2.msra.mxu0 %v4721
    %4910 = vmatprep.subr.mxu0 %v4718
    %4911 = vmatpush2.msra.mxu0 %v4717
    %4912 = vmatprep.subr.mxu0 %v4714
    %4913 = vmatpush2.msra.mxu0 %v4713
    %4914 = vmatprep.subr.mxu0 %v4710
    %4915 = vmatpush2.msra.mxu0 %v4709
    %4916 = vmatprep.subr.mxu0 %v4706
    %4917 = vmatpush2.msra.mxu0 %v4705
    %4918 = vmatprep.subr.mxu0 %v4702
    %4919 = vmatpush2.msra.mxu0 %v4701
    %4920 = vmatprep.mubr.f32.mxu0 %v4634
    %4921 = vmatmul.mubr.f32.gmra.mxu0 %v4632
    %v4922 = vpop.f32.mrf.mxu0
    %v4923 = vadd.f32 %v4776, %v4922
    %v4924 = vpop.f32.mrf.mxu0
    %v4925 = vadd.f32 %v4780, %v4924
    %4926 = vdwg.mxu0
    %v4927 = vxor.u32 %v4852, 2147483648
    %v4928 = vmul.f32 %v4927, 1.442695
    %v4929 = vpow.pop %v4928
    %v4930 = vadd.f32 %v4929, 1.0
    %v4931 = vrcp.pop %v4930
    %v4932 = vmul.f32 1.0, %v4931
    %v4933 = vxor.u32 %v4854, 2147483648
    %v4934 = vmul.f32 %v4933, 1.442695
    %v4935 = vpow.pop %v4934
    %v4936 = vadd.f32 %v4935, 1.0
    %v4937 = vrcp.pop %v4936
    %v4938 = vmul.f32 1.0, %v4937
    %v4939 = vtanh.pop %v4923
    %v4940 = vxor.u32 %v4925, 2147483648
    %v4941 = vmul.f32 %v4940, 1.442695
    %v4942 = vpow.pop %v4941
    %v4943 = vadd.f32 %v4942, 1.0
    %v4944 = vrcp.pop %v4943
    %v4945 = vmul.f32 1.0, %v4944
    %v4946 = vmul.f32 %v4938, %v4633
    %v4947 = vmul.f32 %v4932, %v4939
    %v4948 = vadd.f32 %v4946, %v4947
    %v4949 = vtanh.pop %v4948
    %v4950 = vmul.f32 %v4945, %v4949
    %4951 = vst [vmem:[#allocation2] sm:$0xff] %v4950
    %4952 = vst [vmem:[#allocation3] sm:$0xff] %v4948
    %v4953 = vld [vmem:[%s444] sm:$0xff]
    %v4954 = vld [vmem:[%s446] sm:$0xff]
    %v4955 = vld [vmem:[#allocation10] sm:$0xff]
    %v4956 = vld [vmem:[#allocation10 + $0x8] sm:$0xff]
    %v4957 = vld [vmem:[#allocation10 + $0x10] sm:$0xff]
    %v4958 = vld [vmem:[#allocation10 + $0x18] sm:$0xff]
    %v4959 = vld [vmem:[#allocation10 + $0x20] sm:$0xff]
    %v4960 = vld [vmem:[#allocation10 + $0x28] sm:$0xff]
    %v4961 = vld [vmem:[#allocation10 + $0x30] sm:$0xff]
    %v4962 = vld [vmem:[#allocation10 + $0x38] sm:$0xff]
    %v4963 = vld [vmem:[#allocation10 + $0x40] sm:$0xff]
    %v4964 = vld [vmem:[#allocation10 + $0x48] sm:$0xff]
    %v4965 = vld [vmem:[#allocation10 + $0x50] sm:$0xff]
    %v4966 = vld [vmem:[#allocation10 + $0x58] sm:$0xff]
    %v4967 = vld [vmem:[#allocation10 + $0x60] sm:$0xff]
    %v4968 = vld [vmem:[#allocation10 + $0x68] sm:$0xff]
    %v4969 = vld [vmem:[#allocation10 + $0x70] sm:$0xff]
    %v4970 = vld [vmem:[#allocation10 + $0x78] sm:$0xff]
    %v4971 = vld [vmem:[#allocation10 + $0x80] sm:$0xff]
    %v4972 = vld [vmem:[#allocation10 + $0x88] sm:$0xff]
    %v4973 = vld [vmem:[#allocation10 + $0x90] sm:$0xff]
    %v4974 = vld [vmem:[#allocation10 + $0x98] sm:$0xff]
    %v4975 = vld [vmem:[#allocation10 + $0xa0] sm:$0xff]
    %v4976 = vld [vmem:[#allocation10 + $0xa8] sm:$0xff]
    %v4977 = vld [vmem:[#allocation10 + $0xb0] sm:$0xff]
    %v4978 = vld [vmem:[#allocation10 + $0xb8] sm:$0xff]
    %v4979 = vld [vmem:[#allocation10 + $0xc0] sm:$0xff]
    %v4980 = vld [vmem:[#allocation10 + $0xc8] sm:$0xff]
    %v4981 = vld [vmem:[#allocation10 + $0xd0] sm:$0xff]
    %v4982 = vld [vmem:[#allocation10 + $0xd8] sm:$0xff]
    %v4983 = vld [vmem:[#allocation10 + $0xe0] sm:$0xff]
    %v4984 = vld [vmem:[#allocation10 + $0xe8] sm:$0xff]
    %v4985 = vld [vmem:[#allocation10 + $0xf0] sm:$0xff]
    %v4986 = vld [vmem:[#allocation10 + $0xf8] sm:$0xff]
    %v4987 = vld [vmem:[#allocation10 + $0x100] sm:$0xff]
    %v4988 = vld [vmem:[#allocation10 + $0x108] sm:$0xff]
    %v4989 = vld [vmem:[#allocation10 + $0x110] sm:$0xff]
    %v4990 = vld [vmem:[#allocation10 + $0x118] sm:$0xff]
    %v4991 = vld [vmem:[#allocation10 + $0x120] sm:$0xff]
    %v4992 = vld [vmem:[#allocation10 + $0x128] sm:$0xff]
    %v4993 = vld [vmem:[#allocation10 + $0x130] sm:$0xff]
    %v4994 = vld [vmem:[#allocation10 + $0x138] sm:$0xff]
    %v4995 = vld [vmem:[#allocation10 + $0x140] sm:$0xff]
    %v4996 = vld [vmem:[#allocation10 + $0x148] sm:$0xff]
    %v4997 = vld [vmem:[#allocation10 + $0x150] sm:$0xff]
    %v4998 = vld [vmem:[#allocation10 + $0x158] sm:$0xff]
    %v4999 = vld [vmem:[#allocation10 + $0x160] sm:$0xff]
    %v5000 = vld [vmem:[#allocation10 + $0x168] sm:$0xff]
    %v5001 = vld [vmem:[#allocation10 + $0x170] sm:$0xff]
    %v5002 = vld [vmem:[#allocation10 + $0x178] sm:$0xff]
    %v5003 = vld [vmem:[#allocation10 + $0x180] sm:$0xff]
    %v5004 = vld [vmem:[#allocation10 + $0x188] sm:$0xff]
    %v5005 = vld [vmem:[#allocation10 + $0x190] sm:$0xff]
    %v5006 = vld [vmem:[#allocation10 + $0x198] sm:$0xff]
    %v5007 = vld [vmem:[#allocation10 + $0x1a0] sm:$0xff]
    %v5008 = vld [vmem:[#allocation10 + $0x1a8] sm:$0xff]
    %v5009 = vld [vmem:[#allocation10 + $0x1b0] sm:$0xff]
    %v5010 = vld [vmem:[#allocation10 + $0x1b8] sm:$0xff]
    %v5011 = vld [vmem:[#allocation10 + $0x1c0] sm:$0xff]
    %v5012 = vld [vmem:[#allocation10 + $0x1c8] sm:$0xff]
    %v5013 = vld [vmem:[#allocation10 + $0x1d0] sm:$0xff]
    %v5014 = vld [vmem:[#allocation10 + $0x1d8] sm:$0xff]
    %v5015 = vld [vmem:[#allocation10 + $0x1e0] sm:$0xff]
    %v5016 = vld [vmem:[#allocation10 + $0x1e8] sm:$0xff]
    %v5017 = vld [vmem:[#allocation10 + $0x1f0] sm:$0xff]
    %v5018 = vld [vmem:[#allocation10 + $0x1f8] sm:$0xff]
    %v5019 = vld [vmem:[#allocation10 + $0x200] sm:$0xff]
    %v5020 = vld [vmem:[#allocation10 + $0x208] sm:$0xff]
    %v5021 = vld [vmem:[#allocation10 + $0x210] sm:$0xff]
    %v5022 = vld [vmem:[#allocation10 + $0x218] sm:$0xff]
    %v5023 = vld [vmem:[#allocation10 + $0x220] sm:$0xff]
    %v5024 = vld [vmem:[#allocation10 + $0x228] sm:$0xff]
    %v5025 = vld [vmem:[#allocation10 + $0x230] sm:$0xff]
    %v5026 = vld [vmem:[#allocation10 + $0x238] sm:$0xff]
    %v5027 = vld [vmem:[#allocation10 + $0x240] sm:$0xff]
    %v5028 = vld [vmem:[#allocation10 + $0x248] sm:$0xff]
    %v5029 = vld [vmem:[#allocation10 + $0x250] sm:$0xff]
    %v5030 = vld [vmem:[#allocation10 + $0x258] sm:$0xff]
    %v5031 = vld [vmem:[#allocation10 + $0x260] sm:$0xff]
    %v5032 = vld [vmem:[#allocation10 + $0x268] sm:$0xff]
    %v5033 = vld [vmem:[#allocation10 + $0x270] sm:$0xff]
    %v5034 = vld [vmem:[#allocation10 + $0x278] sm:$0xff]
    %v5035 = vld [vmem:[#allocation10 + $0x280] sm:$0xff]
    %v5036 = vld [vmem:[#allocation10 + $0x288] sm:$0xff]
    %v5037 = vld [vmem:[#allocation10 + $0x290] sm:$0xff]
    %v5038 = vld [vmem:[#allocation10 + $0x298] sm:$0xff]
    %v5039 = vld [vmem:[#allocation10 + $0x2a0] sm:$0xff]
    %v5040 = vld [vmem:[#allocation10 + $0x2a8] sm:$0xff]
    %v5041 = vld [vmem:[#allocation10 + $0x2b0] sm:$0xff]
    %v5042 = vld [vmem:[#allocation10 + $0x2b8] sm:$0xff]
    %v5043 = vld [vmem:[#allocation10 + $0x2c0] sm:$0xff]
    %v5044 = vld [vmem:[#allocation10 + $0x2c8] sm:$0xff]
    %v5045 = vld [vmem:[#allocation10 + $0x2d0] sm:$0xff]
    %v5046 = vld [vmem:[#allocation10 + $0x2d8] sm:$0xff]
    %v5047 = vld [vmem:[#allocation10 + $0x2e0] sm:$0xff]
    %v5048 = vld [vmem:[#allocation10 + $0x2e8] sm:$0xff]
    %v5049 = vld [vmem:[#allocation10 + $0x2f0] sm:$0xff]
    %v5050 = vld [vmem:[#allocation10 + $0x2f8] sm:$0xff]
    %v5051 = vld [vmem:[#allocation10 + $0x300] sm:$0xff]
    %v5052 = vld [vmem:[#allocation10 + $0x308] sm:$0xff]
    %v5053 = vld [vmem:[#allocation10 + $0x310] sm:$0xff]
    %v5054 = vld [vmem:[#allocation10 + $0x318] sm:$0xff]
    %v5055 = vld [vmem:[#allocation10 + $0x320] sm:$0xff]
    %v5056 = vld [vmem:[#allocation10 + $0x328] sm:$0xff]
    %v5057 = vld [vmem:[#allocation10 + $0x330] sm:$0xff]
    %v5058 = vld [vmem:[#allocation10 + $0x338] sm:$0xff]
    %v5059 = vld [vmem:[#allocation10 + $0x340] sm:$0xff]
    %v5060 = vld [vmem:[#allocation10 + $0x348] sm:$0xff]
    %v5061 = vld [vmem:[#allocation10 + $0x350] sm:$0xff]
    %v5062 = vld [vmem:[#allocation10 + $0x358] sm:$0xff]
    %v5063 = vld [vmem:[#allocation10 + $0x360] sm:$0xff]
    %v5064 = vld [vmem:[#allocation10 + $0x368] sm:$0xff]
    %v5065 = vld [vmem:[#allocation10 + $0x370] sm:$0xff]
    %v5066 = vld [vmem:[#allocation10 + $0x378] sm:$0xff]
    %v5067 = vld [vmem:[#allocation10 + $0x380] sm:$0xff]
    %v5068 = vld [vmem:[#allocation10 + $0x388] sm:$0xff]
    %v5069 = vld [vmem:[#allocation10 + $0x390] sm:$0xff]
    %v5070 = vld [vmem:[#allocation10 + $0x398] sm:$0xff]
    %v5071 = vld [vmem:[#allocation10 + $0x3a0] sm:$0xff]
    %v5072 = vld [vmem:[#allocation10 + $0x3a8] sm:$0xff]
    %v5073 = vld [vmem:[#allocation10 + $0x3b0] sm:$0xff]
    %v5074 = vld [vmem:[#allocation10 + $0x3b8] sm:$0xff]
    %v5075 = vld [vmem:[#allocation10 + $0x3c0] sm:$0xff]
    %v5076 = vld [vmem:[#allocation10 + $0x3c8] sm:$0xff]
    %v5077 = vld [vmem:[#allocation10 + $0x3d0] sm:$0xff]
    %v5078 = vld [vmem:[#allocation10 + $0x3d8] sm:$0xff]
    %v5079 = vld [vmem:[#allocation10 + $0x3e0] sm:$0xff]
    %v5080 = vld [vmem:[#allocation10 + $0x3e8] sm:$0xff]
    %v5081 = vld [vmem:[#allocation10 + $0x3f0] sm:$0xff]
    %v5082 = vld [vmem:[#allocation10 + $0x3f8] sm:$0xff]
    %v5083 = vld [vmem:[%s4] sm:$0xf]
    %v5085 = vlaneseq
    %v5086 = vshrl.u32 %v5085, 7
    %v5087 = vsub.s32 0, %v5086
    %v5088 = vrot.slane %v5083, %v5087
    %v5089 = vlaneseq
    %v5090 = vshrl.u32 %v5089, 7
    %v5091 = vsub.s32 1, %v5090
    %v5092 = vrot.slane %v5083, %v5091
    %v5093 = vlaneseq
    %v5094 = vshrl.u32 %v5093, 7
    %v5095 = vsub.s32 2, %v5094
    %v5096 = vrot.slane %v5083, %v5095
    %v5097 = vlaneseq
    %v5098 = vshrl.u32 %v5097, 7
    %v5099 = vsub.s32 3, %v5098
    %v5100 = vrot.slane %v5083, %v5099
    %5105 = vmatprep.subr.mxu0 %v5016
    %5106 = vmatpush1.msra.mxu0 %v5015
    %5107 = vmatprep.subr.mxu0 %v5012
    %5108 = vmatpush1.msra.mxu0 %v5011
    %5109 = vmatprep.subr.mxu0 %v5008
    %5110 = vmatpush1.msra.mxu0 %v5007
    %5111 = vmatprep.subr.mxu0 %v5004
    %5112 = vmatpush1.msra.mxu0 %v5003
    %5113 = vmatprep.subr.mxu0 %v5000
    %5114 = vmatpush1.msra.mxu0 %v4999
    %5115 = vmatprep.subr.mxu0 %v4996
    %5116 = vmatpush1.msra.mxu0 %v4995
    %5117 = vmatprep.subr.mxu0 %v4992
    %5118 = vmatpush1.msra.mxu0 %v4991
    %5119 = vmatprep.subr.mxu0 %v4988
    %5120 = vmatpush1.msra.mxu0 %v4987
    %5121 = vmatprep.subr.mxu0 %v4984
    %5122 = vmatpush1.msra.mxu0 %v4983
    %5123 = vmatprep.subr.mxu0 %v4980
    %5124 = vmatpush1.msra.mxu0 %v4979
    %5125 = vmatprep.subr.mxu0 %v4976
    %5126 = vmatpush1.msra.mxu0 %v4975
    %5127 = vmatprep.subr.mxu0 %v4972
    %5128 = vmatpush1.msra.mxu0 %v4971
    %5129 = vmatprep.subr.mxu0 %v4968
    %5130 = vmatpush1.msra.mxu0 %v4967
    %5131 = vmatprep.subr.mxu0 %v4964
    %5132 = vmatpush1.msra.mxu0 %v4963
    %5133 = vmatprep.subr.mxu0 %v4960
    %5134 = vmatpush1.msra.mxu0 %v4959
    %5135 = vmatprep.subr.mxu0 %v4956
    %5136 = vmatpush1.msra.mxu0 %v4955
    %5137 = vmatprep.subr.mxu0 %v5080
    %5138 = vmatpush2.msra.mxu0 %v5079
    %5139 = vmatprep.subr.mxu0 %v5076
    %5140 = vmatpush2.msra.mxu0 %v5075
    %5141 = vmatprep.subr.mxu0 %v5072
    %5142 = vmatpush2.msra.mxu0 %v5071
    %5143 = vmatprep.subr.mxu0 %v5068
    %5144 = vmatpush2.msra.mxu0 %v5067
    %5145 = vmatprep.subr.mxu0 %v5064
    %5146 = vmatpush2.msra.mxu0 %v5063
    %5147 = vmatprep.subr.mxu0 %v5060
    %5148 = vmatpush2.msra.mxu0 %v5059
    %5149 = vmatprep.subr.mxu0 %v5056
    %5150 = vmatpush2.msra.mxu0 %v5055
    %5151 = vmatprep.subr.mxu0 %v5052
    %5152 = vmatpush2.msra.mxu0 %v5051
    %5153 = vmatprep.subr.mxu0 %v5048
    %5154 = vmatpush2.msra.mxu0 %v5047
    %5155 = vmatprep.subr.mxu0 %v5044
    %5156 = vmatpush2.msra.mxu0 %v5043
    %5157 = vmatprep.subr.mxu0 %v5040
    %5158 = vmatpush2.msra.mxu0 %v5039
    %5159 = vmatprep.subr.mxu0 %v5036
    %5160 = vmatpush2.msra.mxu0 %v5035
    %5161 = vmatprep.subr.mxu0 %v5032
    %5162 = vmatpush2.msra.mxu0 %v5031
    %5163 = vmatprep.subr.mxu0 %v5028
    %5164 = vmatpush2.msra.mxu0 %v5027
    %5165 = vmatprep.subr.mxu0 %v5024
    %5166 = vmatpush2.msra.mxu0 %v5023
    %5167 = vmatprep.subr.mxu0 %v5020
    %5168 = vmatpush2.msra.mxu0 %v5019
    %5169 = vmatprep.mubr.f32.mxu0 %v4954
    %5170 = vmatmul.mubr.f32.gmra.mxu0 %v4950
    %v5171 = vpop.f32.mrf.mxu0
    %v5172 = vadd.f32 %v5088, %v5171
    %v5173 = vpop.f32.mrf.mxu0
    %v5174 = vadd.f32 %v5092, %v5173
    %5175 = vdwg.mxu0
    %5176 = vmatprep.subr.mxu0 %v5018
    %5177 = vmatpush1.msra.mxu0 %v5017
    %5178 = vmatprep.subr.mxu0 %v5014
    %5179 = vmatpush1.msra.mxu0 %v5013
    %5180 = vmatprep.subr.mxu0 %v5010
    %5181 = vmatpush1.msra.mxu0 %v5009
    %5182 = vmatprep.subr.mxu0 %v5006
    %5183 = vmatpush1.msra.mxu0 %v5005
    %5184 = vmatprep.subr.mxu0 %v5002
    %5185 = vmatpush1.msra.mxu0 %v5001
    %5186 = vmatprep.subr.mxu0 %v4998
    %5187 = vmatpush1.msra.mxu0 %v4997
    %5188 = vmatprep.subr.mxu0 %v4994
    %5189 = vmatpush1.msra.mxu0 %v4993
    %5190 = vmatprep.subr.mxu0 %v4990
    %5191 = vmatpush1.msra.mxu0 %v4989
    %5192 = vmatprep.subr.mxu0 %v4986
    %5193 = vmatpush1.msra.mxu0 %v4985
    %5194 = vmatprep.subr.mxu0 %v4982
    %5195 = vmatpush1.msra.mxu0 %v4981
    %5196 = vmatprep.subr.mxu0 %v4978
    %5197 = vmatpush1.msra.mxu0 %v4977
    %5198 = vmatprep.subr.mxu0 %v4974
    %5199 = vmatpush1.msra.mxu0 %v4973
    %5200 = vmatprep.subr.mxu0 %v4970
    %5201 = vmatpush1.msra.mxu0 %v4969
    %5202 = vmatprep.subr.mxu0 %v4966
    %5203 = vmatpush1.msra.mxu0 %v4965
    %5204 = vmatprep.subr.mxu0 %v4962
    %5205 = vmatpush1.msra.mxu0 %v4961
    %5206 = vmatprep.subr.mxu0 %v4958
    %5207 = vmatpush1.msra.mxu0 %v4957
    %5208 = vmatprep.subr.mxu0 %v5082
    %5209 = vmatpush2.msra.mxu0 %v5081
    %5210 = vmatprep.subr.mxu0 %v5078
    %5211 = vmatpush2.msra.mxu0 %v5077
    %5212 = vmatprep.subr.mxu0 %v5074
    %5213 = vmatpush2.msra.mxu0 %v5073
    %5214 = vmatprep.subr.mxu0 %v5070
    %5215 = vmatpush2.msra.mxu0 %v5069
    %5216 = vmatprep.subr.mxu0 %v5066
    %5217 = vmatpush2.msra.mxu0 %v5065
    %5218 = vmatprep.subr.mxu0 %v5062
    %5219 = vmatpush2.msra.mxu0 %v5061
    %5220 = vmatprep.subr.mxu0 %v5058
    %5221 = vmatpush2.msra.mxu0 %v5057
    %5222 = vmatprep.subr.mxu0 %v5054
    %5223 = vmatpush2.msra.mxu0 %v5053
    %5224 = vmatprep.subr.mxu0 %v5050
    %5225 = vmatpush2.msra.mxu0 %v5049
    %5226 = vmatprep.subr.mxu0 %v5046
    %5227 = vmatpush2.msra.mxu0 %v5045
    %5228 = vmatprep.subr.mxu0 %v5042
    %5229 = vmatpush2.msra.mxu0 %v5041
    %5230 = vmatprep.subr.mxu0 %v5038
    %5231 = vmatpush2.msra.mxu0 %v5037
    %5232 = vmatprep.subr.mxu0 %v5034
    %5233 = vmatpush2.msra.mxu0 %v5033
    %5234 = vmatprep.subr.mxu0 %v5030
    %5235 = vmatpush2.msra.mxu0 %v5029
    %5236 = vmatprep.subr.mxu0 %v5026
    %5237 = vmatpush2.msra.mxu0 %v5025
    %5238 = vmatprep.subr.mxu0 %v5022
    %5239 = vmatpush2.msra.mxu0 %v5021
    %5240 = vmatprep.mubr.f32.mxu0 %v4954
    %5241 = vmatmul.mubr.f32.gmra.mxu0 %v4950
    %v5242 = vpop.f32.mrf.mxu0
    %v5243 = vadd.f32 %v5096, %v5242
    %v5244 = vpop.f32.mrf.mxu0
    %v5245 = vadd.f32 %v5100, %v5244
    %5246 = vdwg.mxu0
    %v5247 = vxor.u32 %v5172, 2147483648
    %v5248 = vmul.f32 %v5247, 1.442695
    %v5249 = vpow.pop %v5248
    %v5250 = vadd.f32 %v5249, 1.0
    %v5251 = vrcp.pop %v5250
    %v5252 = vmul.f32 1.0, %v5251
    %v5253 = vxor.u32 %v5174, 2147483648
    %v5254 = vmul.f32 %v5253, 1.442695
    %v5255 = vpow.pop %v5254
    %v5256 = vadd.f32 %v5255, 1.0
    %v5257 = vrcp.pop %v5256
    %v5258 = vmul.f32 1.0, %v5257
    %v5259 = vtanh.pop %v5243
    %v5260 = vxor.u32 %v5245, 2147483648
    %v5261 = vmul.f32 %v5260, 1.442695
    %v5262 = vpow.pop %v5261
    %v5263 = vadd.f32 %v5262, 1.0
    %v5264 = vrcp.pop %v5263
    %v5265 = vmul.f32 1.0, %v5264
    %v5266 = vmul.f32 %v5258, %v4953
    %v5267 = vmul.f32 %v5252, %v5259
    %v5268 = vadd.f32 %v5266, %v5267
    %v5269 = vtanh.pop %v5268
    %v5270 = vmul.f32 %v5265, %v5269
    %5271 = vst [vmem:[%s446] sm:$0xff] %v5270
    %5272 = vst [vmem:[%s444] sm:$0xff] %v5268
    %s5273 = scalar_lea.vmem [#allocation15], 56
    %5274 = vst [vmem:[%s5273] sm:$0xff] %v5270
    // Predicated region
    $region58: #{tpu_custom_call.1} parent=1 // pred_check
      %p5275 = pneg %p111
    $region59: #{tpu_custom_call.1} parent=1 // pred_check_branch
      %5277 = sbr.rel (%p5275) target = $region61
    $region60: #{tpu_custom_call.1} parent=1 // pred_region
      %v5278 = vld [vmem:[#allocation2] sm:$0xff]
      %v5279 = vld [vmem:[#allocation2 + $0x8] sm:$0xff]
      %5280 = vst [vmem:[#allocation16] sm:$0xff] %v5278
      %5281 = vst [vmem:[#allocation16 + $0x8] sm:$0xff] %v5279
      %v5282 = vld [vmem:[#allocation3] sm:$0xff]
      %v5283 = vld [vmem:[#allocation3 + $0x8] sm:$0xff]
      %5284 = vst [vmem:[#allocation18] sm:$0xff] %v5282
      %5285 = vst [vmem:[#allocation18 + $0x8] sm:$0xff] %v5283
    $region61: #{tpu_custom_call.1} parent=1 // pred_fallthru
      _
    // Predicated region
    $region62: #{tpu_custom_call.1} parent=1 // pred_check
      _
    $region63: #{tpu_custom_call.1} parent=1 // pred_check_branch
      %5287 = sbr.rel (0) target = $region65
    $region64: #{tpu_custom_call.1} parent=1 // pred_region
      %s5289 = ssub.s32 1024, 1024
      %5290 = vsyncadd [#allocation6], %s5289
      %s5291 = sshll.u32 [#allocation15], 4
      %s5292 = int_to_ptr.vmem [resolvable:$true] %s5291
      %5297 = dma.vmem_to_hbm [thread:$0]  %s5292, 1024, %s7, [#allocation6], 128, 128, 8
    $region65: #{tpu_custom_call.1} parent=1 // pred_fallthru
      _
    // Predicated region
    $region66: #{tpu_custom_call.1} parent=1 // pred_check
      _
    $region67: #{tpu_custom_call.1} parent=1 // pred_check_branch
      %5299 = sbr.rel (0) target = $region69
    $region68: #{tpu_custom_call.1} parent=1 // pred_region
      %s5301 = ssub.s32 256, 256
      %5302 = vsyncadd [#allocation17], %s5301
      %s5303 = sshll.u32 [#allocation16], 4
      %s5304 = int_to_ptr.vmem [resolvable:$true] %s5303
      %5309 = dma.vmem_to_hbm [thread:$0]  %s5304, 256, %s8, [#allocation17], 128, 128, 8
    $region69: #{tpu_custom_call.1} parent=1 // pred_fallthru
      _
    // Predicated region
    $region70: #{tpu_custom_call.1} parent=1 // pred_check
      _
    $region71: #{tpu_custom_call.1} parent=1 // pred_check_branch
      %5311 = sbr.rel (0) target = $region73
    $region72: #{tpu_custom_call.1} parent=1 // pred_region
      %s5313 = ssub.s32 256, 256
      %5314 = vsyncadd [#allocation17], %s5313
      %s5315 = sshll.u32 [#allocation18], 4
      %s5316 = int_to_ptr.vmem [resolvable:$true] %s5315
      %5321 = dma.vmem_to_hbm [thread:$0]  %s5316, 256, %s9, [#allocation17], 128, 128, 8
    $region73: #{tpu_custom_call.1} parent=1 // pred_fallthru
      _
    // Predicated region
    $region74: #{tpu_custom_call.1} parent=1 // pred_check
      _
    $region75: #{tpu_custom_call.1} parent=1 // pred_check_branch
      %5323 = sbr.rel (0) target = $region77
    $region76: #{tpu_custom_call.1} parent=1 // pred_region
      %5324 = dma.done [#allocation6], 1024
    $region77: #{tpu_custom_call.1} parent=1 // pred_fallthru
      _
    // Predicated region
    $region78: #{tpu_custom_call.1} parent=1 // pred_check
      _
    $region79: #{tpu_custom_call.1} parent=1 // pred_check_branch
      %5326 = sbr.rel (0) target = $region81
    $region80: #{tpu_custom_call.1} parent=1 // pred_region
      %5327 = dma.done [#allocation17], 256
    $region81: #{tpu_custom_call.1} parent=1 // pred_fallthru
      _
    // Predicated region
    $region82: #{tpu_custom_call.1} parent=1 // pred_check
      _
    $region83: #{tpu_custom_call.1} parent=1 // pred_check_branch
      %5329 = sbr.rel (0) target = $region85
    $region84: #{tpu_custom_call.1} parent=1 // pred_region
      %5330 = dma.done [#allocation17], 256
    $region85: #{tpu_custom_call.1} parent=1 // pred_fallthru
      _
    %5331 = vsyncpa [#allocation5], 1
    %5332 = vsyncpa [#allocation8], 1
    %5333 = vsyncpa [#allocation11], 1
    %5334 = vsyncpa [#allocation14], 1
    %5335 = vsyncpa [#allocation6], 1
    %5336 = vsyncpa [#allocation17], 1

</llo_original>
